<compile_context>
chip_gen: v7x
topology: tpu7x:2x2x1
jax: 0.10.0
libtpu: 0.0.40
codegen_flags: <defaults>
</compile_context>

<pallas_src>
import functools

import jax
import jax.numpy as jnp
from jax.experimental import pallas as pl
from jax.experimental.pallas import tpu as pltpu

_BN_EPS = 1e-5
_LEAKY_SLOPE = 0.01  # F.leaky_relu default negative_slope

_LAYER_DIMS = [
    # (in, out, activation)   encoder
    (773, 600, "leaky_relu"),
    (600, 400, "leaky_relu"),
    (400, 200, "leaky_relu"),
    (200, 100, "leaky_relu"),
    # decoder
    (100, 200, "leaky_relu"),
    (200, 400, "leaky_relu"),
    (400, 600, "leaky_relu"),
    (600, 773, "sigmoid"),
]
_N_LAYERS = len(_LAYER_DIMS)
_ACTS = tuple(a for (_i, _o, a) in _LAYER_DIMS)


def _round_up(n, m):
    return ((n + m - 1) // m) * m


_PAD_IN = [_round_up(d_in, 128) for (d_in, _d, _a) in _LAYER_DIMS]
_PAD_OUT = [_round_up(d_out, 128) for (_d, d_out, _a) in _LAYER_DIMS]

# Column offsets of each layer's gamma/beta inside the consolidated slab.
_GB_OFF = [0]
for _d in _PAD_OUT:
    _GB_OFF.append(_GB_OFF[-1] + _d)
_GB_TOTAL = _GB_OFF[-1]


def _pad_batch(b):
    """Sublane/MXU-friendly padded batch: >=16, x16; x128 once large."""
    if b >= 128:
        return _round_up(b, 128)
    return max(16, _round_up(b, 16))


def _autoencoder_kernel(x_ref, *refs, acts, batch_real, batch_pad):
    """Fully fused 8-stage forward: Linear -> BN(batch stats) -> activation."""
    w_refs = refs[:_N_LAYERS]          # bf16 (Din_p, Dout_p) each
    gb_ref = refs[_N_LAYERS]           # f32  (2, sum(Dout_p)): row0=gamma, row1=beta
    dec_ref, enc_ref = refs[_N_LAYERS + 1:]

    inv_b = jnp.float32(1.0 / batch_real)

    # Row mask only needed when padded rows exist; keeps padded rows exactly
    # zero so next-layer matmul rows stay zero and BN sums remain exact.
    if batch_pad > batch_real:
        row_ids = jax.lax.broadcasted_iota(jnp.int32, (batch_pad, 1), 0)
        row_mask = (row_ids < batch_real).astype(jnp.float32)
    else:
        row_mask = None

    h = x_ref[...]                                      # (B_pad, 896) bf16
    for li in range(_N_LAYERS):
        dop = _PAD_OUT[li]
        off = _GB_OFF[li]

        # Linear (bias dropped: exactly cancelled by BN mean subtraction).
        # bf16 MXU operands, f32 accumulation.
        y = jnp.dot(h, w_refs[li][...], preferred_element_type=jnp.float32)

        # One-pass BatchNorm1d batch statistics (biased variance), f32.
        # Padded rows of y are exactly zero, so dividing by the REAL batch
        # gives the exact statistics of the real rows.
        s1 = jnp.sum(y, axis=0, keepdims=True)
        s2 = jnp.sum(y * y, axis=0, keepdims=True)
        mean = s1 * inv_b
        var = s2 * inv_b - mean * mean

        gamma = gb_ref[0:1, off:off + dop]
        beta = gb_ref[1:2, off:off + dop]
        z = gamma * ((y - mean) * jax.lax.rsqrt(var + _BN_EPS)) + beta

        if acts[li] == "leaky_relu":
            a = jnp.maximum(z, _LEAKY_SLOPE * z)
        else:  # "sigmoid"
            a = jax.nn.sigmoid(z)

        if row_mask is not None:
            a = a * row_mask            # re-zero padded rows for next layer

        if li == 3:                     # end of encode()
            enc_ref[...] = a.astype(enc_ref.dtype)
        if li == _N_LAYERS - 1:
            dec_ref[...] = a.astype(dec_ref.dtype)

        h = a.astype(jnp.bfloat16)      # next-layer MXU operand


def init_params(key):
    """Returns (kernel_params, ref_params).

    kernel_params: (tuple of 8 bf16 weight mats padded to (Din_p, Dout_p),
                    one f32 (2, sum(Dout_p)) gamma/beta slab).
    ref_params:    unpadded f32 (w, b, gamma, beta) per layer, PyTorch-like
                   init, used only by the pure-JAX reference.
    """
    w_pads = []
    ref_params = []
    gb = jnp.zeros((2, _GB_TOTAL), jnp.float32)
    for li, (d_in, d_out, _act) in enumerate(_LAYER_DIMS):
        key, kw, kb = jax.random.split(key, 3)
        bound = 1.0 / float(d_in) ** 0.5
        w = jax.random.uniform(kw, (d_in, d_out), jnp.float32, -bound, bound)
        b = jax.random.uniform(kb, (1, d_out), jnp.float32, -bound, bound)
        gamma = jnp.ones((1, d_out), jnp.float32)   # BatchNorm1d weight init
        beta = jnp.zeros((1, d_out), jnp.float32)   # BatchNorm1d bias init

        dip, dop = _PAD_IN[li], _PAD_OUT[li]
        w_pad = jnp.zeros((dip, dop), jnp.float32).at[:d_in, :d_out].set(w)
        w_pads.append(w_pad.astype(jnp.bfloat16))

        off = _GB_OFF[li]
        gb = gb.at[0, off:off + d_out].set(gamma[0])
        gb = gb.at[1, off:off + d_out].set(beta[0])

        ref_params.append((w, b, gamma, beta))
    return (tuple(w_pads), gb), ref_params


def autoencoder_forward(x, kernel_params):
    """Returns (decoder_out, encoder_out), matching AutoEncoder.forward."""
    ws, gb = kernel_params
    x2 = x.reshape(-1, 773)
    batch = x2.shape[0]
    batch_pad = _pad_batch(batch)

    # Zero-pad rows (batch) and columns (lanes); zero rows/cols are inert.
    x_pad = jnp.pad(x2.astype(jnp.bfloat16),
                    ((0, batch_pad - batch), (0, _PAD_IN[0] - 773)))

    vmem = pl.BlockSpec(memory_space=pltpu.MemorySpace.VMEM)
    n_inputs = 1 + _N_LAYERS + 1        # x, 8 weights, gamma/beta slab

    weight_bytes = sum(int(w.size) * 2 for w in ws)
    # ~6 live (B_pad, 896) f32 activation slabs is a generous working-set bound.
    act_bytes = 6 * batch_pad * _PAD_IN[0] * 4
    # Cap at 56 MiB so the same kernel is safe on v7x's 64 MiB physical VMEM.
    vmem_limit = int(min(56 * 1024 * 1024,
                         max(32 * 1024 * 1024, 2 * (weight_bytes + act_bytes))))

    flops = 2 * batch_pad * sum(di * do for di, do in zip(_PAD_IN, _PAD_OUT))
    bytes_accessed = (x_pad.size * 2 + weight_bytes + int(gb.size) * 4
                      + batch_pad * (_PAD_OUT[-1] + _PAD_OUT[3]) * 4)
    transcendentals = batch_pad * _PAD_OUT[-1] + sum(_PAD_OUT)  # sigmoid + rsqrt

    dec_pad, enc_pad = pl.pallas_call(
        functools.partial(_autoencoder_kernel, acts=_ACTS,
                          batch_real=batch, batch_pad=batch_pad),
        out_shape=(
            jax.ShapeDtypeStruct((batch_pad, _PAD_OUT[-1]), jnp.float32),  # decoder
            jax.ShapeDtypeStruct((batch_pad, _PAD_OUT[3]), jnp.float32),   # encoder
        ),
        in_specs=[vmem] * n_inputs,
        out_specs=(vmem, vmem),
        compiler_params=pltpu.CompilerParams(vmem_limit_bytes=vmem_limit),
        cost_estimate=pl.CostEstimate(
            flops=flops,
            transcendentals=transcendentals,
            bytes_accessed=bytes_accessed),
    )(x_pad, *ws, gb)

    decoder_out = dec_pad[:batch, :773]
    encoder_out = enc_pad[:batch, :100]
    return decoder_out, encoder_out


# Pure-JAX reference for correctness checking (matches PyTorch forward with
# training-mode BatchNorm; uses the same bf16 matmul operands as the kernel).
def _reference_forward(x, ref_params):
    h = x.reshape(-1, 773)
    enc = None
    for li, ((w, b, g, be), (_di, _do, act)) in enumerate(zip(ref_params, _LAYER_DIMS)):
        y = jnp.dot(h.astype(jnp.bfloat16), w.astype(jnp.bfloat16),
                    preferred_element_type=jnp.float32) + b
        mean = jnp.mean(y, axis=0, keepdims=True)
        var = jnp.mean((y - mean) ** 2, axis=0, keepdims=True)
        z = g * (y - mean) * jax.lax.rsqrt(var + _BN_EPS) + be
        h = (jnp.where(z >= 0, z, _LEAKY_SLOPE * z)
             if act == "leaky_relu" else jax.nn.sigmoid(z))
        if li == 3:
            enc = h
    return h, enc


if __name__ == "__main__":
    key = jax.random.PRNGKey(0)
    key, kx, kp = jax.random.split(key, 3)

    batch = 8
    # DeepChess input: 773-dim binary board encoding.
    x = (jax.random.uniform(kx, (batch, 773), jnp.float32) > 0.5).astype(jnp.float32)

    kernel_params, ref_params = init_params(kp)

    fwd = jax.jit(autoencoder_forward)
    decoder_out, encoder_out = fwd(x, kernel_params)
    jax.block_until_ready((decoder_out, encoder_out))

    ref_dec, ref_enc = _reference_forward(x, ref_params)
    assert decoder_out.shape == (batch, 773) and encoder_out.shape == (batch, 100)
    assert jnp.allclose(decoder_out, ref_dec, rtol=1e-2, atol=1e-2), (
        "decoder mismatch, max abs err = %f"
        % float(jnp.max(jnp.abs(decoder_out - ref_dec))))
    assert jnp.allclose(encoder_out, ref_enc, rtol=1e-2, atol=1e-2), (
        "encoder mismatch, max abs err = %f"
        % float(jnp.max(jnp.abs(encoder_out - ref_enc))))

    print("KERNEL_OK")
</pallas_src>

<mosaic_0001>
module attributes {stable_mosaic.version = 11 : i64} {
  func.func @_autoencoder_kernel(%arg0: memref<16x896xbf16, #tpu.memory_space<vmem>>, %arg1: memref<896x640xbf16, #tpu.memory_space<vmem>>, %arg2: memref<640x512xbf16, #tpu.memory_space<vmem>>, %arg3: memref<512x256xbf16, #tpu.memory_space<vmem>>, %arg4: memref<256x128xbf16, #tpu.memory_space<vmem>>, %arg5: memref<128x256xbf16, #tpu.memory_space<vmem>>, %arg6: memref<256x512xbf16, #tpu.memory_space<vmem>>, %arg7: memref<512x640xbf16, #tpu.memory_space<vmem>>, %arg8: memref<640x896xbf16, #tpu.memory_space<vmem>>, %arg9: memref<2x3840xf32, #tpu.memory_space<vmem>>, %arg10: memref<16x896xf32, #tpu.memory_space<vmem>>, %arg11: memref<16x128xf32, #tpu.memory_space<vmem>>) attributes {dimension_semantics = [], scalar_prefetch = 0 : i64, scratch_operands = 0 : i64, tpu.core_type = #tpu.core_type<tc>} {
    %0 = tpu.iota {dimensions = array<i32: 0>} : vector<16x1xi32>
    %c8_i32 = arith.constant 8 : i32
    %1 = vector.broadcast %c8_i32 : i32 to vector<16x1xi32>
    %2 = arith.cmpi slt, %0, %1 : vector<16x1xi32>
    %3 = arith.extui %2 : vector<16x1xi1> to vector<16x1xi32>
    %4 = arith.sitofp %3 : vector<16x1xi32> to vector<16x1xf32>
    %c0 = arith.constant 0 : index
    %c0_0 = arith.constant 0 : index
    %5 = vector.load %arg0[%c0, %c0_0] : memref<16x896xbf16, #tpu.memory_space<vmem>>, vector<16x896xbf16>
    %c0_1 = arith.constant 0 : index
    %c0_2 = arith.constant 0 : index
    %6 = vector.load %arg1[%c0_1, %c0_2] : memref<896x640xbf16, #tpu.memory_space<vmem>>, vector<896x640xbf16>
    %cst = arith.constant dense<0.000000e+00> : vector<16x640xf32>
    %7 = tpu.matmul %5, %6, %cst {dimension_numbers = #tpu.dot_dimension_numbers<[1], [0], [0], [1], [0, 0, 1, 1], [], []>} : vector<16x896xbf16>, vector<896x640xbf16>, vector<16x640xf32> -> vector<16x640xf32>
    %cst_3 = arith.constant dense<0.000000e+00> : vector<640xf32>
    %8 = vector.multi_reduction <add>, %7, %cst_3 [0] : vector<16x640xf32> to vector<640xf32>
    %9 = vector.shape_cast %8 : vector<640xf32> to vector<1x640xf32>
    %10 = arith.mulf %7, %7 : vector<16x640xf32>
    %cst_4 = arith.constant dense<0.000000e+00> : vector<640xf32>
    %11 = vector.multi_reduction <add>, %10, %cst_4 [0] : vector<16x640xf32> to vector<640xf32>
    %12 = vector.shape_cast %11 : vector<640xf32> to vector<1x640xf32>
    %cst_5 = arith.constant 1.250000e-01 : f32
    %13 = vector.broadcast %cst_5 : f32 to vector<1x640xf32>
    %14 = arith.mulf %9, %13 : vector<1x640xf32>
    %cst_6 = arith.constant 1.250000e-01 : f32
    %15 = vector.broadcast %cst_6 : f32 to vector<1x640xf32>
    %16 = arith.mulf %12, %15 : vector<1x640xf32>
    %17 = arith.mulf %14, %14 : vector<1x640xf32>
    %18 = arith.subf %16, %17 : vector<1x640xf32>
    %c0_7 = arith.constant 0 : index
    %c0_8 = arith.constant 0 : index
    %19 = vector.load %arg9[%c0_7, %c0_8] : memref<2x3840xf32, #tpu.memory_space<vmem>>, vector<1x640xf32>
    %c1 = arith.constant 1 : index
    %c0_9 = arith.constant 0 : index
    %20 = vector.load %arg9[%c1, %c0_9] : memref<2x3840xf32, #tpu.memory_space<vmem>>, vector<1x640xf32>
    %21 = vector.broadcast %14 : vector<1x640xf32> to vector<16x640xf32>
    %22 = arith.subf %7, %21 : vector<16x640xf32>
    %cst_10 = arith.constant 9.99999974E-6 : f32
    %23 = vector.broadcast %cst_10 : f32 to vector<1x640xf32>
    %24 = arith.addf %18, %23 : vector<1x640xf32>
    %25 = math.rsqrt %24 : vector<1x640xf32>
    %26 = vector.broadcast %25 : vector<1x640xf32> to vector<16x640xf32>
    %27 = arith.mulf %22, %26 : vector<16x640xf32>
    %28 = vector.broadcast %19 : vector<1x640xf32> to vector<16x640xf32>
    %29 = arith.mulf %28, %27 : vector<16x640xf32>
    %30 = vector.broadcast %20 : vector<1x640xf32> to vector<16x640xf32>
    %31 = arith.addf %29, %30 : vector<16x640xf32>
    %cst_11 = arith.constant 0.00999999977 : f32
    %32 = vector.broadcast %cst_11 : f32 to vector<16x640xf32>
    %33 = arith.mulf %32, %31 : vector<16x640xf32>
    %34 = arith.maximumf %31, %33 : vector<16x640xf32>
    %35 = vector.broadcast %4 : vector<16x1xf32> to vector<16x640xf32>
    %36 = arith.mulf %34, %35 : vector<16x640xf32>
    %37 = arith.truncf %36 : vector<16x640xf32> to vector<16x640xbf16>
    %c0_12 = arith.constant 0 : index
    %c0_13 = arith.constant 0 : index
    %38 = vector.load %arg2[%c0_12, %c0_13] : memref<640x512xbf16, #tpu.memory_space<vmem>>, vector<640x512xbf16>
    %cst_14 = arith.constant dense<0.000000e+00> : vector<16x512xf32>
    %39 = tpu.matmul %37, %38, %cst_14 {dimension_numbers = #tpu.dot_dimension_numbers<[1], [0], [0], [1], [0, 0, 1, 1], [], []>} : vector<16x640xbf16>, vector<640x512xbf16>, vector<16x512xf32> -> vector<16x512xf32>
    %cst_15 = arith.constant dense<0.000000e+00> : vector<512xf32>
    %40 = vector.multi_reduction <add>, %39, %cst_15 [0] : vector<16x512xf32> to vector<512xf32>
    %41 = vector.shape_cast %40 : vector<512xf32> to vector<1x512xf32>
    %42 = arith.mulf %39, %39 : vector<16x512xf32>
    %cst_16 = arith.constant dense<0.000000e+00> : vector<512xf32>
    %43 = vector.multi_reduction <add>, %42, %cst_16 [0] : vector<16x512xf32> to vector<512xf32>
    %44 = vector.shape_cast %43 : vector<512xf32> to vector<1x512xf32>
    %cst_17 = arith.constant 1.250000e-01 : f32
    %45 = vector.broadcast %cst_17 : f32 to vector<1x512xf32>
    %46 = arith.mulf %41, %45 : vector<1x512xf32>
    %cst_18 = arith.constant 1.250000e-01 : f32
    %47 = vector.broadcast %cst_18 : f32 to vector<1x512xf32>
    %48 = arith.mulf %44, %47 : vector<1x512xf32>
    %49 = arith.mulf %46, %46 : vector<1x512xf32>
    %50 = arith.subf %48, %49 : vector<1x512xf32>
    %c0_19 = arith.constant 0 : index
    %c640 = arith.constant 640 : index
    %51 = vector.load %arg9[%c0_19, %c640] : memref<2x3840xf32, #tpu.memory_space<vmem>>, vector<1x512xf32>
    %c1_20 = arith.constant 1 : index
    %c640_21 = arith.constant 640 : index
    %52 = vector.load %arg9[%c1_20, %c640_21] : memref<2x3840xf32, #tpu.memory_space<vmem>>, vector<1x512xf32>
    %53 = vector.broadcast %46 : vector<1x512xf32> to vector<16x512xf32>
    %54 = arith.subf %39, %53 : vector<16x512xf32>
    %cst_22 = arith.constant 9.99999974E-6 : f32
    %55 = vector.broadcast %cst_22 : f32 to vector<1x512xf32>
    %56 = arith.addf %50, %55 : vector<1x512xf32>
    %57 = math.rsqrt %56 : vector<1x512xf32>
    %58 = vector.broadcast %57 : vector<1x512xf32> to vector<16x512xf32>
    %59 = arith.mulf %54, %58 : vector<16x512xf32>
    %60 = vector.broadcast %51 : vector<1x512xf32> to vector<16x512xf32>
    %61 = arith.mulf %60, %59 : vector<16x512xf32>
    %62 = vector.broadcast %52 : vector<1x512xf32> to vector<16x512xf32>
    %63 = arith.addf %61, %62 : vector<16x512xf32>
    %cst_23 = arith.constant 0.00999999977 : f32
    %64 = vector.broadcast %cst_23 : f32 to vector<16x512xf32>
    %65 = arith.mulf %64, %63 : vector<16x512xf32>
    %66 = arith.maximumf %63, %65 : vector<16x512xf32>
    %67 = vector.broadcast %4 : vector<16x1xf32> to vector<16x512xf32>
    %68 = arith.mulf %66, %67 : vector<16x512xf32>
    %69 = arith.truncf %68 : vector<16x512xf32> to vector<16x512xbf16>
    %c0_24 = arith.constant 0 : index
    %c0_25 = arith.constant 0 : index
    %70 = vector.load %arg3[%c0_24, %c0_25] : memref<512x256xbf16, #tpu.memory_space<vmem>>, vector<512x256xbf16>
    %cst_26 = arith.constant dense<0.000000e+00> : vector<16x256xf32>
    %71 = tpu.matmul %69, %70, %cst_26 {dimension_numbers = #tpu.dot_dimension_numbers<[1], [0], [0], [1], [0, 0, 1, 1], [], []>} : vector<16x512xbf16>, vector<512x256xbf16>, vector<16x256xf32> -> vector<16x256xf32>
    %cst_27 = arith.constant dense<0.000000e+00> : vector<256xf32>
    %72 = vector.multi_reduction <add>, %71, %cst_27 [0] : vector<16x256xf32> to vector<256xf32>
    %73 = vector.shape_cast %72 : vector<256xf32> to vector<1x256xf32>
    %74 = arith.mulf %71, %71 : vector<16x256xf32>
    %cst_28 = arith.constant dense<0.000000e+00> : vector<256xf32>
    %75 = vector.multi_reduction <add>, %74, %cst_28 [0] : vector<16x256xf32> to vector<256xf32>
    %76 = vector.shape_cast %75 : vector<256xf32> to vector<1x256xf32>
    %cst_29 = arith.constant 1.250000e-01 : f32
    %77 = vector.broadcast %cst_29 : f32 to vector<1x256xf32>
    %78 = arith.mulf %73, %77 : vector<1x256xf32>
    %cst_30 = arith.constant 1.250000e-01 : f32
    %79 = vector.broadcast %cst_30 : f32 to vector<1x256xf32>
    %80 = arith.mulf %76, %79 : vector<1x256xf32>
    %81 = arith.mulf %78, %78 : vector<1x256xf32>
    %82 = arith.subf %80, %81 : vector<1x256xf32>
    %c0_31 = arith.constant 0 : index
    %c1152 = arith.constant 1152 : index
    %83 = vector.load %arg9[%c0_31, %c1152] : memref<2x3840xf32, #tpu.memory_space<vmem>>, vector<1x256xf32>
    %c1_32 = arith.constant 1 : index
    %c1152_33 = arith.constant 1152 : index
    %84 = vector.load %arg9[%c1_32, %c1152_33] : memref<2x3840xf32, #tpu.memory_space<vmem>>, vector<1x256xf32>
    %85 = vector.broadcast %78 : vector<1x256xf32> to vector<16x256xf32>
    %86 = arith.subf %71, %85 : vector<16x256xf32>
    %cst_34 = arith.constant 9.99999974E-6 : f32
    %87 = vector.broadcast %cst_34 : f32 to vector<1x256xf32>
    %88 = arith.addf %82, %87 : vector<1x256xf32>
    %89 = math.rsqrt %88 : vector<1x256xf32>
    %90 = vector.broadcast %89 : vector<1x256xf32> to vector<16x256xf32>
    %91 = arith.mulf %86, %90 : vector<16x256xf32>
    %92 = vector.broadcast %83 : vector<1x256xf32> to vector<16x256xf32>
    %93 = arith.mulf %92, %91 : vector<16x256xf32>
    %94 = vector.broadcast %84 : vector<1x256xf32> to vector<16x256xf32>
    %95 = arith.addf %93, %94 : vector<16x256xf32>
    %cst_35 = arith.constant 0.00999999977 : f32
    %96 = vector.broadcast %cst_35 : f32 to vector<16x256xf32>
    %97 = arith.mulf %96, %95 : vector<16x256xf32>
    %98 = arith.maximumf %95, %97 : vector<16x256xf32>
    %99 = vector.broadcast %4 : vector<16x1xf32> to vector<16x256xf32>
    %100 = arith.mulf %98, %99 : vector<16x256xf32>
    %101 = arith.truncf %100 : vector<16x256xf32> to vector<16x256xbf16>
    %c0_36 = arith.constant 0 : index
    %c0_37 = arith.constant 0 : index
    %102 = vector.load %arg4[%c0_36, %c0_37] : memref<256x128xbf16, #tpu.memory_space<vmem>>, vector<256x128xbf16>
    %cst_38 = arith.constant dense<0.000000e+00> : vector<16x128xf32>
    %103 = tpu.matmul %101, %102, %cst_38 {dimension_numbers = #tpu.dot_dimension_numbers<[1], [0], [0], [1], [0, 0, 1, 1], [], []>} : vector<16x256xbf16>, vector<256x128xbf16>, vector<16x128xf32> -> vector<16x128xf32>
    %cst_39 = arith.constant dense<0.000000e+00> : vector<128xf32>
    %104 = vector.multi_reduction <add>, %103, %cst_39 [0] : vector<16x128xf32> to vector<128xf32>
    %105 = vector.shape_cast %104 : vector<128xf32> to vector<1x128xf32>
    %106 = arith.mulf %103, %103 : vector<16x128xf32>
    %cst_40 = arith.constant dense<0.000000e+00> : vector<128xf32>
    %107 = vector.multi_reduction <add>, %106, %cst_40 [0] : vector<16x128xf32> to vector<128xf32>
    %108 = vector.shape_cast %107 : vector<128xf32> to vector<1x128xf32>
    %cst_41 = arith.constant 1.250000e-01 : f32
    %109 = vector.broadcast %cst_41 : f32 to vector<1x128xf32>
    %110 = arith.mulf %105, %109 : vector<1x128xf32>
    %cst_42 = arith.constant 1.250000e-01 : f32
    %111 = vector.broadcast %cst_42 : f32 to vector<1x128xf32>
    %112 = arith.mulf %108, %111 : vector<1x128xf32>
    %113 = arith.mulf %110, %110 : vector<1x128xf32>
    %114 = arith.subf %112, %113 : vector<1x128xf32>
    %c0_43 = arith.constant 0 : index
    %c1408 = arith.constant 1408 : index
    %115 = vector.load %arg9[%c0_43, %c1408] : memref<2x3840xf32, #tpu.memory_space<vmem>>, vector<1x128xf32>
    %c1_44 = arith.constant 1 : index
    %c1408_45 = arith.constant 1408 : index
    %116 = vector.load %arg9[%c1_44, %c1408_45] : memref<2x3840xf32, #tpu.memory_space<vmem>>, vector<1x128xf32>
    %117 = vector.broadcast %110 : vector<1x128xf32> to vector<16x128xf32>
    %118 = arith.subf %103, %117 : vector<16x128xf32>
    %cst_46 = arith.constant 9.99999974E-6 : f32
    %119 = vector.broadcast %cst_46 : f32 to vector<1x128xf32>
    %120 = arith.addf %114, %119 : vector<1x128xf32>
    %121 = math.rsqrt %120 : vector<1x128xf32>
    %122 = vector.broadcast %121 : vector<1x128xf32> to vector<16x128xf32>
    %123 = arith.mulf %118, %122 : vector<16x128xf32>
    %124 = vector.broadcast %115 : vector<1x128xf32> to vector<16x128xf32>
    %125 = arith.mulf %124, %123 : vector<16x128xf32>
    %126 = vector.broadcast %116 : vector<1x128xf32> to vector<16x128xf32>
    %127 = arith.addf %125, %126 : vector<16x128xf32>
    %cst_47 = arith.constant 0.00999999977 : f32
    %128 = vector.broadcast %cst_47 : f32 to vector<16x128xf32>
    %129 = arith.mulf %128, %127 : vector<16x128xf32>
    %130 = arith.maximumf %127, %129 : vector<16x128xf32>
    %131 = vector.broadcast %4 : vector<16x1xf32> to vector<16x128xf32>
    %132 = arith.mulf %130, %131 : vector<16x128xf32>
    %c0_48 = arith.constant 0 : index
    %c0_49 = arith.constant 0 : index
    %133 = vector.load %arg11[%c0_48, %c0_49] : memref<16x128xf32, #tpu.memory_space<vmem>>, vector<16x128xf32>
    tpu.vector_store %arg11[%c0_48, %c0_49], %132 {strides = array<i32>} : memref<16x128xf32, #tpu.memory_space<vmem>>, vector<16x128xf32>,
    %134 = arith.truncf %132 : vector<16x128xf32> to vector<16x128xbf16>
    %c0_50 = arith.constant 0 : index
    %c0_51 = arith.constant 0 : index
    %135 = vector.load %arg5[%c0_50, %c0_51] : memref<128x256xbf16, #tpu.memory_space<vmem>>, vector<128x256xbf16>
    %cst_52 = arith.constant dense<0.000000e+00> : vector<16x256xf32>
    %136 = tpu.matmul %134, %135, %cst_52 {dimension_numbers = #tpu.dot_dimension_numbers<[1], [0], [0], [1], [0, 0, 1, 1], [], []>} : vector<16x128xbf16>, vector<128x256xbf16>, vector<16x256xf32> -> vector<16x256xf32>
    %cst_53 = arith.constant dense<0.000000e+00> : vector<256xf32>
    %137 = vector.multi_reduction <add>, %136, %cst_53 [0] : vector<16x256xf32> to vector<256xf32>
    %138 = vector.shape_cast %137 : vector<256xf32> to vector<1x256xf32>
    %139 = arith.mulf %136, %136 : vector<16x256xf32>
    %cst_54 = arith.constant dense<0.000000e+00> : vector<256xf32>
    %140 = vector.multi_reduction <add>, %139, %cst_54 [0] : vector<16x256xf32> to vector<256xf32>
    %141 = vector.shape_cast %140 : vector<256xf32> to vector<1x256xf32>
    %cst_55 = arith.constant 1.250000e-01 : f32
    %142 = vector.broadcast %cst_55 : f32 to vector<1x256xf32>
    %143 = arith.mulf %138, %142 : vector<1x256xf32>
    %cst_56 = arith.constant 1.250000e-01 : f32
    %144 = vector.broadcast %cst_56 : f32 to vector<1x256xf32>
    %145 = arith.mulf %141, %144 : vector<1x256xf32>
    %146 = arith.mulf %143, %143 : vector<1x256xf32>
    %147 = arith.subf %145, %146 : vector<1x256xf32>
    %c0_57 = arith.constant 0 : index
    %c1536 = arith.constant 1536 : index
    %148 = vector.load %arg9[%c0_57, %c1536] : memref<2x3840xf32, #tpu.memory_space<vmem>>, vector<1x256xf32>
    %c1_58 = arith.constant 1 : index
    %c1536_59 = arith.constant 1536 : index
    %149 = vector.load %arg9[%c1_58, %c1536_59] : memref<2x3840xf32, #tpu.memory_space<vmem>>, vector<1x256xf32>
    %150 = vector.broadcast %143 : vector<1x256xf32> to vector<16x256xf32>
    %151 = arith.subf %136, %150 : vector<16x256xf32>
    %cst_60 = arith.constant 9.99999974E-6 : f32
    %152 = vector.broadcast %cst_60 : f32 to vector<1x256xf32>
    %153 = arith.addf %147, %152 : vector<1x256xf32>
    %154 = math.rsqrt %153 : vector<1x256xf32>
    %155 = vector.broadcast %154 : vector<1x256xf32> to vector<16x256xf32>
    %156 = arith.mulf %151, %155 : vector<16x256xf32>
    %157 = vector.broadcast %148 : vector<1x256xf32> to vector<16x256xf32>
    %158 = arith.mulf %157, %156 : vector<16x256xf32>
    %159 = vector.broadcast %149 : vector<1x256xf32> to vector<16x256xf32>
    %160 = arith.addf %158, %159 : vector<16x256xf32>
    %cst_61 = arith.constant 0.00999999977 : f32
    %161 = vector.broadcast %cst_61 : f32 to vector<16x256xf32>
    %162 = arith.mulf %161, %160 : vector<16x256xf32>
    %163 = arith.maximumf %160, %162 : vector<16x256xf32>
    %164 = vector.broadcast %4 : vector<16x1xf32> to vector<16x256xf32>
    %165 = arith.mulf %163, %164 : vector<16x256xf32>
    %166 = arith.truncf %165 : vector<16x256xf32> to vector<16x256xbf16>
    %c0_62 = arith.constant 0 : index
    %c0_63 = arith.constant 0 : index
    %167 = vector.load %arg6[%c0_62, %c0_63] : memref<256x512xbf16, #tpu.memory_space<vmem>>, vector<256x512xbf16>
    %cst_64 = arith.constant dense<0.000000e+00> : vector<16x512xf32>
    %168 = tpu.matmul %166, %167, %cst_64 {dimension_numbers = #tpu.dot_dimension_numbers<[1], [0], [0], [1], [0, 0, 1, 1], [], []>} : vector<16x256xbf16>, vector<256x512xbf16>, vector<16x512xf32> -> vector<16x512xf32>
    %cst_65 = arith.constant dense<0.000000e+00> : vector<512xf32>
    %169 = vector.multi_reduction <add>, %168, %cst_65 [0] : vector<16x512xf32> to vector<512xf32>
    %170 = vector.shape_cast %169 : vector<512xf32> to vector<1x512xf32>
    %171 = arith.mulf %168, %168 : vector<16x512xf32>
    %cst_66 = arith.constant dense<0.000000e+00> : vector<512xf32>
    %172 = vector.multi_reduction <add>, %171, %cst_66 [0] : vector<16x512xf32> to vector<512xf32>
    %173 = vector.shape_cast %172 : vector<512xf32> to vector<1x512xf32>
    %cst_67 = arith.constant 1.250000e-01 : f32
    %174 = vector.broadcast %cst_67 : f32 to vector<1x512xf32>
    %175 = arith.mulf %170, %174 : vector<1x512xf32>
    %cst_68 = arith.constant 1.250000e-01 : f32
    %176 = vector.broadcast %cst_68 : f32 to vector<1x512xf32>
    %177 = arith.mulf %173, %176 : vector<1x512xf32>
    %178 = arith.mulf %175, %175 : vector<1x512xf32>
    %179 = arith.subf %177, %178 : vector<1x512xf32>
    %c0_69 = arith.constant 0 : index
    %c1792 = arith.constant 1792 : index
    %180 = vector.load %arg9[%c0_69, %c1792] : memref<2x3840xf32, #tpu.memory_space<vmem>>, vector<1x512xf32>
    %c1_70 = arith.constant 1 : index
    %c1792_71 = arith.constant 1792 : index
    %181 = vector.load %arg9[%c1_70, %c1792_71] : memref<2x3840xf32, #tpu.memory_space<vmem>>, vector<1x512xf32>
    %182 = vector.broadcast %175 : vector<1x512xf32> to vector<16x512xf32>
    %183 = arith.subf %168, %182 : vector<16x512xf32>
    %cst_72 = arith.constant 9.99999974E-6 : f32
    %184 = vector.broadcast %cst_72 : f32 to vector<1x512xf32>
    %185 = arith.addf %179, %184 : vector<1x512xf32>
    %186 = math.rsqrt %185 : vector<1x512xf32>
    %187 = vector.broadcast %186 : vector<1x512xf32> to vector<16x512xf32>
    %188 = arith.mulf %183, %187 : vector<16x512xf32>
    %189 = vector.broadcast %180 : vector<1x512xf32> to vector<16x512xf32>
    %190 = arith.mulf %189, %188 : vector<16x512xf32>
    %191 = vector.broadcast %181 : vector<1x512xf32> to vector<16x512xf32>
    %192 = arith.addf %190, %191 : vector<16x512xf32>
    %cst_73 = arith.constant 0.00999999977 : f32
    %193 = vector.broadcast %cst_73 : f32 to vector<16x512xf32>
    %194 = arith.mulf %193, %192 : vector<16x512xf32>
    %195 = arith.maximumf %192, %194 : vector<16x512xf32>
    %196 = vector.broadcast %4 : vector<16x1xf32> to vector<16x512xf32>
    %197 = arith.mulf %195, %196 : vector<16x512xf32>
    %198 = arith.truncf %197 : vector<16x512xf32> to vector<16x512xbf16>
    %c0_74 = arith.constant 0 : index
    %c0_75 = arith.constant 0 : index
    %199 = vector.load %arg7[%c0_74, %c0_75] : memref<512x640xbf16, #tpu.memory_space<vmem>>, vector<512x640xbf16>
    %cst_76 = arith.constant dense<0.000000e+00> : vector<16x640xf32>
    %200 = tpu.matmul %198, %199, %cst_76 {dimension_numbers = #tpu.dot_dimension_numbers<[1], [0], [0], [1], [0, 0, 1, 1], [], []>} : vector<16x512xbf16>, vector<512x640xbf16>, vector<16x640xf32> -> vector<16x640xf32>
    %cst_77 = arith.constant dense<0.000000e+00> : vector<640xf32>
    %201 = vector.multi_reduction <add>, %200, %cst_77 [0] : vector<16x640xf32> to vector<640xf32>
    %202 = vector.shape_cast %201 : vector<640xf32> to vector<1x640xf32>
    %203 = arith.mulf %200, %200 : vector<16x640xf32>
    %cst_78 = arith.constant dense<0.000000e+00> : vector<640xf32>
    %204 = vector.multi_reduction <add>, %203, %cst_78 [0] : vector<16x640xf32> to vector<640xf32>
    %205 = vector.shape_cast %204 : vector<640xf32> to vector<1x640xf32>
    %cst_79 = arith.constant 1.250000e-01 : f32
    %206 = vector.broadcast %cst_79 : f32 to vector<1x640xf32>
    %207 = arith.mulf %202, %206 : vector<1x640xf32>
    %cst_80 = arith.constant 1.250000e-01 : f32
    %208 = vector.broadcast %cst_80 : f32 to vector<1x640xf32>
    %209 = arith.mulf %205, %208 : vector<1x640xf32>
    %210 = arith.mulf %207, %207 : vector<1x640xf32>
    %211 = arith.subf %209, %210 : vector<1x640xf32>
    %c0_81 = arith.constant 0 : index
    %c2304 = arith.constant 2304 : index
    %212 = vector.load %arg9[%c0_81, %c2304] : memref<2x3840xf32, #tpu.memory_space<vmem>>, vector<1x640xf32>
    %c1_82 = arith.constant 1 : index
    %c2304_83 = arith.constant 2304 : index
    %213 = vector.load %arg9[%c1_82, %c2304_83] : memref<2x3840xf32, #tpu.memory_space<vmem>>, vector<1x640xf32>
    %214 = vector.broadcast %207 : vector<1x640xf32> to vector<16x640xf32>
    %215 = arith.subf %200, %214 : vector<16x640xf32>
    %cst_84 = arith.constant 9.99999974E-6 : f32
    %216 = vector.broadcast %cst_84 : f32 to vector<1x640xf32>
    %217 = arith.addf %211, %216 : vector<1x640xf32>
    %218 = math.rsqrt %217 : vector<1x640xf32>
    %219 = vector.broadcast %218 : vector<1x640xf32> to vector<16x640xf32>
    %220 = arith.mulf %215, %219 : vector<16x640xf32>
    %221 = vector.broadcast %212 : vector<1x640xf32> to vector<16x640xf32>
    %222 = arith.mulf %221, %220 : vector<16x640xf32>
    %223 = vector.broadcast %213 : vector<1x640xf32> to vector<16x640xf32>
    %224 = arith.addf %222, %223 : vector<16x640xf32>
    %cst_85 = arith.constant 0.00999999977 : f32
    %225 = vector.broadcast %cst_85 : f32 to vector<16x640xf32>
    %226 = arith.mulf %225, %224 : vector<16x640xf32>
    %227 = arith.maximumf %224, %226 : vector<16x640xf32>
    %228 = vector.broadcast %4 : vector<16x1xf32> to vector<16x640xf32>
    %229 = arith.mulf %227, %228 : vector<16x640xf32>
    %230 = arith.truncf %229 : vector<16x640xf32> to vector<16x640xbf16>
    %c0_86 = arith.constant 0 : index
    %c0_87 = arith.constant 0 : index
    %231 = vector.load %arg8[%c0_86, %c0_87] : memref<640x896xbf16, #tpu.memory_space<vmem>>, vector<640x896xbf16>
    %cst_88 = arith.constant dense<0.000000e+00> : vector<16x896xf32>
    %232 = tpu.matmul %230, %231, %cst_88 {dimension_numbers = #tpu.dot_dimension_numbers<[1], [0], [0], [1], [0, 0, 1, 1], [], []>} : vector<16x640xbf16>, vector<640x896xbf16>, vector<16x896xf32> -> vector<16x896xf32>
    %cst_89 = arith.constant dense<0.000000e+00> : vector<896xf32>
    %233 = vector.multi_reduction <add>, %232, %cst_89 [0] : vector<16x896xf32> to vector<896xf32>
    %234 = vector.shape_cast %233 : vector<896xf32> to vector<1x896xf32>
    %235 = arith.mulf %232, %232 : vector<16x896xf32>
    %cst_90 = arith.constant dense<0.000000e+00> : vector<896xf32>
    %236 = vector.multi_reduction <add>, %235, %cst_90 [0] : vector<16x896xf32> to vector<896xf32>
    %237 = vector.shape_cast %236 : vector<896xf32> to vector<1x896xf32>
    %cst_91 = arith.constant 1.250000e-01 : f32
    %238 = vector.broadcast %cst_91 : f32 to vector<1x896xf32>
    %239 = arith.mulf %234, %238 : vector<1x896xf32>
    %cst_92 = arith.constant 1.250000e-01 : f32
    %240 = vector.broadcast %cst_92 : f32 to vector<1x896xf32>
    %241 = arith.mulf %237, %240 : vector<1x896xf32>
    %242 = arith.mulf %239, %239 : vector<1x896xf32>
    %243 = arith.subf %241, %242 : vector<1x896xf32>
    %c0_93 = arith.constant 0 : index
    %c2944 = arith.constant 2944 : index
    %244 = vector.load %arg9[%c0_93, %c2944] : memref<2x3840xf32, #tpu.memory_space<vmem>>, vector<1x896xf32>
    %c1_94 = arith.constant 1 : index
    %c2944_95 = arith.constant 2944 : index
    %245 = vector.load %arg9[%c1_94, %c2944_95] : memref<2x3840xf32, #tpu.memory_space<vmem>>, vector<1x896xf32>
    %246 = vector.broadcast %239 : vector<1x896xf32> to vector<16x896xf32>
    %247 = arith.subf %232, %246 : vector<16x896xf32>
    %cst_96 = arith.constant 9.99999974E-6 : f32
    %248 = vector.broadcast %cst_96 : f32 to vector<1x896xf32>
    %249 = arith.addf %243, %248 : vector<1x896xf32>
    %250 = math.rsqrt %249 : vector<1x896xf32>
    %251 = vector.broadcast %250 : vector<1x896xf32> to vector<16x896xf32>
    %252 = arith.mulf %247, %251 : vector<16x896xf32>
    %253 = vector.broadcast %244 : vector<1x896xf32> to vector<16x896xf32>
    %254 = arith.mulf %253, %252 : vector<16x896xf32>
    %255 = vector.broadcast %245 : vector<1x896xf32> to vector<16x896xf32>
    %256 = arith.addf %254, %255 : vector<16x896xf32>
    %257 = arith.negf %256 : vector<16x896xf32>
    %258 = math.exp %257 : vector<16x896xf32>
    %cst_97 = arith.constant 1.000000e+00 : f32
    %259 = vector.broadcast %cst_97 : f32 to vector<16x896xf32>
    %260 = arith.addf %259, %258 : vector<16x896xf32>
    %261 = arith.divf %259, %260 : vector<16x896xf32>
    %262 = vector.broadcast %4 : vector<16x1xf32> to vector<16x896xf32>
    %263 = arith.mulf %261, %262 : vector<16x896xf32>
    %c0_98 = arith.constant 0 : index
    %c0_99 = arith.constant 0 : index
    %264 = vector.load %arg10[%c0_98, %c0_99] : memref<16x896xf32, #tpu.memory_space<vmem>>, vector<16x896xf32>
    tpu.vector_store %arg10[%c0_98, %c0_99], %263 {strides = array<i32>} : memref<16x896xf32, #tpu.memory_space<vmem>>, vector<16x896xf32>,
    return
  }
}

</mosaic_0001>

<llo_original>
// kernel: autoencoder_forward.1
$region0: #{autoencoder_forward.1}
  #allocation0 [shape = 'u32[]', space=smem, size = 0x4, offset = 0x4, fixed_abs, tag = 'smem constant byte address 0x4 - core index']
  #allocation1 [shape = 'u32[144,128]{1,0:T(1,128)}', space=vmem, size = 0x12000, scoped, tag = 'internal scratch']
  %s0 = inlined_call_operand.vmem [shape: bf16[16,896], index: 0, kind: input, shape index: {}]
  %s1 = inlined_call_operand.hbm [shape: bf16[896,640], index: 1, kind: input, shape index: {}]
  %s2 = inlined_call_operand.hbm [shape: bf16[640,512], index: 2, kind: input, shape index: {}]
  %s3 = inlined_call_operand.hbm [shape: bf16[512,256], index: 3, kind: input, shape index: {}]
  %s4 = inlined_call_operand.hbm [shape: bf16[256,128], index: 4, kind: input, shape index: {}]
  %s5 = inlined_call_operand.hbm [shape: bf16[128,256], index: 5, kind: input, shape index: {}]
  %s6 = inlined_call_operand.hbm [shape: bf16[256,512], index: 6, kind: input, shape index: {}]
  %s7 = inlined_call_operand.hbm [shape: bf16[512,640], index: 7, kind: input, shape index: {}]
  %s8 = inlined_call_operand.hbm [shape: bf16[640,896], index: 8, kind: input, shape index: {}]
  %s9 = inlined_call_operand.hbm [shape: f32[2,3840], index: 9, kind: input, shape index: {}]
  %s10 = inlined_call_operand.vmem [shape: f32[16,896], index: 10, kind: output, shape index: {0}]
  %s11 = inlined_call_operand.vmem [shape: f32[16,128], index: 11, kind: output, shape index: {1}]
  %12 = xla_tuple %s10, %s11
  %s13 = sld [smem:[#allocation0]]
  $region94: #{autoencoder_forward.1} parent=0
    _
  %s15 = ssub.s32 1, %s13
  %s16 = scalar_select 0, %s15, %s13
  $region1: #{autoencoder_forward.1} parent=0
    #allocation2 [shape = 'u8[1146880]{0}', space=vmem, size = 0x118000, scoped, tag = 'input window, operand 1, single buffered']
    #allocation3 [shape = 's32[1]{0}', space=sflag, size = 0x4, scoped, tag = 'scoped memory for autoencoder_forward.1']
    #allocation4 [shape = 'u8[655360]{0}', space=vmem, size = 0xa0000, scoped, tag = 'input window, operand 2, single buffered']
    #allocation5 [shape = 's32[1]{0}', space=sflag, size = 0x4, scoped, tag = 'scoped memory for autoencoder_forward.1']
    #allocation6 [shape = 'u8[262144]{0}', space=vmem, size = 0x40000, scoped, tag = 'input window, operand 3, single buffered']
    #allocation7 [shape = 'u8[65536]{0}', space=vmem, size = 0x10000, scoped, tag = 'input window, operand 4, single buffered']
    #allocation8 [shape = 's32[1]{0}', space=sflag, size = 0x4, scoped, tag = 'scoped memory for autoencoder_forward.1']
    #allocation9 [shape = 'u8[65536]{0}', space=vmem, size = 0x10000, scoped, tag = 'input window, operand 5, single buffered']
    #allocation10 [shape = 'u8[262144]{0}', space=vmem, size = 0x40000, scoped, tag = 'input window, operand 6, single buffered']
    #allocation11 [shape = 's32[1]{0}', space=sflag, size = 0x4, scoped, tag = 'scoped memory for autoencoder_forward.1']
    #allocation12 [shape = 'u8[655360]{0}', space=vmem, size = 0xa0000, scoped, tag = 'input window, operand 7, single buffered']
    #allocation13 [shape = 'u8[1146880]{0}', space=vmem, size = 0x118000, scoped, tag = 'input window, operand 8, single buffered']
    #allocation14 [shape = 's32[1]{0}', space=sflag, size = 0x4, scoped, tag = 'scoped memory for autoencoder_forward.1']
    #allocation15 [shape = 'u8[30720]{0}', space=vmem, size = 0x7800, scoped, tag = 'input window, operand 9, single buffered']
    %17 = vsyncpa [#allocation3], 0
    %18 = vsyncpa [#allocation5], 0
    %19 = vsyncpa [#allocation8], 0
    %20 = vsyncpa [#allocation11], 0
    %21 = vsyncpa [#allocation14], 0
    // Predicated region
    $region2: #{autoencoder_forward.1} parent=1 // pred_check
      _
    $region3: #{autoencoder_forward.1} parent=1 // pred_check_branch
      %23 = sbr.rel (0) target = $region5
    $region4: #{autoencoder_forward.1} parent=1 // pred_region
      _
    $region5: #{autoencoder_forward.1} parent=1 // pred_fallthru
      _
    // Predicated region
    $region6: #{autoencoder_forward.1} parent=1 // pred_check
      _
    $region7: #{autoencoder_forward.1} parent=1 // pred_check_branch
      %25 = sbr.rel (0) target = $region9
    $region8: #{autoencoder_forward.1} parent=1 // pred_region
      %s27 = ssub.s32 35840, 35840
      %28 = vsyncadd [#allocation3], %s27
      %s29 = sshll.u32 [#allocation2], 4
      %s30 = int_to_ptr.vmem [resolvable:$true] %s29
      %35 = dma.hbm_to_vmem [thread:$0]  %s1, 35840, %s30, [#allocation3], 320, 320, 20
    $region9: #{autoencoder_forward.1} parent=1 // pred_fallthru
      _
    // Predicated region
    $region10: #{autoencoder_forward.1} parent=1 // pred_check
      _
    $region11: #{autoencoder_forward.1} parent=1 // pred_check_branch
      %37 = sbr.rel (0) target = $region13
    $region12: #{autoencoder_forward.1} parent=1 // pred_region
      %s39 = ssub.s32 20480, 20480
      %40 = vsyncadd [#allocation5], %s39
      %s41 = sshll.u32 [#allocation4], 4
      %s42 = int_to_ptr.vmem [resolvable:$true] %s41
      %47 = dma.hbm_to_vmem [thread:$0]  %s2, 20480, %s42, [#allocation5], 256, 256, 16
    $region13: #{autoencoder_forward.1} parent=1 // pred_fallthru
      _
    // Predicated region
    $region14: #{autoencoder_forward.1} parent=1 // pred_check
      _
    $region15: #{autoencoder_forward.1} parent=1 // pred_check_branch
      %49 = sbr.rel (0) target = $region17
    $region16: #{autoencoder_forward.1} parent=1 // pred_region
      %s51 = ssub.s32 8192, 8192
      %52 = vsyncadd [#allocation5], %s51
      %s53 = sshll.u32 [#allocation6], 4
      %s54 = int_to_ptr.vmem [resolvable:$true] %s53
      %59 = dma.hbm_to_vmem [thread:$0]  %s3, 8192, %s54, [#allocation5], 128, 128, 8
    $region17: #{autoencoder_forward.1} parent=1 // pred_fallthru
      _
    // Predicated region
    $region18: #{autoencoder_forward.1} parent=1 // pred_check
      _
    $region19: #{autoencoder_forward.1} parent=1 // pred_check_branch
      %61 = sbr.rel (0) target = $region21
    $region20: #{autoencoder_forward.1} parent=1 // pred_region
      %s63 = ssub.s32 2048, 2048
      %64 = vsyncadd [#allocation8], %s63
      %s65 = sshll.u32 [#allocation7], 4
      %s66 = int_to_ptr.vmem [resolvable:$true] %s65
      %71 = dma.hbm_to_vmem [thread:$0]  %s4, 2048, %s66, [#allocation8], 64, 64, 4
    $region21: #{autoencoder_forward.1} parent=1 // pred_fallthru
      _
    // Predicated region
    $region22: #{autoencoder_forward.1} parent=1 // pred_check
      _
    $region23: #{autoencoder_forward.1} parent=1 // pred_check_branch
      %73 = sbr.rel (0) target = $region25
    $region24: #{autoencoder_forward.1} parent=1 // pred_region
      %s75 = ssub.s32 2048, 2048
      %76 = vsyncadd [#allocation8], %s75
      %s77 = sshll.u32 [#allocation9], 4
      %s78 = int_to_ptr.vmem [resolvable:$true] %s77
      %83 = dma.hbm_to_vmem [thread:$0]  %s5, 2048, %s78, [#allocation8], 128, 128, 8
    $region25: #{autoencoder_forward.1} parent=1 // pred_fallthru
      _
    // Predicated region
    $region26: #{autoencoder_forward.1} parent=1 // pred_check
      _
    $region27: #{autoencoder_forward.1} parent=1 // pred_check_branch
      %85 = sbr.rel (0) target = $region29
    $region28: #{autoencoder_forward.1} parent=1 // pred_region
      %s87 = ssub.s32 8192, 8192
      %88 = vsyncadd [#allocation11], %s87
      %s89 = sshll.u32 [#allocation10], 4
      %s90 = int_to_ptr.vmem [resolvable:$true] %s89
      %95 = dma.hbm_to_vmem [thread:$0]  %s6, 8192, %s90, [#allocation11], 256, 256, 16
    $region29: #{autoencoder_forward.1} parent=1 // pred_fallthru
      _
    // Predicated region
    $region30: #{autoencoder_forward.1} parent=1 // pred_check
      _
    $region31: #{autoencoder_forward.1} parent=1 // pred_check_branch
      %97 = sbr.rel (0) target = $region33
    $region32: #{autoencoder_forward.1} parent=1 // pred_region
      %s99 = ssub.s32 20480, 20480
      %100 = vsyncadd [#allocation11], %s99
      %s101 = sshll.u32 [#allocation12], 4
      %s102 = int_to_ptr.vmem [resolvable:$true] %s101
      %107 = dma.hbm_to_vmem [thread:$0]  %s7, 20480, %s102, [#allocation11], 320, 320, 20
    $region33: #{autoencoder_forward.1} parent=1 // pred_fallthru
      _
    // Predicated region
    $region34: #{autoencoder_forward.1} parent=1 // pred_check
      _
    $region35: #{autoencoder_forward.1} parent=1 // pred_check_branch
      %109 = sbr.rel (0) target = $region37
    $region36: #{autoencoder_forward.1} parent=1 // pred_region
      %s111 = ssub.s32 35840, 35840
      %112 = vsyncadd [#allocation14], %s111
      %s113 = sshll.u32 [#allocation13], 4
      %s114 = int_to_ptr.vmem [resolvable:$true] %s113
      %119 = dma.hbm_to_vmem [thread:$0]  %s8, 35840, %s114, [#allocation14], 448, 448, 28
    $region37: #{autoencoder_forward.1} parent=1 // pred_fallthru
      _
    // Predicated region
    $region38: #{autoencoder_forward.1} parent=1 // pred_check
      _
    $region39: #{autoencoder_forward.1} parent=1 // pred_check_branch
      %121 = sbr.rel (0) target = $region41
    $region40: #{autoencoder_forward.1} parent=1 // pred_region
      %s123 = ssub.s32 960, 960
      %124 = vsyncadd [#allocation14], %s123
      %s126 = sshll.u32 [#allocation15], 4
      %s127 = int_to_ptr.vmem [resolvable:$true] %s126
      %129 = dma.hbm_to_vmem [thread:$0]  %s9, 960, %s127, [#allocation14]
    $region41: #{autoencoder_forward.1} parent=1 // pred_fallthru
      _
    // Predicated region
    $region42: #{autoencoder_forward.1} parent=1 // pred_check
      _
    $region43: #{autoencoder_forward.1} parent=1 // pred_check_branch
      %131 = sbr.rel (0) target = $region45
    $region44: #{autoencoder_forward.1} parent=1 // pred_region
      %132 = dma.done [#allocation3], 35840
    $region45: #{autoencoder_forward.1} parent=1 // pred_fallthru
      _
    // Predicated region
    $region46: #{autoencoder_forward.1} parent=1 // pred_check
      _
    $region47: #{autoencoder_forward.1} parent=1 // pred_check_branch
      %134 = sbr.rel (0) target = $region49
    $region48: #{autoencoder_forward.1} parent=1 // pred_region
      %135 = dma.done [#allocation5], 20480
    $region49: #{autoencoder_forward.1} parent=1 // pred_fallthru
      _
    // Predicated region
    $region50: #{autoencoder_forward.1} parent=1 // pred_check
      _
    $region51: #{autoencoder_forward.1} parent=1 // pred_check_branch
      %137 = sbr.rel (0) target = $region53
    $region52: #{autoencoder_forward.1} parent=1 // pred_region
      %138 = dma.done [#allocation5], 8192
    $region53: #{autoencoder_forward.1} parent=1 // pred_fallthru
      _
    // Predicated region
    $region54: #{autoencoder_forward.1} parent=1 // pred_check
      _
    $region55: #{autoencoder_forward.1} parent=1 // pred_check_branch
      %140 = sbr.rel (0) target = $region57
    $region56: #{autoencoder_forward.1} parent=1 // pred_region
      %141 = dma.done [#allocation8], 2048
    $region57: #{autoencoder_forward.1} parent=1 // pred_fallthru
      _
    // Predicated region
    $region58: #{autoencoder_forward.1} parent=1 // pred_check
      _
    $region59: #{autoencoder_forward.1} parent=1 // pred_check_branch
      %143 = sbr.rel (0) target = $region61
    $region60: #{autoencoder_forward.1} parent=1 // pred_region
      %144 = dma.done [#allocation8], 2048
    $region61: #{autoencoder_forward.1} parent=1 // pred_fallthru
      _
    // Predicated region
    $region62: #{autoencoder_forward.1} parent=1 // pred_check
      _
    $region63: #{autoencoder_forward.1} parent=1 // pred_check_branch
      %146 = sbr.rel (0) target = $region65
    $region64: #{autoencoder_forward.1} parent=1 // pred_region
      %147 = dma.done [#allocation11], 8192
    $region65: #{autoencoder_forward.1} parent=1 // pred_fallthru
      _
    // Predicated region
    $region66: #{autoencoder_forward.1} parent=1 // pred_check
      _
    $region67: #{autoencoder_forward.1} parent=1 // pred_check_branch
      %149 = sbr.rel (0) target = $region69
    $region68: #{autoencoder_forward.1} parent=1 // pred_region
      %150 = dma.done [#allocation11], 20480
    $region69: #{autoencoder_forward.1} parent=1 // pred_fallthru
      _
    // Predicated region
    $region70: #{autoencoder_forward.1} parent=1 // pred_check
      _
    $region71: #{autoencoder_forward.1} parent=1 // pred_check_branch
      %152 = sbr.rel (0) target = $region73
    $region72: #{autoencoder_forward.1} parent=1 // pred_region
      %153 = dma.done [#allocation14], 35840
    $region73: #{autoencoder_forward.1} parent=1 // pred_fallthru
      _
    // Predicated region
    $region74: #{autoencoder_forward.1} parent=1 // pred_check
      _
    $region75: #{autoencoder_forward.1} parent=1 // pred_check_branch
      %155 = sbr.rel (0) target = $region77
    $region76: #{autoencoder_forward.1} parent=1 // pred_region
      %156 = dma.done [#allocation14], 960
    $region77: #{autoencoder_forward.1} parent=1 // pred_fallthru
      _
    %v158 = vlaneseq
    %v159 = vshrl.u32 %v158, 7
    %v160 = vadd.s32 %v159, 8
    %vm161 = vcmp.lt.s32.totalorder %v159, 8
    %vm162 = vcmp.lt.s32.totalorder %v160, 8
    %v163 = vsel %vm161, 1, 0
    %v164 = vsel %vm162, 1, 0
    %v165 = vcvt.s32.f32 %v163
    %v166 = vcvt.s32.f32 %v164
    %v167 = vld [vmem:[%s0] sm:$0xff]
    %v168 = vld [vmem:[%s0 + $0x8] sm:$0xff]
    %v169 = vld [vmem:[%s0 + $0x10] sm:$0xff]
    %v170 = vld [vmem:[%s0 + $0x18] sm:$0xf]
    %v171 = vld [vmem:[%s0 + $0x1c] sm:$0xff]
    %v172 = vld [vmem:[%s0 + $0x24] sm:$0xff]
    %v173 = vld [vmem:[%s0 + $0x2c] sm:$0xff]
    %v174 = vld [vmem:[%s0 + $0x34] sm:$0xf]
    %v175 = vld [vmem:[#allocation2] sm:$0xff]
    %v176 = vld [vmem:[#allocation2 + $0x8] sm:$0xff]
    %v177 = vld [vmem:[#allocation2 + $0x10] sm:$0xf]
    %v178 = vld [vmem:[#allocation2 + $0x14] sm:$0xff]
    %v179 = vld [vmem:[#allocation2 + $0x1c] sm:$0xff]
    %v180 = vld [vmem:[#allocation2 + $0x24] sm:$0xf]
    %v181 = vld [vmem:[#allocation2 + $0x28] sm:$0xff]
    %v182 = vld [vmem:[#allocation2 + $0x30] sm:$0xff]
    %v183 = vld [vmem:[#allocation2 + $0x38] sm:$0xf]
    %v184 = vld [vmem:[#allocation2 + $0x3c] sm:$0xff]
    %v185 = vld [vmem:[#allocation2 + $0x44] sm:$0xff]
    %v186 = vld [vmem:[#allocation2 + $0x4c] sm:$0xf]
    %v187 = vld [vmem:[#allocation2 + $0x50] sm:$0xff]
    %v188 = vld [vmem:[#allocation2 + $0x58] sm:$0xff]
    %v189 = vld [vmem:[#allocation2 + $0x60] sm:$0xf]
    %v190 = vld [vmem:[#allocation2 + $0x64] sm:$0xff]
    %v191 = vld [vmem:[#allocation2 + $0x6c] sm:$0xff]
    %v192 = vld [vmem:[#allocation2 + $0x74] sm:$0xf]
    %v193 = vld [vmem:[#allocation2 + $0x78] sm:$0xff]
    %v194 = vld [vmem:[#allocation2 + $0x80] sm:$0xff]
    %v195 = vld [vmem:[#allocation2 + $0x88] sm:$0xf]
    %v196 = vld [vmem:[#allocation2 + $0x8c] sm:$0xff]
    %v197 = vld [vmem:[#allocation2 + $0x94] sm:$0xff]
    %v198 = vld [vmem:[#allocation2 + $0x9c] sm:$0xf]
    %v199 = vld [vmem:[#allocation2 + $0xa0] sm:$0xff]
    %v200 = vld [vmem:[#allocation2 + $0xa8] sm:$0xff]
    %v201 = vld [vmem:[#allocation2 + $0xb0] sm:$0xf]
    %v202 = vld [vmem:[#allocation2 + $0xb4] sm:$0xff]
    %v203 = vld [vmem:[#allocation2 + $0xbc] sm:$0xff]
    %v204 = vld [vmem:[#allocation2 + $0xc4] sm:$0xf]
    %v205 = vld [vmem:[#allocation2 + $0xc8] sm:$0xff]
    %v206 = vld [vmem:[#allocation2 + $0xd0] sm:$0xff]
    %v207 = vld [vmem:[#allocation2 + $0xd8] sm:$0xf]
    %v208 = vld [vmem:[#allocation2 + $0xdc] sm:$0xff]
    %v209 = vld [vmem:[#allocation2 + $0xe4] sm:$0xff]
    %v210 = vld [vmem:[#allocation2 + $0xec] sm:$0xf]
    %v211 = vld [vmem:[#allocation2 + $0xf0] sm:$0xff]
    %v212 = vld [vmem:[#allocation2 + $0xf8] sm:$0xff]
    %v213 = vld [vmem:[#allocation2 + $0x100] sm:$0xf]
    %v214 = vld [vmem:[#allocation2 + $0x104] sm:$0xff]
    %v215 = vld [vmem:[#allocation2 + $0x10c] sm:$0xff]
    %v216 = vld [vmem:[#allocation2 + $0x114] sm:$0xf]
    %v217 = vld [vmem:[#allocation2 + $0x118] sm:$0xff]
    %v218 = vld [vmem:[#allocation2 + $0x120] sm:$0xff]
    %v219 = vld [vmem:[#allocation2 + $0x128] sm:$0xf]
    %v220 = vld [vmem:[#allocation2 + $0x12c] sm:$0xff]
    %v221 = vld [vmem:[#allocation2 + $0x134] sm:$0xff]
    %v222 = vld [vmem:[#allocation2 + $0x13c] sm:$0xf]
    %v223 = vld [vmem:[#allocation2 + $0x140] sm:$0xff]
    %v224 = vld [vmem:[#allocation2 + $0x148] sm:$0xff]
    %v225 = vld [vmem:[#allocation2 + $0x150] sm:$0xf]
    %v226 = vld [vmem:[#allocation2 + $0x154] sm:$0xff]
    %v227 = vld [vmem:[#allocation2 + $0x15c] sm:$0xff]
    %v228 = vld [vmem:[#allocation2 + $0x164] sm:$0xf]
    %v229 = vld [vmem:[#allocation2 + $0x168] sm:$0xff]
    %v230 = vld [vmem:[#allocation2 + $0x170] sm:$0xff]
    %v231 = vld [vmem:[#allocation2 + $0x178] sm:$0xf]
    %v232 = vld [vmem:[#allocation2 + $0x17c] sm:$0xff]
    %v233 = vld [vmem:[#allocation2 + $0x184] sm:$0xff]
    %v234 = vld [vmem:[#allocation2 + $0x18c] sm:$0xf]
    %v235 = vld [vmem:[#allocation2 + $0x190] sm:$0xff]
    %v236 = vld [vmem:[#allocation2 + $0x198] sm:$0xff]
    %v237 = vld [vmem:[#allocation2 + $0x1a0] sm:$0xf]
    %v238 = vld [vmem:[#allocation2 + $0x1a4] sm:$0xff]
    %v239 = vld [vmem:[#allocation2 + $0x1ac] sm:$0xff]
    %v240 = vld [vmem:[#allocation2 + $0x1b4] sm:$0xf]
    %v241 = vld [vmem:[#allocation2 + $0x1b8] sm:$0xff]
    %v242 = vld [vmem:[#allocation2 + $0x1c0] sm:$0xff]
    %v243 = vld [vmem:[#allocation2 + $0x1c8] sm:$0xf]
    %v244 = vld [vmem:[#allocation2 + $0x1cc] sm:$0xff]
    %v245 = vld [vmem:[#allocation2 + $0x1d4] sm:$0xff]
    %v246 = vld [vmem:[#allocation2 + $0x1dc] sm:$0xf]
    %v247 = vld [vmem:[#allocation2 + $0x1e0] sm:$0xff]
    %v248 = vld [vmem:[#allocation2 + $0x1e8] sm:$0xff]
    %v249 = vld [vmem:[#allocation2 + $0x1f0] sm:$0xf]
    %v250 = vld [vmem:[#allocation2 + $0x1f4] sm:$0xff]
    %v251 = vld [vmem:[#allocation2 + $0x1fc] sm:$0xff]
    %v252 = vld [vmem:[#allocation2 + $0x204] sm:$0xf]
    %v253 = vld [vmem:[#allocation2 + $0x208] sm:$0xff]
    %v254 = vld [vmem:[#allocation2 + $0x210] sm:$0xff]
    %v255 = vld [vmem:[#allocation2 + $0x218] sm:$0xf]
    %v256 = vld [vmem:[#allocation2 + $0x21c] sm:$0xff]
    %v257 = vld [vmem:[#allocation2 + $0x224] sm:$0xff]
    %v258 = vld [vmem:[#allocation2 + $0x22c] sm:$0xf]
    %v259 = vld [vmem:[#allocation2 + $0x230] sm:$0xff]
    %v260 = vld [vmem:[#allocation2 + $0x238] sm:$0xff]
    %v261 = vld [vmem:[#allocation2 + $0x240] sm:$0xf]
    %v262 = vld [vmem:[#allocation2 + $0x244] sm:$0xff]
    %v263 = vld [vmem:[#allocation2 + $0x24c] sm:$0xff]
    %v264 = vld [vmem:[#allocation2 + $0x254] sm:$0xf]
    %v265 = vld [vmem:[#allocation2 + $0x258] sm:$0xff]
    %v266 = vld [vmem:[#allocation2 + $0x260] sm:$0xff]
    %v267 = vld [vmem:[#allocation2 + $0x268] sm:$0xf]
    %v268 = vld [vmem:[#allocation2 + $0x26c] sm:$0xff]
    %v269 = vld [vmem:[#allocation2 + $0x274] sm:$0xff]
    %v270 = vld [vmem:[#allocation2 + $0x27c] sm:$0xf]
    %v271 = vld [vmem:[#allocation2 + $0x280] sm:$0xff]
    %v272 = vld [vmem:[#allocation2 + $0x288] sm:$0xff]
    %v273 = vld [vmem:[#allocation2 + $0x290] sm:$0xf]
    %v274 = vld [vmem:[#allocation2 + $0x294] sm:$0xff]
    %v275 = vld [vmem:[#allocation2 + $0x29c] sm:$0xff]
    %v276 = vld [vmem:[#allocation2 + $0x2a4] sm:$0xf]
    %v277 = vld [vmem:[#allocation2 + $0x2a8] sm:$0xff]
    %v278 = vld [vmem:[#allocation2 + $0x2b0] sm:$0xff]
    %v279 = vld [vmem:[#allocation2 + $0x2b8] sm:$0xf]
    %v280 = vld [vmem:[#allocation2 + $0x2bc] sm:$0xff]
    %v281 = vld [vmem:[#allocation2 + $0x2c4] sm:$0xff]
    %v282 = vld [vmem:[#allocation2 + $0x2cc] sm:$0xf]
    %v283 = vld [vmem:[#allocation2 + $0x2d0] sm:$0xff]
    %v284 = vld [vmem:[#allocation2 + $0x2d8] sm:$0xff]
    %v285 = vld [vmem:[#allocation2 + $0x2e0] sm:$0xf]
    %v286 = vld [vmem:[#allocation2 + $0x2e4] sm:$0xff]
    %v287 = vld [vmem:[#allocation2 + $0x2ec] sm:$0xff]
    %v288 = vld [vmem:[#allocation2 + $0x2f4] sm:$0xf]
    %v289 = vld [vmem:[#allocation2 + $0x2f8] sm:$0xff]
    %v290 = vld [vmem:[#allocation2 + $0x300] sm:$0xff]
    %v291 = vld [vmem:[#allocation2 + $0x308] sm:$0xf]
    %v292 = vld [vmem:[#allocation2 + $0x30c] sm:$0xff]
    %v293 = vld [vmem:[#allocation2 + $0x314] sm:$0xff]
    %v294 = vld [vmem:[#allocation2 + $0x31c] sm:$0xf]
    %v295 = vld [vmem:[#allocation2 + $0x320] sm:$0xff]
    %v296 = vld [vmem:[#allocation2 + $0x328] sm:$0xff]
    %v297 = vld [vmem:[#allocation2 + $0x330] sm:$0xf]
    %v298 = vld [vmem:[#allocation2 + $0x334] sm:$0xff]
    %v299 = vld [vmem:[#allocation2 + $0x33c] sm:$0xff]
    %v300 = vld [vmem:[#allocation2 + $0x344] sm:$0xf]
    %v301 = vld [vmem:[#allocation2 + $0x348] sm:$0xff]
    %v302 = vld [vmem:[#allocation2 + $0x350] sm:$0xff]
    %v303 = vld [vmem:[#allocation2 + $0x358] sm:$0xf]
    %v304 = vld [vmem:[#allocation2 + $0x35c] sm:$0xff]
    %v305 = vld [vmem:[#allocation2 + $0x364] sm:$0xff]
    %v306 = vld [vmem:[#allocation2 + $0x36c] sm:$0xf]
    %v307 = vld [vmem:[#allocation2 + $0x370] sm:$0xff]
    %v308 = vld [vmem:[#allocation2 + $0x378] sm:$0xff]
    %v309 = vld [vmem:[#allocation2 + $0x380] sm:$0xf]
    %v310 = vld [vmem:[#allocation2 + $0x384] sm:$0xff]
    %v311 = vld [vmem:[#allocation2 + $0x38c] sm:$0xff]
    %v312 = vld [vmem:[#allocation2 + $0x394] sm:$0xf]
    %v313 = vld [vmem:[#allocation2 + $0x398] sm:$0xff]
    %v314 = vld [vmem:[#allocation2 + $0x3a0] sm:$0xff]
    %v315 = vld [vmem:[#allocation2 + $0x3a8] sm:$0xf]
    %v316 = vld [vmem:[#allocation2 + $0x3ac] sm:$0xff]
    %v317 = vld [vmem:[#allocation2 + $0x3b4] sm:$0xff]
    %v318 = vld [vmem:[#allocation2 + $0x3bc] sm:$0xf]
    %v319 = vld [vmem:[#allocation2 + $0x3c0] sm:$0xff]
    %v320 = vld [vmem:[#allocation2 + $0x3c8] sm:$0xff]
    %v321 = vld [vmem:[#allocation2 + $0x3d0] sm:$0xf]
    %v322 = vld [vmem:[#allocation2 + $0x3d4] sm:$0xff]
    %v323 = vld [vmem:[#allocation2 + $0x3dc] sm:$0xff]
    %v324 = vld [vmem:[#allocation2 + $0x3e4] sm:$0xf]
    %v325 = vld [vmem:[#allocation2 + $0x3e8] sm:$0xff]
    %v326 = vld [vmem:[#allocation2 + $0x3f0] sm:$0xff]
    %v327 = vld [vmem:[#allocation2 + $0x3f8] sm:$0xf]
    %v328 = vld [vmem:[#allocation2 + $0x3fc] sm:$0xff]
    %v329 = vld [vmem:[#allocation2 + $0x404] sm:$0xff]
    %v330 = vld [vmem:[#allocation2 + $0x40c] sm:$0xf]
    %v331 = vld [vmem:[#allocation2 + $0x410] sm:$0xff]
    %v332 = vld [vmem:[#allocation2 + $0x418] sm:$0xff]
    %v333 = vld [vmem:[#allocation2 + $0x420] sm:$0xf]
    %v334 = vld [vmem:[#allocation2 + $0x424] sm:$0xff]
    %v335 = vld [vmem:[#allocation2 + $0x42c] sm:$0xff]
    %v336 = vld [vmem:[#allocation2 + $0x434] sm:$0xf]
    %v337 = vld [vmem:[#allocation2 + $0x438] sm:$0xff]
    %v338 = vld [vmem:[#allocation2 + $0x440] sm:$0xff]
    %v339 = vld [vmem:[#allocation2 + $0x448] sm:$0xf]
    %v340 = vld [vmem:[#allocation2 + $0x44c] sm:$0xff]
    %v341 = vld [vmem:[#allocation2 + $0x454] sm:$0xff]
    %v342 = vld [vmem:[#allocation2 + $0x45c] sm:$0xf]
    %v343 = vld [vmem:[#allocation2 + $0x460] sm:$0xff]
    %v344 = vld [vmem:[#allocation2 + $0x468] sm:$0xff]
    %v345 = vld [vmem:[#allocation2 + $0x470] sm:$0xf]
    %v346 = vld [vmem:[#allocation2 + $0x474] sm:$0xff]
    %v347 = vld [vmem:[#allocation2 + $0x47c] sm:$0xff]
    %v348 = vld [vmem:[#allocation2 + $0x484] sm:$0xf]
    %v349 = vld [vmem:[#allocation2 + $0x488] sm:$0xff]
    %v350 = vld [vmem:[#allocation2 + $0x490] sm:$0xff]
    %v351 = vld [vmem:[#allocation2 + $0x498] sm:$0xf]
    %v352 = vld [vmem:[#allocation2 + $0x49c] sm:$0xff]
    %v353 = vld [vmem:[#allocation2 + $0x4a4] sm:$0xff]
    %v354 = vld [vmem:[#allocation2 + $0x4ac] sm:$0xf]
    %v355 = vld [vmem:[#allocation2 + $0x4b0] sm:$0xff]
    %v356 = vld [vmem:[#allocation2 + $0x4b8] sm:$0xff]
    %v357 = vld [vmem:[#allocation2 + $0x4c0] sm:$0xf]
    %v358 = vld [vmem:[#allocation2 + $0x4c4] sm:$0xff]
    %v359 = vld [vmem:[#allocation2 + $0x4cc] sm:$0xff]
    %v360 = vld [vmem:[#allocation2 + $0x4d4] sm:$0xf]
    %v361 = vld [vmem:[#allocation2 + $0x4d8] sm:$0xff]
    %v362 = vld [vmem:[#allocation2 + $0x4e0] sm:$0xff]
    %v363 = vld [vmem:[#allocation2 + $0x4e8] sm:$0xf]
    %v364 = vld [vmem:[#allocation2 + $0x4ec] sm:$0xff]
    %v365 = vld [vmem:[#allocation2 + $0x4f4] sm:$0xff]
    %v366 = vld [vmem:[#allocation2 + $0x4fc] sm:$0xf]
    %v367 = vld [vmem:[#allocation2 + $0x500] sm:$0xff]
    %v368 = vld [vmem:[#allocation2 + $0x508] sm:$0xff]
    %v369 = vld [vmem:[#allocation2 + $0x510] sm:$0xf]
    %v370 = vld [vmem:[#allocation2 + $0x514] sm:$0xff]
    %v371 = vld [vmem:[#allocation2 + $0x51c] sm:$0xff]
    %v372 = vld [vmem:[#allocation2 + $0x524] sm:$0xf]
    %v373 = vld [vmem:[#allocation2 + $0x528] sm:$0xff]
    %v374 = vld [vmem:[#allocation2 + $0x530] sm:$0xff]
    %v375 = vld [vmem:[#allocation2 + $0x538] sm:$0xf]
    %v376 = vld [vmem:[#allocation2 + $0x53c] sm:$0xff]
    %v377 = vld [vmem:[#allocation2 + $0x544] sm:$0xff]
    %v378 = vld [vmem:[#allocation2 + $0x54c] sm:$0xf]
    %v379 = vld [vmem:[#allocation2 + $0x550] sm:$0xff]
    %v380 = vld [vmem:[#allocation2 + $0x558] sm:$0xff]
    %v381 = vld [vmem:[#allocation2 + $0x560] sm:$0xf]
    %v382 = vld [vmem:[#allocation2 + $0x564] sm:$0xff]
    %v383 = vld [vmem:[#allocation2 + $0x56c] sm:$0xff]
    %v384 = vld [vmem:[#allocation2 + $0x574] sm:$0xf]
    %v385 = vld [vmem:[#allocation2 + $0x578] sm:$0xff]
    %v386 = vld [vmem:[#allocation2 + $0x580] sm:$0xff]
    %v387 = vld [vmem:[#allocation2 + $0x588] sm:$0xf]
    %v388 = vld [vmem:[#allocation2 + $0x58c] sm:$0xff]
    %v389 = vld [vmem:[#allocation2 + $0x594] sm:$0xff]
    %v390 = vld [vmem:[#allocation2 + $0x59c] sm:$0xf]
    %v391 = vld [vmem:[#allocation2 + $0x5a0] sm:$0xff]
    %v392 = vld [vmem:[#allocation2 + $0x5a8] sm:$0xff]
    %v393 = vld [vmem:[#allocation2 + $0x5b0] sm:$0xf]
    %v394 = vld [vmem:[#allocation2 + $0x5b4] sm:$0xff]
    %v395 = vld [vmem:[#allocation2 + $0x5bc] sm:$0xff]
    %v396 = vld [vmem:[#allocation2 + $0x5c4] sm:$0xf]
    %v397 = vld [vmem:[#allocation2 + $0x5c8] sm:$0xff]
    %v398 = vld [vmem:[#allocation2 + $0x5d0] sm:$0xff]
    %v399 = vld [vmem:[#allocation2 + $0x5d8] sm:$0xf]
    %v400 = vld [vmem:[#allocation2 + $0x5dc] sm:$0xff]
    %v401 = vld [vmem:[#allocation2 + $0x5e4] sm:$0xff]
    %v402 = vld [vmem:[#allocation2 + $0x5ec] sm:$0xf]
    %v403 = vld [vmem:[#allocation2 + $0x5f0] sm:$0xff]
    %v404 = vld [vmem:[#allocation2 + $0x5f8] sm:$0xff]
    %v405 = vld [vmem:[#allocation2 + $0x600] sm:$0xf]
    %v406 = vld [vmem:[#allocation2 + $0x604] sm:$0xff]
    %v407 = vld [vmem:[#allocation2 + $0x60c] sm:$0xff]
    %v408 = vld [vmem:[#allocation2 + $0x614] sm:$0xf]
    %v409 = vld [vmem:[#allocation2 + $0x618] sm:$0xff]
    %v410 = vld [vmem:[#allocation2 + $0x620] sm:$0xff]
    %v411 = vld [vmem:[#allocation2 + $0x628] sm:$0xf]
    %v412 = vld [vmem:[#allocation2 + $0x62c] sm:$0xff]
    %v413 = vld [vmem:[#allocation2 + $0x634] sm:$0xff]
    %v414 = vld [vmem:[#allocation2 + $0x63c] sm:$0xf]
    %v415 = vld [vmem:[#allocation2 + $0x640] sm:$0xff]
    %v416 = vld [vmem:[#allocation2 + $0x648] sm:$0xff]
    %v417 = vld [vmem:[#allocation2 + $0x650] sm:$0xf]
    %v418 = vld [vmem:[#allocation2 + $0x654] sm:$0xff]
    %v419 = vld [vmem:[#allocation2 + $0x65c] sm:$0xff]
    %v420 = vld [vmem:[#allocation2 + $0x664] sm:$0xf]
    %v421 = vld [vmem:[#allocation2 + $0x668] sm:$0xff]
    %v422 = vld [vmem:[#allocation2 + $0x670] sm:$0xff]
    %v423 = vld [vmem:[#allocation2 + $0x678] sm:$0xf]
    %v424 = vld [vmem:[#allocation2 + $0x67c] sm:$0xff]
    %v425 = vld [vmem:[#allocation2 + $0x684] sm:$0xff]
    %v426 = vld [vmem:[#allocation2 + $0x68c] sm:$0xf]
    %v427 = vld [vmem:[#allocation2 + $0x690] sm:$0xff]
    %v428 = vld [vmem:[#allocation2 + $0x698] sm:$0xff]
    %v429 = vld [vmem:[#allocation2 + $0x6a0] sm:$0xf]
    %v430 = vld [vmem:[#allocation2 + $0x6a4] sm:$0xff]
    %v431 = vld [vmem:[#allocation2 + $0x6ac] sm:$0xff]
    %v432 = vld [vmem:[#allocation2 + $0x6b4] sm:$0xf]
    %v433 = vld [vmem:[#allocation2 + $0x6b8] sm:$0xff]
    %v434 = vld [vmem:[#allocation2 + $0x6c0] sm:$0xff]
    %v435 = vld [vmem:[#allocation2 + $0x6c8] sm:$0xf]
    %v436 = vld [vmem:[#allocation2 + $0x6cc] sm:$0xff]
    %v437 = vld [vmem:[#allocation2 + $0x6d4] sm:$0xff]
    %v438 = vld [vmem:[#allocation2 + $0x6dc] sm:$0xf]
    %v439 = vld [vmem:[#allocation2 + $0x6e0] sm:$0xff]
    %v440 = vld [vmem:[#allocation2 + $0x6e8] sm:$0xff]
    %v441 = vld [vmem:[#allocation2 + $0x6f0] sm:$0xf]
    %v442 = vld [vmem:[#allocation2 + $0x6f4] sm:$0xff]
    %v443 = vld [vmem:[#allocation2 + $0x6fc] sm:$0xff]
    %v444 = vld [vmem:[#allocation2 + $0x704] sm:$0xf]
    %v445 = vld [vmem:[#allocation2 + $0x708] sm:$0xff]
    %v446 = vld [vmem:[#allocation2 + $0x710] sm:$0xff]
    %v447 = vld [vmem:[#allocation2 + $0x718] sm:$0xf]
    %v448 = vld [vmem:[#allocation2 + $0x71c] sm:$0xff]
    %v449 = vld [vmem:[#allocation2 + $0x724] sm:$0xff]
    %v450 = vld [vmem:[#allocation2 + $0x72c] sm:$0xf]
    %v451 = vld [vmem:[#allocation2 + $0x730] sm:$0xff]
    %v452 = vld [vmem:[#allocation2 + $0x738] sm:$0xff]
    %v453 = vld [vmem:[#allocation2 + $0x740] sm:$0xf]
    %v454 = vld [vmem:[#allocation2 + $0x744] sm:$0xff]
    %v455 = vld [vmem:[#allocation2 + $0x74c] sm:$0xff]
    %v456 = vld [vmem:[#allocation2 + $0x754] sm:$0xf]
    %v457 = vld [vmem:[#allocation2 + $0x758] sm:$0xff]
    %v458 = vld [vmem:[#allocation2 + $0x760] sm:$0xff]
    %v459 = vld [vmem:[#allocation2 + $0x768] sm:$0xf]
    %v460 = vld [vmem:[#allocation2 + $0x76c] sm:$0xff]
    %v461 = vld [vmem:[#allocation2 + $0x774] sm:$0xff]
    %v462 = vld [vmem:[#allocation2 + $0x77c] sm:$0xf]
    %v463 = vld [vmem:[#allocation2 + $0x780] sm:$0xff]
    %v464 = vld [vmem:[#allocation2 + $0x788] sm:$0xff]
    %v465 = vld [vmem:[#allocation2 + $0x790] sm:$0xf]
    %v466 = vld [vmem:[#allocation2 + $0x794] sm:$0xff]
    %v467 = vld [vmem:[#allocation2 + $0x79c] sm:$0xff]
    %v468 = vld [vmem:[#allocation2 + $0x7a4] sm:$0xf]
    %v469 = vld [vmem:[#allocation2 + $0x7a8] sm:$0xff]
    %v470 = vld [vmem:[#allocation2 + $0x7b0] sm:$0xff]
    %v471 = vld [vmem:[#allocation2 + $0x7b8] sm:$0xf]
    %v472 = vld [vmem:[#allocation2 + $0x7bc] sm:$0xff]
    %v473 = vld [vmem:[#allocation2 + $0x7c4] sm:$0xff]
    %v474 = vld [vmem:[#allocation2 + $0x7cc] sm:$0xf]
    %v475 = vld [vmem:[#allocation2 + $0x7d0] sm:$0xff]
    %v476 = vld [vmem:[#allocation2 + $0x7d8] sm:$0xff]
    %v477 = vld [vmem:[#allocation2 + $0x7e0] sm:$0xf]
    %v478 = vld [vmem:[#allocation2 + $0x7e4] sm:$0xff]
    %v479 = vld [vmem:[#allocation2 + $0x7ec] sm:$0xff]
    %v480 = vld [vmem:[#allocation2 + $0x7f4] sm:$0xf]
    %v481 = vld [vmem:[#allocation2 + $0x7f8] sm:$0xff]
    %v482 = vld [vmem:[#allocation2 + $0x800] sm:$0xff]
    %v483 = vld [vmem:[#allocation2 + $0x808] sm:$0xf]
    %v484 = vld [vmem:[#allocation2 + $0x80c] sm:$0xff]
    %v485 = vld [vmem:[#allocation2 + $0x814] sm:$0xff]
    %v486 = vld [vmem:[#allocation2 + $0x81c] sm:$0xf]
    %v487 = vld [vmem:[#allocation2 + $0x820] sm:$0xff]
    %v488 = vld [vmem:[#allocation2 + $0x828] sm:$0xff]
    %v489 = vld [vmem:[#allocation2 + $0x830] sm:$0xf]
    %v490 = vld [vmem:[#allocation2 + $0x834] sm:$0xff]
    %v491 = vld [vmem:[#allocation2 + $0x83c] sm:$0xff]
    %v492 = vld [vmem:[#allocation2 + $0x844] sm:$0xf]
    %v493 = vld [vmem:[#allocation2 + $0x848] sm:$0xff]
    %v494 = vld [vmem:[#allocation2 + $0x850] sm:$0xff]
    %v495 = vld [vmem:[#allocation2 + $0x858] sm:$0xf]
    %v496 = vld [vmem:[#allocation2 + $0x85c] sm:$0xff]
    %v497 = vld [vmem:[#allocation2 + $0x864] sm:$0xff]
    %v498 = vld [vmem:[#allocation2 + $0x86c] sm:$0xf]
    %v499 = vld [vmem:[#allocation2 + $0x870] sm:$0xff]
    %v500 = vld [vmem:[#allocation2 + $0x878] sm:$0xff]
    %v501 = vld [vmem:[#allocation2 + $0x880] sm:$0xf]
    %v502 = vld [vmem:[#allocation2 + $0x884] sm:$0xff]
    %v503 = vld [vmem:[#allocation2 + $0x88c] sm:$0xff]
    %v504 = vld [vmem:[#allocation2 + $0x894] sm:$0xf]
    %v505 = vld [vmem:[#allocation2 + $0x898] sm:$0xff]
    %v506 = vld [vmem:[#allocation2 + $0x8a0] sm:$0xff]
    %v507 = vld [vmem:[#allocation2 + $0x8a8] sm:$0xf]
    %v508 = vld [vmem:[#allocation2 + $0x8ac] sm:$0xff]
    %v509 = vld [vmem:[#allocation2 + $0x8b4] sm:$0xff]
    %v510 = vld [vmem:[#allocation2 + $0x8bc] sm:$0xf]
    %v519 = vunpack.c.l.b16 %v167
    %v520 = vunpack.c.h.b16 %v167
    %v521 = vunpack.c.l.b16 %v168
    %v522 = vunpack.c.h.b16 %v168
    %v523 = vunpack.c.l.b16 %v169
    %v524 = vunpack.c.h.b16 %v169
    %v525 = vunpack.c.l.b16 %v170
    %v526 = vunpack.c.l.b16 %v171
    %v527 = vunpack.c.h.b16 %v171
    %v528 = vunpack.c.l.b16 %v172
    %v529 = vunpack.c.h.b16 %v172
    %v530 = vunpack.c.l.b16 %v173
    %v531 = vunpack.c.h.b16 %v173
    %v532 = vunpack.c.l.b16 %v174
    %v533 = vpack.c.b16 %v526, %v519
    %v534 = vpack.c.b16 %v527, %v520
    %v535 = vpack.c.b16 %v528, %v521
    %v536 = vpack.c.b16 %v529, %v522
    %v537 = vpack.c.b16 %v530, %v523
    %v538 = vpack.c.b16 %v531, %v524
    %v539 = vpack.c.b16 %v532, %v525
    %v883 = vunpack.c.l.b16 %v175
    %v884 = vunpack.c.h.b16 %v175
    %v885 = vunpack.c.l.b16 %v176
    %v886 = vunpack.c.h.b16 %v176
    %v887 = vunpack.c.l.b16 %v177
    %v888 = vunpack.c.l.b16 %v178
    %v889 = vunpack.c.h.b16 %v178
    %v890 = vunpack.c.l.b16 %v179
    %v891 = vunpack.c.h.b16 %v179
    %v892 = vunpack.c.l.b16 %v180
    %v893 = vunpack.c.l.b16 %v181
    %v894 = vunpack.c.h.b16 %v181
    %v895 = vunpack.c.l.b16 %v182
    %v896 = vunpack.c.h.b16 %v182
    %v897 = vunpack.c.l.b16 %v183
    %v898 = vunpack.c.l.b16 %v184
    %v899 = vunpack.c.h.b16 %v184
    %v900 = vunpack.c.l.b16 %v185
    %v901 = vunpack.c.h.b16 %v185
    %v902 = vunpack.c.l.b16 %v186
    %v903 = vunpack.c.l.b16 %v187
    %v904 = vunpack.c.h.b16 %v187
    %v905 = vunpack.c.l.b16 %v188
    %v906 = vunpack.c.h.b16 %v188
    %v907 = vunpack.c.l.b16 %v189
    %v908 = vunpack.c.l.b16 %v190
    %v909 = vunpack.c.h.b16 %v190
    %v910 = vunpack.c.l.b16 %v191
    %v911 = vunpack.c.h.b16 %v191
    %v912 = vunpack.c.l.b16 %v192
    %v913 = vunpack.c.l.b16 %v193
    %v914 = vunpack.c.h.b16 %v193
    %v915 = vunpack.c.l.b16 %v194
    %v916 = vunpack.c.h.b16 %v194
    %v917 = vunpack.c.l.b16 %v195
    %v918 = vunpack.c.l.b16 %v196
    %v919 = vunpack.c.h.b16 %v196
    %v920 = vunpack.c.l.b16 %v197
    %v921 = vunpack.c.h.b16 %v197
    %v922 = vunpack.c.l.b16 %v198
    %v923 = vunpack.c.l.b16 %v199
    %v924 = vunpack.c.h.b16 %v199
    %v925 = vunpack.c.l.b16 %v200
    %v926 = vunpack.c.h.b16 %v200
    %v927 = vunpack.c.l.b16 %v201
    %v928 = vunpack.c.l.b16 %v202
    %v929 = vunpack.c.h.b16 %v202
    %v930 = vunpack.c.l.b16 %v203
    %v931 = vunpack.c.h.b16 %v203
    %v932 = vunpack.c.l.b16 %v204
    %v933 = vunpack.c.l.b16 %v205
    %v934 = vunpack.c.h.b16 %v205
    %v935 = vunpack.c.l.b16 %v206
    %v936 = vunpack.c.h.b16 %v206
    %v937 = vunpack.c.l.b16 %v207
    %v938 = vunpack.c.l.b16 %v208
    %v939 = vunpack.c.h.b16 %v208
    %v940 = vunpack.c.l.b16 %v209
    %v941 = vunpack.c.h.b16 %v209
    %v942 = vunpack.c.l.b16 %v210
    %v943 = vunpack.c.l.b16 %v211
    %v944 = vunpack.c.h.b16 %v211
    %v945 = vunpack.c.l.b16 %v212
    %v946 = vunpack.c.h.b16 %v212
    %v947 = vunpack.c.l.b16 %v213
    %v948 = vunpack.c.l.b16 %v214
    %v949 = vunpack.c.h.b16 %v214
    %v950 = vunpack.c.l.b16 %v215
    %v951 = vunpack.c.h.b16 %v215
    %v952 = vunpack.c.l.b16 %v216
    %v953 = vunpack.c.l.b16 %v217
    %v954 = vunpack.c.h.b16 %v217
    %v955 = vunpack.c.l.b16 %v218
    %v956 = vunpack.c.h.b16 %v218
    %v957 = vunpack.c.l.b16 %v219
    %v958 = vunpack.c.l.b16 %v220
    %v959 = vunpack.c.h.b16 %v220
    %v960 = vunpack.c.l.b16 %v221
    %v961 = vunpack.c.h.b16 %v221
    %v962 = vunpack.c.l.b16 %v222
    %v963 = vunpack.c.l.b16 %v223
    %v964 = vunpack.c.h.b16 %v223
    %v965 = vunpack.c.l.b16 %v224
    %v966 = vunpack.c.h.b16 %v224
    %v967 = vunpack.c.l.b16 %v225
    %v968 = vunpack.c.l.b16 %v226
    %v969 = vunpack.c.h.b16 %v226
    %v970 = vunpack.c.l.b16 %v227
    %v971 = vunpack.c.h.b16 %v227
    %v972 = vunpack.c.l.b16 %v228
    %v973 = vunpack.c.l.b16 %v229
    %v974 = vunpack.c.h.b16 %v229
    %v975 = vunpack.c.l.b16 %v230
    %v976 = vunpack.c.h.b16 %v230
    %v977 = vunpack.c.l.b16 %v231
    %v978 = vunpack.c.l.b16 %v232
    %v979 = vunpack.c.h.b16 %v232
    %v980 = vunpack.c.l.b16 %v233
    %v981 = vunpack.c.h.b16 %v233
    %v982 = vunpack.c.l.b16 %v234
    %v983 = vunpack.c.l.b16 %v235
    %v984 = vunpack.c.h.b16 %v235
    %v985 = vunpack.c.l.b16 %v236
    %v986 = vunpack.c.h.b16 %v236
    %v987 = vunpack.c.l.b16 %v237
    %v988 = vunpack.c.l.b16 %v238
    %v989 = vunpack.c.h.b16 %v238
    %v990 = vunpack.c.l.b16 %v239
    %v991 = vunpack.c.h.b16 %v239
    %v992 = vunpack.c.l.b16 %v240
    %v993 = vunpack.c.l.b16 %v241
    %v994 = vunpack.c.h.b16 %v241
    %v995 = vunpack.c.l.b16 %v242
    %v996 = vunpack.c.h.b16 %v242
    %v997 = vunpack.c.l.b16 %v243
    %v998 = vunpack.c.l.b16 %v244
    %v999 = vunpack.c.h.b16 %v244
    %v1000 = vunpack.c.l.b16 %v245
    %v1001 = vunpack.c.h.b16 %v245
    %v1002 = vunpack.c.l.b16 %v246
    %v1003 = vunpack.c.l.b16 %v247
    %v1004 = vunpack.c.h.b16 %v247
    %v1005 = vunpack.c.l.b16 %v248
    %v1006 = vunpack.c.h.b16 %v248
    %v1007 = vunpack.c.l.b16 %v249
    %v1008 = vunpack.c.l.b16 %v250
    %v1009 = vunpack.c.h.b16 %v250
    %v1010 = vunpack.c.l.b16 %v251
    %v1011 = vunpack.c.h.b16 %v251
    %v1012 = vunpack.c.l.b16 %v252
    %v1013 = vunpack.c.l.b16 %v253
    %v1014 = vunpack.c.h.b16 %v253
    %v1015 = vunpack.c.l.b16 %v254
    %v1016 = vunpack.c.h.b16 %v254
    %v1017 = vunpack.c.l.b16 %v255
    %v1018 = vunpack.c.l.b16 %v256
    %v1019 = vunpack.c.h.b16 %v256
    %v1020 = vunpack.c.l.b16 %v257
    %v1021 = vunpack.c.h.b16 %v257
    %v1022 = vunpack.c.l.b16 %v258
    %v1023 = vunpack.c.l.b16 %v259
    %v1024 = vunpack.c.h.b16 %v259
    %v1025 = vunpack.c.l.b16 %v260
    %v1026 = vunpack.c.h.b16 %v260
    %v1027 = vunpack.c.l.b16 %v261
    %v1028 = vunpack.c.l.b16 %v262
    %v1029 = vunpack.c.h.b16 %v262
    %v1030 = vunpack.c.l.b16 %v263
    %v1031 = vunpack.c.h.b16 %v263
    %v1032 = vunpack.c.l.b16 %v264
    %v1033 = vunpack.c.l.b16 %v265
    %v1034 = vunpack.c.h.b16 %v265
    %v1035 = vunpack.c.l.b16 %v266
    %v1036 = vunpack.c.h.b16 %v266
    %v1037 = vunpack.c.l.b16 %v267
    %v1038 = vunpack.c.l.b16 %v268
    %v1039 = vunpack.c.h.b16 %v268
    %v1040 = vunpack.c.l.b16 %v269
    %v1041 = vunpack.c.h.b16 %v269
    %v1042 = vunpack.c.l.b16 %v270
    %v1043 = vunpack.c.l.b16 %v271
    %v1044 = vunpack.c.h.b16 %v271
    %v1045 = vunpack.c.l.b16 %v272
    %v1046 = vunpack.c.h.b16 %v272
    %v1047 = vunpack.c.l.b16 %v273
    %v1048 = vunpack.c.l.b16 %v274
    %v1049 = vunpack.c.h.b16 %v274
    %v1050 = vunpack.c.l.b16 %v275
    %v1051 = vunpack.c.h.b16 %v275
    %v1052 = vunpack.c.l.b16 %v276
    %v1053 = vunpack.c.l.b16 %v277
    %v1054 = vunpack.c.h.b16 %v277
    %v1055 = vunpack.c.l.b16 %v278
    %v1056 = vunpack.c.h.b16 %v278
    %v1057 = vunpack.c.l.b16 %v279
    %v1058 = vunpack.c.l.b16 %v280
    %v1059 = vunpack.c.h.b16 %v280
    %v1060 = vunpack.c.l.b16 %v281
    %v1061 = vunpack.c.h.b16 %v281
    %v1062 = vunpack.c.l.b16 %v282
    %v1063 = vunpack.c.l.b16 %v283
    %v1064 = vunpack.c.h.b16 %v283
    %v1065 = vunpack.c.l.b16 %v284
    %v1066 = vunpack.c.h.b16 %v284
    %v1067 = vunpack.c.l.b16 %v285
    %v1068 = vunpack.c.l.b16 %v286
    %v1069 = vunpack.c.h.b16 %v286
    %v1070 = vunpack.c.l.b16 %v287
    %v1071 = vunpack.c.h.b16 %v287
    %v1072 = vunpack.c.l.b16 %v288
    %v1073 = vunpack.c.l.b16 %v289
    %v1074 = vunpack.c.h.b16 %v289
    %v1075 = vunpack.c.l.b16 %v290
    %v1076 = vunpack.c.h.b16 %v290
    %v1077 = vunpack.c.l.b16 %v291
    %v1078 = vunpack.c.l.b16 %v292
    %v1079 = vunpack.c.h.b16 %v292
    %v1080 = vunpack.c.l.b16 %v293
    %v1081 = vunpack.c.h.b16 %v293
    %v1082 = vunpack.c.l.b16 %v294
    %v1083 = vunpack.c.l.b16 %v295
    %v1084 = vunpack.c.h.b16 %v295
    %v1085 = vunpack.c.l.b16 %v296
    %v1086 = vunpack.c.h.b16 %v296
    %v1087 = vunpack.c.l.b16 %v297
    %v1088 = vunpack.c.l.b16 %v298
    %v1089 = vunpack.c.h.b16 %v298
    %v1090 = vunpack.c.l.b16 %v299
    %v1091 = vunpack.c.h.b16 %v299
    %v1092 = vunpack.c.l.b16 %v300
    %v1093 = vunpack.c.l.b16 %v301
    %v1094 = vunpack.c.h.b16 %v301
    %v1095 = vunpack.c.l.b16 %v302
    %v1096 = vunpack.c.h.b16 %v302
    %v1097 = vunpack.c.l.b16 %v303
    %v1098 = vunpack.c.l.b16 %v304
    %v1099 = vunpack.c.h.b16 %v304
    %v1100 = vunpack.c.l.b16 %v305
    %v1101 = vunpack.c.h.b16 %v305
    %v1102 = vunpack.c.l.b16 %v306
    %v1103 = vunpack.c.l.b16 %v307
    %v1104 = vunpack.c.h.b16 %v307
    %v1105 = vunpack.c.l.b16 %v308
    %v1106 = vunpack.c.h.b16 %v308
    %v1107 = vunpack.c.l.b16 %v309
    %v1108 = vunpack.c.l.b16 %v310
    %v1109 = vunpack.c.h.b16 %v310
    %v1110 = vunpack.c.l.b16 %v311
    %v1111 = vunpack.c.h.b16 %v311
    %v1112 = vunpack.c.l.b16 %v312
    %v1113 = vunpack.c.l.b16 %v313
    %v1114 = vunpack.c.h.b16 %v313
    %v1115 = vunpack.c.l.b16 %v314
    %v1116 = vunpack.c.h.b16 %v314
    %v1117 = vunpack.c.l.b16 %v315
    %v1118 = vunpack.c.l.b16 %v316
    %v1119 = vunpack.c.h.b16 %v316
    %v1120 = vunpack.c.l.b16 %v317
    %v1121 = vunpack.c.h.b16 %v317
    %v1122 = vunpack.c.l.b16 %v318
    %v1123 = vunpack.c.l.b16 %v319
    %v1124 = vunpack.c.h.b16 %v319
    %v1125 = vunpack.c.l.b16 %v320
    %v1126 = vunpack.c.h.b16 %v320
    %v1127 = vunpack.c.l.b16 %v321
    %v1128 = vunpack.c.l.b16 %v322
    %v1129 = vunpack.c.h.b16 %v322
    %v1130 = vunpack.c.l.b16 %v323
    %v1131 = vunpack.c.h.b16 %v323
    %v1132 = vunpack.c.l.b16 %v324
    %v1133 = vunpack.c.l.b16 %v325
    %v1134 = vunpack.c.h.b16 %v325
    %v1135 = vunpack.c.l.b16 %v326
    %v1136 = vunpack.c.h.b16 %v326
    %v1137 = vunpack.c.l.b16 %v327
    %v1138 = vunpack.c.l.b16 %v328
    %v1139 = vunpack.c.h.b16 %v328
    %v1140 = vunpack.c.l.b16 %v329
    %v1141 = vunpack.c.h.b16 %v329
    %v1142 = vunpack.c.l.b16 %v330
    %v1143 = vunpack.c.l.b16 %v331
    %v1144 = vunpack.c.h.b16 %v331
    %v1145 = vunpack.c.l.b16 %v332
    %v1146 = vunpack.c.h.b16 %v332
    %v1147 = vunpack.c.l.b16 %v333
    %v1148 = vunpack.c.l.b16 %v334
    %v1149 = vunpack.c.h.b16 %v334
    %v1150 = vunpack.c.l.b16 %v335
    %v1151 = vunpack.c.h.b16 %v335
    %v1152 = vunpack.c.l.b16 %v336
    %v1153 = vunpack.c.l.b16 %v337
    %v1154 = vunpack.c.h.b16 %v337
    %v1155 = vunpack.c.l.b16 %v338
    %v1156 = vunpack.c.h.b16 %v338
    %v1157 = vunpack.c.l.b16 %v339
    %v1158 = vunpack.c.l.b16 %v340
    %v1159 = vunpack.c.h.b16 %v340
    %v1160 = vunpack.c.l.b16 %v341
    %v1161 = vunpack.c.h.b16 %v341
    %v1162 = vunpack.c.l.b16 %v342
    %v1163 = vunpack.c.l.b16 %v343
    %v1164 = vunpack.c.h.b16 %v343
    %v1165 = vunpack.c.l.b16 %v344
    %v1166 = vunpack.c.h.b16 %v344
    %v1167 = vunpack.c.l.b16 %v345
    %v1168 = vunpack.c.l.b16 %v346
    %v1169 = vunpack.c.h.b16 %v346
    %v1170 = vunpack.c.l.b16 %v347
    %v1171 = vunpack.c.h.b16 %v347
    %v1172 = vunpack.c.l.b16 %v348
    %v1173 = vunpack.c.l.b16 %v349
    %v1174 = vunpack.c.h.b16 %v349
    %v1175 = vunpack.c.l.b16 %v350
    %v1176 = vunpack.c.h.b16 %v350
    %v1177 = vunpack.c.l.b16 %v351
    %v1178 = vunpack.c.l.b16 %v352
    %v1179 = vunpack.c.h.b16 %v352
    %v1180 = vunpack.c.l.b16 %v353
    %v1181 = vunpack.c.h.b16 %v353
    %v1182 = vunpack.c.l.b16 %v354
    %v1183 = vunpack.c.l.b16 %v355
    %v1184 = vunpack.c.h.b16 %v355
    %v1185 = vunpack.c.l.b16 %v356
    %v1186 = vunpack.c.h.b16 %v356
    %v1187 = vunpack.c.l.b16 %v357
    %v1188 = vunpack.c.l.b16 %v358
    %v1189 = vunpack.c.h.b16 %v358
    %v1190 = vunpack.c.l.b16 %v359
    %v1191 = vunpack.c.h.b16 %v359
    %v1192 = vunpack.c.l.b16 %v360
    %v1193 = vunpack.c.l.b16 %v361
    %v1194 = vunpack.c.h.b16 %v361
    %v1195 = vunpack.c.l.b16 %v362
    %v1196 = vunpack.c.h.b16 %v362
    %v1197 = vunpack.c.l.b16 %v363
    %v1198 = vunpack.c.l.b16 %v364
    %v1199 = vunpack.c.h.b16 %v364
    %v1200 = vunpack.c.l.b16 %v365
    %v1201 = vunpack.c.h.b16 %v365
    %v1202 = vunpack.c.l.b16 %v366
    %v1203 = vunpack.c.l.b16 %v367
    %v1204 = vunpack.c.h.b16 %v367
    %v1205 = vunpack.c.l.b16 %v368
    %v1206 = vunpack.c.h.b16 %v368
    %v1207 = vunpack.c.l.b16 %v369
    %v1208 = vunpack.c.l.b16 %v370
    %v1209 = vunpack.c.h.b16 %v370
    %v1210 = vunpack.c.l.b16 %v371
    %v1211 = vunpack.c.h.b16 %v371
    %v1212 = vunpack.c.l.b16 %v372
    %v1213 = vunpack.c.l.b16 %v373
    %v1214 = vunpack.c.h.b16 %v373
    %v1215 = vunpack.c.l.b16 %v374
    %v1216 = vunpack.c.h.b16 %v374
    %v1217 = vunpack.c.l.b16 %v375
    %v1218 = vunpack.c.l.b16 %v376
    %v1219 = vunpack.c.h.b16 %v376
    %v1220 = vunpack.c.l.b16 %v377
    %v1221 = vunpack.c.h.b16 %v377
    %v1222 = vunpack.c.l.b16 %v378
    %v1223 = vunpack.c.l.b16 %v379
    %v1224 = vunpack.c.h.b16 %v379
    %v1225 = vunpack.c.l.b16 %v380
    %v1226 = vunpack.c.h.b16 %v380
    %v1227 = vunpack.c.l.b16 %v381
    %v1228 = vunpack.c.l.b16 %v382
    %v1229 = vunpack.c.h.b16 %v382
    %v1230 = vunpack.c.l.b16 %v383
    %v1231 = vunpack.c.h.b16 %v383
    %v1232 = vunpack.c.l.b16 %v384
    %v1233 = vunpack.c.l.b16 %v385
    %v1234 = vunpack.c.h.b16 %v385
    %v1235 = vunpack.c.l.b16 %v386
    %v1236 = vunpack.c.h.b16 %v386
    %v1237 = vunpack.c.l.b16 %v387
    %v1238 = vunpack.c.l.b16 %v388
    %v1239 = vunpack.c.h.b16 %v388
    %v1240 = vunpack.c.l.b16 %v389
    %v1241 = vunpack.c.h.b16 %v389
    %v1242 = vunpack.c.l.b16 %v390
    %v1243 = vunpack.c.l.b16 %v391
    %v1244 = vunpack.c.h.b16 %v391
    %v1245 = vunpack.c.l.b16 %v392
    %v1246 = vunpack.c.h.b16 %v392
    %v1247 = vunpack.c.l.b16 %v393
    %v1248 = vunpack.c.l.b16 %v394
    %v1249 = vunpack.c.h.b16 %v394
    %v1250 = vunpack.c.l.b16 %v395
    %v1251 = vunpack.c.h.b16 %v395
    %v1252 = vunpack.c.l.b16 %v396
    %v1253 = vunpack.c.l.b16 %v397
    %v1254 = vunpack.c.h.b16 %v397
    %v1255 = vunpack.c.l.b16 %v398
    %v1256 = vunpack.c.h.b16 %v398
    %v1257 = vunpack.c.l.b16 %v399
    %v1258 = vunpack.c.l.b16 %v400
    %v1259 = vunpack.c.h.b16 %v400
    %v1260 = vunpack.c.l.b16 %v401
    %v1261 = vunpack.c.h.b16 %v401
    %v1262 = vunpack.c.l.b16 %v402
    %v1263 = vunpack.c.l.b16 %v403
    %v1264 = vunpack.c.h.b16 %v403
    %v1265 = vunpack.c.l.b16 %v404
    %v1266 = vunpack.c.h.b16 %v404
    %v1267 = vunpack.c.l.b16 %v405
    %v1268 = vunpack.c.l.b16 %v406
    %v1269 = vunpack.c.h.b16 %v406
    %v1270 = vunpack.c.l.b16 %v407
    %v1271 = vunpack.c.h.b16 %v407
    %v1272 = vunpack.c.l.b16 %v408
    %v1273 = vunpack.c.l.b16 %v409
    %v1274 = vunpack.c.h.b16 %v409
    %v1275 = vunpack.c.l.b16 %v410
    %v1276 = vunpack.c.h.b16 %v410
    %v1277 = vunpack.c.l.b16 %v411
    %v1278 = vunpack.c.l.b16 %v412
    %v1279 = vunpack.c.h.b16 %v412
    %v1280 = vunpack.c.l.b16 %v413
    %v1281 = vunpack.c.h.b16 %v413
    %v1282 = vunpack.c.l.b16 %v414
    %v1283 = vunpack.c.l.b16 %v415
    %v1284 = vunpack.c.h.b16 %v415
    %v1285 = vunpack.c.l.b16 %v416
    %v1286 = vunpack.c.h.b16 %v416
    %v1287 = vunpack.c.l.b16 %v417
    %v1288 = vunpack.c.l.b16 %v418
    %v1289 = vunpack.c.h.b16 %v418
    %v1290 = vunpack.c.l.b16 %v419
    %v1291 = vunpack.c.h.b16 %v419
    %v1292 = vunpack.c.l.b16 %v420
    %v1293 = vunpack.c.l.b16 %v421
    %v1294 = vunpack.c.h.b16 %v421
    %v1295 = vunpack.c.l.b16 %v422
    %v1296 = vunpack.c.h.b16 %v422
    %v1297 = vunpack.c.l.b16 %v423
    %v1298 = vunpack.c.l.b16 %v424
    %v1299 = vunpack.c.h.b16 %v424
    %v1300 = vunpack.c.l.b16 %v425
    %v1301 = vunpack.c.h.b16 %v425
    %v1302 = vunpack.c.l.b16 %v426
    %v1303 = vunpack.c.l.b16 %v427
    %v1304 = vunpack.c.h.b16 %v427
    %v1305 = vunpack.c.l.b16 %v428
    %v1306 = vunpack.c.h.b16 %v428
    %v1307 = vunpack.c.l.b16 %v429
    %v1308 = vunpack.c.l.b16 %v430
    %v1309 = vunpack.c.h.b16 %v430
    %v1310 = vunpack.c.l.b16 %v431
    %v1311 = vunpack.c.h.b16 %v431
    %v1312 = vunpack.c.l.b16 %v432
    %v1313 = vunpack.c.l.b16 %v433
    %v1314 = vunpack.c.h.b16 %v433
    %v1315 = vunpack.c.l.b16 %v434
    %v1316 = vunpack.c.h.b16 %v434
    %v1317 = vunpack.c.l.b16 %v435
    %v1318 = vunpack.c.l.b16 %v436
    %v1319 = vunpack.c.h.b16 %v436
    %v1320 = vunpack.c.l.b16 %v437
    %v1321 = vunpack.c.h.b16 %v437
    %v1322 = vunpack.c.l.b16 %v438
    %v1323 = vunpack.c.l.b16 %v439
    %v1324 = vunpack.c.h.b16 %v439
    %v1325 = vunpack.c.l.b16 %v440
    %v1326 = vunpack.c.h.b16 %v440
    %v1327 = vunpack.c.l.b16 %v441
    %v1328 = vunpack.c.l.b16 %v442
    %v1329 = vunpack.c.h.b16 %v442
    %v1330 = vunpack.c.l.b16 %v443
    %v1331 = vunpack.c.h.b16 %v443
    %v1332 = vunpack.c.l.b16 %v444
    %v1333 = vunpack.c.l.b16 %v445
    %v1334 = vunpack.c.h.b16 %v445
    %v1335 = vunpack.c.l.b16 %v446
    %v1336 = vunpack.c.h.b16 %v446
    %v1337 = vunpack.c.l.b16 %v447
    %v1338 = vunpack.c.l.b16 %v448
    %v1339 = vunpack.c.h.b16 %v448
    %v1340 = vunpack.c.l.b16 %v449
    %v1341 = vunpack.c.h.b16 %v449
    %v1342 = vunpack.c.l.b16 %v450
    %v1343 = vunpack.c.l.b16 %v451
    %v1344 = vunpack.c.h.b16 %v451
    %v1345 = vunpack.c.l.b16 %v452
    %v1346 = vunpack.c.h.b16 %v452
    %v1347 = vunpack.c.l.b16 %v453
    %v1348 = vunpack.c.l.b16 %v454
    %v1349 = vunpack.c.h.b16 %v454
    %v1350 = vunpack.c.l.b16 %v455
    %v1351 = vunpack.c.h.b16 %v455
    %v1352 = vunpack.c.l.b16 %v456
    %v1353 = vunpack.c.l.b16 %v457
    %v1354 = vunpack.c.h.b16 %v457
    %v1355 = vunpack.c.l.b16 %v458
    %v1356 = vunpack.c.h.b16 %v458
    %v1357 = vunpack.c.l.b16 %v459
    %v1358 = vunpack.c.l.b16 %v460
    %v1359 = vunpack.c.h.b16 %v460
    %v1360 = vunpack.c.l.b16 %v461
    %v1361 = vunpack.c.h.b16 %v461
    %v1362 = vunpack.c.l.b16 %v462
    %v1363 = vunpack.c.l.b16 %v463
    %v1364 = vunpack.c.h.b16 %v463
    %v1365 = vunpack.c.l.b16 %v464
    %v1366 = vunpack.c.h.b16 %v464
    %v1367 = vunpack.c.l.b16 %v465
    %v1368 = vunpack.c.l.b16 %v466
    %v1369 = vunpack.c.h.b16 %v466
    %v1370 = vunpack.c.l.b16 %v467
    %v1371 = vunpack.c.h.b16 %v467
    %v1372 = vunpack.c.l.b16 %v468
    %v1373 = vunpack.c.l.b16 %v469
    %v1374 = vunpack.c.h.b16 %v469
    %v1375 = vunpack.c.l.b16 %v470
    %v1376 = vunpack.c.h.b16 %v470
    %v1377 = vunpack.c.l.b16 %v471
    %v1378 = vunpack.c.l.b16 %v472
    %v1379 = vunpack.c.h.b16 %v472
    %v1380 = vunpack.c.l.b16 %v473
    %v1381 = vunpack.c.h.b16 %v473
    %v1382 = vunpack.c.l.b16 %v474
    %v1383 = vunpack.c.l.b16 %v475
    %v1384 = vunpack.c.h.b16 %v475
    %v1385 = vunpack.c.l.b16 %v476
    %v1386 = vunpack.c.h.b16 %v476
    %v1387 = vunpack.c.l.b16 %v477
    %v1388 = vunpack.c.l.b16 %v478
    %v1389 = vunpack.c.h.b16 %v478
    %v1390 = vunpack.c.l.b16 %v479
    %v1391 = vunpack.c.h.b16 %v479
    %v1392 = vunpack.c.l.b16 %v480
    %v1393 = vunpack.c.l.b16 %v481
    %v1394 = vunpack.c.h.b16 %v481
    %v1395 = vunpack.c.l.b16 %v482
    %v1396 = vunpack.c.h.b16 %v482
    %v1397 = vunpack.c.l.b16 %v483
    %v1398 = vunpack.c.l.b16 %v484
    %v1399 = vunpack.c.h.b16 %v484
    %v1400 = vunpack.c.l.b16 %v485
    %v1401 = vunpack.c.h.b16 %v485
    %v1402 = vunpack.c.l.b16 %v486
    %v1403 = vunpack.c.l.b16 %v487
    %v1404 = vunpack.c.h.b16 %v487
    %v1405 = vunpack.c.l.b16 %v488
    %v1406 = vunpack.c.h.b16 %v488
    %v1407 = vunpack.c.l.b16 %v489
    %v1408 = vunpack.c.l.b16 %v490
    %v1409 = vunpack.c.h.b16 %v490
    %v1410 = vunpack.c.l.b16 %v491
    %v1411 = vunpack.c.h.b16 %v491
    %v1412 = vunpack.c.l.b16 %v492
    %v1413 = vunpack.c.l.b16 %v493
    %v1414 = vunpack.c.h.b16 %v493
    %v1415 = vunpack.c.l.b16 %v494
    %v1416 = vunpack.c.h.b16 %v494
    %v1417 = vunpack.c.l.b16 %v495
    %v1418 = vunpack.c.l.b16 %v496
    %v1419 = vunpack.c.h.b16 %v496
    %v1420 = vunpack.c.l.b16 %v497
    %v1421 = vunpack.c.h.b16 %v497
    %v1422 = vunpack.c.l.b16 %v498
    %v1423 = vunpack.c.l.b16 %v499
    %v1424 = vunpack.c.h.b16 %v499
    %v1425 = vunpack.c.l.b16 %v500
    %v1426 = vunpack.c.h.b16 %v500
    %v1427 = vunpack.c.l.b16 %v501
    %v1428 = vunpack.c.l.b16 %v502
    %v1429 = vunpack.c.h.b16 %v502
    %v1430 = vunpack.c.l.b16 %v503
    %v1431 = vunpack.c.h.b16 %v503
    %v1432 = vunpack.c.l.b16 %v504
    %v1433 = vunpack.c.l.b16 %v505
    %v1434 = vunpack.c.h.b16 %v505
    %v1435 = vunpack.c.l.b16 %v506
    %v1436 = vunpack.c.h.b16 %v506
    %v1437 = vunpack.c.l.b16 %v507
    %v1438 = vunpack.c.l.b16 %v508
    %v1439 = vunpack.c.h.b16 %v508
    %v1440 = vunpack.c.l.b16 %v509
    %v1441 = vunpack.c.h.b16 %v509
    %v1442 = vunpack.c.l.b16 %v510
    %v1443 = vpack.c.b16 %v888, %v883
    %v1444 = vpack.c.b16 %v889, %v884
    %v1445 = vpack.c.b16 %v890, %v885
    %v1446 = vpack.c.b16 %v891, %v886
    %v1447 = vpack.c.b16 %v892, %v887
    %v1448 = vpack.c.b16 %v898, %v893
    %v1449 = vpack.c.b16 %v899, %v894
    %v1450 = vpack.c.b16 %v900, %v895
    %v1451 = vpack.c.b16 %v901, %v896
    %v1452 = vpack.c.b16 %v902, %v897
    %v1453 = vpack.c.b16 %v908, %v903
    %v1454 = vpack.c.b16 %v909, %v904
    %v1455 = vpack.c.b16 %v910, %v905
    %v1456 = vpack.c.b16 %v911, %v906
    %v1457 = vpack.c.b16 %v912, %v907
    %v1458 = vpack.c.b16 %v918, %v913
    %v1459 = vpack.c.b16 %v919, %v914
    %v1460 = vpack.c.b16 %v920, %v915
    %v1461 = vpack.c.b16 %v921, %v916
    %v1462 = vpack.c.b16 %v922, %v917
    %v1463 = vpack.c.b16 %v928, %v923
    %v1464 = vpack.c.b16 %v929, %v924
    %v1465 = vpack.c.b16 %v930, %v925
    %v1466 = vpack.c.b16 %v931, %v926
    %v1467 = vpack.c.b16 %v932, %v927
    %v1468 = vpack.c.b16 %v938, %v933
    %v1469 = vpack.c.b16 %v939, %v934
    %v1470 = vpack.c.b16 %v940, %v935
    %v1471 = vpack.c.b16 %v941, %v936
    %v1472 = vpack.c.b16 %v942, %v937
    %v1473 = vpack.c.b16 %v948, %v943
    %v1474 = vpack.c.b16 %v949, %v944
    %v1475 = vpack.c.b16 %v950, %v945
    %v1476 = vpack.c.b16 %v951, %v946
    %v1477 = vpack.c.b16 %v952, %v947
    %v1478 = vpack.c.b16 %v958, %v953
    %v1479 = vpack.c.b16 %v959, %v954
    %v1480 = vpack.c.b16 %v960, %v955
    %v1481 = vpack.c.b16 %v961, %v956
    %v1482 = vpack.c.b16 %v962, %v957
    %v1483 = vpack.c.b16 %v968, %v963
    %v1484 = vpack.c.b16 %v969, %v964
    %v1485 = vpack.c.b16 %v970, %v965
    %v1486 = vpack.c.b16 %v971, %v966
    %v1487 = vpack.c.b16 %v972, %v967
    %v1488 = vpack.c.b16 %v978, %v973
    %v1489 = vpack.c.b16 %v979, %v974
    %v1490 = vpack.c.b16 %v980, %v975
    %v1491 = vpack.c.b16 %v981, %v976
    %v1492 = vpack.c.b16 %v982, %v977
    %v1493 = vpack.c.b16 %v988, %v983
    %v1494 = vpack.c.b16 %v989, %v984
    %v1495 = vpack.c.b16 %v990, %v985
    %v1496 = vpack.c.b16 %v991, %v986
    %v1497 = vpack.c.b16 %v992, %v987
    %v1498 = vpack.c.b16 %v998, %v993
    %v1499 = vpack.c.b16 %v999, %v994
    %v1500 = vpack.c.b16 %v1000, %v995
    %v1501 = vpack.c.b16 %v1001, %v996
    %v1502 = vpack.c.b16 %v1002, %v997
    %v1503 = vpack.c.b16 %v1008, %v1003
    %v1504 = vpack.c.b16 %v1009, %v1004
    %v1505 = vpack.c.b16 %v1010, %v1005
    %v1506 = vpack.c.b16 %v1011, %v1006
    %v1507 = vpack.c.b16 %v1012, %v1007
    %v1508 = vpack.c.b16 %v1018, %v1013
    %v1509 = vpack.c.b16 %v1019, %v1014
    %v1510 = vpack.c.b16 %v1020, %v1015
    %v1511 = vpack.c.b16 %v1021, %v1016
    %v1512 = vpack.c.b16 %v1022, %v1017
    %v1513 = vpack.c.b16 %v1028, %v1023
    %v1514 = vpack.c.b16 %v1029, %v1024
    %v1515 = vpack.c.b16 %v1030, %v1025
    %v1516 = vpack.c.b16 %v1031, %v1026
    %v1517 = vpack.c.b16 %v1032, %v1027
    %v1518 = vpack.c.b16 %v1038, %v1033
    %v1519 = vpack.c.b16 %v1039, %v1034
    %v1520 = vpack.c.b16 %v1040, %v1035
    %v1521 = vpack.c.b16 %v1041, %v1036
    %v1522 = vpack.c.b16 %v1042, %v1037
    %v1523 = vpack.c.b16 %v1048, %v1043
    %v1524 = vpack.c.b16 %v1049, %v1044
    %v1525 = vpack.c.b16 %v1050, %v1045
    %v1526 = vpack.c.b16 %v1051, %v1046
    %v1527 = vpack.c.b16 %v1052, %v1047
    %v1528 = vpack.c.b16 %v1058, %v1053
    %v1529 = vpack.c.b16 %v1059, %v1054
    %v1530 = vpack.c.b16 %v1060, %v1055
    %v1531 = vpack.c.b16 %v1061, %v1056
    %v1532 = vpack.c.b16 %v1062, %v1057
    %v1533 = vpack.c.b16 %v1068, %v1063
    %v1534 = vpack.c.b16 %v1069, %v1064
    %v1535 = vpack.c.b16 %v1070, %v1065
    %v1536 = vpack.c.b16 %v1071, %v1066
    %v1537 = vpack.c.b16 %v1072, %v1067
    %v1538 = vpack.c.b16 %v1078, %v1073
    %v1539 = vpack.c.b16 %v1079, %v1074
    %v1540 = vpack.c.b16 %v1080, %v1075
    %v1541 = vpack.c.b16 %v1081, %v1076
    %v1542 = vpack.c.b16 %v1082, %v1077
    %v1543 = vpack.c.b16 %v1088, %v1083
    %v1544 = vpack.c.b16 %v1089, %v1084
    %v1545 = vpack.c.b16 %v1090, %v1085
    %v1546 = vpack.c.b16 %v1091, %v1086
    %v1547 = vpack.c.b16 %v1092, %v1087
    %v1548 = vpack.c.b16 %v1098, %v1093
    %v1549 = vpack.c.b16 %v1099, %v1094
    %v1550 = vpack.c.b16 %v1100, %v1095
    %v1551 = vpack.c.b16 %v1101, %v1096
    %v1552 = vpack.c.b16 %v1102, %v1097
    %v1553 = vpack.c.b16 %v1108, %v1103
    %v1554 = vpack.c.b16 %v1109, %v1104
    %v1555 = vpack.c.b16 %v1110, %v1105
    %v1556 = vpack.c.b16 %v1111, %v1106
    %v1557 = vpack.c.b16 %v1112, %v1107
    %v1558 = vpack.c.b16 %v1118, %v1113
    %v1559 = vpack.c.b16 %v1119, %v1114
    %v1560 = vpack.c.b16 %v1120, %v1115
    %v1561 = vpack.c.b16 %v1121, %v1116
    %v1562 = vpack.c.b16 %v1122, %v1117
    %v1563 = vpack.c.b16 %v1128, %v1123
    %v1564 = vpack.c.b16 %v1129, %v1124
    %v1565 = vpack.c.b16 %v1130, %v1125
    %v1566 = vpack.c.b16 %v1131, %v1126
    %v1567 = vpack.c.b16 %v1132, %v1127
    %v1568 = vpack.c.b16 %v1138, %v1133
    %v1569 = vpack.c.b16 %v1139, %v1134
    %v1570 = vpack.c.b16 %v1140, %v1135
    %v1571 = vpack.c.b16 %v1141, %v1136
    %v1572 = vpack.c.b16 %v1142, %v1137
    %v1573 = vpack.c.b16 %v1148, %v1143
    %v1574 = vpack.c.b16 %v1149, %v1144
    %v1575 = vpack.c.b16 %v1150, %v1145
    %v1576 = vpack.c.b16 %v1151, %v1146
    %v1577 = vpack.c.b16 %v1152, %v1147
    %v1578 = vpack.c.b16 %v1158, %v1153
    %v1579 = vpack.c.b16 %v1159, %v1154
    %v1580 = vpack.c.b16 %v1160, %v1155
    %v1581 = vpack.c.b16 %v1161, %v1156
    %v1582 = vpack.c.b16 %v1162, %v1157
    %v1583 = vpack.c.b16 %v1168, %v1163
    %v1584 = vpack.c.b16 %v1169, %v1164
    %v1585 = vpack.c.b16 %v1170, %v1165
    %v1586 = vpack.c.b16 %v1171, %v1166
    %v1587 = vpack.c.b16 %v1172, %v1167
    %v1588 = vpack.c.b16 %v1178, %v1173
    %v1589 = vpack.c.b16 %v1179, %v1174
    %v1590 = vpack.c.b16 %v1180, %v1175
    %v1591 = vpack.c.b16 %v1181, %v1176
    %v1592 = vpack.c.b16 %v1182, %v1177
    %v1593 = vpack.c.b16 %v1188, %v1183
    %v1594 = vpack.c.b16 %v1189, %v1184
    %v1595 = vpack.c.b16 %v1190, %v1185
    %v1596 = vpack.c.b16 %v1191, %v1186
    %v1597 = vpack.c.b16 %v1192, %v1187
    %v1598 = vpack.c.b16 %v1198, %v1193
    %v1599 = vpack.c.b16 %v1199, %v1194
    %v1600 = vpack.c.b16 %v1200, %v1195
    %v1601 = vpack.c.b16 %v1201, %v1196
    %v1602 = vpack.c.b16 %v1202, %v1197
    %v1603 = vpack.c.b16 %v1208, %v1203
    %v1604 = vpack.c.b16 %v1209, %v1204
    %v1605 = vpack.c.b16 %v1210, %v1205
    %v1606 = vpack.c.b16 %v1211, %v1206
    %v1607 = vpack.c.b16 %v1212, %v1207
    %v1608 = vpack.c.b16 %v1218, %v1213
    %v1609 = vpack.c.b16 %v1219, %v1214
    %v1610 = vpack.c.b16 %v1220, %v1215
    %v1611 = vpack.c.b16 %v1221, %v1216
    %v1612 = vpack.c.b16 %v1222, %v1217
    %v1613 = vpack.c.b16 %v1228, %v1223
    %v1614 = vpack.c.b16 %v1229, %v1224
    %v1615 = vpack.c.b16 %v1230, %v1225
    %v1616 = vpack.c.b16 %v1231, %v1226
    %v1617 = vpack.c.b16 %v1232, %v1227
    %v1618 = vpack.c.b16 %v1238, %v1233
    %v1619 = vpack.c.b16 %v1239, %v1234
    %v1620 = vpack.c.b16 %v1240, %v1235
    %v1621 = vpack.c.b16 %v1241, %v1236
    %v1622 = vpack.c.b16 %v1242, %v1237
    %v1623 = vpack.c.b16 %v1248, %v1243
    %v1624 = vpack.c.b16 %v1249, %v1244
    %v1625 = vpack.c.b16 %v1250, %v1245
    %v1626 = vpack.c.b16 %v1251, %v1246
    %v1627 = vpack.c.b16 %v1252, %v1247
    %v1628 = vpack.c.b16 %v1258, %v1253
    %v1629 = vpack.c.b16 %v1259, %v1254
    %v1630 = vpack.c.b16 %v1260, %v1255
    %v1631 = vpack.c.b16 %v1261, %v1256
    %v1632 = vpack.c.b16 %v1262, %v1257
    %v1633 = vpack.c.b16 %v1268, %v1263
    %v1634 = vpack.c.b16 %v1269, %v1264
    %v1635 = vpack.c.b16 %v1270, %v1265
    %v1636 = vpack.c.b16 %v1271, %v1266
    %v1637 = vpack.c.b16 %v1272, %v1267
    %v1638 = vpack.c.b16 %v1278, %v1273
    %v1639 = vpack.c.b16 %v1279, %v1274
    %v1640 = vpack.c.b16 %v1280, %v1275
    %v1641 = vpack.c.b16 %v1281, %v1276
    %v1642 = vpack.c.b16 %v1282, %v1277
    %v1643 = vpack.c.b16 %v1288, %v1283
    %v1644 = vpack.c.b16 %v1289, %v1284
    %v1645 = vpack.c.b16 %v1290, %v1285
    %v1646 = vpack.c.b16 %v1291, %v1286
    %v1647 = vpack.c.b16 %v1292, %v1287
    %v1648 = vpack.c.b16 %v1298, %v1293
    %v1649 = vpack.c.b16 %v1299, %v1294
    %v1650 = vpack.c.b16 %v1300, %v1295
    %v1651 = vpack.c.b16 %v1301, %v1296
    %v1652 = vpack.c.b16 %v1302, %v1297
    %v1653 = vpack.c.b16 %v1308, %v1303
    %v1654 = vpack.c.b16 %v1309, %v1304
    %v1655 = vpack.c.b16 %v1310, %v1305
    %v1656 = vpack.c.b16 %v1311, %v1306
    %v1657 = vpack.c.b16 %v1312, %v1307
    %v1658 = vpack.c.b16 %v1318, %v1313
    %v1659 = vpack.c.b16 %v1319, %v1314
    %v1660 = vpack.c.b16 %v1320, %v1315
    %v1661 = vpack.c.b16 %v1321, %v1316
    %v1662 = vpack.c.b16 %v1322, %v1317
    %v1663 = vpack.c.b16 %v1328, %v1323
    %v1664 = vpack.c.b16 %v1329, %v1324
    %v1665 = vpack.c.b16 %v1330, %v1325
    %v1666 = vpack.c.b16 %v1331, %v1326
    %v1667 = vpack.c.b16 %v1332, %v1327
    %v1668 = vpack.c.b16 %v1338, %v1333
    %v1669 = vpack.c.b16 %v1339, %v1334
    %v1670 = vpack.c.b16 %v1340, %v1335
    %v1671 = vpack.c.b16 %v1341, %v1336
    %v1672 = vpack.c.b16 %v1342, %v1337
    %v1673 = vpack.c.b16 %v1348, %v1343
    %v1674 = vpack.c.b16 %v1349, %v1344
    %v1675 = vpack.c.b16 %v1350, %v1345
    %v1676 = vpack.c.b16 %v1351, %v1346
    %v1677 = vpack.c.b16 %v1352, %v1347
    %v1678 = vpack.c.b16 %v1358, %v1353
    %v1679 = vpack.c.b16 %v1359, %v1354
    %v1680 = vpack.c.b16 %v1360, %v1355
    %v1681 = vpack.c.b16 %v1361, %v1356
    %v1682 = vpack.c.b16 %v1362, %v1357
    %v1683 = vpack.c.b16 %v1368, %v1363
    %v1684 = vpack.c.b16 %v1369, %v1364
    %v1685 = vpack.c.b16 %v1370, %v1365
    %v1686 = vpack.c.b16 %v1371, %v1366
    %v1687 = vpack.c.b16 %v1372, %v1367
    %v1688 = vpack.c.b16 %v1378, %v1373
    %v1689 = vpack.c.b16 %v1379, %v1374
    %v1690 = vpack.c.b16 %v1380, %v1375
    %v1691 = vpack.c.b16 %v1381, %v1376
    %v1692 = vpack.c.b16 %v1382, %v1377
    %v1693 = vpack.c.b16 %v1388, %v1383
    %v1694 = vpack.c.b16 %v1389, %v1384
    %v1695 = vpack.c.b16 %v1390, %v1385
    %v1696 = vpack.c.b16 %v1391, %v1386
    %v1697 = vpack.c.b16 %v1392, %v1387
    %v1698 = vpack.c.b16 %v1398, %v1393
    %v1699 = vpack.c.b16 %v1399, %v1394
    %v1700 = vpack.c.b16 %v1400, %v1395
    %v1701 = vpack.c.b16 %v1401, %v1396
    %v1702 = vpack.c.b16 %v1402, %v1397
    %v1703 = vpack.c.b16 %v1408, %v1403
    %v1704 = vpack.c.b16 %v1409, %v1404
    %v1705 = vpack.c.b16 %v1410, %v1405
    %v1706 = vpack.c.b16 %v1411, %v1406
    %v1707 = vpack.c.b16 %v1412, %v1407
    %v1708 = vpack.c.b16 %v1418, %v1413
    %v1709 = vpack.c.b16 %v1419, %v1414
    %v1710 = vpack.c.b16 %v1420, %v1415
    %v1711 = vpack.c.b16 %v1421, %v1416
    %v1712 = vpack.c.b16 %v1422, %v1417
    %v1713 = vpack.c.b16 %v1428, %v1423
    %v1714 = vpack.c.b16 %v1429, %v1424
    %v1715 = vpack.c.b16 %v1430, %v1425
    %v1716 = vpack.c.b16 %v1431, %v1426
    %v1717 = vpack.c.b16 %v1432, %v1427
    %v1718 = vpack.c.b16 %v1438, %v1433
    %v1719 = vpack.c.b16 %v1439, %v1434
    %v1720 = vpack.c.b16 %v1440, %v1435
    %v1721 = vpack.c.b16 %v1441, %v1436
    %v1722 = vpack.c.b16 %v1442, %v1437
    %2003 = vmatprep.subr.bf16.mxu0 %v1444
    %2004 = vmatpush1.bf16.msra.mxu0 %v1443
    %2005 = vmatprep.subr.bf16.mxu0 %v1449
    %2006 = vmatpush1.bf16.msra.mxu0 %v1448
    %2007 = vmatprep.subr.bf16.mxu0 %v1454
    %2008 = vmatpush1.bf16.msra.mxu0 %v1453
    %2009 = vmatprep.subr.bf16.mxu0 %v1459
    %2010 = vmatpush1.bf16.msra.mxu0 %v1458
    %2011 = vmatprep.subr.bf16.mxu0 %v1464
    %2012 = vmatpush1.bf16.msra.mxu0 %v1463
    %2013 = vmatprep.subr.bf16.mxu0 %v1469
    %2014 = vmatpush1.bf16.msra.mxu0 %v1468
    %2015 = vmatprep.subr.bf16.mxu0 %v1474
    %2016 = vmatpush1.bf16.msra.mxu0 %v1473
    %2017 = vmatprep.subr.bf16.mxu0 %v1479
    %2018 = vmatpush1.bf16.msra.mxu0 %v1478
    %2019 = vmatprep.subr.bf16.mxu0 %v1484
    %2020 = vmatpush1.bf16.msra.mxu0 %v1483
    %2021 = vmatprep.subr.bf16.mxu0 %v1489
    %2022 = vmatpush1.bf16.msra.mxu0 %v1488
    %2023 = vmatprep.subr.bf16.mxu0 %v1494
    %2024 = vmatpush1.bf16.msra.mxu0 %v1493
    %2025 = vmatprep.subr.bf16.mxu0 %v1499
    %2026 = vmatpush1.bf16.msra.mxu0 %v1498
    %2027 = vmatprep.subr.bf16.mxu0 %v1504
    %2028 = vmatpush1.bf16.msra.mxu0 %v1503
    %2029 = vmatprep.subr.bf16.mxu0 %v1509
    %2030 = vmatpush1.bf16.msra.mxu0 %v1508
    %2031 = vmatprep.subr.bf16.mxu0 %v1514
    %2032 = vmatpush1.bf16.msra.mxu0 %v1513
    %2033 = vmatprep.subr.bf16.mxu0 %v1519
    %2034 = vmatpush1.bf16.msra.mxu0 %v1518
    %2035 = vmatprep.mubr.bf16.mxu0 %v534
    %2036 = vmatmul.mubr.bf16.gmra.mrb[0].mxu0 %v533
    %v2037 = vpop.f32.mrb[0].mxu0
    %v2038 = vadd.f32 0.0, %v2037
    %v2039 = vpop.f32.mrb[0].mxu0
    %v2040 = vadd.f32 0.0, %v2039
    %v2041 = vpop.f32.mrb[0].mxu0
    %v2042 = vadd.f32 0.0, %v2041
    %v2043 = vpop.f32.mrb[0].mxu0
    %v2044 = vadd.f32 0.0, %v2043
    %2045 = vdwg.mxu0
    %2046 = vmatprep.subr.bf16.mxu0 %v1524
    %2047 = vmatpush1.bf16.msra.mxu0 %v1523
    %2048 = vmatprep.subr.bf16.mxu0 %v1529
    %2049 = vmatpush1.bf16.msra.mxu0 %v1528
    %2050 = vmatprep.subr.bf16.mxu0 %v1534
    %2051 = vmatpush1.bf16.msra.mxu0 %v1533
    %2052 = vmatprep.subr.bf16.mxu0 %v1539
    %2053 = vmatpush1.bf16.msra.mxu0 %v1538
    %2054 = vmatprep.subr.bf16.mxu0 %v1544
    %2055 = vmatpush1.bf16.msra.mxu0 %v1543
    %2056 = vmatprep.subr.bf16.mxu0 %v1549
    %2057 = vmatpush1.bf16.msra.mxu0 %v1548
    %2058 = vmatprep.subr.bf16.mxu0 %v1554
    %2059 = vmatpush1.bf16.msra.mxu0 %v1553
    %2060 = vmatprep.subr.bf16.mxu0 %v1559
    %2061 = vmatpush1.bf16.msra.mxu0 %v1558
    %2062 = vmatprep.subr.bf16.mxu0 %v1564
    %2063 = vmatpush1.bf16.msra.mxu0 %v1563
    %2064 = vmatprep.subr.bf16.mxu0 %v1569
    %2065 = vmatpush1.bf16.msra.mxu0 %v1568
    %2066 = vmatprep.subr.bf16.mxu0 %v1574
    %2067 = vmatpush1.bf16.msra.mxu0 %v1573
    %2068 = vmatprep.subr.bf16.mxu0 %v1579
    %2069 = vmatpush1.bf16.msra.mxu0 %v1578
    %2070 = vmatprep.subr.bf16.mxu0 %v1584
    %2071 = vmatpush1.bf16.msra.mxu0 %v1583
    %2072 = vmatprep.subr.bf16.mxu0 %v1589
    %2073 = vmatpush1.bf16.msra.mxu0 %v1588
    %2074 = vmatprep.subr.bf16.mxu0 %v1594
    %2075 = vmatpush1.bf16.msra.mxu0 %v1593
    %2076 = vmatprep.subr.bf16.mxu0 %v1599
    %2077 = vmatpush1.bf16.msra.mxu0 %v1598
    %2078 = vmatprep.mubr.bf16.mxu0 %v536
    %2079 = vmatmul.mubr.bf16.gmra.mrb[0].mxu0 %v535
    %v2080 = vpop.f32.mrb[0].mxu0
    %v2081 = vadd.f32 %v2038, %v2080
    %v2082 = vpop.f32.mrb[0].mxu0
    %v2083 = vadd.f32 %v2040, %v2082
    %v2084 = vpop.f32.mrb[0].mxu0
    %v2085 = vadd.f32 %v2042, %v2084
    %v2086 = vpop.f32.mrb[0].mxu0
    %v2087 = vadd.f32 %v2044, %v2086
    %2088 = vdwg.mxu0
    %2089 = vmatprep.subr.bf16.mxu0 %v1604
    %2090 = vmatpush1.bf16.msra.mxu0 %v1603
    %2091 = vmatprep.subr.bf16.mxu0 %v1609
    %2092 = vmatpush1.bf16.msra.mxu0 %v1608
    %2093 = vmatprep.subr.bf16.mxu0 %v1614
    %2094 = vmatpush1.bf16.msra.mxu0 %v1613
    %2095 = vmatprep.subr.bf16.mxu0 %v1619
    %2096 = vmatpush1.bf16.msra.mxu0 %v1618
    %2097 = vmatprep.subr.bf16.mxu0 %v1624
    %2098 = vmatpush1.bf16.msra.mxu0 %v1623
    %2099 = vmatprep.subr.bf16.mxu0 %v1629
    %2100 = vmatpush1.bf16.msra.mxu0 %v1628
    %2101 = vmatprep.subr.bf16.mxu0 %v1634
    %2102 = vmatpush1.bf16.msra.mxu0 %v1633
    %2103 = vmatprep.subr.bf16.mxu0 %v1639
    %2104 = vmatpush1.bf16.msra.mxu0 %v1638
    %2105 = vmatprep.subr.bf16.mxu0 %v1644
    %2106 = vmatpush1.bf16.msra.mxu0 %v1643
    %2107 = vmatprep.subr.bf16.mxu0 %v1649
    %2108 = vmatpush1.bf16.msra.mxu0 %v1648
    %2109 = vmatprep.subr.bf16.mxu0 %v1654
    %2110 = vmatpush1.bf16.msra.mxu0 %v1653
    %2111 = vmatprep.subr.bf16.mxu0 %v1659
    %2112 = vmatpush1.bf16.msra.mxu0 %v1658
    %2113 = vmatprep.subr.bf16.mxu0 %v1664
    %2114 = vmatpush1.bf16.msra.mxu0 %v1663
    %2115 = vmatprep.subr.bf16.mxu0 %v1669
    %2116 = vmatpush1.bf16.msra.mxu0 %v1668
    %2117 = vmatprep.subr.bf16.mxu0 %v1674
    %2118 = vmatpush1.bf16.msra.mxu0 %v1673
    %2119 = vmatprep.subr.bf16.mxu0 %v1679
    %2120 = vmatpush1.bf16.msra.mxu0 %v1678
    %2121 = vmatprep.mubr.bf16.mxu0 %v538
    %2122 = vmatmul.mubr.bf16.gmra.mrb[0].mxu0 %v537
    %v2123 = vpop.f32.mrb[0].mxu0
    %v2124 = vadd.f32 %v2081, %v2123
    %v2125 = vpop.f32.mrb[0].mxu0
    %v2126 = vadd.f32 %v2083, %v2125
    %v2127 = vpop.f32.mrb[0].mxu0
    %v2128 = vadd.f32 %v2085, %v2127
    %v2129 = vpop.f32.mrb[0].mxu0
    %v2130 = vadd.f32 %v2087, %v2129
    %2131 = vdwg.mxu0
    %2132 = vmatprep.subr.bf16.mxu0 %v1684
    %2133 = vmatpush1.bf16.msra.mxu0 %v1683
    %2134 = vmatprep.subr.bf16.mxu0 %v1689
    %2135 = vmatpush1.bf16.msra.mxu0 %v1688
    %2136 = vmatprep.subr.bf16.mxu0 %v1694
    %2137 = vmatpush1.bf16.msra.mxu0 %v1693
    %2138 = vmatprep.subr.bf16.mxu0 %v1699
    %2139 = vmatpush1.bf16.msra.mxu0 %v1698
    %2140 = vmatprep.subr.bf16.mxu0 %v1704
    %2141 = vmatpush1.bf16.msra.mxu0 %v1703
    %2142 = vmatprep.subr.bf16.mxu0 %v1709
    %2143 = vmatpush1.bf16.msra.mxu0 %v1708
    %2144 = vmatprep.subr.bf16.mxu0 %v1714
    %2145 = vmatpush1.bf16.msra.mxu0 %v1713
    %2146 = vmatprep.subr.bf16.mxu0 %v1719
    %2147 = vmatpush1.bf16.msra.mxu0 %v1718
    %2148 = vmatprep.subr.bf16.mxu0 0
    %2149 = vmatpush1.bf16.msra.mxu0 0
    %2150 = vmatprep.subr.bf16.mxu0 0
    %2151 = vmatpush1.bf16.msra.mxu0 0
    %2152 = vmatprep.subr.bf16.mxu0 0
    %2153 = vmatpush1.bf16.msra.mxu0 0
    %2154 = vmatprep.subr.bf16.mxu0 0
    %2155 = vmatpush1.bf16.msra.mxu0 0
    %2156 = vmatprep.subr.bf16.mxu0 0
    %2157 = vmatpush1.bf16.msra.mxu0 0
    %2158 = vmatprep.subr.bf16.mxu0 0
    %2159 = vmatpush1.bf16.msra.mxu0 0
    %2160 = vmatprep.subr.bf16.mxu0 0
    %2161 = vmatpush1.bf16.msra.mxu0 0
    %2162 = vmatprep.subr.bf16.mxu0 0
    %2163 = vmatpush1.bf16.msra.mxu0 0
    %2164 = vmatprep.mubr.bf16.mxu0 0
    %2165 = vmatmul.mubr.bf16.gmra.mrb[0].mxu0 %v539
    %v2166 = vpop.f32.mrb[0].mxu0
    %v2167 = vadd.f32 %v2124, %v2166
    %v2168 = vpop.f32.mrb[0].mxu0
    %v2169 = vadd.f32 %v2126, %v2168
    %v2170 = vpop.f32.mrb[0].mxu0
    %v2171 = vadd.f32 %v2128, %v2170
    %v2172 = vpop.f32.mrb[0].mxu0
    %v2173 = vadd.f32 %v2130, %v2172
    %2174 = vdwg.mxu0
    %2175 = vmatprep.subr.bf16.mxu0 %v1446
    %2176 = vmatpush1.bf16.msra.mxu0 %v1445
    %2177 = vmatprep.subr.bf16.mxu0 %v1451
    %2178 = vmatpush1.bf16.msra.mxu0 %v1450
    %2179 = vmatprep.subr.bf16.mxu0 %v1456
    %2180 = vmatpush1.bf16.msra.mxu0 %v1455
    %2181 = vmatprep.subr.bf16.mxu0 %v1461
    %2182 = vmatpush1.bf16.msra.mxu0 %v1460
    %2183 = vmatprep.subr.bf16.mxu0 %v1466
    %2184 = vmatpush1.bf16.msra.mxu0 %v1465
    %2185 = vmatprep.subr.bf16.mxu0 %v1471
    %2186 = vmatpush1.bf16.msra.mxu0 %v1470
    %2187 = vmatprep.subr.bf16.mxu0 %v1476
    %2188 = vmatpush1.bf16.msra.mxu0 %v1475
    %2189 = vmatprep.subr.bf16.mxu0 %v1481
    %2190 = vmatpush1.bf16.msra.mxu0 %v1480
    %2191 = vmatprep.subr.bf16.mxu0 %v1486
    %2192 = vmatpush1.bf16.msra.mxu0 %v1485
    %2193 = vmatprep.subr.bf16.mxu0 %v1491
    %2194 = vmatpush1.bf16.msra.mxu0 %v1490
    %2195 = vmatprep.subr.bf16.mxu0 %v1496
    %2196 = vmatpush1.bf16.msra.mxu0 %v1495
    %2197 = vmatprep.subr.bf16.mxu0 %v1501
    %2198 = vmatpush1.bf16.msra.mxu0 %v1500
    %2199 = vmatprep.subr.bf16.mxu0 %v1506
    %2200 = vmatpush1.bf16.msra.mxu0 %v1505
    %2201 = vmatprep.subr.bf16.mxu0 %v1511
    %2202 = vmatpush1.bf16.msra.mxu0 %v1510
    %2203 = vmatprep.subr.bf16.mxu0 %v1516
    %2204 = vmatpush1.bf16.msra.mxu0 %v1515
    %2205 = vmatprep.subr.bf16.mxu0 %v1521
    %2206 = vmatpush1.bf16.msra.mxu0 %v1520
    %2207 = vmatprep.mubr.bf16.mxu0 %v534
    %2208 = vmatmul.mubr.bf16.gmra.mrb[0].mxu0 %v533
    %v2209 = vpop.f32.mrb[0].mxu0
    %v2210 = vadd.f32 0.0, %v2209
    %v2211 = vpop.f32.mrb[0].mxu0
    %v2212 = vadd.f32 0.0, %v2211
    %v2213 = vpop.f32.mrb[0].mxu0
    %v2214 = vadd.f32 0.0, %v2213
    %v2215 = vpop.f32.mrb[0].mxu0
    %v2216 = vadd.f32 0.0, %v2215
    %2217 = vdwg.mxu0
    %2218 = vmatprep.subr.bf16.mxu0 %v1526
    %2219 = vmatpush1.bf16.msra.mxu0 %v1525
    %2220 = vmatprep.subr.bf16.mxu0 %v1531
    %2221 = vmatpush1.bf16.msra.mxu0 %v1530
    %2222 = vmatprep.subr.bf16.mxu0 %v1536
    %2223 = vmatpush1.bf16.msra.mxu0 %v1535
    %2224 = vmatprep.subr.bf16.mxu0 %v1541
    %2225 = vmatpush1.bf16.msra.mxu0 %v1540
    %2226 = vmatprep.subr.bf16.mxu0 %v1546
    %2227 = vmatpush1.bf16.msra.mxu0 %v1545
    %2228 = vmatprep.subr.bf16.mxu0 %v1551
    %2229 = vmatpush1.bf16.msra.mxu0 %v1550
    %2230 = vmatprep.subr.bf16.mxu0 %v1556
    %2231 = vmatpush1.bf16.msra.mxu0 %v1555
    %2232 = vmatprep.subr.bf16.mxu0 %v1561
    %2233 = vmatpush1.bf16.msra.mxu0 %v1560
    %2234 = vmatprep.subr.bf16.mxu0 %v1566
    %2235 = vmatpush1.bf16.msra.mxu0 %v1565
    %2236 = vmatprep.subr.bf16.mxu0 %v1571
    %2237 = vmatpush1.bf16.msra.mxu0 %v1570
    %2238 = vmatprep.subr.bf16.mxu0 %v1576
    %2239 = vmatpush1.bf16.msra.mxu0 %v1575
    %2240 = vmatprep.subr.bf16.mxu0 %v1581
    %2241 = vmatpush1.bf16.msra.mxu0 %v1580
    %2242 = vmatprep.subr.bf16.mxu0 %v1586
    %2243 = vmatpush1.bf16.msra.mxu0 %v1585
    %2244 = vmatprep.subr.bf16.mxu0 %v1591
    %2245 = vmatpush1.bf16.msra.mxu0 %v1590
    %2246 = vmatprep.subr.bf16.mxu0 %v1596
    %2247 = vmatpush1.bf16.msra.mxu0 %v1595
    %2248 = vmatprep.subr.bf16.mxu0 %v1601
    %2249 = vmatpush1.bf16.msra.mxu0 %v1600
    %2250 = vmatprep.mubr.bf16.mxu0 %v536
    %2251 = vmatmul.mubr.bf16.gmra.mrb[0].mxu0 %v535
    %v2252 = vpop.f32.mrb[0].mxu0
    %v2253 = vadd.f32 %v2210, %v2252
    %v2254 = vpop.f32.mrb[0].mxu0
    %v2255 = vadd.f32 %v2212, %v2254
    %v2256 = vpop.f32.mrb[0].mxu0
    %v2257 = vadd.f32 %v2214, %v2256
    %v2258 = vpop.f32.mrb[0].mxu0
    %v2259 = vadd.f32 %v2216, %v2258
    %2260 = vdwg.mxu0
    %2261 = vmatprep.subr.bf16.mxu0 %v1606
    %2262 = vmatpush1.bf16.msra.mxu0 %v1605
    %2263 = vmatprep.subr.bf16.mxu0 %v1611
    %2264 = vmatpush1.bf16.msra.mxu0 %v1610
    %2265 = vmatprep.subr.bf16.mxu0 %v1616
    %2266 = vmatpush1.bf16.msra.mxu0 %v1615
    %2267 = vmatprep.subr.bf16.mxu0 %v1621
    %2268 = vmatpush1.bf16.msra.mxu0 %v1620
    %2269 = vmatprep.subr.bf16.mxu0 %v1626
    %2270 = vmatpush1.bf16.msra.mxu0 %v1625
    %2271 = vmatprep.subr.bf16.mxu0 %v1631
    %2272 = vmatpush1.bf16.msra.mxu0 %v1630
    %2273 = vmatprep.subr.bf16.mxu0 %v1636
    %2274 = vmatpush1.bf16.msra.mxu0 %v1635
    %2275 = vmatprep.subr.bf16.mxu0 %v1641
    %2276 = vmatpush1.bf16.msra.mxu0 %v1640
    %2277 = vmatprep.subr.bf16.mxu0 %v1646
    %2278 = vmatpush1.bf16.msra.mxu0 %v1645
    %2279 = vmatprep.subr.bf16.mxu0 %v1651
    %2280 = vmatpush1.bf16.msra.mxu0 %v1650
    %2281 = vmatprep.subr.bf16.mxu0 %v1656
    %2282 = vmatpush1.bf16.msra.mxu0 %v1655
    %2283 = vmatprep.subr.bf16.mxu0 %v1661
    %2284 = vmatpush1.bf16.msra.mxu0 %v1660
    %2285 = vmatprep.subr.bf16.mxu0 %v1666
    %2286 = vmatpush1.bf16.msra.mxu0 %v1665
    %2287 = vmatprep.subr.bf16.mxu0 %v1671
    %2288 = vmatpush1.bf16.msra.mxu0 %v1670
    %2289 = vmatprep.subr.bf16.mxu0 %v1676
    %2290 = vmatpush1.bf16.msra.mxu0 %v1675
    %2291 = vmatprep.subr.bf16.mxu0 %v1681
    %2292 = vmatpush1.bf16.msra.mxu0 %v1680
    %2293 = vmatprep.mubr.bf16.mxu0 %v538
    %2294 = vmatmul.mubr.bf16.gmra.mrb[0].mxu0 %v537
    %v2295 = vpop.f32.mrb[0].mxu0
    %v2296 = vadd.f32 %v2253, %v2295
    %v2297 = vpop.f32.mrb[0].mxu0
    %v2298 = vadd.f32 %v2255, %v2297
    %v2299 = vpop.f32.mrb[0].mxu0
    %v2300 = vadd.f32 %v2257, %v2299
    %v2301 = vpop.f32.mrb[0].mxu0
    %v2302 = vadd.f32 %v2259, %v2301
    %2303 = vdwg.mxu0
    %2304 = vmatprep.subr.bf16.mxu0 %v1686
    %2305 = vmatpush1.bf16.msra.mxu0 %v1685
    %2306 = vmatprep.subr.bf16.mxu0 %v1691
    %2307 = vmatpush1.bf16.msra.mxu0 %v1690
    %2308 = vmatprep.subr.bf16.mxu0 %v1696
    %2309 = vmatpush1.bf16.msra.mxu0 %v1695
    %2310 = vmatprep.subr.bf16.mxu0 %v1701
    %2311 = vmatpush1.bf16.msra.mxu0 %v1700
    %2312 = vmatprep.subr.bf16.mxu0 %v1706
    %2313 = vmatpush1.bf16.msra.mxu0 %v1705
    %2314 = vmatprep.subr.bf16.mxu0 %v1711
    %2315 = vmatpush1.bf16.msra.mxu0 %v1710
    %2316 = vmatprep.subr.bf16.mxu0 %v1716
    %2317 = vmatpush1.bf16.msra.mxu0 %v1715
    %2318 = vmatprep.subr.bf16.mxu0 %v1721
    %2319 = vmatpush1.bf16.msra.mxu0 %v1720
    %2320 = vmatprep.subr.bf16.mxu0 0
    %2321 = vmatpush1.bf16.msra.mxu0 0
    %2322 = vmatprep.subr.bf16.mxu0 0
    %2323 = vmatpush1.bf16.msra.mxu0 0
    %2324 = vmatprep.subr.bf16.mxu0 0
    %2325 = vmatpush1.bf16.msra.mxu0 0
    %2326 = vmatprep.subr.bf16.mxu0 0
    %2327 = vmatpush1.bf16.msra.mxu0 0
    %2328 = vmatprep.subr.bf16.mxu0 0
    %2329 = vmatpush1.bf16.msra.mxu0 0
    %2330 = vmatprep.subr.bf16.mxu0 0
    %2331 = vmatpush1.bf16.msra.mxu0 0
    %2332 = vmatprep.subr.bf16.mxu0 0
    %2333 = vmatpush1.bf16.msra.mxu0 0
    %2334 = vmatprep.subr.bf16.mxu0 0
    %2335 = vmatpush1.bf16.msra.mxu0 0
    %2336 = vmatprep.mubr.bf16.mxu0 0
    %2337 = vmatmul.mubr.bf16.gmra.mrb[0].mxu0 %v539
    %v2338 = vpop.f32.mrb[0].mxu0
    %v2339 = vadd.f32 %v2296, %v2338
    %v2340 = vpop.f32.mrb[0].mxu0
    %v2341 = vadd.f32 %v2298, %v2340
    %v2342 = vpop.f32.mrb[0].mxu0
    %v2343 = vadd.f32 %v2300, %v2342
    %v2344 = vpop.f32.mrb[0].mxu0
    %v2345 = vadd.f32 %v2302, %v2344
    %2346 = vdwg.mxu0
    %2347 = vmatprep.subr.bf16.mxu0 0
    %2348 = vmatpush1.bf16.msra.mxu0 %v1447
    %2349 = vmatprep.subr.bf16.mxu0 0
    %2350 = vmatpush1.bf16.msra.mxu0 %v1452
    %2351 = vmatprep.subr.bf16.mxu0 0
    %2352 = vmatpush1.bf16.msra.mxu0 %v1457
    %2353 = vmatprep.subr.bf16.mxu0 0
    %2354 = vmatpush1.bf16.msra.mxu0 %v1462
    %2355 = vmatprep.subr.bf16.mxu0 0
    %2356 = vmatpush1.bf16.msra.mxu0 %v1467
    %2357 = vmatprep.subr.bf16.mxu0 0
    %2358 = vmatpush1.bf16.msra.mxu0 %v1472
    %2359 = vmatprep.subr.bf16.mxu0 0
    %2360 = vmatpush1.bf16.msra.mxu0 %v1477
    %2361 = vmatprep.subr.bf16.mxu0 0
    %2362 = vmatpush1.bf16.msra.mxu0 %v1482
    %2363 = vmatprep.subr.bf16.mxu0 0
    %2364 = vmatpush1.bf16.msra.mxu0 %v1487
    %2365 = vmatprep.subr.bf16.mxu0 0
    %2366 = vmatpush1.bf16.msra.mxu0 %v1492
    %2367 = vmatprep.subr.bf16.mxu0 0
    %2368 = vmatpush1.bf16.msra.mxu0 %v1497
    %2369 = vmatprep.subr.bf16.mxu0 0
    %2370 = vmatpush1.bf16.msra.mxu0 %v1502
    %2371 = vmatprep.subr.bf16.mxu0 0
    %2372 = vmatpush1.bf16.msra.mxu0 %v1507
    %2373 = vmatprep.subr.bf16.mxu0 0
    %2374 = vmatpush1.bf16.msra.mxu0 %v1512
    %2375 = vmatprep.subr.bf16.mxu0 0
    %2376 = vmatpush1.bf16.msra.mxu0 %v1517
    %2377 = vmatprep.subr.bf16.mxu0 0
    %2378 = vmatpush1.bf16.msra.mxu0 %v1522
    %2379 = vmatprep.mubr.bf16.mxu0 %v534
    %2380 = vmatmul.mubr.bf16.gmra.mrb[0].mxu0 %v533
    %v2381 = vpop.f32.mrb[0].mxu0
    %v2382 = vadd.f32 0.0, %v2381
    %v2383 = vpop.f32.mrb[0].mxu0
    %v2384 = vpop.f32.mrb[0].mxu0
    %v2385 = vadd.f32 0.0, %v2384
    %v2386 = vpop.f32.mrb[0].mxu0
    %2387 = vdwg.mxu0
    %2388 = vmatprep.subr.bf16.mxu0 0
    %2389 = vmatpush1.bf16.msra.mxu0 %v1527
    %2390 = vmatprep.subr.bf16.mxu0 0
    %2391 = vmatpush1.bf16.msra.mxu0 %v1532
    %2392 = vmatprep.subr.bf16.mxu0 0
    %2393 = vmatpush1.bf16.msra.mxu0 %v1537
    %2394 = vmatprep.subr.bf16.mxu0 0
    %2395 = vmatpush1.bf16.msra.mxu0 %v1542
    %2396 = vmatprep.subr.bf16.mxu0 0
    %2397 = vmatpush1.bf16.msra.mxu0 %v1547
    %2398 = vmatprep.subr.bf16.mxu0 0
    %2399 = vmatpush1.bf16.msra.mxu0 %v1552
    %2400 = vmatprep.subr.bf16.mxu0 0
    %2401 = vmatpush1.bf16.msra.mxu0 %v1557
    %2402 = vmatprep.subr.bf16.mxu0 0
    %2403 = vmatpush1.bf16.msra.mxu0 %v1562
    %2404 = vmatprep.subr.bf16.mxu0 0
    %2405 = vmatpush1.bf16.msra.mxu0 %v1567
    %2406 = vmatprep.subr.bf16.mxu0 0
    %2407 = vmatpush1.bf16.msra.mxu0 %v1572
    %2408 = vmatprep.subr.bf16.mxu0 0
    %2409 = vmatpush1.bf16.msra.mxu0 %v1577
    %2410 = vmatprep.subr.bf16.mxu0 0
    %2411 = vmatpush1.bf16.msra.mxu0 %v1582
    %2412 = vmatprep.subr.bf16.mxu0 0
    %2413 = vmatpush1.bf16.msra.mxu0 %v1587
    %2414 = vmatprep.subr.bf16.mxu0 0
    %2415 = vmatpush1.bf16.msra.mxu0 %v1592
    %2416 = vmatprep.subr.bf16.mxu0 0
    %2417 = vmatpush1.bf16.msra.mxu0 %v1597
    %2418 = vmatprep.subr.bf16.mxu0 0
    %2419 = vmatpush1.bf16.msra.mxu0 %v1602
    %2420 = vmatprep.mubr.bf16.mxu0 %v536
    %2421 = vmatmul.mubr.bf16.gmra.mrb[0].mxu0 %v535
    %v2422 = vpop.f32.mrb[0].mxu0
    %v2423 = vadd.f32 %v2382, %v2422
    %v2424 = vpop.f32.mrb[0].mxu0
    %v2425 = vpop.f32.mrb[0].mxu0
    %v2426 = vadd.f32 %v2385, %v2425
    %v2427 = vpop.f32.mrb[0].mxu0
    %2428 = vdwg.mxu0
    %2429 = vmatprep.subr.bf16.mxu0 0
    %2430 = vmatpush1.bf16.msra.mxu0 %v1607
    %2431 = vmatprep.subr.bf16.mxu0 0
    %2432 = vmatpush1.bf16.msra.mxu0 %v1612
    %2433 = vmatprep.subr.bf16.mxu0 0
    %2434 = vmatpush1.bf16.msra.mxu0 %v1617
    %2435 = vmatprep.subr.bf16.mxu0 0
    %2436 = vmatpush1.bf16.msra.mxu0 %v1622
    %2437 = vmatprep.subr.bf16.mxu0 0
    %2438 = vmatpush1.bf16.msra.mxu0 %v1627
    %2439 = vmatprep.subr.bf16.mxu0 0
    %2440 = vmatpush1.bf16.msra.mxu0 %v1632
    %2441 = vmatprep.subr.bf16.mxu0 0
    %2442 = vmatpush1.bf16.msra.mxu0 %v1637
    %2443 = vmatprep.subr.bf16.mxu0 0
    %2444 = vmatpush1.bf16.msra.mxu0 %v1642
    %2445 = vmatprep.subr.bf16.mxu0 0
    %2446 = vmatpush1.bf16.msra.mxu0 %v1647
    %2447 = vmatprep.subr.bf16.mxu0 0
    %2448 = vmatpush1.bf16.msra.mxu0 %v1652
    %2449 = vmatprep.subr.bf16.mxu0 0
    %2450 = vmatpush1.bf16.msra.mxu0 %v1657
    %2451 = vmatprep.subr.bf16.mxu0 0
    %2452 = vmatpush1.bf16.msra.mxu0 %v1662
    %2453 = vmatprep.subr.bf16.mxu0 0
    %2454 = vmatpush1.bf16.msra.mxu0 %v1667
    %2455 = vmatprep.subr.bf16.mxu0 0
    %2456 = vmatpush1.bf16.msra.mxu0 %v1672
    %2457 = vmatprep.subr.bf16.mxu0 0
    %2458 = vmatpush1.bf16.msra.mxu0 %v1677
    %2459 = vmatprep.subr.bf16.mxu0 0
    %2460 = vmatpush1.bf16.msra.mxu0 %v1682
    %2461 = vmatprep.mubr.bf16.mxu0 %v538
    %2462 = vmatmul.mubr.bf16.gmra.mrb[0].mxu0 %v537
    %v2463 = vpop.f32.mrb[0].mxu0
    %v2464 = vadd.f32 %v2423, %v2463
    %v2465 = vpop.f32.mrb[0].mxu0
    %v2466 = vpop.f32.mrb[0].mxu0
    %v2467 = vadd.f32 %v2426, %v2466
    %v2468 = vpop.f32.mrb[0].mxu0
    %2469 = vdwg.mxu0
    %2470 = vmatprep.subr.bf16.mxu0 0
    %2471 = vmatpush1.bf16.msra.mxu0 %v1687
    %2472 = vmatprep.subr.bf16.mxu0 0
    %2473 = vmatpush1.bf16.msra.mxu0 %v1692
    %2474 = vmatprep.subr.bf16.mxu0 0
    %2475 = vmatpush1.bf16.msra.mxu0 %v1697
    %2476 = vmatprep.subr.bf16.mxu0 0
    %2477 = vmatpush1.bf16.msra.mxu0 %v1702
    %2478 = vmatprep.subr.bf16.mxu0 0
    %2479 = vmatpush1.bf16.msra.mxu0 %v1707
    %2480 = vmatprep.subr.bf16.mxu0 0
    %2481 = vmatpush1.bf16.msra.mxu0 %v1712
    %2482 = vmatprep.subr.bf16.mxu0 0
    %2483 = vmatpush1.bf16.msra.mxu0 %v1717
    %2484 = vmatprep.subr.bf16.mxu0 0
    %2485 = vmatpush1.bf16.msra.mxu0 %v1722
    %2486 = vmatprep.subr.bf16.mxu0 0
    %2487 = vmatpush1.bf16.msra.mxu0 0
    %2488 = vmatprep.subr.bf16.mxu0 0
    %2489 = vmatpush1.bf16.msra.mxu0 0
    %2490 = vmatprep.subr.bf16.mxu0 0
    %2491 = vmatpush1.bf16.msra.mxu0 0
    %2492 = vmatprep.subr.bf16.mxu0 0
    %2493 = vmatpush1.bf16.msra.mxu0 0
    %2494 = vmatprep.subr.bf16.mxu0 0
    %2495 = vmatpush1.bf16.msra.mxu0 0
    %2496 = vmatprep.subr.bf16.mxu0 0
    %2497 = vmatpush1.bf16.msra.mxu0 0
    %2498 = vmatprep.subr.bf16.mxu0 0
    %2499 = vmatpush1.bf16.msra.mxu0 0
    %2500 = vmatprep.subr.bf16.mxu0 0
    %2501 = vmatpush1.bf16.msra.mxu0 0
    %2502 = vmatprep.mubr.bf16.mxu0 0
    %2503 = vmatmul.mubr.bf16.gmra.mrb[0].mxu0 %v539
    %v2504 = vpop.f32.mrb[0].mxu0
    %v2505 = vadd.f32 %v2464, %v2504
    %v2506 = vpop.f32.mrb[0].mxu0
    %v2507 = vpop.f32.mrb[0].mxu0
    %v2508 = vadd.f32 %v2467, %v2507
    %v2509 = vpop.f32.mrb[0].mxu0
    %2510 = vdwg.mxu0
    %v2511 = vadd.f32 %v2167, %v2171
    %v2512 = vrot.slane %v2511, 4
    %v2513 = vadd.f32 %v2511, %v2512
    %v2514 = vrot.slane %v2513, 2
    %v2515 = vadd.f32 %v2513, %v2514
    %v2516 = vrot.slane %v2515, 1
    %v2517 = vadd.f32 %v2515, %v2516
    %v2518 = vadd.f32 %v2169, %v2173
    %v2519 = vrot.slane %v2518, 4
    %v2520 = vadd.f32 %v2518, %v2519
    %v2521 = vrot.slane %v2520, 2
    %v2522 = vadd.f32 %v2520, %v2521
    %v2523 = vrot.slane %v2522, 1
    %v2524 = vadd.f32 %v2522, %v2523
    %v2525 = vadd.f32 %v2339, %v2343
    %v2526 = vrot.slane %v2525, 4
    %v2527 = vadd.f32 %v2525, %v2526
    %v2528 = vrot.slane %v2527, 2
    %v2529 = vadd.f32 %v2527, %v2528
    %v2530 = vrot.slane %v2529, 1
    %v2531 = vadd.f32 %v2529, %v2530
    %v2532 = vadd.f32 %v2341, %v2345
    %v2533 = vrot.slane %v2532, 4
    %v2534 = vadd.f32 %v2532, %v2533
    %v2535 = vrot.slane %v2534, 2
    %v2536 = vadd.f32 %v2534, %v2535
    %v2537 = vrot.slane %v2536, 1
    %v2538 = vadd.f32 %v2536, %v2537
    %v2539 = vadd.f32 %v2505, %v2508
    %v2540 = vrot.slane %v2539, 4
    %v2541 = vadd.f32 %v2539, %v2540
    %v2542 = vrot.slane %v2541, 2
    %v2543 = vadd.f32 %v2541, %v2542
    %v2544 = vrot.slane %v2543, 1
    %v2545 = vadd.f32 %v2543, %v2544
    %v2546 = vmul.f32 %v2167, %v2167
    %v2547 = vmul.f32 %v2169, %v2169
    %v2548 = vmul.f32 %v2339, %v2339
    %v2549 = vmul.f32 %v2341, %v2341
    %v2550 = vmul.f32 %v2505, %v2505
    %v2551 = vmul.f32 %v2171, %v2171
    %v2552 = vmul.f32 %v2173, %v2173
    %v2553 = vmul.f32 %v2343, %v2343
    %v2554 = vmul.f32 %v2345, %v2345
    %v2555 = vmul.f32 %v2508, %v2508
    %v2556 = vadd.f32 %v2546, %v2551
    %v2557 = vrot.slane %v2556, 4
    %v2558 = vadd.f32 %v2556, %v2557
    %v2559 = vrot.slane %v2558, 2
    %v2560 = vadd.f32 %v2558, %v2559
    %v2561 = vrot.slane %v2560, 1
    %v2562 = vadd.f32 %v2560, %v2561
    %v2563 = vadd.f32 %v2547, %v2552
    %v2564 = vrot.slane %v2563, 4
    %v2565 = vadd.f32 %v2563, %v2564
    %v2566 = vrot.slane %v2565, 2
    %v2567 = vadd.f32 %v2565, %v2566
    %v2568 = vrot.slane %v2567, 1
    %v2569 = vadd.f32 %v2567, %v2568
    %v2570 = vadd.f32 %v2548, %v2553
    %v2571 = vrot.slane %v2570, 4
    %v2572 = vadd.f32 %v2570, %v2571
    %v2573 = vrot.slane %v2572, 2
    %v2574 = vadd.f32 %v2572, %v2573
    %v2575 = vrot.slane %v2574, 1
    %v2576 = vadd.f32 %v2574, %v2575
    %v2577 = vadd.f32 %v2549, %v2554
    %v2578 = vrot.slane %v2577, 4
    %v2579 = vadd.f32 %v2577, %v2578
    %v2580 = vrot.slane %v2579, 2
    %v2581 = vadd.f32 %v2579, %v2580
    %v2582 = vrot.slane %v2581, 1
    %v2583 = vadd.f32 %v2581, %v2582
    %v2584 = vadd.f32 %v2550, %v2555
    %v2585 = vrot.slane %v2584, 4
    %v2586 = vadd.f32 %v2584, %v2585
    %v2587 = vrot.slane %v2586, 2
    %v2588 = vadd.f32 %v2586, %v2587
    %v2589 = vrot.slane %v2588, 1
    %v2590 = vadd.f32 %v2588, %v2589
    %v2591 = vmul.f32 %v2517, 0.125
    %v2592 = vmul.f32 %v2524, 0.125
    %v2593 = vmul.f32 %v2531, 0.125
    %v2594 = vmul.f32 %v2538, 0.125
    %v2595 = vmul.f32 %v2545, 0.125
    %v2596 = vmul.f32 %v2562, 0.125
    %v2597 = vmul.f32 %v2569, 0.125
    %v2598 = vmul.f32 %v2576, 0.125
    %v2599 = vmul.f32 %v2583, 0.125
    %v2600 = vmul.f32 %v2590, 0.125
    %v2601 = vmul.f32 %v2591, %v2591
    %v2602 = vmul.f32 %v2592, %v2592
    %v2603 = vmul.f32 %v2593, %v2593
    %v2604 = vmul.f32 %v2594, %v2594
    %v2605 = vmul.f32 %v2595, %v2595
    %v2606 = vsub.f32 %v2596, %v2601
    %v2607 = vsub.f32 %v2597, %v2602
    %v2608 = vsub.f32 %v2598, %v2603
    %v2609 = vsub.f32 %v2599, %v2604
    %v2610 = vsub.f32 %v2600, %v2605
    %v2611 = vld [vmem:[#allocation15] ss:$2 sm:$0x1f]
    %s2612 = scalar_lea.vmem [#allocation15], 1
    %v2613 = vld [vmem:[%s2612] ss:$2 sm:$0x1f]
    %v2614 = vsub.f32 %v2167, %v2591
    %v2615 = vsub.f32 %v2169, %v2592
    %v2616 = vsub.f32 %v2339, %v2593
    %v2617 = vsub.f32 %v2341, %v2594
    %v2618 = vsub.f32 %v2505, %v2595
    %v2619 = vsub.f32 %v2171, %v2591
    %v2620 = vsub.f32 %v2173, %v2592
    %v2621 = vsub.f32 %v2343, %v2593
    %v2622 = vsub.f32 %v2345, %v2594
    %v2623 = vsub.f32 %v2508, %v2595
    %v2624 = vadd.f32 %v2606, 1e-05
    %v2625 = vadd.f32 %v2607, 1e-05
    %v2626 = vadd.f32 %v2608, 1e-05
    %v2627 = vadd.f32 %v2609, 1e-05
    %v2628 = vadd.f32 %v2610, 1e-05
    %v2629 = vrsqrt.pop %v2624
    %v2630 = vrsqrt.pop %v2625
    %v2631 = vrsqrt.pop %v2626
    %v2632 = vrsqrt.pop %v2627
    %v2633 = vrsqrt.pop %v2628
    %v2634 = vmul.f32 %v2614, %v2629
    %v2635 = vmul.f32 %v2615, %v2630
    %v2636 = vmul.f32 %v2616, %v2631
    %v2637 = vmul.f32 %v2617, %v2632
    %v2638 = vmul.f32 %v2618, %v2633
    %v2639 = vmul.f32 %v2619, %v2629
    %v2640 = vmul.f32 %v2620, %v2630
    %v2641 = vmul.f32 %v2621, %v2631
    %v2642 = vmul.f32 %v2622, %v2632
    %v2643 = vmul.f32 %v2623, %v2633
    %v2645 = vlaneseq
    %v2646 = vshrl.u32 %v2645, 7
    %v2647 = vsub.s32 0, %v2646
    %v2648 = vrot.slane %v2611, %v2647
    %v2649 = vlaneseq
    %v2650 = vshrl.u32 %v2649, 7
    %v2651 = vsub.s32 1, %v2650
    %v2652 = vrot.slane %v2611, %v2651
    %v2653 = vlaneseq
    %v2654 = vshrl.u32 %v2653, 7
    %v2655 = vsub.s32 2, %v2654
    %v2656 = vrot.slane %v2611, %v2655
    %v2657 = vlaneseq
    %v2658 = vshrl.u32 %v2657, 7
    %v2659 = vsub.s32 3, %v2658
    %v2660 = vrot.slane %v2611, %v2659
    %v2661 = vlaneseq
    %v2662 = vshrl.u32 %v2661, 7
    %v2663 = vsub.s32 4, %v2662
    %v2664 = vrot.slane %v2611, %v2663
    %v2670 = vmul.f32 %v2648, %v2634
    %v2671 = vmul.f32 %v2652, %v2635
    %v2672 = vmul.f32 %v2656, %v2636
    %v2673 = vmul.f32 %v2660, %v2637
    %v2674 = vmul.f32 %v2664, %v2638
    %v2675 = vmul.f32 %v2648, %v2639
    %v2676 = vmul.f32 %v2652, %v2640
    %v2677 = vmul.f32 %v2656, %v2641
    %v2678 = vmul.f32 %v2660, %v2642
    %v2679 = vmul.f32 %v2664, %v2643
    %v2681 = vlaneseq
    %v2682 = vshrl.u32 %v2681, 7
    %v2683 = vsub.s32 0, %v2682
    %v2684 = vrot.slane %v2613, %v2683
    %v2685 = vlaneseq
    %v2686 = vshrl.u32 %v2685, 7
    %v2687 = vsub.s32 1, %v2686
    %v2688 = vrot.slane %v2613, %v2687
    %v2689 = vlaneseq
    %v2690 = vshrl.u32 %v2689, 7
    %v2691 = vsub.s32 2, %v2690
    %v2692 = vrot.slane %v2613, %v2691
    %v2693 = vlaneseq
    %v2694 = vshrl.u32 %v2693, 7
    %v2695 = vsub.s32 3, %v2694
    %v2696 = vrot.slane %v2613, %v2695
    %v2697 = vlaneseq
    %v2698 = vshrl.u32 %v2697, 7
    %v2699 = vsub.s32 4, %v2698
    %v2700 = vrot.slane %v2613, %v2699
    %v2706 = vadd.f32 %v2670, %v2684
    %v2707 = vadd.f32 %v2671, %v2688
    %v2708 = vadd.f32 %v2672, %v2692
    %v2709 = vadd.f32 %v2673, %v2696
    %v2710 = vadd.f32 %v2674, %v2700
    %v2711 = vadd.f32 %v2675, %v2684
    %v2712 = vadd.f32 %v2676, %v2688
    %v2713 = vadd.f32 %v2677, %v2692
    %v2714 = vadd.f32 %v2678, %v2696
    %v2715 = vadd.f32 %v2679, %v2700
    %v2716 = vmul.f32 %v2706, 0.01
    %v2717 = vmul.f32 %v2707, 0.01
    %v2718 = vmul.f32 %v2708, 0.01
    %v2719 = vmul.f32 %v2709, 0.01
    %v2720 = vmul.f32 %v2710, 0.01
    %v2721 = vmul.f32 %v2711, 0.01
    %v2722 = vmul.f32 %v2712, 0.01
    %v2723 = vmul.f32 %v2713, 0.01
    %v2724 = vmul.f32 %v2714, 0.01
    %v2725 = vmul.f32 %v2715, 0.01
    %v2726 = vmax.f32 %v2706, %v2716
    %v2727 = vmax.f32 %v2707, %v2717
    %v2728 = vmax.f32 %v2708, %v2718
    %v2729 = vmax.f32 %v2709, %v2719
    %v2730 = vmax.f32 %v2710, %v2720
    %v2731 = vmax.f32 %v2711, %v2721
    %v2732 = vmax.f32 %v2712, %v2722
    %v2733 = vmax.f32 %v2713, %v2723
    %v2734 = vmax.f32 %v2714, %v2724
    %v2735 = vmax.f32 %v2715, %v2725
    %v2736 = vmul.f32 %v2726, %v165
    %v2737 = vmul.f32 %v2727, %v165
    %v2738 = vmul.f32 %v2728, %v165
    %v2739 = vmul.f32 %v2729, %v165
    %v2740 = vmul.f32 %v2730, %v165
    %v2741 = vmul.f32 %v2731, %v166
    %v2742 = vmul.f32 %v2732, %v166
    %v2743 = vmul.f32 %v2733, %v166
    %v2744 = vmul.f32 %v2734, %v166
    %v2745 = vmul.f32 %v2735, %v166
    %v2746 = vpack.c.bf16 %v2741, %v2736
    %v2747 = vpack.c.bf16 %v2742, %v2737
    %v2748 = vpack.c.bf16 %v2743, %v2738
    %v2749 = vpack.c.bf16 %v2744, %v2739
    %v2750 = vpack.c.bf16 %v2745, %v2740
    %v2751 = vld [vmem:[#allocation4] sm:$0xff]
    %v2752 = vld [vmem:[#allocation4 + $0x8] sm:$0xff]
    %v2753 = vld [vmem:[#allocation4 + $0x10] sm:$0xff]
    %v2754 = vld [vmem:[#allocation4 + $0x18] sm:$0xff]
    %v2755 = vld [vmem:[#allocation4 + $0x20] sm:$0xff]
    %v2756 = vld [vmem:[#allocation4 + $0x28] sm:$0xff]
    %v2757 = vld [vmem:[#allocation4 + $0x30] sm:$0xff]
    %v2758 = vld [vmem:[#allocation4 + $0x38] sm:$0xff]
    %v2759 = vld [vmem:[#allocation4 + $0x40] sm:$0xff]
    %v2760 = vld [vmem:[#allocation4 + $0x48] sm:$0xff]
    %v2761 = vld [vmem:[#allocation4 + $0x50] sm:$0xff]
    %v2762 = vld [vmem:[#allocation4 + $0x58] sm:$0xff]
    %v2763 = vld [vmem:[#allocation4 + $0x60] sm:$0xff]
    %v2764 = vld [vmem:[#allocation4 + $0x68] sm:$0xff]
    %v2765 = vld [vmem:[#allocation4 + $0x70] sm:$0xff]
    %v2766 = vld [vmem:[#allocation4 + $0x78] sm:$0xff]
    %v2767 = vld [vmem:[#allocation4 + $0x80] sm:$0xff]
    %v2768 = vld [vmem:[#allocation4 + $0x88] sm:$0xff]
    %v2769 = vld [vmem:[#allocation4 + $0x90] sm:$0xff]
    %v2770 = vld [vmem:[#allocation4 + $0x98] sm:$0xff]
    %v2771 = vld [vmem:[#allocation4 + $0xa0] sm:$0xff]
    %v2772 = vld [vmem:[#allocation4 + $0xa8] sm:$0xff]
    %v2773 = vld [vmem:[#allocation4 + $0xb0] sm:$0xff]
    %v2774 = vld [vmem:[#allocation4 + $0xb8] sm:$0xff]
    %v2775 = vld [vmem:[#allocation4 + $0xc0] sm:$0xff]
    %v2776 = vld [vmem:[#allocation4 + $0xc8] sm:$0xff]
    %v2777 = vld [vmem:[#allocation4 + $0xd0] sm:$0xff]
    %v2778 = vld [vmem:[#allocation4 + $0xd8] sm:$0xff]
    %v2779 = vld [vmem:[#allocation4 + $0xe0] sm:$0xff]
    %v2780 = vld [vmem:[#allocation4 + $0xe8] sm:$0xff]
    %v2781 = vld [vmem:[#allocation4 + $0xf0] sm:$0xff]
    %v2782 = vld [vmem:[#allocation4 + $0xf8] sm:$0xff]
    %v2783 = vld [vmem:[#allocation4 + $0x100] sm:$0xff]
    %v2784 = vld [vmem:[#allocation4 + $0x108] sm:$0xff]
    %v2785 = vld [vmem:[#allocation4 + $0x110] sm:$0xff]
    %v2786 = vld [vmem:[#allocation4 + $0x118] sm:$0xff]
    %v2787 = vld [vmem:[#allocation4 + $0x120] sm:$0xff]
    %v2788 = vld [vmem:[#allocation4 + $0x128] sm:$0xff]
    %v2789 = vld [vmem:[#allocation4 + $0x130] sm:$0xff]
    %v2790 = vld [vmem:[#allocation4 + $0x138] sm:$0xff]
    %v2791 = vld [vmem:[#allocation4 + $0x140] sm:$0xff]
    %v2792 = vld [vmem:[#allocation4 + $0x148] sm:$0xff]
    %v2793 = vld [vmem:[#allocation4 + $0x150] sm:$0xff]
    %v2794 = vld [vmem:[#allocation4 + $0x158] sm:$0xff]
    %v2795 = vld [vmem:[#allocation4 + $0x160] sm:$0xff]
    %v2796 = vld [vmem:[#allocation4 + $0x168] sm:$0xff]
    %v2797 = vld [vmem:[#allocation4 + $0x170] sm:$0xff]
    %v2798 = vld [vmem:[#allocation4 + $0x178] sm:$0xff]
    %v2799 = vld [vmem:[#allocation4 + $0x180] sm:$0xff]
    %v2800 = vld [vmem:[#allocation4 + $0x188] sm:$0xff]
    %v2801 = vld [vmem:[#allocation4 + $0x190] sm:$0xff]
    %v2802 = vld [vmem:[#allocation4 + $0x198] sm:$0xff]
    %v2803 = vld [vmem:[#allocation4 + $0x1a0] sm:$0xff]
    %v2804 = vld [vmem:[#allocation4 + $0x1a8] sm:$0xff]
    %v2805 = vld [vmem:[#allocation4 + $0x1b0] sm:$0xff]
    %v2806 = vld [vmem:[#allocation4 + $0x1b8] sm:$0xff]
    %v2807 = vld [vmem:[#allocation4 + $0x1c0] sm:$0xff]
    %v2808 = vld [vmem:[#allocation4 + $0x1c8] sm:$0xff]
    %v2809 = vld [vmem:[#allocation4 + $0x1d0] sm:$0xff]
    %v2810 = vld [vmem:[#allocation4 + $0x1d8] sm:$0xff]
    %v2811 = vld [vmem:[#allocation4 + $0x1e0] sm:$0xff]
    %v2812 = vld [vmem:[#allocation4 + $0x1e8] sm:$0xff]
    %v2813 = vld [vmem:[#allocation4 + $0x1f0] sm:$0xff]
    %v2814 = vld [vmem:[#allocation4 + $0x1f8] sm:$0xff]
    %v2815 = vld [vmem:[#allocation4 + $0x200] sm:$0xff]
    %v2816 = vld [vmem:[#allocation4 + $0x208] sm:$0xff]
    %v2817 = vld [vmem:[#allocation4 + $0x210] sm:$0xff]
    %v2818 = vld [vmem:[#allocation4 + $0x218] sm:$0xff]
    %v2819 = vld [vmem:[#allocation4 + $0x220] sm:$0xff]
    %v2820 = vld [vmem:[#allocation4 + $0x228] sm:$0xff]
    %v2821 = vld [vmem:[#allocation4 + $0x230] sm:$0xff]
    %v2822 = vld [vmem:[#allocation4 + $0x238] sm:$0xff]
    %v2823 = vld [vmem:[#allocation4 + $0x240] sm:$0xff]
    %v2824 = vld [vmem:[#allocation4 + $0x248] sm:$0xff]
    %v2825 = vld [vmem:[#allocation4 + $0x250] sm:$0xff]
    %v2826 = vld [vmem:[#allocation4 + $0x258] sm:$0xff]
    %v2827 = vld [vmem:[#allocation4 + $0x260] sm:$0xff]
    %v2828 = vld [vmem:[#allocation4 + $0x268] sm:$0xff]
    %v2829 = vld [vmem:[#allocation4 + $0x270] sm:$0xff]
    %v2830 = vld [vmem:[#allocation4 + $0x278] sm:$0xff]
    %v2831 = vld [vmem:[#allocation4 + $0x280] sm:$0xff]
    %v2832 = vld [vmem:[#allocation4 + $0x288] sm:$0xff]
    %v2833 = vld [vmem:[#allocation4 + $0x290] sm:$0xff]
    %v2834 = vld [vmem:[#allocation4 + $0x298] sm:$0xff]
    %v2835 = vld [vmem:[#allocation4 + $0x2a0] sm:$0xff]
    %v2836 = vld [vmem:[#allocation4 + $0x2a8] sm:$0xff]
    %v2837 = vld [vmem:[#allocation4 + $0x2b0] sm:$0xff]
    %v2838 = vld [vmem:[#allocation4 + $0x2b8] sm:$0xff]
    %v2839 = vld [vmem:[#allocation4 + $0x2c0] sm:$0xff]
    %v2840 = vld [vmem:[#allocation4 + $0x2c8] sm:$0xff]
    %v2841 = vld [vmem:[#allocation4 + $0x2d0] sm:$0xff]
    %v2842 = vld [vmem:[#allocation4 + $0x2d8] sm:$0xff]
    %v2843 = vld [vmem:[#allocation4 + $0x2e0] sm:$0xff]
    %v2844 = vld [vmem:[#allocation4 + $0x2e8] sm:$0xff]
    %v2845 = vld [vmem:[#allocation4 + $0x2f0] sm:$0xff]
    %v2846 = vld [vmem:[#allocation4 + $0x2f8] sm:$0xff]
    %v2847 = vld [vmem:[#allocation4 + $0x300] sm:$0xff]
    %v2848 = vld [vmem:[#allocation4 + $0x308] sm:$0xff]
    %v2849 = vld [vmem:[#allocation4 + $0x310] sm:$0xff]
    %v2850 = vld [vmem:[#allocation4 + $0x318] sm:$0xff]
    %v2851 = vld [vmem:[#allocation4 + $0x320] sm:$0xff]
    %v2852 = vld [vmem:[#allocation4 + $0x328] sm:$0xff]
    %v2853 = vld [vmem:[#allocation4 + $0x330] sm:$0xff]
    %v2854 = vld [vmem:[#allocation4 + $0x338] sm:$0xff]
    %v2855 = vld [vmem:[#allocation4 + $0x340] sm:$0xff]
    %v2856 = vld [vmem:[#allocation4 + $0x348] sm:$0xff]
    %v2857 = vld [vmem:[#allocation4 + $0x350] sm:$0xff]
    %v2858 = vld [vmem:[#allocation4 + $0x358] sm:$0xff]
    %v2859 = vld [vmem:[#allocation4 + $0x360] sm:$0xff]
    %v2860 = vld [vmem:[#allocation4 + $0x368] sm:$0xff]
    %v2861 = vld [vmem:[#allocation4 + $0x370] sm:$0xff]
    %v2862 = vld [vmem:[#allocation4 + $0x378] sm:$0xff]
    %v2863 = vld [vmem:[#allocation4 + $0x380] sm:$0xff]
    %v2864 = vld [vmem:[#allocation4 + $0x388] sm:$0xff]
    %v2865 = vld [vmem:[#allocation4 + $0x390] sm:$0xff]
    %v2866 = vld [vmem:[#allocation4 + $0x398] sm:$0xff]
    %v2867 = vld [vmem:[#allocation4 + $0x3a0] sm:$0xff]
    %v2868 = vld [vmem:[#allocation4 + $0x3a8] sm:$0xff]
    %v2869 = vld [vmem:[#allocation4 + $0x3b0] sm:$0xff]
    %v2870 = vld [vmem:[#allocation4 + $0x3b8] sm:$0xff]
    %v2871 = vld [vmem:[#allocation4 + $0x3c0] sm:$0xff]
    %v2872 = vld [vmem:[#allocation4 + $0x3c8] sm:$0xff]
    %v2873 = vld [vmem:[#allocation4 + $0x3d0] sm:$0xff]
    %v2874 = vld [vmem:[#allocation4 + $0x3d8] sm:$0xff]
    %v2875 = vld [vmem:[#allocation4 + $0x3e0] sm:$0xff]
    %v2876 = vld [vmem:[#allocation4 + $0x3e8] sm:$0xff]
    %v2877 = vld [vmem:[#allocation4 + $0x3f0] sm:$0xff]
    %v2878 = vld [vmem:[#allocation4 + $0x3f8] sm:$0xff]
    %v2879 = vld [vmem:[#allocation4 + $0x400] sm:$0xff]
    %v2880 = vld [vmem:[#allocation4 + $0x408] sm:$0xff]
    %v2881 = vld [vmem:[#allocation4 + $0x410] sm:$0xff]
    %v2882 = vld [vmem:[#allocation4 + $0x418] sm:$0xff]
    %v2883 = vld [vmem:[#allocation4 + $0x420] sm:$0xff]
    %v2884 = vld [vmem:[#allocation4 + $0x428] sm:$0xff]
    %v2885 = vld [vmem:[#allocation4 + $0x430] sm:$0xff]
    %v2886 = vld [vmem:[#allocation4 + $0x438] sm:$0xff]
    %v2887 = vld [vmem:[#allocation4 + $0x440] sm:$0xff]
    %v2888 = vld [vmem:[#allocation4 + $0x448] sm:$0xff]
    %v2889 = vld [vmem:[#allocation4 + $0x450] sm:$0xff]
    %v2890 = vld [vmem:[#allocation4 + $0x458] sm:$0xff]
    %v2891 = vld [vmem:[#allocation4 + $0x460] sm:$0xff]
    %v2892 = vld [vmem:[#allocation4 + $0x468] sm:$0xff]
    %v2893 = vld [vmem:[#allocation4 + $0x470] sm:$0xff]
    %v2894 = vld [vmem:[#allocation4 + $0x478] sm:$0xff]
    %v2895 = vld [vmem:[#allocation4 + $0x480] sm:$0xff]
    %v2896 = vld [vmem:[#allocation4 + $0x488] sm:$0xff]
    %v2897 = vld [vmem:[#allocation4 + $0x490] sm:$0xff]
    %v2898 = vld [vmem:[#allocation4 + $0x498] sm:$0xff]
    %v2899 = vld [vmem:[#allocation4 + $0x4a0] sm:$0xff]
    %v2900 = vld [vmem:[#allocation4 + $0x4a8] sm:$0xff]
    %v2901 = vld [vmem:[#allocation4 + $0x4b0] sm:$0xff]
    %v2902 = vld [vmem:[#allocation4 + $0x4b8] sm:$0xff]
    %v2903 = vld [vmem:[#allocation4 + $0x4c0] sm:$0xff]
    %v2904 = vld [vmem:[#allocation4 + $0x4c8] sm:$0xff]
    %v2905 = vld [vmem:[#allocation4 + $0x4d0] sm:$0xff]
    %v2906 = vld [vmem:[#allocation4 + $0x4d8] sm:$0xff]
    %v2907 = vld [vmem:[#allocation4 + $0x4e0] sm:$0xff]
    %v2908 = vld [vmem:[#allocation4 + $0x4e8] sm:$0xff]
    %v2909 = vld [vmem:[#allocation4 + $0x4f0] sm:$0xff]
    %v2910 = vld [vmem:[#allocation4 + $0x4f8] sm:$0xff]
    %v3071 = vunpack.c.l.b16 %v2751
    %v3072 = vunpack.c.h.b16 %v2751
    %v3073 = vunpack.c.l.b16 %v2752
    %v3074 = vunpack.c.h.b16 %v2752
    %v3075 = vunpack.c.l.b16 %v2753
    %v3076 = vunpack.c.h.b16 %v2753
    %v3077 = vunpack.c.l.b16 %v2754
    %v3078 = vunpack.c.h.b16 %v2754
    %v3079 = vunpack.c.l.b16 %v2755
    %v3080 = vunpack.c.h.b16 %v2755
    %v3081 = vunpack.c.l.b16 %v2756
    %v3082 = vunpack.c.h.b16 %v2756
    %v3083 = vunpack.c.l.b16 %v2757
    %v3084 = vunpack.c.h.b16 %v2757
    %v3085 = vunpack.c.l.b16 %v2758
    %v3086 = vunpack.c.h.b16 %v2758
    %v3087 = vunpack.c.l.b16 %v2759
    %v3088 = vunpack.c.h.b16 %v2759
    %v3089 = vunpack.c.l.b16 %v2760
    %v3090 = vunpack.c.h.b16 %v2760
    %v3091 = vunpack.c.l.b16 %v2761
    %v3092 = vunpack.c.h.b16 %v2761
    %v3093 = vunpack.c.l.b16 %v2762
    %v3094 = vunpack.c.h.b16 %v2762
    %v3095 = vunpack.c.l.b16 %v2763
    %v3096 = vunpack.c.h.b16 %v2763
    %v3097 = vunpack.c.l.b16 %v2764
    %v3098 = vunpack.c.h.b16 %v2764
    %v3099 = vunpack.c.l.b16 %v2765
    %v3100 = vunpack.c.h.b16 %v2765
    %v3101 = vunpack.c.l.b16 %v2766
    %v3102 = vunpack.c.h.b16 %v2766
    %v3103 = vunpack.c.l.b16 %v2767
    %v3104 = vunpack.c.h.b16 %v2767
    %v3105 = vunpack.c.l.b16 %v2768
    %v3106 = vunpack.c.h.b16 %v2768
    %v3107 = vunpack.c.l.b16 %v2769
    %v3108 = vunpack.c.h.b16 %v2769
    %v3109 = vunpack.c.l.b16 %v2770
    %v3110 = vunpack.c.h.b16 %v2770
    %v3111 = vunpack.c.l.b16 %v2771
    %v3112 = vunpack.c.h.b16 %v2771
    %v3113 = vunpack.c.l.b16 %v2772
    %v3114 = vunpack.c.h.b16 %v2772
    %v3115 = vunpack.c.l.b16 %v2773
    %v3116 = vunpack.c.h.b16 %v2773
    %v3117 = vunpack.c.l.b16 %v2774
    %v3118 = vunpack.c.h.b16 %v2774
    %v3119 = vunpack.c.l.b16 %v2775
    %v3120 = vunpack.c.h.b16 %v2775
    %v3121 = vunpack.c.l.b16 %v2776
    %v3122 = vunpack.c.h.b16 %v2776
    %v3123 = vunpack.c.l.b16 %v2777
    %v3124 = vunpack.c.h.b16 %v2777
    %v3125 = vunpack.c.l.b16 %v2778
    %v3126 = vunpack.c.h.b16 %v2778
    %v3127 = vunpack.c.l.b16 %v2779
    %v3128 = vunpack.c.h.b16 %v2779
    %v3129 = vunpack.c.l.b16 %v2780
    %v3130 = vunpack.c.h.b16 %v2780
    %v3131 = vunpack.c.l.b16 %v2781
    %v3132 = vunpack.c.h.b16 %v2781
    %v3133 = vunpack.c.l.b16 %v2782
    %v3134 = vunpack.c.h.b16 %v2782
    %v3135 = vunpack.c.l.b16 %v2783
    %v3136 = vunpack.c.h.b16 %v2783
    %v3137 = vunpack.c.l.b16 %v2784
    %v3138 = vunpack.c.h.b16 %v2784
    %v3139 = vunpack.c.l.b16 %v2785
    %v3140 = vunpack.c.h.b16 %v2785
    %v3141 = vunpack.c.l.b16 %v2786
    %v3142 = vunpack.c.h.b16 %v2786
    %v3143 = vunpack.c.l.b16 %v2787
    %v3144 = vunpack.c.h.b16 %v2787
    %v3145 = vunpack.c.l.b16 %v2788
    %v3146 = vunpack.c.h.b16 %v2788
    %v3147 = vunpack.c.l.b16 %v2789
    %v3148 = vunpack.c.h.b16 %v2789
    %v3149 = vunpack.c.l.b16 %v2790
    %v3150 = vunpack.c.h.b16 %v2790
    %v3151 = vunpack.c.l.b16 %v2791
    %v3152 = vunpack.c.h.b16 %v2791
    %v3153 = vunpack.c.l.b16 %v2792
    %v3154 = vunpack.c.h.b16 %v2792
    %v3155 = vunpack.c.l.b16 %v2793
    %v3156 = vunpack.c.h.b16 %v2793
    %v3157 = vunpack.c.l.b16 %v2794
    %v3158 = vunpack.c.h.b16 %v2794
    %v3159 = vunpack.c.l.b16 %v2795
    %v3160 = vunpack.c.h.b16 %v2795
    %v3161 = vunpack.c.l.b16 %v2796
    %v3162 = vunpack.c.h.b16 %v2796
    %v3163 = vunpack.c.l.b16 %v2797
    %v3164 = vunpack.c.h.b16 %v2797
    %v3165 = vunpack.c.l.b16 %v2798
    %v3166 = vunpack.c.h.b16 %v2798
    %v3167 = vunpack.c.l.b16 %v2799
    %v3168 = vunpack.c.h.b16 %v2799
    %v3169 = vunpack.c.l.b16 %v2800
    %v3170 = vunpack.c.h.b16 %v2800
    %v3171 = vunpack.c.l.b16 %v2801
    %v3172 = vunpack.c.h.b16 %v2801
    %v3173 = vunpack.c.l.b16 %v2802
    %v3174 = vunpack.c.h.b16 %v2802
    %v3175 = vunpack.c.l.b16 %v2803
    %v3176 = vunpack.c.h.b16 %v2803
    %v3177 = vunpack.c.l.b16 %v2804
    %v3178 = vunpack.c.h.b16 %v2804
    %v3179 = vunpack.c.l.b16 %v2805
    %v3180 = vunpack.c.h.b16 %v2805
    %v3181 = vunpack.c.l.b16 %v2806
    %v3182 = vunpack.c.h.b16 %v2806
    %v3183 = vunpack.c.l.b16 %v2807
    %v3184 = vunpack.c.h.b16 %v2807
    %v3185 = vunpack.c.l.b16 %v2808
    %v3186 = vunpack.c.h.b16 %v2808
    %v3187 = vunpack.c.l.b16 %v2809
    %v3188 = vunpack.c.h.b16 %v2809
    %v3189 = vunpack.c.l.b16 %v2810
    %v3190 = vunpack.c.h.b16 %v2810
    %v3191 = vunpack.c.l.b16 %v2811
    %v3192 = vunpack.c.h.b16 %v2811
    %v3193 = vunpack.c.l.b16 %v2812
    %v3194 = vunpack.c.h.b16 %v2812
    %v3195 = vunpack.c.l.b16 %v2813
    %v3196 = vunpack.c.h.b16 %v2813
    %v3197 = vunpack.c.l.b16 %v2814
    %v3198 = vunpack.c.h.b16 %v2814
    %v3199 = vunpack.c.l.b16 %v2815
    %v3200 = vunpack.c.h.b16 %v2815
    %v3201 = vunpack.c.l.b16 %v2816
    %v3202 = vunpack.c.h.b16 %v2816
    %v3203 = vunpack.c.l.b16 %v2817
    %v3204 = vunpack.c.h.b16 %v2817
    %v3205 = vunpack.c.l.b16 %v2818
    %v3206 = vunpack.c.h.b16 %v2818
    %v3207 = vunpack.c.l.b16 %v2819
    %v3208 = vunpack.c.h.b16 %v2819
    %v3209 = vunpack.c.l.b16 %v2820
    %v3210 = vunpack.c.h.b16 %v2820
    %v3211 = vunpack.c.l.b16 %v2821
    %v3212 = vunpack.c.h.b16 %v2821
    %v3213 = vunpack.c.l.b16 %v2822
    %v3214 = vunpack.c.h.b16 %v2822
    %v3215 = vunpack.c.l.b16 %v2823
    %v3216 = vunpack.c.h.b16 %v2823
    %v3217 = vunpack.c.l.b16 %v2824
    %v3218 = vunpack.c.h.b16 %v2824
    %v3219 = vunpack.c.l.b16 %v2825
    %v3220 = vunpack.c.h.b16 %v2825
    %v3221 = vunpack.c.l.b16 %v2826
    %v3222 = vunpack.c.h.b16 %v2826
    %v3223 = vunpack.c.l.b16 %v2827
    %v3224 = vunpack.c.h.b16 %v2827
    %v3225 = vunpack.c.l.b16 %v2828
    %v3226 = vunpack.c.h.b16 %v2828
    %v3227 = vunpack.c.l.b16 %v2829
    %v3228 = vunpack.c.h.b16 %v2829
    %v3229 = vunpack.c.l.b16 %v2830
    %v3230 = vunpack.c.h.b16 %v2830
    %v3231 = vunpack.c.l.b16 %v2831
    %v3232 = vunpack.c.h.b16 %v2831
    %v3233 = vunpack.c.l.b16 %v2832
    %v3234 = vunpack.c.h.b16 %v2832
    %v3235 = vunpack.c.l.b16 %v2833
    %v3236 = vunpack.c.h.b16 %v2833
    %v3237 = vunpack.c.l.b16 %v2834
    %v3238 = vunpack.c.h.b16 %v2834
    %v3239 = vunpack.c.l.b16 %v2835
    %v3240 = vunpack.c.h.b16 %v2835
    %v3241 = vunpack.c.l.b16 %v2836
    %v3242 = vunpack.c.h.b16 %v2836
    %v3243 = vunpack.c.l.b16 %v2837
    %v3244 = vunpack.c.h.b16 %v2837
    %v3245 = vunpack.c.l.b16 %v2838
    %v3246 = vunpack.c.h.b16 %v2838
    %v3247 = vunpack.c.l.b16 %v2839
    %v3248 = vunpack.c.h.b16 %v2839
    %v3249 = vunpack.c.l.b16 %v2840
    %v3250 = vunpack.c.h.b16 %v2840
    %v3251 = vunpack.c.l.b16 %v2841
    %v3252 = vunpack.c.h.b16 %v2841
    %v3253 = vunpack.c.l.b16 %v2842
    %v3254 = vunpack.c.h.b16 %v2842
    %v3255 = vunpack.c.l.b16 %v2843
    %v3256 = vunpack.c.h.b16 %v2843
    %v3257 = vunpack.c.l.b16 %v2844
    %v3258 = vunpack.c.h.b16 %v2844
    %v3259 = vunpack.c.l.b16 %v2845
    %v3260 = vunpack.c.h.b16 %v2845
    %v3261 = vunpack.c.l.b16 %v2846
    %v3262 = vunpack.c.h.b16 %v2846
    %v3263 = vunpack.c.l.b16 %v2847
    %v3264 = vunpack.c.h.b16 %v2847
    %v3265 = vunpack.c.l.b16 %v2848
    %v3266 = vunpack.c.h.b16 %v2848
    %v3267 = vunpack.c.l.b16 %v2849
    %v3268 = vunpack.c.h.b16 %v2849
    %v3269 = vunpack.c.l.b16 %v2850
    %v3270 = vunpack.c.h.b16 %v2850
    %v3271 = vunpack.c.l.b16 %v2851
    %v3272 = vunpack.c.h.b16 %v2851
    %v3273 = vunpack.c.l.b16 %v2852
    %v3274 = vunpack.c.h.b16 %v2852
    %v3275 = vunpack.c.l.b16 %v2853
    %v3276 = vunpack.c.h.b16 %v2853
    %v3277 = vunpack.c.l.b16 %v2854
    %v3278 = vunpack.c.h.b16 %v2854
    %v3279 = vunpack.c.l.b16 %v2855
    %v3280 = vunpack.c.h.b16 %v2855
    %v3281 = vunpack.c.l.b16 %v2856
    %v3282 = vunpack.c.h.b16 %v2856
    %v3283 = vunpack.c.l.b16 %v2857
    %v3284 = vunpack.c.h.b16 %v2857
    %v3285 = vunpack.c.l.b16 %v2858
    %v3286 = vunpack.c.h.b16 %v2858
    %v3287 = vunpack.c.l.b16 %v2859
    %v3288 = vunpack.c.h.b16 %v2859
    %v3289 = vunpack.c.l.b16 %v2860
    %v3290 = vunpack.c.h.b16 %v2860
    %v3291 = vunpack.c.l.b16 %v2861
    %v3292 = vunpack.c.h.b16 %v2861
    %v3293 = vunpack.c.l.b16 %v2862
    %v3294 = vunpack.c.h.b16 %v2862
    %v3295 = vunpack.c.l.b16 %v2863
    %v3296 = vunpack.c.h.b16 %v2863
    %v3297 = vunpack.c.l.b16 %v2864
    %v3298 = vunpack.c.h.b16 %v2864
    %v3299 = vunpack.c.l.b16 %v2865
    %v3300 = vunpack.c.h.b16 %v2865
    %v3301 = vunpack.c.l.b16 %v2866
    %v3302 = vunpack.c.h.b16 %v2866
    %v3303 = vunpack.c.l.b16 %v2867
    %v3304 = vunpack.c.h.b16 %v2867
    %v3305 = vunpack.c.l.b16 %v2868
    %v3306 = vunpack.c.h.b16 %v2868
    %v3307 = vunpack.c.l.b16 %v2869
    %v3308 = vunpack.c.h.b16 %v2869
    %v3309 = vunpack.c.l.b16 %v2870
    %v3310 = vunpack.c.h.b16 %v2870
    %v3311 = vunpack.c.l.b16 %v2871
    %v3312 = vunpack.c.h.b16 %v2871
    %v3313 = vunpack.c.l.b16 %v2872
    %v3314 = vunpack.c.h.b16 %v2872
    %v3315 = vunpack.c.l.b16 %v2873
    %v3316 = vunpack.c.h.b16 %v2873
    %v3317 = vunpack.c.l.b16 %v2874
    %v3318 = vunpack.c.h.b16 %v2874
    %v3319 = vunpack.c.l.b16 %v2875
    %v3320 = vunpack.c.h.b16 %v2875
    %v3321 = vunpack.c.l.b16 %v2876
    %v3322 = vunpack.c.h.b16 %v2876
    %v3323 = vunpack.c.l.b16 %v2877
    %v3324 = vunpack.c.h.b16 %v2877
    %v3325 = vunpack.c.l.b16 %v2878
    %v3326 = vunpack.c.h.b16 %v2878
    %v3327 = vunpack.c.l.b16 %v2879
    %v3328 = vunpack.c.h.b16 %v2879
    %v3329 = vunpack.c.l.b16 %v2880
    %v3330 = vunpack.c.h.b16 %v2880
    %v3331 = vunpack.c.l.b16 %v2881
    %v3332 = vunpack.c.h.b16 %v2881
    %v3333 = vunpack.c.l.b16 %v2882
    %v3334 = vunpack.c.h.b16 %v2882
    %v3335 = vunpack.c.l.b16 %v2883
    %v3336 = vunpack.c.h.b16 %v2883
    %v3337 = vunpack.c.l.b16 %v2884
    %v3338 = vunpack.c.h.b16 %v2884
    %v3339 = vunpack.c.l.b16 %v2885
    %v3340 = vunpack.c.h.b16 %v2885
    %v3341 = vunpack.c.l.b16 %v2886
    %v3342 = vunpack.c.h.b16 %v2886
    %v3343 = vunpack.c.l.b16 %v2887
    %v3344 = vunpack.c.h.b16 %v2887
    %v3345 = vunpack.c.l.b16 %v2888
    %v3346 = vunpack.c.h.b16 %v2888
    %v3347 = vunpack.c.l.b16 %v2889
    %v3348 = vunpack.c.h.b16 %v2889
    %v3349 = vunpack.c.l.b16 %v2890
    %v3350 = vunpack.c.h.b16 %v2890
    %v3351 = vunpack.c.l.b16 %v2891
    %v3352 = vunpack.c.h.b16 %v2891
    %v3353 = vunpack.c.l.b16 %v2892
    %v3354 = vunpack.c.h.b16 %v2892
    %v3355 = vunpack.c.l.b16 %v2893
    %v3356 = vunpack.c.h.b16 %v2893
    %v3357 = vunpack.c.l.b16 %v2894
    %v3358 = vunpack.c.h.b16 %v2894
    %v3359 = vunpack.c.l.b16 %v2895
    %v3360 = vunpack.c.h.b16 %v2895
    %v3361 = vunpack.c.l.b16 %v2896
    %v3362 = vunpack.c.h.b16 %v2896
    %v3363 = vunpack.c.l.b16 %v2897
    %v3364 = vunpack.c.h.b16 %v2897
    %v3365 = vunpack.c.l.b16 %v2898
    %v3366 = vunpack.c.h.b16 %v2898
    %v3367 = vunpack.c.l.b16 %v2899
    %v3368 = vunpack.c.h.b16 %v2899
    %v3369 = vunpack.c.l.b16 %v2900
    %v3370 = vunpack.c.h.b16 %v2900
    %v3371 = vunpack.c.l.b16 %v2901
    %v3372 = vunpack.c.h.b16 %v2901
    %v3373 = vunpack.c.l.b16 %v2902
    %v3374 = vunpack.c.h.b16 %v2902
    %v3375 = vunpack.c.l.b16 %v2903
    %v3376 = vunpack.c.h.b16 %v2903
    %v3377 = vunpack.c.l.b16 %v2904
    %v3378 = vunpack.c.h.b16 %v2904
    %v3379 = vunpack.c.l.b16 %v2905
    %v3380 = vunpack.c.h.b16 %v2905
    %v3381 = vunpack.c.l.b16 %v2906
    %v3382 = vunpack.c.h.b16 %v2906
    %v3383 = vunpack.c.l.b16 %v2907
    %v3384 = vunpack.c.h.b16 %v2907
    %v3385 = vunpack.c.l.b16 %v2908
    %v3386 = vunpack.c.h.b16 %v2908
    %v3387 = vunpack.c.l.b16 %v2909
    %v3388 = vunpack.c.h.b16 %v2909
    %v3389 = vunpack.c.l.b16 %v2910
    %v3390 = vunpack.c.h.b16 %v2910
    %v3391 = vpack.c.b16 %v3075, %v3071
    %v3392 = vpack.c.b16 %v3076, %v3072
    %v3393 = vpack.c.b16 %v3077, %v3073
    %v3394 = vpack.c.b16 %v3078, %v3074
    %v3395 = vpack.c.b16 %v3083, %v3079
    %v3396 = vpack.c.b16 %v3084, %v3080
    %v3397 = vpack.c.b16 %v3085, %v3081
    %v3398 = vpack.c.b16 %v3086, %v3082
    %v3399 = vpack.c.b16 %v3091, %v3087
    %v3400 = vpack.c.b16 %v3092, %v3088
    %v3401 = vpack.c.b16 %v3093, %v3089
    %v3402 = vpack.c.b16 %v3094, %v3090
    %v3403 = vpack.c.b16 %v3099, %v3095
    %v3404 = vpack.c.b16 %v3100, %v3096
    %v3405 = vpack.c.b16 %v3101, %v3097
    %v3406 = vpack.c.b16 %v3102, %v3098
    %v3407 = vpack.c.b16 %v3107, %v3103
    %v3408 = vpack.c.b16 %v3108, %v3104
    %v3409 = vpack.c.b16 %v3109, %v3105
    %v3410 = vpack.c.b16 %v3110, %v3106
    %v3411 = vpack.c.b16 %v3115, %v3111
    %v3412 = vpack.c.b16 %v3116, %v3112
    %v3413 = vpack.c.b16 %v3117, %v3113
    %v3414 = vpack.c.b16 %v3118, %v3114
    %v3415 = vpack.c.b16 %v3123, %v3119
    %v3416 = vpack.c.b16 %v3124, %v3120
    %v3417 = vpack.c.b16 %v3125, %v3121
    %v3418 = vpack.c.b16 %v3126, %v3122
    %v3419 = vpack.c.b16 %v3131, %v3127
    %v3420 = vpack.c.b16 %v3132, %v3128
    %v3421 = vpack.c.b16 %v3133, %v3129
    %v3422 = vpack.c.b16 %v3134, %v3130
    %v3423 = vpack.c.b16 %v3139, %v3135
    %v3424 = vpack.c.b16 %v3140, %v3136
    %v3425 = vpack.c.b16 %v3141, %v3137
    %v3426 = vpack.c.b16 %v3142, %v3138
    %v3427 = vpack.c.b16 %v3147, %v3143
    %v3428 = vpack.c.b16 %v3148, %v3144
    %v3429 = vpack.c.b16 %v3149, %v3145
    %v3430 = vpack.c.b16 %v3150, %v3146
    %v3431 = vpack.c.b16 %v3155, %v3151
    %v3432 = vpack.c.b16 %v3156, %v3152
    %v3433 = vpack.c.b16 %v3157, %v3153
    %v3434 = vpack.c.b16 %v3158, %v3154
    %v3435 = vpack.c.b16 %v3163, %v3159
    %v3436 = vpack.c.b16 %v3164, %v3160
    %v3437 = vpack.c.b16 %v3165, %v3161
    %v3438 = vpack.c.b16 %v3166, %v3162
    %v3439 = vpack.c.b16 %v3171, %v3167
    %v3440 = vpack.c.b16 %v3172, %v3168
    %v3441 = vpack.c.b16 %v3173, %v3169
    %v3442 = vpack.c.b16 %v3174, %v3170
    %v3443 = vpack.c.b16 %v3179, %v3175
    %v3444 = vpack.c.b16 %v3180, %v3176
    %v3445 = vpack.c.b16 %v3181, %v3177
    %v3446 = vpack.c.b16 %v3182, %v3178
    %v3447 = vpack.c.b16 %v3187, %v3183
    %v3448 = vpack.c.b16 %v3188, %v3184
    %v3449 = vpack.c.b16 %v3189, %v3185
    %v3450 = vpack.c.b16 %v3190, %v3186
    %v3451 = vpack.c.b16 %v3195, %v3191
    %v3452 = vpack.c.b16 %v3196, %v3192
    %v3453 = vpack.c.b16 %v3197, %v3193
    %v3454 = vpack.c.b16 %v3198, %v3194
    %v3455 = vpack.c.b16 %v3203, %v3199
    %v3456 = vpack.c.b16 %v3204, %v3200
    %v3457 = vpack.c.b16 %v3205, %v3201
    %v3458 = vpack.c.b16 %v3206, %v3202
    %v3459 = vpack.c.b16 %v3211, %v3207
    %v3460 = vpack.c.b16 %v3212, %v3208
    %v3461 = vpack.c.b16 %v3213, %v3209
    %v3462 = vpack.c.b16 %v3214, %v3210
    %v3463 = vpack.c.b16 %v3219, %v3215
    %v3464 = vpack.c.b16 %v3220, %v3216
    %v3465 = vpack.c.b16 %v3221, %v3217
    %v3466 = vpack.c.b16 %v3222, %v3218
    %v3467 = vpack.c.b16 %v3227, %v3223
    %v3468 = vpack.c.b16 %v3228, %v3224
    %v3469 = vpack.c.b16 %v3229, %v3225
    %v3470 = vpack.c.b16 %v3230, %v3226
    %v3471 = vpack.c.b16 %v3235, %v3231
    %v3472 = vpack.c.b16 %v3236, %v3232
    %v3473 = vpack.c.b16 %v3237, %v3233
    %v3474 = vpack.c.b16 %v3238, %v3234
    %v3475 = vpack.c.b16 %v3243, %v3239
    %v3476 = vpack.c.b16 %v3244, %v3240
    %v3477 = vpack.c.b16 %v3245, %v3241
    %v3478 = vpack.c.b16 %v3246, %v3242
    %v3479 = vpack.c.b16 %v3251, %v3247
    %v3480 = vpack.c.b16 %v3252, %v3248
    %v3481 = vpack.c.b16 %v3253, %v3249
    %v3482 = vpack.c.b16 %v3254, %v3250
    %v3483 = vpack.c.b16 %v3259, %v3255
    %v3484 = vpack.c.b16 %v3260, %v3256
    %v3485 = vpack.c.b16 %v3261, %v3257
    %v3486 = vpack.c.b16 %v3262, %v3258
    %v3487 = vpack.c.b16 %v3267, %v3263
    %v3488 = vpack.c.b16 %v3268, %v3264
    %v3489 = vpack.c.b16 %v3269, %v3265
    %v3490 = vpack.c.b16 %v3270, %v3266
    %v3491 = vpack.c.b16 %v3275, %v3271
    %v3492 = vpack.c.b16 %v3276, %v3272
    %v3493 = vpack.c.b16 %v3277, %v3273
    %v3494 = vpack.c.b16 %v3278, %v3274
    %v3495 = vpack.c.b16 %v3283, %v3279
    %v3496 = vpack.c.b16 %v3284, %v3280
    %v3497 = vpack.c.b16 %v3285, %v3281
    %v3498 = vpack.c.b16 %v3286, %v3282
    %v3499 = vpack.c.b16 %v3291, %v3287
    %v3500 = vpack.c.b16 %v3292, %v3288
    %v3501 = vpack.c.b16 %v3293, %v3289
    %v3502 = vpack.c.b16 %v3294, %v3290
    %v3503 = vpack.c.b16 %v3299, %v3295
    %v3504 = vpack.c.b16 %v3300, %v3296
    %v3505 = vpack.c.b16 %v3301, %v3297
    %v3506 = vpack.c.b16 %v3302, %v3298
    %v3507 = vpack.c.b16 %v3307, %v3303
    %v3508 = vpack.c.b16 %v3308, %v3304
    %v3509 = vpack.c.b16 %v3309, %v3305
    %v3510 = vpack.c.b16 %v3310, %v3306
    %v3511 = vpack.c.b16 %v3315, %v3311
    %v3512 = vpack.c.b16 %v3316, %v3312
    %v3513 = vpack.c.b16 %v3317, %v3313
    %v3514 = vpack.c.b16 %v3318, %v3314
    %v3515 = vpack.c.b16 %v3323, %v3319
    %v3516 = vpack.c.b16 %v3324, %v3320
    %v3517 = vpack.c.b16 %v3325, %v3321
    %v3518 = vpack.c.b16 %v3326, %v3322
    %v3519 = vpack.c.b16 %v3331, %v3327
    %v3520 = vpack.c.b16 %v3332, %v3328
    %v3521 = vpack.c.b16 %v3333, %v3329
    %v3522 = vpack.c.b16 %v3334, %v3330
    %v3523 = vpack.c.b16 %v3339, %v3335
    %v3524 = vpack.c.b16 %v3340, %v3336
    %v3525 = vpack.c.b16 %v3341, %v3337
    %v3526 = vpack.c.b16 %v3342, %v3338
    %v3527 = vpack.c.b16 %v3347, %v3343
    %v3528 = vpack.c.b16 %v3348, %v3344
    %v3529 = vpack.c.b16 %v3349, %v3345
    %v3530 = vpack.c.b16 %v3350, %v3346
    %v3531 = vpack.c.b16 %v3355, %v3351
    %v3532 = vpack.c.b16 %v3356, %v3352
    %v3533 = vpack.c.b16 %v3357, %v3353
    %v3534 = vpack.c.b16 %v3358, %v3354
    %v3535 = vpack.c.b16 %v3363, %v3359
    %v3536 = vpack.c.b16 %v3364, %v3360
    %v3537 = vpack.c.b16 %v3365, %v3361
    %v3538 = vpack.c.b16 %v3366, %v3362
    %v3539 = vpack.c.b16 %v3371, %v3367
    %v3540 = vpack.c.b16 %v3372, %v3368
    %v3541 = vpack.c.b16 %v3373, %v3369
    %v3542 = vpack.c.b16 %v3374, %v3370
    %v3543 = vpack.c.b16 %v3379, %v3375
    %v3544 = vpack.c.b16 %v3380, %v3376
    %v3545 = vpack.c.b16 %v3381, %v3377
    %v3546 = vpack.c.b16 %v3382, %v3378
    %v3547 = vpack.c.b16 %v3387, %v3383
    %v3548 = vpack.c.b16 %v3388, %v3384
    %v3549 = vpack.c.b16 %v3389, %v3385
    %v3550 = vpack.c.b16 %v3390, %v3386
    %3711 = vmatprep.subr.bf16.mxu0 %v3392
    %3712 = vmatpush1.bf16.msra.mxu0 %v3391
    %3713 = vmatprep.subr.bf16.mxu0 %v3396
    %3714 = vmatpush1.bf16.msra.mxu0 %v3395
    %3715 = vmatprep.subr.bf16.mxu0 %v3400
    %3716 = vmatpush1.bf16.msra.mxu0 %v3399
    %3717 = vmatprep.subr.bf16.mxu0 %v3404
    %3718 = vmatpush1.bf16.msra.mxu0 %v3403
    %3719 = vmatprep.subr.bf16.mxu0 %v3408
    %3720 = vmatpush1.bf16.msra.mxu0 %v3407
    %3721 = vmatprep.subr.bf16.mxu0 %v3412
    %3722 = vmatpush1.bf16.msra.mxu0 %v3411
    %3723 = vmatprep.subr.bf16.mxu0 %v3416
    %3724 = vmatpush1.bf16.msra.mxu0 %v3415
    %3725 = vmatprep.subr.bf16.mxu0 %v3420
    %3726 = vmatpush1.bf16.msra.mxu0 %v3419
    %3727 = vmatprep.subr.bf16.mxu0 %v3424
    %3728 = vmatpush1.bf16.msra.mxu0 %v3423
    %3729 = vmatprep.subr.bf16.mxu0 %v3428
    %3730 = vmatpush1.bf16.msra.mxu0 %v3427
    %3731 = vmatprep.subr.bf16.mxu0 %v3432
    %3732 = vmatpush1.bf16.msra.mxu0 %v3431
    %3733 = vmatprep.subr.bf16.mxu0 %v3436
    %3734 = vmatpush1.bf16.msra.mxu0 %v3435
    %3735 = vmatprep.subr.bf16.mxu0 %v3440
    %3736 = vmatpush1.bf16.msra.mxu0 %v3439
    %3737 = vmatprep.subr.bf16.mxu0 %v3444
    %3738 = vmatpush1.bf16.msra.mxu0 %v3443
    %3739 = vmatprep.subr.bf16.mxu0 %v3448
    %3740 = vmatpush1.bf16.msra.mxu0 %v3447
    %3741 = vmatprep.subr.bf16.mxu0 %v3452
    %3742 = vmatpush1.bf16.msra.mxu0 %v3451
    %3743 = vmatprep.mubr.bf16.mxu0 %v2747
    %3744 = vmatmul.mubr.bf16.gmra.mrb[0].mxu0 %v2746
    %v3745 = vpop.f32.mrb[0].mxu0
    %v3746 = vadd.f32 0.0, %v3745
    %v3747 = vpop.f32.mrb[0].mxu0
    %v3748 = vadd.f32 0.0, %v3747
    %v3749 = vpop.f32.mrb[0].mxu0
    %v3750 = vadd.f32 0.0, %v3749
    %v3751 = vpop.f32.mrb[0].mxu0
    %v3752 = vadd.f32 0.0, %v3751
    %3753 = vdwg.mxu0
    %3754 = vmatprep.subr.bf16.mxu0 %v3456
    %3755 = vmatpush1.bf16.msra.mxu0 %v3455
    %3756 = vmatprep.subr.bf16.mxu0 %v3460
    %3757 = vmatpush1.bf16.msra.mxu0 %v3459
    %3758 = vmatprep.subr.bf16.mxu0 %v3464
    %3759 = vmatpush1.bf16.msra.mxu0 %v3463
    %3760 = vmatprep.subr.bf16.mxu0 %v3468
    %3761 = vmatpush1.bf16.msra.mxu0 %v3467
    %3762 = vmatprep.subr.bf16.mxu0 %v3472
    %3763 = vmatpush1.bf16.msra.mxu0 %v3471
    %3764 = vmatprep.subr.bf16.mxu0 %v3476
    %3765 = vmatpush1.bf16.msra.mxu0 %v3475
    %3766 = vmatprep.subr.bf16.mxu0 %v3480
    %3767 = vmatpush1.bf16.msra.mxu0 %v3479
    %3768 = vmatprep.subr.bf16.mxu0 %v3484
    %3769 = vmatpush1.bf16.msra.mxu0 %v3483
    %3770 = vmatprep.subr.bf16.mxu0 %v3488
    %3771 = vmatpush1.bf16.msra.mxu0 %v3487
    %3772 = vmatprep.subr.bf16.mxu0 %v3492
    %3773 = vmatpush1.bf16.msra.mxu0 %v3491
    %3774 = vmatprep.subr.bf16.mxu0 %v3496
    %3775 = vmatpush1.bf16.msra.mxu0 %v3495
    %3776 = vmatprep.subr.bf16.mxu0 %v3500
    %3777 = vmatpush1.bf16.msra.mxu0 %v3499
    %3778 = vmatprep.subr.bf16.mxu0 %v3504
    %3779 = vmatpush1.bf16.msra.mxu0 %v3503
    %3780 = vmatprep.subr.bf16.mxu0 %v3508
    %3781 = vmatpush1.bf16.msra.mxu0 %v3507
    %3782 = vmatprep.subr.bf16.mxu0 %v3512
    %3783 = vmatpush1.bf16.msra.mxu0 %v3511
    %3784 = vmatprep.subr.bf16.mxu0 %v3516
    %3785 = vmatpush1.bf16.msra.mxu0 %v3515
    %3786 = vmatprep.mubr.bf16.mxu0 %v2749
    %3787 = vmatmul.mubr.bf16.gmra.mrb[0].mxu0 %v2748
    %v3788 = vpop.f32.mrb[0].mxu0
    %v3789 = vadd.f32 %v3746, %v3788
    %v3790 = vpop.f32.mrb[0].mxu0
    %v3791 = vadd.f32 %v3748, %v3790
    %v3792 = vpop.f32.mrb[0].mxu0
    %v3793 = vadd.f32 %v3750, %v3792
    %v3794 = vpop.f32.mrb[0].mxu0
    %v3795 = vadd.f32 %v3752, %v3794
    %3796 = vdwg.mxu0
    %3797 = vmatprep.subr.bf16.mxu0 %v3520
    %3798 = vmatpush1.bf16.msra.mxu0 %v3519
    %3799 = vmatprep.subr.bf16.mxu0 %v3524
    %3800 = vmatpush1.bf16.msra.mxu0 %v3523
    %3801 = vmatprep.subr.bf16.mxu0 %v3528
    %3802 = vmatpush1.bf16.msra.mxu0 %v3527
    %3803 = vmatprep.subr.bf16.mxu0 %v3532
    %3804 = vmatpush1.bf16.msra.mxu0 %v3531
    %3805 = vmatprep.subr.bf16.mxu0 %v3536
    %3806 = vmatpush1.bf16.msra.mxu0 %v3535
    %3807 = vmatprep.subr.bf16.mxu0 %v3540
    %3808 = vmatpush1.bf16.msra.mxu0 %v3539
    %3809 = vmatprep.subr.bf16.mxu0 %v3544
    %3810 = vmatpush1.bf16.msra.mxu0 %v3543
    %3811 = vmatprep.subr.bf16.mxu0 %v3548
    %3812 = vmatpush1.bf16.msra.mxu0 %v3547
    %3813 = vmatprep.subr.bf16.mxu0 0
    %3814 = vmatpush1.bf16.msra.mxu0 0
    %3815 = vmatprep.subr.bf16.mxu0 0
    %3816 = vmatpush1.bf16.msra.mxu0 0
    %3817 = vmatprep.subr.bf16.mxu0 0
    %3818 = vmatpush1.bf16.msra.mxu0 0
    %3819 = vmatprep.subr.bf16.mxu0 0
    %3820 = vmatpush1.bf16.msra.mxu0 0
    %3821 = vmatprep.subr.bf16.mxu0 0
    %3822 = vmatpush1.bf16.msra.mxu0 0
    %3823 = vmatprep.subr.bf16.mxu0 0
    %3824 = vmatpush1.bf16.msra.mxu0 0
    %3825 = vmatprep.subr.bf16.mxu0 0
    %3826 = vmatpush1.bf16.msra.mxu0 0
    %3827 = vmatprep.subr.bf16.mxu0 0
    %3828 = vmatpush1.bf16.msra.mxu0 0
    %3829 = vmatprep.mubr.bf16.mxu0 0
    %3830 = vmatmul.mubr.bf16.gmra.mrb[0].mxu0 %v2750
    %v3831 = vpop.f32.mrb[0].mxu0
    %v3832 = vadd.f32 %v3789, %v3831
    %v3833 = vpop.f32.mrb[0].mxu0
    %v3834 = vadd.f32 %v3791, %v3833
    %v3835 = vpop.f32.mrb[0].mxu0
    %v3836 = vadd.f32 %v3793, %v3835
    %v3837 = vpop.f32.mrb[0].mxu0
    %v3838 = vadd.f32 %v3795, %v3837
    %3839 = vdwg.mxu0
    %3840 = vmatprep.subr.bf16.mxu0 %v3394
    %3841 = vmatpush1.bf16.msra.mxu0 %v3393
    %3842 = vmatprep.subr.bf16.mxu0 %v3398
    %3843 = vmatpush1.bf16.msra.mxu0 %v3397
    %3844 = vmatprep.subr.bf16.mxu0 %v3402
    %3845 = vmatpush1.bf16.msra.mxu0 %v3401
    %3846 = vmatprep.subr.bf16.mxu0 %v3406
    %3847 = vmatpush1.bf16.msra.mxu0 %v3405
    %3848 = vmatprep.subr.bf16.mxu0 %v3410
    %3849 = vmatpush1.bf16.msra.mxu0 %v3409
    %3850 = vmatprep.subr.bf16.mxu0 %v3414
    %3851 = vmatpush1.bf16.msra.mxu0 %v3413
    %3852 = vmatprep.subr.bf16.mxu0 %v3418
    %3853 = vmatpush1.bf16.msra.mxu0 %v3417
    %3854 = vmatprep.subr.bf16.mxu0 %v3422
    %3855 = vmatpush1.bf16.msra.mxu0 %v3421
    %3856 = vmatprep.subr.bf16.mxu0 %v3426
    %3857 = vmatpush1.bf16.msra.mxu0 %v3425
    %3858 = vmatprep.subr.bf16.mxu0 %v3430
    %3859 = vmatpush1.bf16.msra.mxu0 %v3429
    %3860 = vmatprep.subr.bf16.mxu0 %v3434
    %3861 = vmatpush1.bf16.msra.mxu0 %v3433
    %3862 = vmatprep.subr.bf16.mxu0 %v3438
    %3863 = vmatpush1.bf16.msra.mxu0 %v3437
    %3864 = vmatprep.subr.bf16.mxu0 %v3442
    %3865 = vmatpush1.bf16.msra.mxu0 %v3441
    %3866 = vmatprep.subr.bf16.mxu0 %v3446
    %3867 = vmatpush1.bf16.msra.mxu0 %v3445
    %3868 = vmatprep.subr.bf16.mxu0 %v3450
    %3869 = vmatpush1.bf16.msra.mxu0 %v3449
    %3870 = vmatprep.subr.bf16.mxu0 %v3454
    %3871 = vmatpush1.bf16.msra.mxu0 %v3453
    %3872 = vmatprep.mubr.bf16.mxu0 %v2747
    %3873 = vmatmul.mubr.bf16.gmra.mrb[0].mxu0 %v2746
    %v3874 = vpop.f32.mrb[0].mxu0
    %v3875 = vadd.f32 0.0, %v3874
    %v3876 = vpop.f32.mrb[0].mxu0
    %v3877 = vadd.f32 0.0, %v3876
    %v3878 = vpop.f32.mrb[0].mxu0
    %v3879 = vadd.f32 0.0, %v3878
    %v3880 = vpop.f32.mrb[0].mxu0
    %v3881 = vadd.f32 0.0, %v3880
    %3882 = vdwg.mxu0
    %3883 = vmatprep.subr.bf16.mxu0 %v3458
    %3884 = vmatpush1.bf16.msra.mxu0 %v3457
    %3885 = vmatprep.subr.bf16.mxu0 %v3462
    %3886 = vmatpush1.bf16.msra.mxu0 %v3461
    %3887 = vmatprep.subr.bf16.mxu0 %v3466
    %3888 = vmatpush1.bf16.msra.mxu0 %v3465
    %3889 = vmatprep.subr.bf16.mxu0 %v3470
    %3890 = vmatpush1.bf16.msra.mxu0 %v3469
    %3891 = vmatprep.subr.bf16.mxu0 %v3474
    %3892 = vmatpush1.bf16.msra.mxu0 %v3473
    %3893 = vmatprep.subr.bf16.mxu0 %v3478
    %3894 = vmatpush1.bf16.msra.mxu0 %v3477
    %3895 = vmatprep.subr.bf16.mxu0 %v3482
    %3896 = vmatpush1.bf16.msra.mxu0 %v3481
    %3897 = vmatprep.subr.bf16.mxu0 %v3486
    %3898 = vmatpush1.bf16.msra.mxu0 %v3485
    %3899 = vmatprep.subr.bf16.mxu0 %v3490
    %3900 = vmatpush1.bf16.msra.mxu0 %v3489
    %3901 = vmatprep.subr.bf16.mxu0 %v3494
    %3902 = vmatpush1.bf16.msra.mxu0 %v3493
    %3903 = vmatprep.subr.bf16.mxu0 %v3498
    %3904 = vmatpush1.bf16.msra.mxu0 %v3497
    %3905 = vmatprep.subr.bf16.mxu0 %v3502
    %3906 = vmatpush1.bf16.msra.mxu0 %v3501
    %3907 = vmatprep.subr.bf16.mxu0 %v3506
    %3908 = vmatpush1.bf16.msra.mxu0 %v3505
    %3909 = vmatprep.subr.bf16.mxu0 %v3510
    %3910 = vmatpush1.bf16.msra.mxu0 %v3509
    %3911 = vmatprep.subr.bf16.mxu0 %v3514
    %3912 = vmatpush1.bf16.msra.mxu0 %v3513
    %3913 = vmatprep.subr.bf16.mxu0 %v3518
    %3914 = vmatpush1.bf16.msra.mxu0 %v3517
    %3915 = vmatprep.mubr.bf16.mxu0 %v2749
    %3916 = vmatmul.mubr.bf16.gmra.mrb[0].mxu0 %v2748
    %v3917 = vpop.f32.mrb[0].mxu0
    %v3918 = vadd.f32 %v3875, %v3917
    %v3919 = vpop.f32.mrb[0].mxu0
    %v3920 = vadd.f32 %v3877, %v3919
    %v3921 = vpop.f32.mrb[0].mxu0
    %v3922 = vadd.f32 %v3879, %v3921
    %v3923 = vpop.f32.mrb[0].mxu0
    %v3924 = vadd.f32 %v3881, %v3923
    %3925 = vdwg.mxu0
    %3926 = vmatprep.subr.bf16.mxu0 %v3522
    %3927 = vmatpush1.bf16.msra.mxu0 %v3521
    %3928 = vmatprep.subr.bf16.mxu0 %v3526
    %3929 = vmatpush1.bf16.msra.mxu0 %v3525
    %3930 = vmatprep.subr.bf16.mxu0 %v3530
    %3931 = vmatpush1.bf16.msra.mxu0 %v3529
    %3932 = vmatprep.subr.bf16.mxu0 %v3534
    %3933 = vmatpush1.bf16.msra.mxu0 %v3533
    %3934 = vmatprep.subr.bf16.mxu0 %v3538
    %3935 = vmatpush1.bf16.msra.mxu0 %v3537
    %3936 = vmatprep.subr.bf16.mxu0 %v3542
    %3937 = vmatpush1.bf16.msra.mxu0 %v3541
    %3938 = vmatprep.subr.bf16.mxu0 %v3546
    %3939 = vmatpush1.bf16.msra.mxu0 %v3545
    %3940 = vmatprep.subr.bf16.mxu0 %v3550
    %3941 = vmatpush1.bf16.msra.mxu0 %v3549
    %3942 = vmatprep.subr.bf16.mxu0 0
    %3943 = vmatpush1.bf16.msra.mxu0 0
    %3944 = vmatprep.subr.bf16.mxu0 0
    %3945 = vmatpush1.bf16.msra.mxu0 0
    %3946 = vmatprep.subr.bf16.mxu0 0
    %3947 = vmatpush1.bf16.msra.mxu0 0
    %3948 = vmatprep.subr.bf16.mxu0 0
    %3949 = vmatpush1.bf16.msra.mxu0 0
    %3950 = vmatprep.subr.bf16.mxu0 0
    %3951 = vmatpush1.bf16.msra.mxu0 0
    %3952 = vmatprep.subr.bf16.mxu0 0
    %3953 = vmatpush1.bf16.msra.mxu0 0
    %3954 = vmatprep.subr.bf16.mxu0 0
    %3955 = vmatpush1.bf16.msra.mxu0 0
    %3956 = vmatprep.subr.bf16.mxu0 0
    %3957 = vmatpush1.bf16.msra.mxu0 0
    %3958 = vmatprep.mubr.bf16.mxu0 0
    %3959 = vmatmul.mubr.bf16.gmra.mrb[0].mxu0 %v2750
    %v3960 = vpop.f32.mrb[0].mxu0
    %v3961 = vadd.f32 %v3918, %v3960
    %v3962 = vpop.f32.mrb[0].mxu0
    %v3963 = vadd.f32 %v3920, %v3962
    %v3964 = vpop.f32.mrb[0].mxu0
    %v3965 = vadd.f32 %v3922, %v3964
    %v3966 = vpop.f32.mrb[0].mxu0
    %v3967 = vadd.f32 %v3924, %v3966
    %3968 = vdwg.mxu0
    %v3969 = vadd.f32 %v3832, %v3836
    %v3970 = vrot.slane %v3969, 4
    %v3971 = vadd.f32 %v3969, %v3970
    %v3972 = vrot.slane %v3971, 2
    %v3973 = vadd.f32 %v3971, %v3972
    %v3974 = vrot.slane %v3973, 1
    %v3975 = vadd.f32 %v3973, %v3974
    %v3976 = vadd.f32 %v3834, %v3838
    %v3977 = vrot.slane %v3976, 4
    %v3978 = vadd.f32 %v3976, %v3977
    %v3979 = vrot.slane %v3978, 2
    %v3980 = vadd.f32 %v3978, %v3979
    %v3981 = vrot.slane %v3980, 1
    %v3982 = vadd.f32 %v3980, %v3981
    %v3983 = vadd.f32 %v3961, %v3965
    %v3984 = vrot.slane %v3983, 4
    %v3985 = vadd.f32 %v3983, %v3984
    %v3986 = vrot.slane %v3985, 2
    %v3987 = vadd.f32 %v3985, %v3986
    %v3988 = vrot.slane %v3987, 1
    %v3989 = vadd.f32 %v3987, %v3988
    %v3990 = vadd.f32 %v3963, %v3967
    %v3991 = vrot.slane %v3990, 4
    %v3992 = vadd.f32 %v3990, %v3991
    %v3993 = vrot.slane %v3992, 2
    %v3994 = vadd.f32 %v3992, %v3993
    %v3995 = vrot.slane %v3994, 1
    %v3996 = vadd.f32 %v3994, %v3995
    %v3997 = vmul.f32 %v3832, %v3832
    %v3998 = vmul.f32 %v3834, %v3834
    %v3999 = vmul.f32 %v3961, %v3961
    %v4000 = vmul.f32 %v3963, %v3963
    %v4001 = vmul.f32 %v3836, %v3836
    %v4002 = vmul.f32 %v3838, %v3838
    %v4003 = vmul.f32 %v3965, %v3965
    %v4004 = vmul.f32 %v3967, %v3967
    %v4005 = vadd.f32 %v3997, %v4001
    %v4006 = vrot.slane %v4005, 4
    %v4007 = vadd.f32 %v4005, %v4006
    %v4008 = vrot.slane %v4007, 2
    %v4009 = vadd.f32 %v4007, %v4008
    %v4010 = vrot.slane %v4009, 1
    %v4011 = vadd.f32 %v4009, %v4010
    %v4012 = vadd.f32 %v3998, %v4002
    %v4013 = vrot.slane %v4012, 4
    %v4014 = vadd.f32 %v4012, %v4013
    %v4015 = vrot.slane %v4014, 2
    %v4016 = vadd.f32 %v4014, %v4015
    %v4017 = vrot.slane %v4016, 1
    %v4018 = vadd.f32 %v4016, %v4017
    %v4019 = vadd.f32 %v3999, %v4003
    %v4020 = vrot.slane %v4019, 4
    %v4021 = vadd.f32 %v4019, %v4020
    %v4022 = vrot.slane %v4021, 2
    %v4023 = vadd.f32 %v4021, %v4022
    %v4024 = vrot.slane %v4023, 1
    %v4025 = vadd.f32 %v4023, %v4024
    %v4026 = vadd.f32 %v4000, %v4004
    %v4027 = vrot.slane %v4026, 4
    %v4028 = vadd.f32 %v4026, %v4027
    %v4029 = vrot.slane %v4028, 2
    %v4030 = vadd.f32 %v4028, %v4029
    %v4031 = vrot.slane %v4030, 1
    %v4032 = vadd.f32 %v4030, %v4031
    %v4033 = vmul.f32 %v3975, 0.125
    %v4034 = vmul.f32 %v3982, 0.125
    %v4035 = vmul.f32 %v3989, 0.125
    %v4036 = vmul.f32 %v3996, 0.125
    %v4037 = vmul.f32 %v4011, 0.125
    %v4038 = vmul.f32 %v4018, 0.125
    %v4039 = vmul.f32 %v4025, 0.125
    %v4040 = vmul.f32 %v4032, 0.125
    %v4041 = vmul.f32 %v4033, %v4033
    %v4042 = vmul.f32 %v4034, %v4034
    %v4043 = vmul.f32 %v4035, %v4035
    %v4044 = vmul.f32 %v4036, %v4036
    %v4045 = vsub.f32 %v4037, %v4041
    %v4046 = vsub.f32 %v4038, %v4042
    %v4047 = vsub.f32 %v4039, %v4043
    %v4048 = vsub.f32 %v4040, %v4044
    %s4049 = scalar_lea.vmem [#allocation15], 10
    %v4050 = vld [vmem:[%s4049] ss:$2 sm:$0xf]
    %s4051 = scalar_lea.vmem [#allocation15], 11
    %v4052 = vld [vmem:[%s4051] ss:$2 sm:$0xf]
    %v4053 = vsub.f32 %v3832, %v4033
    %v4054 = vsub.f32 %v3834, %v4034
    %v4055 = vsub.f32 %v3961, %v4035
    %v4056 = vsub.f32 %v3963, %v4036
    %v4057 = vsub.f32 %v3836, %v4033
    %v4058 = vsub.f32 %v3838, %v4034
    %v4059 = vsub.f32 %v3965, %v4035
    %v4060 = vsub.f32 %v3967, %v4036
    %v4061 = vadd.f32 %v4045, 1e-05
    %v4062 = vadd.f32 %v4046, 1e-05
    %v4063 = vadd.f32 %v4047, 1e-05
    %v4064 = vadd.f32 %v4048, 1e-05
    %v4065 = vrsqrt.pop %v4061
    %v4066 = vrsqrt.pop %v4062
    %v4067 = vrsqrt.pop %v4063
    %v4068 = vrsqrt.pop %v4064
    %v4069 = vmul.f32 %v4053, %v4065
    %v4070 = vmul.f32 %v4054, %v4066
    %v4071 = vmul.f32 %v4055, %v4067
    %v4072 = vmul.f32 %v4056, %v4068
    %v4073 = vmul.f32 %v4057, %v4065
    %v4074 = vmul.f32 %v4058, %v4066
    %v4075 = vmul.f32 %v4059, %v4067
    %v4076 = vmul.f32 %v4060, %v4068
    %v4078 = vlaneseq
    %v4079 = vshrl.u32 %v4078, 7
    %v4080 = vsub.s32 0, %v4079
    %v4081 = vrot.slane %v4050, %v4080
    %v4082 = vlaneseq
    %v4083 = vshrl.u32 %v4082, 7
    %v4084 = vsub.s32 1, %v4083
    %v4085 = vrot.slane %v4050, %v4084
    %v4086 = vlaneseq
    %v4087 = vshrl.u32 %v4086, 7
    %v4088 = vsub.s32 2, %v4087
    %v4089 = vrot.slane %v4050, %v4088
    %v4090 = vlaneseq
    %v4091 = vshrl.u32 %v4090, 7
    %v4092 = vsub.s32 3, %v4091
    %v4093 = vrot.slane %v4050, %v4092
    %v4098 = vmul.f32 %v4081, %v4069
    %v4099 = vmul.f32 %v4085, %v4070
    %v4100 = vmul.f32 %v4089, %v4071
    %v4101 = vmul.f32 %v4093, %v4072
    %v4102 = vmul.f32 %v4081, %v4073
    %v4103 = vmul.f32 %v4085, %v4074
    %v4104 = vmul.f32 %v4089, %v4075
    %v4105 = vmul.f32 %v4093, %v4076
    %v4107 = vlaneseq
    %v4108 = vshrl.u32 %v4107, 7
    %v4109 = vsub.s32 0, %v4108
    %v4110 = vrot.slane %v4052, %v4109
    %v4111 = vlaneseq
    %v4112 = vshrl.u32 %v4111, 7
    %v4113 = vsub.s32 1, %v4112
    %v4114 = vrot.slane %v4052, %v4113
    %v4115 = vlaneseq
    %v4116 = vshrl.u32 %v4115, 7
    %v4117 = vsub.s32 2, %v4116
    %v4118 = vrot.slane %v4052, %v4117
    %v4119 = vlaneseq
    %v4120 = vshrl.u32 %v4119, 7
    %v4121 = vsub.s32 3, %v4120
    %v4122 = vrot.slane %v4052, %v4121
    %v4127 = vadd.f32 %v4098, %v4110
    %v4128 = vadd.f32 %v4099, %v4114
    %v4129 = vadd.f32 %v4100, %v4118
    %v4130 = vadd.f32 %v4101, %v4122
    %v4131 = vadd.f32 %v4102, %v4110
    %v4132 = vadd.f32 %v4103, %v4114
    %v4133 = vadd.f32 %v4104, %v4118
    %v4134 = vadd.f32 %v4105, %v4122
    %v4135 = vmul.f32 %v4127, 0.01
    %v4136 = vmul.f32 %v4128, 0.01
    %v4137 = vmul.f32 %v4129, 0.01
    %v4138 = vmul.f32 %v4130, 0.01
    %v4139 = vmul.f32 %v4131, 0.01
    %v4140 = vmul.f32 %v4132, 0.01
    %v4141 = vmul.f32 %v4133, 0.01
    %v4142 = vmul.f32 %v4134, 0.01
    %v4143 = vmax.f32 %v4127, %v4135
    %v4144 = vmax.f32 %v4128, %v4136
    %v4145 = vmax.f32 %v4129, %v4137
    %v4146 = vmax.f32 %v4130, %v4138
    %v4147 = vmax.f32 %v4131, %v4139
    %v4148 = vmax.f32 %v4132, %v4140
    %v4149 = vmax.f32 %v4133, %v4141
    %v4150 = vmax.f32 %v4134, %v4142
    %v4151 = vmul.f32 %v4143, %v165
    %v4152 = vmul.f32 %v4144, %v165
    %v4153 = vmul.f32 %v4145, %v165
    %v4154 = vmul.f32 %v4146, %v165
    %v4155 = vmul.f32 %v4147, %v166
    %v4156 = vmul.f32 %v4148, %v166
    %v4157 = vmul.f32 %v4149, %v166
    %v4158 = vmul.f32 %v4150, %v166
    %v4159 = vpack.c.bf16 %v4155, %v4151
    %v4160 = vpack.c.bf16 %v4156, %v4152
    %v4161 = vpack.c.bf16 %v4157, %v4153
    %v4162 = vpack.c.bf16 %v4158, %v4154
    %v4163 = vld [vmem:[#allocation6] sm:$0xff]
    %v4164 = vld [vmem:[#allocation6 + $0x8] sm:$0xff]
    %v4165 = vld [vmem:[#allocation6 + $0x10] sm:$0xff]
    %v4166 = vld [vmem:[#allocation6 + $0x18] sm:$0xff]
    %v4167 = vld [vmem:[#allocation6 + $0x20] sm:$0xff]
    %v4168 = vld [vmem:[#allocation6 + $0x28] sm:$0xff]
    %v4169 = vld [vmem:[#allocation6 + $0x30] sm:$0xff]
    %v4170 = vld [vmem:[#allocation6 + $0x38] sm:$0xff]
    %v4171 = vld [vmem:[#allocation6 + $0x40] sm:$0xff]
    %v4172 = vld [vmem:[#allocation6 + $0x48] sm:$0xff]
    %v4173 = vld [vmem:[#allocation6 + $0x50] sm:$0xff]
    %v4174 = vld [vmem:[#allocation6 + $0x58] sm:$0xff]
    %v4175 = vld [vmem:[#allocation6 + $0x60] sm:$0xff]
    %v4176 = vld [vmem:[#allocation6 + $0x68] sm:$0xff]
    %v4177 = vld [vmem:[#allocation6 + $0x70] sm:$0xff]
    %v4178 = vld [vmem:[#allocation6 + $0x78] sm:$0xff]
    %v4179 = vld [vmem:[#allocation6 + $0x80] sm:$0xff]
    %v4180 = vld [vmem:[#allocation6 + $0x88] sm:$0xff]
    %v4181 = vld [vmem:[#allocation6 + $0x90] sm:$0xff]
    %v4182 = vld [vmem:[#allocation6 + $0x98] sm:$0xff]
    %v4183 = vld [vmem:[#allocation6 + $0xa0] sm:$0xff]
    %v4184 = vld [vmem:[#allocation6 + $0xa8] sm:$0xff]
    %v4185 = vld [vmem:[#allocation6 + $0xb0] sm:$0xff]
    %v4186 = vld [vmem:[#allocation6 + $0xb8] sm:$0xff]
    %v4187 = vld [vmem:[#allocation6 + $0xc0] sm:$0xff]
    %v4188 = vld [vmem:[#allocation6 + $0xc8] sm:$0xff]
    %v4189 = vld [vmem:[#allocation6 + $0xd0] sm:$0xff]
    %v4190 = vld [vmem:[#allocation6 + $0xd8] sm:$0xff]
    %v4191 = vld [vmem:[#allocation6 + $0xe0] sm:$0xff]
    %v4192 = vld [vmem:[#allocation6 + $0xe8] sm:$0xff]
    %v4193 = vld [vmem:[#allocation6 + $0xf0] sm:$0xff]
    %v4194 = vld [vmem:[#allocation6 + $0xf8] sm:$0xff]
    %v4195 = vld [vmem:[#allocation6 + $0x100] sm:$0xff]
    %v4196 = vld [vmem:[#allocation6 + $0x108] sm:$0xff]
    %v4197 = vld [vmem:[#allocation6 + $0x110] sm:$0xff]
    %v4198 = vld [vmem:[#allocation6 + $0x118] sm:$0xff]
    %v4199 = vld [vmem:[#allocation6 + $0x120] sm:$0xff]
    %v4200 = vld [vmem:[#allocation6 + $0x128] sm:$0xff]
    %v4201 = vld [vmem:[#allocation6 + $0x130] sm:$0xff]
    %v4202 = vld [vmem:[#allocation6 + $0x138] sm:$0xff]
    %v4203 = vld [vmem:[#allocation6 + $0x140] sm:$0xff]
    %v4204 = vld [vmem:[#allocation6 + $0x148] sm:$0xff]
    %v4205 = vld [vmem:[#allocation6 + $0x150] sm:$0xff]
    %v4206 = vld [vmem:[#allocation6 + $0x158] sm:$0xff]
    %v4207 = vld [vmem:[#allocation6 + $0x160] sm:$0xff]
    %v4208 = vld [vmem:[#allocation6 + $0x168] sm:$0xff]
    %v4209 = vld [vmem:[#allocation6 + $0x170] sm:$0xff]
    %v4210 = vld [vmem:[#allocation6 + $0x178] sm:$0xff]
    %v4211 = vld [vmem:[#allocation6 + $0x180] sm:$0xff]
    %v4212 = vld [vmem:[#allocation6 + $0x188] sm:$0xff]
    %v4213 = vld [vmem:[#allocation6 + $0x190] sm:$0xff]
    %v4214 = vld [vmem:[#allocation6 + $0x198] sm:$0xff]
    %v4215 = vld [vmem:[#allocation6 + $0x1a0] sm:$0xff]
    %v4216 = vld [vmem:[#allocation6 + $0x1a8] sm:$0xff]
    %v4217 = vld [vmem:[#allocation6 + $0x1b0] sm:$0xff]
    %v4218 = vld [vmem:[#allocation6 + $0x1b8] sm:$0xff]
    %v4219 = vld [vmem:[#allocation6 + $0x1c0] sm:$0xff]
    %v4220 = vld [vmem:[#allocation6 + $0x1c8] sm:$0xff]
    %v4221 = vld [vmem:[#allocation6 + $0x1d0] sm:$0xff]
    %v4222 = vld [vmem:[#allocation6 + $0x1d8] sm:$0xff]
    %v4223 = vld [vmem:[#allocation6 + $0x1e0] sm:$0xff]
    %v4224 = vld [vmem:[#allocation6 + $0x1e8] sm:$0xff]
    %v4225 = vld [vmem:[#allocation6 + $0x1f0] sm:$0xff]
    %v4226 = vld [vmem:[#allocation6 + $0x1f8] sm:$0xff]
    %v4291 = vunpack.c.l.b16 %v4163
    %v4292 = vunpack.c.h.b16 %v4163
    %v4293 = vunpack.c.l.b16 %v4164
    %v4294 = vunpack.c.h.b16 %v4164
    %v4295 = vunpack.c.l.b16 %v4165
    %v4296 = vunpack.c.h.b16 %v4165
    %v4297 = vunpack.c.l.b16 %v4166
    %v4298 = vunpack.c.h.b16 %v4166
    %v4299 = vunpack.c.l.b16 %v4167
    %v4300 = vunpack.c.h.b16 %v4167
    %v4301 = vunpack.c.l.b16 %v4168
    %v4302 = vunpack.c.h.b16 %v4168
    %v4303 = vunpack.c.l.b16 %v4169
    %v4304 = vunpack.c.h.b16 %v4169
    %v4305 = vunpack.c.l.b16 %v4170
    %v4306 = vunpack.c.h.b16 %v4170
    %v4307 = vunpack.c.l.b16 %v4171
    %v4308 = vunpack.c.h.b16 %v4171
    %v4309 = vunpack.c.l.b16 %v4172
    %v4310 = vunpack.c.h.b16 %v4172
    %v4311 = vunpack.c.l.b16 %v4173
    %v4312 = vunpack.c.h.b16 %v4173
    %v4313 = vunpack.c.l.b16 %v4174
    %v4314 = vunpack.c.h.b16 %v4174
    %v4315 = vunpack.c.l.b16 %v4175
    %v4316 = vunpack.c.h.b16 %v4175
    %v4317 = vunpack.c.l.b16 %v4176
    %v4318 = vunpack.c.h.b16 %v4176
    %v4319 = vunpack.c.l.b16 %v4177
    %v4320 = vunpack.c.h.b16 %v4177
    %v4321 = vunpack.c.l.b16 %v4178
    %v4322 = vunpack.c.h.b16 %v4178
    %v4323 = vunpack.c.l.b16 %v4179
    %v4324 = vunpack.c.h.b16 %v4179
    %v4325 = vunpack.c.l.b16 %v4180
    %v4326 = vunpack.c.h.b16 %v4180
    %v4327 = vunpack.c.l.b16 %v4181
    %v4328 = vunpack.c.h.b16 %v4181
    %v4329 = vunpack.c.l.b16 %v4182
    %v4330 = vunpack.c.h.b16 %v4182
    %v4331 = vunpack.c.l.b16 %v4183
    %v4332 = vunpack.c.h.b16 %v4183
    %v4333 = vunpack.c.l.b16 %v4184
    %v4334 = vunpack.c.h.b16 %v4184
    %v4335 = vunpack.c.l.b16 %v4185
    %v4336 = vunpack.c.h.b16 %v4185
    %v4337 = vunpack.c.l.b16 %v4186
    %v4338 = vunpack.c.h.b16 %v4186
    %v4339 = vunpack.c.l.b16 %v4187
    %v4340 = vunpack.c.h.b16 %v4187
    %v4341 = vunpack.c.l.b16 %v4188
    %v4342 = vunpack.c.h.b16 %v4188
    %v4343 = vunpack.c.l.b16 %v4189
    %v4344 = vunpack.c.h.b16 %v4189
    %v4345 = vunpack.c.l.b16 %v4190
    %v4346 = vunpack.c.h.b16 %v4190
    %v4347 = vunpack.c.l.b16 %v4191
    %v4348 = vunpack.c.h.b16 %v4191
    %v4349 = vunpack.c.l.b16 %v4192
    %v4350 = vunpack.c.h.b16 %v4192
    %v4351 = vunpack.c.l.b16 %v4193
    %v4352 = vunpack.c.h.b16 %v4193
    %v4353 = vunpack.c.l.b16 %v4194
    %v4354 = vunpack.c.h.b16 %v4194
    %v4355 = vunpack.c.l.b16 %v4195
    %v4356 = vunpack.c.h.b16 %v4195
    %v4357 = vunpack.c.l.b16 %v4196
    %v4358 = vunpack.c.h.b16 %v4196
    %v4359 = vunpack.c.l.b16 %v4197
    %v4360 = vunpack.c.h.b16 %v4197
    %v4361 = vunpack.c.l.b16 %v4198
    %v4362 = vunpack.c.h.b16 %v4198
    %v4363 = vunpack.c.l.b16 %v4199
    %v4364 = vunpack.c.h.b16 %v4199
    %v4365 = vunpack.c.l.b16 %v4200
    %v4366 = vunpack.c.h.b16 %v4200
    %v4367 = vunpack.c.l.b16 %v4201
    %v4368 = vunpack.c.h.b16 %v4201
    %v4369 = vunpack.c.l.b16 %v4202
    %v4370 = vunpack.c.h.b16 %v4202
    %v4371 = vunpack.c.l.b16 %v4203
    %v4372 = vunpack.c.h.b16 %v4203
    %v4373 = vunpack.c.l.b16 %v4204
    %v4374 = vunpack.c.h.b16 %v4204
    %v4375 = vunpack.c.l.b16 %v4205
    %v4376 = vunpack.c.h.b16 %v4205
    %v4377 = vunpack.c.l.b16 %v4206
    %v4378 = vunpack.c.h.b16 %v4206
    %v4379 = vunpack.c.l.b16 %v4207
    %v4380 = vunpack.c.h.b16 %v4207
    %v4381 = vunpack.c.l.b16 %v4208
    %v4382 = vunpack.c.h.b16 %v4208
    %v4383 = vunpack.c.l.b16 %v4209
    %v4384 = vunpack.c.h.b16 %v4209
    %v4385 = vunpack.c.l.b16 %v4210
    %v4386 = vunpack.c.h.b16 %v4210
    %v4387 = vunpack.c.l.b16 %v4211
    %v4388 = vunpack.c.h.b16 %v4211
    %v4389 = vunpack.c.l.b16 %v4212
    %v4390 = vunpack.c.h.b16 %v4212
    %v4391 = vunpack.c.l.b16 %v4213
    %v4392 = vunpack.c.h.b16 %v4213
    %v4393 = vunpack.c.l.b16 %v4214
    %v4394 = vunpack.c.h.b16 %v4214
    %v4395 = vunpack.c.l.b16 %v4215
    %v4396 = vunpack.c.h.b16 %v4215
    %v4397 = vunpack.c.l.b16 %v4216
    %v4398 = vunpack.c.h.b16 %v4216
    %v4399 = vunpack.c.l.b16 %v4217
    %v4400 = vunpack.c.h.b16 %v4217
    %v4401 = vunpack.c.l.b16 %v4218
    %v4402 = vunpack.c.h.b16 %v4218
    %v4403 = vunpack.c.l.b16 %v4219
    %v4404 = vunpack.c.h.b16 %v4219
    %v4405 = vunpack.c.l.b16 %v4220
    %v4406 = vunpack.c.h.b16 %v4220
    %v4407 = vunpack.c.l.b16 %v4221
    %v4408 = vunpack.c.h.b16 %v4221
    %v4409 = vunpack.c.l.b16 %v4222
    %v4410 = vunpack.c.h.b16 %v4222
    %v4411 = vunpack.c.l.b16 %v4223
    %v4412 = vunpack.c.h.b16 %v4223
    %v4413 = vunpack.c.l.b16 %v4224
    %v4414 = vunpack.c.h.b16 %v4224
    %v4415 = vunpack.c.l.b16 %v4225
    %v4416 = vunpack.c.h.b16 %v4225
    %v4417 = vunpack.c.l.b16 %v4226
    %v4418 = vunpack.c.h.b16 %v4226
    %v4419 = vpack.c.b16 %v4293, %v4291
    %v4420 = vpack.c.b16 %v4294, %v4292
    %v4421 = vpack.c.b16 %v4297, %v4295
    %v4422 = vpack.c.b16 %v4298, %v4296
    %v4423 = vpack.c.b16 %v4301, %v4299
    %v4424 = vpack.c.b16 %v4302, %v4300
    %v4425 = vpack.c.b16 %v4305, %v4303
    %v4426 = vpack.c.b16 %v4306, %v4304
    %v4427 = vpack.c.b16 %v4309, %v4307
    %v4428 = vpack.c.b16 %v4310, %v4308
    %v4429 = vpack.c.b16 %v4313, %v4311
    %v4430 = vpack.c.b16 %v4314, %v4312
    %v4431 = vpack.c.b16 %v4317, %v4315
    %v4432 = vpack.c.b16 %v4318, %v4316
    %v4433 = vpack.c.b16 %v4321, %v4319
    %v4434 = vpack.c.b16 %v4322, %v4320
    %v4435 = vpack.c.b16 %v4325, %v4323
    %v4436 = vpack.c.b16 %v4326, %v4324
    %v4437 = vpack.c.b16 %v4329, %v4327
    %v4438 = vpack.c.b16 %v4330, %v4328
    %v4439 = vpack.c.b16 %v4333, %v4331
    %v4440 = vpack.c.b16 %v4334, %v4332
    %v4441 = vpack.c.b16 %v4337, %v4335
    %v4442 = vpack.c.b16 %v4338, %v4336
    %v4443 = vpack.c.b16 %v4341, %v4339
    %v4444 = vpack.c.b16 %v4342, %v4340
    %v4445 = vpack.c.b16 %v4345, %v4343
    %v4446 = vpack.c.b16 %v4346, %v4344
    %v4447 = vpack.c.b16 %v4349, %v4347
    %v4448 = vpack.c.b16 %v4350, %v4348
    %v4449 = vpack.c.b16 %v4353, %v4351
    %v4450 = vpack.c.b16 %v4354, %v4352
    %v4451 = vpack.c.b16 %v4357, %v4355
    %v4452 = vpack.c.b16 %v4358, %v4356
    %v4453 = vpack.c.b16 %v4361, %v4359
    %v4454 = vpack.c.b16 %v4362, %v4360
    %v4455 = vpack.c.b16 %v4365, %v4363
    %v4456 = vpack.c.b16 %v4366, %v4364
    %v4457 = vpack.c.b16 %v4369, %v4367
    %v4458 = vpack.c.b16 %v4370, %v4368
    %v4459 = vpack.c.b16 %v4373, %v4371
    %v4460 = vpack.c.b16 %v4374, %v4372
    %v4461 = vpack.c.b16 %v4377, %v4375
    %v4462 = vpack.c.b16 %v4378, %v4376
    %v4463 = vpack.c.b16 %v4381, %v4379
    %v4464 = vpack.c.b16 %v4382, %v4380
    %v4465 = vpack.c.b16 %v4385, %v4383
    %v4466 = vpack.c.b16 %v4386, %v4384
    %v4467 = vpack.c.b16 %v4389, %v4387
    %v4468 = vpack.c.b16 %v4390, %v4388
    %v4469 = vpack.c.b16 %v4393, %v4391
    %v4470 = vpack.c.b16 %v4394, %v4392
    %v4471 = vpack.c.b16 %v4397, %v4395
    %v4472 = vpack.c.b16 %v4398, %v4396
    %v4473 = vpack.c.b16 %v4401, %v4399
    %v4474 = vpack.c.b16 %v4402, %v4400
    %v4475 = vpack.c.b16 %v4405, %v4403
    %v4476 = vpack.c.b16 %v4406, %v4404
    %v4477 = vpack.c.b16 %v4409, %v4407
    %v4478 = vpack.c.b16 %v4410, %v4408
    %v4479 = vpack.c.b16 %v4413, %v4411
    %v4480 = vpack.c.b16 %v4414, %v4412
    %v4481 = vpack.c.b16 %v4417, %v4415
    %v4482 = vpack.c.b16 %v4418, %v4416
    %4547 = vmatprep.subr.bf16.mxu0 %v4420
    %4548 = vmatpush1.bf16.msra.mxu0 %v4419
    %4549 = vmatprep.subr.bf16.mxu0 %v4422
    %4550 = vmatpush1.bf16.msra.mxu0 %v4421
    %4551 = vmatprep.subr.bf16.mxu0 %v4424
    %4552 = vmatpush1.bf16.msra.mxu0 %v4423
    %4553 = vmatprep.subr.bf16.mxu0 %v4426
    %4554 = vmatpush1.bf16.msra.mxu0 %v4425
    %4555 = vmatprep.subr.bf16.mxu0 %v4428
    %4556 = vmatpush1.bf16.msra.mxu0 %v4427
    %4557 = vmatprep.subr.bf16.mxu0 %v4430
    %4558 = vmatpush1.bf16.msra.mxu0 %v4429
    %4559 = vmatprep.subr.bf16.mxu0 %v4432
    %4560 = vmatpush1.bf16.msra.mxu0 %v4431
    %4561 = vmatprep.subr.bf16.mxu0 %v4434
    %4562 = vmatpush1.bf16.msra.mxu0 %v4433
    %4563 = vmatprep.subr.bf16.mxu0 %v4436
    %4564 = vmatpush1.bf16.msra.mxu0 %v4435
    %4565 = vmatprep.subr.bf16.mxu0 %v4438
    %4566 = vmatpush1.bf16.msra.mxu0 %v4437
    %4567 = vmatprep.subr.bf16.mxu0 %v4440
    %4568 = vmatpush1.bf16.msra.mxu0 %v4439
    %4569 = vmatprep.subr.bf16.mxu0 %v4442
    %4570 = vmatpush1.bf16.msra.mxu0 %v4441
    %4571 = vmatprep.subr.bf16.mxu0 %v4444
    %4572 = vmatpush1.bf16.msra.mxu0 %v4443
    %4573 = vmatprep.subr.bf16.mxu0 %v4446
    %4574 = vmatpush1.bf16.msra.mxu0 %v4445
    %4575 = vmatprep.subr.bf16.mxu0 %v4448
    %4576 = vmatpush1.bf16.msra.mxu0 %v4447
    %4577 = vmatprep.subr.bf16.mxu0 %v4450
    %4578 = vmatpush1.bf16.msra.mxu0 %v4449
    %4579 = vmatprep.mubr.bf16.mxu0 %v4160
    %4580 = vmatmul.mubr.bf16.gmra.mrb[0].mxu0 %v4159
    %v4581 = vpop.f32.mrb[0].mxu0
    %v4582 = vadd.f32 0.0, %v4581
    %v4583 = vpop.f32.mrb[0].mxu0
    %v4584 = vadd.f32 0.0, %v4583
    %v4585 = vpop.f32.mrb[0].mxu0
    %v4586 = vadd.f32 0.0, %v4585
    %v4587 = vpop.f32.mrb[0].mxu0
    %v4588 = vadd.f32 0.0, %v4587
    %4589 = vdwg.mxu0
    %4590 = vmatprep.subr.bf16.mxu0 %v4452
    %4591 = vmatpush1.bf16.msra.mxu0 %v4451
    %4592 = vmatprep.subr.bf16.mxu0 %v4454
    %4593 = vmatpush1.bf16.msra.mxu0 %v4453
    %4594 = vmatprep.subr.bf16.mxu0 %v4456
    %4595 = vmatpush1.bf16.msra.mxu0 %v4455
    %4596 = vmatprep.subr.bf16.mxu0 %v4458
    %4597 = vmatpush1.bf16.msra.mxu0 %v4457
    %4598 = vmatprep.subr.bf16.mxu0 %v4460
    %4599 = vmatpush1.bf16.msra.mxu0 %v4459
    %4600 = vmatprep.subr.bf16.mxu0 %v4462
    %4601 = vmatpush1.bf16.msra.mxu0 %v4461
    %4602 = vmatprep.subr.bf16.mxu0 %v4464
    %4603 = vmatpush1.bf16.msra.mxu0 %v4463
    %4604 = vmatprep.subr.bf16.mxu0 %v4466
    %4605 = vmatpush1.bf16.msra.mxu0 %v4465
    %4606 = vmatprep.subr.bf16.mxu0 %v4468
    %4607 = vmatpush1.bf16.msra.mxu0 %v4467
    %4608 = vmatprep.subr.bf16.mxu0 %v4470
    %4609 = vmatpush1.bf16.msra.mxu0 %v4469
    %4610 = vmatprep.subr.bf16.mxu0 %v4472
    %4611 = vmatpush1.bf16.msra.mxu0 %v4471
    %4612 = vmatprep.subr.bf16.mxu0 %v4474
    %4613 = vmatpush1.bf16.msra.mxu0 %v4473
    %4614 = vmatprep.subr.bf16.mxu0 %v4476
    %4615 = vmatpush1.bf16.msra.mxu0 %v4475
    %4616 = vmatprep.subr.bf16.mxu0 %v4478
    %4617 = vmatpush1.bf16.msra.mxu0 %v4477
    %4618 = vmatprep.subr.bf16.mxu0 %v4480
    %4619 = vmatpush1.bf16.msra.mxu0 %v4479
    %4620 = vmatprep.subr.bf16.mxu0 %v4482
    %4621 = vmatpush1.bf16.msra.mxu0 %v4481
    %4622 = vmatprep.mubr.bf16.mxu0 %v4162
    %4623 = vmatmul.mubr.bf16.gmra.mrb[0].mxu0 %v4161
    %v4624 = vpop.f32.mrb[0].mxu0
    %v4625 = vadd.f32 %v4582, %v4624
    %v4626 = vpop.f32.mrb[0].mxu0
    %v4627 = vadd.f32 %v4584, %v4626
    %v4628 = vpop.f32.mrb[0].mxu0
    %v4629 = vadd.f32 %v4586, %v4628
    %v4630 = vpop.f32.mrb[0].mxu0
    %v4631 = vadd.f32 %v4588, %v4630
    %4632 = vdwg.mxu0
    %v4633 = vadd.f32 %v4625, %v4629
    %v4634 = vrot.slane %v4633, 4
    %v4635 = vadd.f32 %v4633, %v4634
    %v4636 = vrot.slane %v4635, 2
    %v4637 = vadd.f32 %v4635, %v4636
    %v4638 = vrot.slane %v4637, 1
    %v4639 = vadd.f32 %v4637, %v4638
    %v4640 = vadd.f32 %v4627, %v4631
    %v4641 = vrot.slane %v4640, 4
    %v4642 = vadd.f32 %v4640, %v4641
    %v4643 = vrot.slane %v4642, 2
    %v4644 = vadd.f32 %v4642, %v4643
    %v4645 = vrot.slane %v4644, 1
    %v4646 = vadd.f32 %v4644, %v4645
    %v4647 = vmul.f32 %v4625, %v4625
    %v4648 = vmul.f32 %v4627, %v4627
    %v4649 = vmul.f32 %v4629, %v4629
    %v4650 = vmul.f32 %v4631, %v4631
    %v4651 = vadd.f32 %v4647, %v4649
    %v4652 = vrot.slane %v4651, 4
    %v4653 = vadd.f32 %v4651, %v4652
    %v4654 = vrot.slane %v4653, 2
    %v4655 = vadd.f32 %v4653, %v4654
    %v4656 = vrot.slane %v4655, 1
    %v4657 = vadd.f32 %v4655, %v4656
    %v4658 = vadd.f32 %v4648, %v4650
    %v4659 = vrot.slane %v4658, 4
    %v4660 = vadd.f32 %v4658, %v4659
    %v4661 = vrot.slane %v4660, 2
    %v4662 = vadd.f32 %v4660, %v4661
    %v4663 = vrot.slane %v4662, 1
    %v4664 = vadd.f32 %v4662, %v4663
    %v4665 = vmul.f32 %v4639, 0.125
    %v4666 = vmul.f32 %v4646, 0.125
    %v4667 = vmul.f32 %v4657, 0.125
    %v4668 = vmul.f32 %v4664, 0.125
    %v4669 = vmul.f32 %v4665, %v4665
    %v4670 = vmul.f32 %v4666, %v4666
    %v4671 = vsub.f32 %v4667, %v4669
    %v4672 = vsub.f32 %v4668, %v4670
    %s4673 = scalar_lea.vmem [#allocation15], 18
    %v4674 = vld [vmem:[%s4673] ss:$2 sm:$0x3]
    %s4675 = scalar_lea.vmem [#allocation15], 19
    %v4676 = vld [vmem:[%s4675] ss:$2 sm:$0x3]
    %v4677 = vsub.f32 %v4625, %v4665
    %v4678 = vsub.f32 %v4627, %v4666
    %v4679 = vsub.f32 %v4629, %v4665
    %v4680 = vsub.f32 %v4631, %v4666
    %v4681 = vadd.f32 %v4671, 1e-05
    %v4682 = vadd.f32 %v4672, 1e-05
    %v4683 = vrsqrt.pop %v4681
    %v4684 = vrsqrt.pop %v4682
    %v4685 = vmul.f32 %v4677, %v4683
    %v4686 = vmul.f32 %v4678, %v4684
    %v4687 = vmul.f32 %v4679, %v4683
    %v4688 = vmul.f32 %v4680, %v4684
    %v4690 = vlaneseq
    %v4691 = vshrl.u32 %v4690, 7
    %v4692 = vsub.s32 0, %v4691
    %v4693 = vrot.slane %v4674, %v4692
    %v4694 = vlaneseq
    %v4695 = vshrl.u32 %v4694, 7
    %v4696 = vsub.s32 1, %v4695
    %v4697 = vrot.slane %v4674, %v4696
    %v4700 = vmul.f32 %v4693, %v4685
    %v4701 = vmul.f32 %v4697, %v4686
    %v4702 = vmul.f32 %v4693, %v4687
    %v4703 = vmul.f32 %v4697, %v4688
    %v4705 = vlaneseq
    %v4706 = vshrl.u32 %v4705, 7
    %v4707 = vsub.s32 0, %v4706
    %v4708 = vrot.slane %v4676, %v4707
    %v4709 = vlaneseq
    %v4710 = vshrl.u32 %v4709, 7
    %v4711 = vsub.s32 1, %v4710
    %v4712 = vrot.slane %v4676, %v4711
    %v4715 = vadd.f32 %v4700, %v4708
    %v4716 = vadd.f32 %v4701, %v4712
    %v4717 = vadd.f32 %v4702, %v4708
    %v4718 = vadd.f32 %v4703, %v4712
    %v4719 = vmul.f32 %v4715, 0.01
    %v4720 = vmul.f32 %v4716, 0.01
    %v4721 = vmul.f32 %v4717, 0.01
    %v4722 = vmul.f32 %v4718, 0.01
    %v4723 = vmax.f32 %v4715, %v4719
    %v4724 = vmax.f32 %v4716, %v4720
    %v4725 = vmax.f32 %v4717, %v4721
    %v4726 = vmax.f32 %v4718, %v4722
    %v4727 = vmul.f32 %v4723, %v165
    %v4728 = vmul.f32 %v4724, %v165
    %v4729 = vmul.f32 %v4725, %v166
    %v4730 = vmul.f32 %v4726, %v166
    %v4731 = vpack.c.bf16 %v4729, %v4727
    %v4732 = vpack.c.bf16 %v4730, %v4728
    %v4733 = vld [vmem:[#allocation7] sm:$0xf]
    %v4734 = vld [vmem:[#allocation7 + $0x4] sm:$0xf]
    %v4735 = vld [vmem:[#allocation7 + $0x8] sm:$0xf]
    %v4736 = vld [vmem:[#allocation7 + $0xc] sm:$0xf]
    %v4737 = vld [vmem:[#allocation7 + $0x10] sm:$0xf]
    %v4738 = vld [vmem:[#allocation7 + $0x14] sm:$0xf]
    %v4739 = vld [vmem:[#allocation7 + $0x18] sm:$0xf]
    %v4740 = vld [vmem:[#allocation7 + $0x1c] sm:$0xf]
    %v4741 = vld [vmem:[#allocation7 + $0x20] sm:$0xf]
    %v4742 = vld [vmem:[#allocation7 + $0x24] sm:$0xf]
    %v4743 = vld [vmem:[#allocation7 + $0x28] sm:$0xf]
    %v4744 = vld [vmem:[#allocation7 + $0x2c] sm:$0xf]
    %v4745 = vld [vmem:[#allocation7 + $0x30] sm:$0xf]
    %v4746 = vld [vmem:[#allocation7 + $0x34] sm:$0xf]
    %v4747 = vld [vmem:[#allocation7 + $0x38] sm:$0xf]
    %v4748 = vld [vmem:[#allocation7 + $0x3c] sm:$0xf]
    %v4749 = vld [vmem:[#allocation7 + $0x40] sm:$0xf]
    %v4750 = vld [vmem:[#allocation7 + $0x44] sm:$0xf]
    %v4751 = vld [vmem:[#allocation7 + $0x48] sm:$0xf]
    %v4752 = vld [vmem:[#allocation7 + $0x4c] sm:$0xf]
    %v4753 = vld [vmem:[#allocation7 + $0x50] sm:$0xf]
    %v4754 = vld [vmem:[#allocation7 + $0x54] sm:$0xf]
    %v4755 = vld [vmem:[#allocation7 + $0x58] sm:$0xf]
    %v4756 = vld [vmem:[#allocation7 + $0x5c] sm:$0xf]
    %v4757 = vld [vmem:[#allocation7 + $0x60] sm:$0xf]
    %v4758 = vld [vmem:[#allocation7 + $0x64] sm:$0xf]
    %v4759 = vld [vmem:[#allocation7 + $0x68] sm:$0xf]
    %v4760 = vld [vmem:[#allocation7 + $0x6c] sm:$0xf]
    %v4761 = vld [vmem:[#allocation7 + $0x70] sm:$0xf]
    %v4762 = vld [vmem:[#allocation7 + $0x74] sm:$0xf]
    %v4763 = vld [vmem:[#allocation7 + $0x78] sm:$0xf]
    %v4764 = vld [vmem:[#allocation7 + $0x7c] sm:$0xf]
    %v4797 = vunpack.c.l.b16 %v4733
    %v4798 = vunpack.c.l.b16 %v4734
    %v4799 = vunpack.c.l.b16 %v4735
    %v4800 = vunpack.c.l.b16 %v4736
    %v4801 = vunpack.c.l.b16 %v4737
    %v4802 = vunpack.c.l.b16 %v4738
    %v4803 = vunpack.c.l.b16 %v4739
    %v4804 = vunpack.c.l.b16 %v4740
    %v4805 = vunpack.c.l.b16 %v4741
    %v4806 = vunpack.c.l.b16 %v4742
    %v4807 = vunpack.c.l.b16 %v4743
    %v4808 = vunpack.c.l.b16 %v4744
    %v4809 = vunpack.c.l.b16 %v4745
    %v4810 = vunpack.c.l.b16 %v4746
    %v4811 = vunpack.c.l.b16 %v4747
    %v4812 = vunpack.c.l.b16 %v4748
    %v4813 = vunpack.c.l.b16 %v4749
    %v4814 = vunpack.c.l.b16 %v4750
    %v4815 = vunpack.c.l.b16 %v4751
    %v4816 = vunpack.c.l.b16 %v4752
    %v4817 = vunpack.c.l.b16 %v4753
    %v4818 = vunpack.c.l.b16 %v4754
    %v4819 = vunpack.c.l.b16 %v4755
    %v4820 = vunpack.c.l.b16 %v4756
    %v4821 = vunpack.c.l.b16 %v4757
    %v4822 = vunpack.c.l.b16 %v4758
    %v4823 = vunpack.c.l.b16 %v4759
    %v4824 = vunpack.c.l.b16 %v4760
    %v4825 = vunpack.c.l.b16 %v4761
    %v4826 = vunpack.c.l.b16 %v4762
    %v4827 = vunpack.c.l.b16 %v4763
    %v4828 = vunpack.c.l.b16 %v4764
    %v4829 = vpack.c.b16 %v4798, %v4797
    %v4830 = vpack.c.b16 %v4800, %v4799
    %v4831 = vpack.c.b16 %v4802, %v4801
    %v4832 = vpack.c.b16 %v4804, %v4803
    %v4833 = vpack.c.b16 %v4806, %v4805
    %v4834 = vpack.c.b16 %v4808, %v4807
    %v4835 = vpack.c.b16 %v4810, %v4809
    %v4836 = vpack.c.b16 %v4812, %v4811
    %v4837 = vpack.c.b16 %v4814, %v4813
    %v4838 = vpack.c.b16 %v4816, %v4815
    %v4839 = vpack.c.b16 %v4818, %v4817
    %v4840 = vpack.c.b16 %v4820, %v4819
    %v4841 = vpack.c.b16 %v4822, %v4821
    %v4842 = vpack.c.b16 %v4824, %v4823
    %v4843 = vpack.c.b16 %v4826, %v4825
    %v4844 = vpack.c.b16 %v4828, %v4827
    %4861 = vmatprep.subr.bf16.mxu0 0
    %4862 = vmatpush1.bf16.msra.mxu0 %v4829
    %4863 = vmatprep.subr.bf16.mxu0 0
    %4864 = vmatpush1.bf16.msra.mxu0 %v4830
    %4865 = vmatprep.subr.bf16.mxu0 0
    %4866 = vmatpush1.bf16.msra.mxu0 %v4831
    %4867 = vmatprep.subr.bf16.mxu0 0
    %4868 = vmatpush1.bf16.msra.mxu0 %v4832
    %4869 = vmatprep.subr.bf16.mxu0 0
    %4870 = vmatpush1.bf16.msra.mxu0 %v4833
    %4871 = vmatprep.subr.bf16.mxu0 0
    %4872 = vmatpush1.bf16.msra.mxu0 %v4834
    %4873 = vmatprep.subr.bf16.mxu0 0
    %4874 = vmatpush1.bf16.msra.mxu0 %v4835
    %4875 = vmatprep.subr.bf16.mxu0 0
    %4876 = vmatpush1.bf16.msra.mxu0 %v4836
    %4877 = vmatprep.subr.bf16.mxu0 0
    %4878 = vmatpush1.bf16.msra.mxu0 %v4837
    %4879 = vmatprep.subr.bf16.mxu0 0
    %4880 = vmatpush1.bf16.msra.mxu0 %v4838
    %4881 = vmatprep.subr.bf16.mxu0 0
    %4882 = vmatpush1.bf16.msra.mxu0 %v4839
    %4883 = vmatprep.subr.bf16.mxu0 0
    %4884 = vmatpush1.bf16.msra.mxu0 %v4840
    %4885 = vmatprep.subr.bf16.mxu0 0
    %4886 = vmatpush1.bf16.msra.mxu0 %v4841
    %4887 = vmatprep.subr.bf16.mxu0 0
    %4888 = vmatpush1.bf16.msra.mxu0 %v4842
    %4889 = vmatprep.subr.bf16.mxu0 0
    %4890 = vmatpush1.bf16.msra.mxu0 %v4843
    %4891 = vmatprep.subr.bf16.mxu0 0
    %4892 = vmatpush1.bf16.msra.mxu0 %v4844
    %4893 = vmatprep.mubr.bf16.mxu0 %v4732
    %4894 = vmatmul.mubr.bf16.gmra.mrb[0].mxu0 %v4731
    %v4895 = vpop.f32.mrb[0].mxu0
    %v4896 = vadd.f32 0.0, %v4895
    %v4897 = vpop.f32.mrb[0].mxu0
    %v4898 = vpop.f32.mrb[0].mxu0
    %v4899 = vadd.f32 0.0, %v4898
    %v4900 = vpop.f32.mrb[0].mxu0
    %4901 = vdwg.mxu0
    %v4902 = vadd.f32 %v4896, %v4899
    %v4903 = vrot.slane %v4902, 4
    %v4904 = vadd.f32 %v4902, %v4903
    %v4905 = vrot.slane %v4904, 2
    %v4906 = vadd.f32 %v4904, %v4905
    %v4907 = vrot.slane %v4906, 1
    %v4908 = vadd.f32 %v4906, %v4907
    %v4909 = vmul.f32 %v4896, %v4896
    %v4910 = vmul.f32 %v4899, %v4899
    %v4911 = vadd.f32 %v4909, %v4910
    %v4912 = vrot.slane %v4911, 4
    %v4913 = vadd.f32 %v4911, %v4912
    %v4914 = vrot.slane %v4913, 2
    %v4915 = vadd.f32 %v4913, %v4914
    %v4916 = vrot.slane %v4915, 1
    %v4917 = vadd.f32 %v4915, %v4916
    %v4918 = vmul.f32 %v4908, 0.125
    %v4919 = vmul.f32 %v4917, 0.125
    %v4920 = vmul.f32 %v4918, %v4918
    %v4921 = vsub.f32 %v4919, %v4920
    %v4922 = vld [vmem:[#allocation15 + $0x16] sm:$0x1]
    %v4923 = vld [vmem:[#allocation15 + $0x17] sm:$0x1]
    %v4924 = vsub.f32 %v4896, %v4918
    %v4925 = vsub.f32 %v4899, %v4918
    %v4926 = vadd.f32 %v4921, 1e-05
    %v4927 = vrsqrt.pop %v4926
    %v4928 = vmul.f32 %v4924, %v4927
    %v4929 = vmul.f32 %v4925, %v4927
    %v4930 = vlaneseq
    %v4931 = vshrl.u32 %v4930, 7
    %v4932 = vsub.s32 0, %v4931
    %v4933 = vrot.slane %v4922, %v4932
    %v4934 = vmul.f32 %v4933, %v4928
    %v4935 = vmul.f32 %v4933, %v4929
    %v4936 = vlaneseq
    %v4937 = vshrl.u32 %v4936, 7
    %v4938 = vsub.s32 0, %v4937
    %v4939 = vrot.slane %v4923, %v4938
    %v4940 = vadd.f32 %v4934, %v4939
    %v4941 = vadd.f32 %v4935, %v4939
    %v4942 = vmul.f32 %v4940, 0.01
    %v4943 = vmul.f32 %v4941, 0.01
    %v4944 = vmax.f32 %v4940, %v4942
    %v4945 = vmax.f32 %v4941, %v4943
    %v4946 = vmul.f32 %v4944, %v165
    %v4947 = vmul.f32 %v4945, %v166
    %4948 = vst [vmem:[%s11] sm:$0xff] %v4946
    %4949 = vst [vmem:[%s11 + $0x8] sm:$0xff] %v4947
    %v4950 = vpack.c.bf16 %v4947, %v4946
    %v4951 = vld [vmem:[#allocation9] sm:$0xff]
    %v4952 = vld [vmem:[#allocation9 + $0x8] sm:$0xff]
    %v4953 = vld [vmem:[#allocation9 + $0x10] sm:$0xff]
    %v4954 = vld [vmem:[#allocation9 + $0x18] sm:$0xff]
    %v4955 = vld [vmem:[#allocation9 + $0x20] sm:$0xff]
    %v4956 = vld [vmem:[#allocation9 + $0x28] sm:$0xff]
    %v4957 = vld [vmem:[#allocation9 + $0x30] sm:$0xff]
    %v4958 = vld [vmem:[#allocation9 + $0x38] sm:$0xff]
    %v4959 = vld [vmem:[#allocation9 + $0x40] sm:$0xff]
    %v4960 = vld [vmem:[#allocation9 + $0x48] sm:$0xff]
    %v4961 = vld [vmem:[#allocation9 + $0x50] sm:$0xff]
    %v4962 = vld [vmem:[#allocation9 + $0x58] sm:$0xff]
    %v4963 = vld [vmem:[#allocation9 + $0x60] sm:$0xff]
    %v4964 = vld [vmem:[#allocation9 + $0x68] sm:$0xff]
    %v4965 = vld [vmem:[#allocation9 + $0x70] sm:$0xff]
    %v4966 = vld [vmem:[#allocation9 + $0x78] sm:$0xff]
    %v4983 = vunpack.c.l.b16 %v4951
    %v4984 = vunpack.c.h.b16 %v4951
    %v4985 = vunpack.c.l.b16 %v4952
    %v4986 = vunpack.c.h.b16 %v4952
    %v4987 = vunpack.c.l.b16 %v4953
    %v4988 = vunpack.c.h.b16 %v4953
    %v4989 = vunpack.c.l.b16 %v4954
    %v4990 = vunpack.c.h.b16 %v4954
    %v4991 = vunpack.c.l.b16 %v4955
    %v4992 = vunpack.c.h.b16 %v4955
    %v4993 = vunpack.c.l.b16 %v4956
    %v4994 = vunpack.c.h.b16 %v4956
    %v4995 = vunpack.c.l.b16 %v4957
    %v4996 = vunpack.c.h.b16 %v4957
    %v4997 = vunpack.c.l.b16 %v4958
    %v4998 = vunpack.c.h.b16 %v4958
    %v4999 = vunpack.c.l.b16 %v4959
    %v5000 = vunpack.c.h.b16 %v4959
    %v5001 = vunpack.c.l.b16 %v4960
    %v5002 = vunpack.c.h.b16 %v4960
    %v5003 = vunpack.c.l.b16 %v4961
    %v5004 = vunpack.c.h.b16 %v4961
    %v5005 = vunpack.c.l.b16 %v4962
    %v5006 = vunpack.c.h.b16 %v4962
    %v5007 = vunpack.c.l.b16 %v4963
    %v5008 = vunpack.c.h.b16 %v4963
    %v5009 = vunpack.c.l.b16 %v4964
    %v5010 = vunpack.c.h.b16 %v4964
    %v5011 = vunpack.c.l.b16 %v4965
    %v5012 = vunpack.c.h.b16 %v4965
    %v5013 = vunpack.c.l.b16 %v4966
    %v5014 = vunpack.c.h.b16 %v4966
    %v5015 = vpack.c.b16 %v4985, %v4983
    %v5016 = vpack.c.b16 %v4986, %v4984
    %v5017 = vpack.c.b16 %v4989, %v4987
    %v5018 = vpack.c.b16 %v4990, %v4988
    %v5019 = vpack.c.b16 %v4993, %v4991
    %v5020 = vpack.c.b16 %v4994, %v4992
    %v5021 = vpack.c.b16 %v4997, %v4995
    %v5022 = vpack.c.b16 %v4998, %v4996
    %v5023 = vpack.c.b16 %v5001, %v4999
    %v5024 = vpack.c.b16 %v5002, %v5000
    %v5025 = vpack.c.b16 %v5005, %v5003
    %v5026 = vpack.c.b16 %v5006, %v5004
    %v5027 = vpack.c.b16 %v5009, %v5007
    %v5028 = vpack.c.b16 %v5010, %v5008
    %v5029 = vpack.c.b16 %v5013, %v5011
    %v5030 = vpack.c.b16 %v5014, %v5012
    %5047 = vmatprep.subr.bf16.mxu0 %v5016
    %5048 = vmatpush1.bf16.msra.mxu0 %v5015
    %5049 = vmatprep.subr.bf16.mxu0 %v5018
    %5050 = vmatpush1.bf16.msra.mxu0 %v5017
    %5051 = vmatprep.subr.bf16.mxu0 %v5020
    %5052 = vmatpush1.bf16.msra.mxu0 %v5019
    %5053 = vmatprep.subr.bf16.mxu0 %v5022
    %5054 = vmatpush1.bf16.msra.mxu0 %v5021
    %5055 = vmatprep.subr.bf16.mxu0 %v5024
    %5056 = vmatpush1.bf16.msra.mxu0 %v5023
    %5057 = vmatprep.subr.bf16.mxu0 %v5026
    %5058 = vmatpush1.bf16.msra.mxu0 %v5025
    %5059 = vmatprep.subr.bf16.mxu0 %v5028
    %5060 = vmatpush1.bf16.msra.mxu0 %v5027
    %5061 = vmatprep.subr.bf16.mxu0 %v5030
    %5062 = vmatpush1.bf16.msra.mxu0 %v5029
    %5063 = vmatprep.subr.bf16.mxu0 0
    %5064 = vmatpush1.bf16.msra.mxu0 0
    %5065 = vmatprep.subr.bf16.mxu0 0
    %5066 = vmatpush1.bf16.msra.mxu0 0
    %5067 = vmatprep.subr.bf16.mxu0 0
    %5068 = vmatpush1.bf16.msra.mxu0 0
    %5069 = vmatprep.subr.bf16.mxu0 0
    %5070 = vmatpush1.bf16.msra.mxu0 0
    %5071 = vmatprep.subr.bf16.mxu0 0
    %5072 = vmatpush1.bf16.msra.mxu0 0
    %5073 = vmatprep.subr.bf16.mxu0 0
    %5074 = vmatpush1.bf16.msra.mxu0 0
    %5075 = vmatprep.subr.bf16.mxu0 0
    %5076 = vmatpush1.bf16.msra.mxu0 0
    %5077 = vmatprep.subr.bf16.mxu0 0
    %5078 = vmatpush1.bf16.msra.mxu0 0
    %5079 = vmatprep.mubr.bf16.mxu0 0
    %5080 = vmatmul.mubr.bf16.gmra.mrb[0].mxu0 %v4950
    %v5081 = vpop.f32.mrb[0].mxu0
    %v5082 = vadd.f32 0.0, %v5081
    %v5083 = vpop.f32.mrb[0].mxu0
    %v5084 = vadd.f32 0.0, %v5083
    %v5085 = vpop.f32.mrb[0].mxu0
    %v5086 = vadd.f32 0.0, %v5085
    %v5087 = vpop.f32.mrb[0].mxu0
    %v5088 = vadd.f32 0.0, %v5087
    %5089 = vdwg.mxu0
    %v5090 = vadd.f32 %v5082, %v5086
    %v5091 = vrot.slane %v5090, 4
    %v5092 = vadd.f32 %v5090, %v5091
    %v5093 = vrot.slane %v5092, 2
    %v5094 = vadd.f32 %v5092, %v5093
    %v5095 = vrot.slane %v5094, 1
    %v5096 = vadd.f32 %v5094, %v5095
    %v5097 = vadd.f32 %v5084, %v5088
    %v5098 = vrot.slane %v5097, 4
    %v5099 = vadd.f32 %v5097, %v5098
    %v5100 = vrot.slane %v5099, 2
    %v5101 = vadd.f32 %v5099, %v5100
    %v5102 = vrot.slane %v5101, 1
    %v5103 = vadd.f32 %v5101, %v5102
    %v5104 = vmul.f32 %v5082, %v5082
    %v5105 = vmul.f32 %v5084, %v5084
    %v5106 = vmul.f32 %v5086, %v5086
    %v5107 = vmul.f32 %v5088, %v5088
    %v5108 = vadd.f32 %v5104, %v5106
    %v5109 = vrot.slane %v5108, 4
    %v5110 = vadd.f32 %v5108, %v5109
    %v5111 = vrot.slane %v5110, 2
    %v5112 = vadd.f32 %v5110, %v5111
    %v5113 = vrot.slane %v5112, 1
    %v5114 = vadd.f32 %v5112, %v5113
    %v5115 = vadd.f32 %v5105, %v5107
    %v5116 = vrot.slane %v5115, 4
    %v5117 = vadd.f32 %v5115, %v5116
    %v5118 = vrot.slane %v5117, 2
    %v5119 = vadd.f32 %v5117, %v5118
    %v5120 = vrot.slane %v5119, 1
    %v5121 = vadd.f32 %v5119, %v5120
    %v5122 = vmul.f32 %v5096, 0.125
    %v5123 = vmul.f32 %v5103, 0.125
    %v5124 = vmul.f32 %v5114, 0.125
    %v5125 = vmul.f32 %v5121, 0.125
    %v5126 = vmul.f32 %v5122, %v5122
    %v5127 = vmul.f32 %v5123, %v5123
    %v5128 = vsub.f32 %v5124, %v5126
    %v5129 = vsub.f32 %v5125, %v5127
    %s5130 = scalar_lea.vmem [#allocation15], 24
    %v5131 = vld [vmem:[%s5130] ss:$2 sm:$0x3]
    %s5132 = scalar_lea.vmem [#allocation15], 25
    %v5133 = vld [vmem:[%s5132] ss:$2 sm:$0x3]
    %v5134 = vsub.f32 %v5082, %v5122
    %v5135 = vsub.f32 %v5084, %v5123
    %v5136 = vsub.f32 %v5086, %v5122
    %v5137 = vsub.f32 %v5088, %v5123
    %v5138 = vadd.f32 %v5128, 1e-05
    %v5139 = vadd.f32 %v5129, 1e-05
    %v5140 = vrsqrt.pop %v5138
    %v5141 = vrsqrt.pop %v5139
    %v5142 = vmul.f32 %v5134, %v5140
    %v5143 = vmul.f32 %v5135, %v5141
    %v5144 = vmul.f32 %v5136, %v5140
    %v5145 = vmul.f32 %v5137, %v5141
    %v5147 = vlaneseq
    %v5148 = vshrl.u32 %v5147, 7
    %v5149 = vsub.s32 0, %v5148
    %v5150 = vrot.slane %v5131, %v5149
    %v5151 = vlaneseq
    %v5152 = vshrl.u32 %v5151, 7
    %v5153 = vsub.s32 1, %v5152
    %v5154 = vrot.slane %v5131, %v5153
    %v5157 = vmul.f32 %v5150, %v5142
    %v5158 = vmul.f32 %v5154, %v5143
    %v5159 = vmul.f32 %v5150, %v5144
    %v5160 = vmul.f32 %v5154, %v5145
    %v5162 = vlaneseq
    %v5163 = vshrl.u32 %v5162, 7
    %v5164 = vsub.s32 0, %v5163
    %v5165 = vrot.slane %v5133, %v5164
    %v5166 = vlaneseq
    %v5167 = vshrl.u32 %v5166, 7
    %v5168 = vsub.s32 1, %v5167
    %v5169 = vrot.slane %v5133, %v5168
    %v5172 = vadd.f32 %v5157, %v5165
    %v5173 = vadd.f32 %v5158, %v5169
    %v5174 = vadd.f32 %v5159, %v5165
    %v5175 = vadd.f32 %v5160, %v5169
    %v5176 = vmul.f32 %v5172, 0.01
    %v5177 = vmul.f32 %v5173, 0.01
    %v5178 = vmul.f32 %v5174, 0.01
    %v5179 = vmul.f32 %v5175, 0.01
    %v5180 = vmax.f32 %v5172, %v5176
    %v5181 = vmax.f32 %v5173, %v5177
    %v5182 = vmax.f32 %v5174, %v5178
    %v5183 = vmax.f32 %v5175, %v5179
    %v5184 = vmul.f32 %v5180, %v165
    %v5185 = vmul.f32 %v5181, %v165
    %v5186 = vmul.f32 %v5182, %v166
    %v5187 = vmul.f32 %v5183, %v166
    %v5188 = vpack.c.bf16 %v5186, %v5184
    %v5189 = vpack.c.bf16 %v5187, %v5185
    %v5190 = vld [vmem:[#allocation10] sm:$0xff]
    %v5191 = vld [vmem:[#allocation10 + $0x8] sm:$0xff]
    %v5192 = vld [vmem:[#allocation10 + $0x10] sm:$0xff]
    %v5193 = vld [vmem:[#allocation10 + $0x18] sm:$0xff]
    %v5194 = vld [vmem:[#allocation10 + $0x20] sm:$0xff]
    %v5195 = vld [vmem:[#allocation10 + $0x28] sm:$0xff]
    %v5196 = vld [vmem:[#allocation10 + $0x30] sm:$0xff]
    %v5197 = vld [vmem:[#allocation10 + $0x38] sm:$0xff]
    %v5198 = vld [vmem:[#allocation10 + $0x40] sm:$0xff]
    %v5199 = vld [vmem:[#allocation10 + $0x48] sm:$0xff]
    %v5200 = vld [vmem:[#allocation10 + $0x50] sm:$0xff]
    %v5201 = vld [vmem:[#allocation10 + $0x58] sm:$0xff]
    %v5202 = vld [vmem:[#allocation10 + $0x60] sm:$0xff]
    %v5203 = vld [vmem:[#allocation10 + $0x68] sm:$0xff]
    %v5204 = vld [vmem:[#allocation10 + $0x70] sm:$0xff]
    %v5205 = vld [vmem:[#allocation10 + $0x78] sm:$0xff]
    %v5206 = vld [vmem:[#allocation10 + $0x80] sm:$0xff]
    %v5207 = vld [vmem:[#allocation10 + $0x88] sm:$0xff]
    %v5208 = vld [vmem:[#allocation10 + $0x90] sm:$0xff]
    %v5209 = vld [vmem:[#allocation10 + $0x98] sm:$0xff]
    %v5210 = vld [vmem:[#allocation10 + $0xa0] sm:$0xff]
    %v5211 = vld [vmem:[#allocation10 + $0xa8] sm:$0xff]
    %v5212 = vld [vmem:[#allocation10 + $0xb0] sm:$0xff]
    %v5213 = vld [vmem:[#allocation10 + $0xb8] sm:$0xff]
    %v5214 = vld [vmem:[#allocation10 + $0xc0] sm:$0xff]
    %v5215 = vld [vmem:[#allocation10 + $0xc8] sm:$0xff]
    %v5216 = vld [vmem:[#allocation10 + $0xd0] sm:$0xff]
    %v5217 = vld [vmem:[#allocation10 + $0xd8] sm:$0xff]
    %v5218 = vld [vmem:[#allocation10 + $0xe0] sm:$0xff]
    %v5219 = vld [vmem:[#allocation10 + $0xe8] sm:$0xff]
    %v5220 = vld [vmem:[#allocation10 + $0xf0] sm:$0xff]
    %v5221 = vld [vmem:[#allocation10 + $0xf8] sm:$0xff]
    %v5222 = vld [vmem:[#allocation10 + $0x100] sm:$0xff]
    %v5223 = vld [vmem:[#allocation10 + $0x108] sm:$0xff]
    %v5224 = vld [vmem:[#allocation10 + $0x110] sm:$0xff]
    %v5225 = vld [vmem:[#allocation10 + $0x118] sm:$0xff]
    %v5226 = vld [vmem:[#allocation10 + $0x120] sm:$0xff]
    %v5227 = vld [vmem:[#allocation10 + $0x128] sm:$0xff]
    %v5228 = vld [vmem:[#allocation10 + $0x130] sm:$0xff]
    %v5229 = vld [vmem:[#allocation10 + $0x138] sm:$0xff]
    %v5230 = vld [vmem:[#allocation10 + $0x140] sm:$0xff]
    %v5231 = vld [vmem:[#allocation10 + $0x148] sm:$0xff]
    %v5232 = vld [vmem:[#allocation10 + $0x150] sm:$0xff]
    %v5233 = vld [vmem:[#allocation10 + $0x158] sm:$0xff]
    %v5234 = vld [vmem:[#allocation10 + $0x160] sm:$0xff]
    %v5235 = vld [vmem:[#allocation10 + $0x168] sm:$0xff]
    %v5236 = vld [vmem:[#allocation10 + $0x170] sm:$0xff]
    %v5237 = vld [vmem:[#allocation10 + $0x178] sm:$0xff]
    %v5238 = vld [vmem:[#allocation10 + $0x180] sm:$0xff]
    %v5239 = vld [vmem:[#allocation10 + $0x188] sm:$0xff]
    %v5240 = vld [vmem:[#allocation10 + $0x190] sm:$0xff]
    %v5241 = vld [vmem:[#allocation10 + $0x198] sm:$0xff]
    %v5242 = vld [vmem:[#allocation10 + $0x1a0] sm:$0xff]
    %v5243 = vld [vmem:[#allocation10 + $0x1a8] sm:$0xff]
    %v5244 = vld [vmem:[#allocation10 + $0x1b0] sm:$0xff]
    %v5245 = vld [vmem:[#allocation10 + $0x1b8] sm:$0xff]
    %v5246 = vld [vmem:[#allocation10 + $0x1c0] sm:$0xff]
    %v5247 = vld [vmem:[#allocation10 + $0x1c8] sm:$0xff]
    %v5248 = vld [vmem:[#allocation10 + $0x1d0] sm:$0xff]
    %v5249 = vld [vmem:[#allocation10 + $0x1d8] sm:$0xff]
    %v5250 = vld [vmem:[#allocation10 + $0x1e0] sm:$0xff]
    %v5251 = vld [vmem:[#allocation10 + $0x1e8] sm:$0xff]
    %v5252 = vld [vmem:[#allocation10 + $0x1f0] sm:$0xff]
    %v5253 = vld [vmem:[#allocation10 + $0x1f8] sm:$0xff]
    %v5318 = vunpack.c.l.b16 %v5190
    %v5319 = vunpack.c.h.b16 %v5190
    %v5320 = vunpack.c.l.b16 %v5191
    %v5321 = vunpack.c.h.b16 %v5191
    %v5322 = vunpack.c.l.b16 %v5192
    %v5323 = vunpack.c.h.b16 %v5192
    %v5324 = vunpack.c.l.b16 %v5193
    %v5325 = vunpack.c.h.b16 %v5193
    %v5326 = vunpack.c.l.b16 %v5194
    %v5327 = vunpack.c.h.b16 %v5194
    %v5328 = vunpack.c.l.b16 %v5195
    %v5329 = vunpack.c.h.b16 %v5195
    %v5330 = vunpack.c.l.b16 %v5196
    %v5331 = vunpack.c.h.b16 %v5196
    %v5332 = vunpack.c.l.b16 %v5197
    %v5333 = vunpack.c.h.b16 %v5197
    %v5334 = vunpack.c.l.b16 %v5198
    %v5335 = vunpack.c.h.b16 %v5198
    %v5336 = vunpack.c.l.b16 %v5199
    %v5337 = vunpack.c.h.b16 %v5199
    %v5338 = vunpack.c.l.b16 %v5200
    %v5339 = vunpack.c.h.b16 %v5200
    %v5340 = vunpack.c.l.b16 %v5201
    %v5341 = vunpack.c.h.b16 %v5201
    %v5342 = vunpack.c.l.b16 %v5202
    %v5343 = vunpack.c.h.b16 %v5202
    %v5344 = vunpack.c.l.b16 %v5203
    %v5345 = vunpack.c.h.b16 %v5203
    %v5346 = vunpack.c.l.b16 %v5204
    %v5347 = vunpack.c.h.b16 %v5204
    %v5348 = vunpack.c.l.b16 %v5205
    %v5349 = vunpack.c.h.b16 %v5205
    %v5350 = vunpack.c.l.b16 %v5206
    %v5351 = vunpack.c.h.b16 %v5206
    %v5352 = vunpack.c.l.b16 %v5207
    %v5353 = vunpack.c.h.b16 %v5207
    %v5354 = vunpack.c.l.b16 %v5208
    %v5355 = vunpack.c.h.b16 %v5208
    %v5356 = vunpack.c.l.b16 %v5209
    %v5357 = vunpack.c.h.b16 %v5209
    %v5358 = vunpack.c.l.b16 %v5210
    %v5359 = vunpack.c.h.b16 %v5210
    %v5360 = vunpack.c.l.b16 %v5211
    %v5361 = vunpack.c.h.b16 %v5211
    %v5362 = vunpack.c.l.b16 %v5212
    %v5363 = vunpack.c.h.b16 %v5212
    %v5364 = vunpack.c.l.b16 %v5213
    %v5365 = vunpack.c.h.b16 %v5213
    %v5366 = vunpack.c.l.b16 %v5214
    %v5367 = vunpack.c.h.b16 %v5214
    %v5368 = vunpack.c.l.b16 %v5215
    %v5369 = vunpack.c.h.b16 %v5215
    %v5370 = vunpack.c.l.b16 %v5216
    %v5371 = vunpack.c.h.b16 %v5216
    %v5372 = vunpack.c.l.b16 %v5217
    %v5373 = vunpack.c.h.b16 %v5217
    %v5374 = vunpack.c.l.b16 %v5218
    %v5375 = vunpack.c.h.b16 %v5218
    %v5376 = vunpack.c.l.b16 %v5219
    %v5377 = vunpack.c.h.b16 %v5219
    %v5378 = vunpack.c.l.b16 %v5220
    %v5379 = vunpack.c.h.b16 %v5220
    %v5380 = vunpack.c.l.b16 %v5221
    %v5381 = vunpack.c.h.b16 %v5221
    %v5382 = vunpack.c.l.b16 %v5222
    %v5383 = vunpack.c.h.b16 %v5222
    %v5384 = vunpack.c.l.b16 %v5223
    %v5385 = vunpack.c.h.b16 %v5223
    %v5386 = vunpack.c.l.b16 %v5224
    %v5387 = vunpack.c.h.b16 %v5224
    %v5388 = vunpack.c.l.b16 %v5225
    %v5389 = vunpack.c.h.b16 %v5225
    %v5390 = vunpack.c.l.b16 %v5226
    %v5391 = vunpack.c.h.b16 %v5226
    %v5392 = vunpack.c.l.b16 %v5227
    %v5393 = vunpack.c.h.b16 %v5227
    %v5394 = vunpack.c.l.b16 %v5228
    %v5395 = vunpack.c.h.b16 %v5228
    %v5396 = vunpack.c.l.b16 %v5229
    %v5397 = vunpack.c.h.b16 %v5229
    %v5398 = vunpack.c.l.b16 %v5230
    %v5399 = vunpack.c.h.b16 %v5230
    %v5400 = vunpack.c.l.b16 %v5231
    %v5401 = vunpack.c.h.b16 %v5231
    %v5402 = vunpack.c.l.b16 %v5232
    %v5403 = vunpack.c.h.b16 %v5232
    %v5404 = vunpack.c.l.b16 %v5233
    %v5405 = vunpack.c.h.b16 %v5233
    %v5406 = vunpack.c.l.b16 %v5234
    %v5407 = vunpack.c.h.b16 %v5234
    %v5408 = vunpack.c.l.b16 %v5235
    %v5409 = vunpack.c.h.b16 %v5235
    %v5410 = vunpack.c.l.b16 %v5236
    %v5411 = vunpack.c.h.b16 %v5236
    %v5412 = vunpack.c.l.b16 %v5237
    %v5413 = vunpack.c.h.b16 %v5237
    %v5414 = vunpack.c.l.b16 %v5238
    %v5415 = vunpack.c.h.b16 %v5238
    %v5416 = vunpack.c.l.b16 %v5239
    %v5417 = vunpack.c.h.b16 %v5239
    %v5418 = vunpack.c.l.b16 %v5240
    %v5419 = vunpack.c.h.b16 %v5240
    %v5420 = vunpack.c.l.b16 %v5241
    %v5421 = vunpack.c.h.b16 %v5241
    %v5422 = vunpack.c.l.b16 %v5242
    %v5423 = vunpack.c.h.b16 %v5242
    %v5424 = vunpack.c.l.b16 %v5243
    %v5425 = vunpack.c.h.b16 %v5243
    %v5426 = vunpack.c.l.b16 %v5244
    %v5427 = vunpack.c.h.b16 %v5244
    %v5428 = vunpack.c.l.b16 %v5245
    %v5429 = vunpack.c.h.b16 %v5245
    %v5430 = vunpack.c.l.b16 %v5246
    %v5431 = vunpack.c.h.b16 %v5246
    %v5432 = vunpack.c.l.b16 %v5247
    %v5433 = vunpack.c.h.b16 %v5247
    %v5434 = vunpack.c.l.b16 %v5248
    %v5435 = vunpack.c.h.b16 %v5248
    %v5436 = vunpack.c.l.b16 %v5249
    %v5437 = vunpack.c.h.b16 %v5249
    %v5438 = vunpack.c.l.b16 %v5250
    %v5439 = vunpack.c.h.b16 %v5250
    %v5440 = vunpack.c.l.b16 %v5251
    %v5441 = vunpack.c.h.b16 %v5251
    %v5442 = vunpack.c.l.b16 %v5252
    %v5443 = vunpack.c.h.b16 %v5252
    %v5444 = vunpack.c.l.b16 %v5253
    %v5445 = vunpack.c.h.b16 %v5253
    %v5446 = vpack.c.b16 %v5322, %v5318
    %v5447 = vpack.c.b16 %v5323, %v5319
    %v5448 = vpack.c.b16 %v5324, %v5320
    %v5449 = vpack.c.b16 %v5325, %v5321
    %v5450 = vpack.c.b16 %v5330, %v5326
    %v5451 = vpack.c.b16 %v5331, %v5327
    %v5452 = vpack.c.b16 %v5332, %v5328
    %v5453 = vpack.c.b16 %v5333, %v5329
    %v5454 = vpack.c.b16 %v5338, %v5334
    %v5455 = vpack.c.b16 %v5339, %v5335
    %v5456 = vpack.c.b16 %v5340, %v5336
    %v5457 = vpack.c.b16 %v5341, %v5337
    %v5458 = vpack.c.b16 %v5346, %v5342
    %v5459 = vpack.c.b16 %v5347, %v5343
    %v5460 = vpack.c.b16 %v5348, %v5344
    %v5461 = vpack.c.b16 %v5349, %v5345
    %v5462 = vpack.c.b16 %v5354, %v5350
    %v5463 = vpack.c.b16 %v5355, %v5351
    %v5464 = vpack.c.b16 %v5356, %v5352
    %v5465 = vpack.c.b16 %v5357, %v5353
    %v5466 = vpack.c.b16 %v5362, %v5358
    %v5467 = vpack.c.b16 %v5363, %v5359
    %v5468 = vpack.c.b16 %v5364, %v5360
    %v5469 = vpack.c.b16 %v5365, %v5361
    %v5470 = vpack.c.b16 %v5370, %v5366
    %v5471 = vpack.c.b16 %v5371, %v5367
    %v5472 = vpack.c.b16 %v5372, %v5368
    %v5473 = vpack.c.b16 %v5373, %v5369
    %v5474 = vpack.c.b16 %v5378, %v5374
    %v5475 = vpack.c.b16 %v5379, %v5375
    %v5476 = vpack.c.b16 %v5380, %v5376
    %v5477 = vpack.c.b16 %v5381, %v5377
    %v5478 = vpack.c.b16 %v5386, %v5382
    %v5479 = vpack.c.b16 %v5387, %v5383
    %v5480 = vpack.c.b16 %v5388, %v5384
    %v5481 = vpack.c.b16 %v5389, %v5385
    %v5482 = vpack.c.b16 %v5394, %v5390
    %v5483 = vpack.c.b16 %v5395, %v5391
    %v5484 = vpack.c.b16 %v5396, %v5392
    %v5485 = vpack.c.b16 %v5397, %v5393
    %v5486 = vpack.c.b16 %v5402, %v5398
    %v5487 = vpack.c.b16 %v5403, %v5399
    %v5488 = vpack.c.b16 %v5404, %v5400
    %v5489 = vpack.c.b16 %v5405, %v5401
    %v5490 = vpack.c.b16 %v5410, %v5406
    %v5491 = vpack.c.b16 %v5411, %v5407
    %v5492 = vpack.c.b16 %v5412, %v5408
    %v5493 = vpack.c.b16 %v5413, %v5409
    %v5494 = vpack.c.b16 %v5418, %v5414
    %v5495 = vpack.c.b16 %v5419, %v5415
    %v5496 = vpack.c.b16 %v5420, %v5416
    %v5497 = vpack.c.b16 %v5421, %v5417
    %v5498 = vpack.c.b16 %v5426, %v5422
    %v5499 = vpack.c.b16 %v5427, %v5423
    %v5500 = vpack.c.b16 %v5428, %v5424
    %v5501 = vpack.c.b16 %v5429, %v5425
    %v5502 = vpack.c.b16 %v5434, %v5430
    %v5503 = vpack.c.b16 %v5435, %v5431
    %v5504 = vpack.c.b16 %v5436, %v5432
    %v5505 = vpack.c.b16 %v5437, %v5433
    %v5506 = vpack.c.b16 %v5442, %v5438
    %v5507 = vpack.c.b16 %v5443, %v5439
    %v5508 = vpack.c.b16 %v5444, %v5440
    %v5509 = vpack.c.b16 %v5445, %v5441
    %5574 = vmatprep.subr.bf16.mxu0 %v5447
    %5575 = vmatpush1.bf16.msra.mxu0 %v5446
    %5576 = vmatprep.subr.bf16.mxu0 %v5451
    %5577 = vmatpush1.bf16.msra.mxu0 %v5450
    %5578 = vmatprep.subr.bf16.mxu0 %v5455
    %5579 = vmatpush1.bf16.msra.mxu0 %v5454
    %5580 = vmatprep.subr.bf16.mxu0 %v5459
    %5581 = vmatpush1.bf16.msra.mxu0 %v5458
    %5582 = vmatprep.subr.bf16.mxu0 %v5463
    %5583 = vmatpush1.bf16.msra.mxu0 %v5462
    %5584 = vmatprep.subr.bf16.mxu0 %v5467
    %5585 = vmatpush1.bf16.msra.mxu0 %v5466
    %5586 = vmatprep.subr.bf16.mxu0 %v5471
    %5587 = vmatpush1.bf16.msra.mxu0 %v5470
    %5588 = vmatprep.subr.bf16.mxu0 %v5475
    %5589 = vmatpush1.bf16.msra.mxu0 %v5474
    %5590 = vmatprep.subr.bf16.mxu0 %v5479
    %5591 = vmatpush1.bf16.msra.mxu0 %v5478
    %5592 = vmatprep.subr.bf16.mxu0 %v5483
    %5593 = vmatpush1.bf16.msra.mxu0 %v5482
    %5594 = vmatprep.subr.bf16.mxu0 %v5487
    %5595 = vmatpush1.bf16.msra.mxu0 %v5486
    %5596 = vmatprep.subr.bf16.mxu0 %v5491
    %5597 = vmatpush1.bf16.msra.mxu0 %v5490
    %5598 = vmatprep.subr.bf16.mxu0 %v5495
    %5599 = vmatpush1.bf16.msra.mxu0 %v5494
    %5600 = vmatprep.subr.bf16.mxu0 %v5499
    %5601 = vmatpush1.bf16.msra.mxu0 %v5498
    %5602 = vmatprep.subr.bf16.mxu0 %v5503
    %5603 = vmatpush1.bf16.msra.mxu0 %v5502
    %5604 = vmatprep.subr.bf16.mxu0 %v5507
    %5605 = vmatpush1.bf16.msra.mxu0 %v5506
    %5606 = vmatprep.mubr.bf16.mxu0 %v5189
    %5607 = vmatmul.mubr.bf16.gmra.mrb[0].mxu0 %v5188
    %v5608 = vpop.f32.mrb[0].mxu0
    %v5609 = vadd.f32 0.0, %v5608
    %v5610 = vpop.f32.mrb[0].mxu0
    %v5611 = vadd.f32 0.0, %v5610
    %v5612 = vpop.f32.mrb[0].mxu0
    %v5613 = vadd.f32 0.0, %v5612
    %v5614 = vpop.f32.mrb[0].mxu0
    %v5615 = vadd.f32 0.0, %v5614
    %5616 = vdwg.mxu0
    %5617 = vmatprep.subr.bf16.mxu0 %v5449
    %5618 = vmatpush1.bf16.msra.mxu0 %v5448
    %5619 = vmatprep.subr.bf16.mxu0 %v5453
    %5620 = vmatpush1.bf16.msra.mxu0 %v5452
    %5621 = vmatprep.subr.bf16.mxu0 %v5457
    %5622 = vmatpush1.bf16.msra.mxu0 %v5456
    %5623 = vmatprep.subr.bf16.mxu0 %v5461
    %5624 = vmatpush1.bf16.msra.mxu0 %v5460
    %5625 = vmatprep.subr.bf16.mxu0 %v5465
    %5626 = vmatpush1.bf16.msra.mxu0 %v5464
    %5627 = vmatprep.subr.bf16.mxu0 %v5469
    %5628 = vmatpush1.bf16.msra.mxu0 %v5468
    %5629 = vmatprep.subr.bf16.mxu0 %v5473
    %5630 = vmatpush1.bf16.msra.mxu0 %v5472
    %5631 = vmatprep.subr.bf16.mxu0 %v5477
    %5632 = vmatpush1.bf16.msra.mxu0 %v5476
    %5633 = vmatprep.subr.bf16.mxu0 %v5481
    %5634 = vmatpush1.bf16.msra.mxu0 %v5480
    %5635 = vmatprep.subr.bf16.mxu0 %v5485
    %5636 = vmatpush1.bf16.msra.mxu0 %v5484
    %5637 = vmatprep.subr.bf16.mxu0 %v5489
    %5638 = vmatpush1.bf16.msra.mxu0 %v5488
    %5639 = vmatprep.subr.bf16.mxu0 %v5493
    %5640 = vmatpush1.bf16.msra.mxu0 %v5492
    %5641 = vmatprep.subr.bf16.mxu0 %v5497
    %5642 = vmatpush1.bf16.msra.mxu0 %v5496
    %5643 = vmatprep.subr.bf16.mxu0 %v5501
    %5644 = vmatpush1.bf16.msra.mxu0 %v5500
    %5645 = vmatprep.subr.bf16.mxu0 %v5505
    %5646 = vmatpush1.bf16.msra.mxu0 %v5504
    %5647 = vmatprep.subr.bf16.mxu0 %v5509
    %5648 = vmatpush1.bf16.msra.mxu0 %v5508
    %5649 = vmatprep.mubr.bf16.mxu0 %v5189
    %5650 = vmatmul.mubr.bf16.gmra.mrb[0].mxu0 %v5188
    %v5651 = vpop.f32.mrb[0].mxu0
    %v5652 = vadd.f32 0.0, %v5651
    %v5653 = vpop.f32.mrb[0].mxu0
    %v5654 = vadd.f32 0.0, %v5653
    %v5655 = vpop.f32.mrb[0].mxu0
    %v5656 = vadd.f32 0.0, %v5655
    %v5657 = vpop.f32.mrb[0].mxu0
    %v5658 = vadd.f32 0.0, %v5657
    %5659 = vdwg.mxu0
    %v5660 = vadd.f32 %v5609, %v5613
    %v5661 = vrot.slane %v5660, 4
    %v5662 = vadd.f32 %v5660, %v5661
    %v5663 = vrot.slane %v5662, 2
    %v5664 = vadd.f32 %v5662, %v5663
    %v5665 = vrot.slane %v5664, 1
    %v5666 = vadd.f32 %v5664, %v5665
    %v5667 = vadd.f32 %v5611, %v5615
    %v5668 = vrot.slane %v5667, 4
    %v5669 = vadd.f32 %v5667, %v5668
    %v5670 = vrot.slane %v5669, 2
    %v5671 = vadd.f32 %v5669, %v5670
    %v5672 = vrot.slane %v5671, 1
    %v5673 = vadd.f32 %v5671, %v5672
    %v5674 = vadd.f32 %v5652, %v5656
    %v5675 = vrot.slane %v5674, 4
    %v5676 = vadd.f32 %v5674, %v5675
    %v5677 = vrot.slane %v5676, 2
    %v5678 = vadd.f32 %v5676, %v5677
    %v5679 = vrot.slane %v5678, 1
    %v5680 = vadd.f32 %v5678, %v5679
    %v5681 = vadd.f32 %v5654, %v5658
    %v5682 = vrot.slane %v5681, 4
    %v5683 = vadd.f32 %v5681, %v5682
    %v5684 = vrot.slane %v5683, 2
    %v5685 = vadd.f32 %v5683, %v5684
    %v5686 = vrot.slane %v5685, 1
    %v5687 = vadd.f32 %v5685, %v5686
    %v5688 = vmul.f32 %v5609, %v5609
    %v5689 = vmul.f32 %v5611, %v5611
    %v5690 = vmul.f32 %v5652, %v5652
    %v5691 = vmul.f32 %v5654, %v5654
    %v5692 = vmul.f32 %v5613, %v5613
    %v5693 = vmul.f32 %v5615, %v5615
    %v5694 = vmul.f32 %v5656, %v5656
    %v5695 = vmul.f32 %v5658, %v5658
    %v5696 = vadd.f32 %v5688, %v5692
    %v5697 = vrot.slane %v5696, 4
    %v5698 = vadd.f32 %v5696, %v5697
    %v5699 = vrot.slane %v5698, 2
    %v5700 = vadd.f32 %v5698, %v5699
    %v5701 = vrot.slane %v5700, 1
    %v5702 = vadd.f32 %v5700, %v5701
    %v5703 = vadd.f32 %v5689, %v5693
    %v5704 = vrot.slane %v5703, 4
    %v5705 = vadd.f32 %v5703, %v5704
    %v5706 = vrot.slane %v5705, 2
    %v5707 = vadd.f32 %v5705, %v5706
    %v5708 = vrot.slane %v5707, 1
    %v5709 = vadd.f32 %v5707, %v5708
    %v5710 = vadd.f32 %v5690, %v5694
    %v5711 = vrot.slane %v5710, 4
    %v5712 = vadd.f32 %v5710, %v5711
    %v5713 = vrot.slane %v5712, 2
    %v5714 = vadd.f32 %v5712, %v5713
    %v5715 = vrot.slane %v5714, 1
    %v5716 = vadd.f32 %v5714, %v5715
    %v5717 = vadd.f32 %v5691, %v5695
    %v5718 = vrot.slane %v5717, 4
    %v5719 = vadd.f32 %v5717, %v5718
    %v5720 = vrot.slane %v5719, 2
    %v5721 = vadd.f32 %v5719, %v5720
    %v5722 = vrot.slane %v5721, 1
    %v5723 = vadd.f32 %v5721, %v5722
    %v5724 = vmul.f32 %v5666, 0.125
    %v5725 = vmul.f32 %v5673, 0.125
    %v5726 = vmul.f32 %v5680, 0.125
    %v5727 = vmul.f32 %v5687, 0.125
    %v5728 = vmul.f32 %v5702, 0.125
    %v5729 = vmul.f32 %v5709, 0.125
    %v5730 = vmul.f32 %v5716, 0.125
    %v5731 = vmul.f32 %v5723, 0.125
    %v5732 = vmul.f32 %v5724, %v5724
    %v5733 = vmul.f32 %v5725, %v5725
    %v5734 = vmul.f32 %v5726, %v5726
    %v5735 = vmul.f32 %v5727, %v5727
    %v5736 = vsub.f32 %v5728, %v5732
    %v5737 = vsub.f32 %v5729, %v5733
    %v5738 = vsub.f32 %v5730, %v5734
    %v5739 = vsub.f32 %v5731, %v5735
    %s5740 = scalar_lea.vmem [#allocation15], 28
    %v5741 = vld [vmem:[%s5740] ss:$2 sm:$0xf]
    %s5742 = scalar_lea.vmem [#allocation15], 29
    %v5743 = vld [vmem:[%s5742] ss:$2 sm:$0xf]
    %v5744 = vsub.f32 %v5609, %v5724
    %v5745 = vsub.f32 %v5611, %v5725
    %v5746 = vsub.f32 %v5652, %v5726
    %v5747 = vsub.f32 %v5654, %v5727
    %v5748 = vsub.f32 %v5613, %v5724
    %v5749 = vsub.f32 %v5615, %v5725
    %v5750 = vsub.f32 %v5656, %v5726
    %v5751 = vsub.f32 %v5658, %v5727
    %v5752 = vadd.f32 %v5736, 1e-05
    %v5753 = vadd.f32 %v5737, 1e-05
    %v5754 = vadd.f32 %v5738, 1e-05
    %v5755 = vadd.f32 %v5739, 1e-05
    %v5756 = vrsqrt.pop %v5752
    %v5757 = vrsqrt.pop %v5753
    %v5758 = vrsqrt.pop %v5754
    %v5759 = vrsqrt.pop %v5755
    %v5760 = vmul.f32 %v5744, %v5756
    %v5761 = vmul.f32 %v5745, %v5757
    %v5762 = vmul.f32 %v5746, %v5758
    %v5763 = vmul.f32 %v5747, %v5759
    %v5764 = vmul.f32 %v5748, %v5756
    %v5765 = vmul.f32 %v5749, %v5757
    %v5766 = vmul.f32 %v5750, %v5758
    %v5767 = vmul.f32 %v5751, %v5759
    %v5769 = vlaneseq
    %v5770 = vshrl.u32 %v5769, 7
    %v5771 = vsub.s32 0, %v5770
    %v5772 = vrot.slane %v5741, %v5771
    %v5773 = vlaneseq
    %v5774 = vshrl.u32 %v5773, 7
    %v5775 = vsub.s32 1, %v5774
    %v5776 = vrot.slane %v5741, %v5775
    %v5777 = vlaneseq
    %v5778 = vshrl.u32 %v5777, 7
    %v5779 = vsub.s32 2, %v5778
    %v5780 = vrot.slane %v5741, %v5779
    %v5781 = vlaneseq
    %v5782 = vshrl.u32 %v5781, 7
    %v5783 = vsub.s32 3, %v5782
    %v5784 = vrot.slane %v5741, %v5783
    %v5789 = vmul.f32 %v5772, %v5760
    %v5790 = vmul.f32 %v5776, %v5761
    %v5791 = vmul.f32 %v5780, %v5762
    %v5792 = vmul.f32 %v5784, %v5763
    %v5793 = vmul.f32 %v5772, %v5764
    %v5794 = vmul.f32 %v5776, %v5765
    %v5795 = vmul.f32 %v5780, %v5766
    %v5796 = vmul.f32 %v5784, %v5767
    %v5798 = vlaneseq
    %v5799 = vshrl.u32 %v5798, 7
    %v5800 = vsub.s32 0, %v5799
    %v5801 = vrot.slane %v5743, %v5800
    %v5802 = vlaneseq
    %v5803 = vshrl.u32 %v5802, 7
    %v5804 = vsub.s32 1, %v5803
    %v5805 = vrot.slane %v5743, %v5804
    %v5806 = vlaneseq
    %v5807 = vshrl.u32 %v5806, 7
    %v5808 = vsub.s32 2, %v5807
    %v5809 = vrot.slane %v5743, %v5808
    %v5810 = vlaneseq
    %v5811 = vshrl.u32 %v5810, 7
    %v5812 = vsub.s32 3, %v5811
    %v5813 = vrot.slane %v5743, %v5812
    %v5818 = vadd.f32 %v5789, %v5801
    %v5819 = vadd.f32 %v5790, %v5805
    %v5820 = vadd.f32 %v5791, %v5809
    %v5821 = vadd.f32 %v5792, %v5813
    %v5822 = vadd.f32 %v5793, %v5801
    %v5823 = vadd.f32 %v5794, %v5805
    %v5824 = vadd.f32 %v5795, %v5809
    %v5825 = vadd.f32 %v5796, %v5813
    %v5826 = vmul.f32 %v5818, 0.01
    %v5827 = vmul.f32 %v5819, 0.01
    %v5828 = vmul.f32 %v5820, 0.01
    %v5829 = vmul.f32 %v5821, 0.01
    %v5830 = vmul.f32 %v5822, 0.01
    %v5831 = vmul.f32 %v5823, 0.01
    %v5832 = vmul.f32 %v5824, 0.01
    %v5833 = vmul.f32 %v5825, 0.01
    %v5834 = vmax.f32 %v5818, %v5826
    %v5835 = vmax.f32 %v5819, %v5827
    %v5836 = vmax.f32 %v5820, %v5828
    %v5837 = vmax.f32 %v5821, %v5829
    %v5838 = vmax.f32 %v5822, %v5830
    %v5839 = vmax.f32 %v5823, %v5831
    %v5840 = vmax.f32 %v5824, %v5832
    %v5841 = vmax.f32 %v5825, %v5833
    %v5842 = vmul.f32 %v5834, %v165
    %v5843 = vmul.f32 %v5835, %v165
    %v5844 = vmul.f32 %v5836, %v165
    %v5845 = vmul.f32 %v5837, %v165
    %v5846 = vmul.f32 %v5838, %v166
    %v5847 = vmul.f32 %v5839, %v166
    %v5848 = vmul.f32 %v5840, %v166
    %v5849 = vmul.f32 %v5841, %v166
    %v5850 = vpack.c.bf16 %v5846, %v5842
    %v5851 = vpack.c.bf16 %v5847, %v5843
    %v5852 = vpack.c.bf16 %v5848, %v5844
    %v5853 = vpack.c.bf16 %v5849, %v5845
    %v5854 = vld [vmem:[#allocation12] sm:$0xff]
    %v5855 = vld [vmem:[#allocation12 + $0x8] sm:$0xff]
    %v5856 = vld [vmem:[#allocation12 + $0x10] sm:$0xf]
    %v5857 = vld [vmem:[#allocation12 + $0x14] sm:$0xff]
    %v5858 = vld [vmem:[#allocation12 + $0x1c] sm:$0xff]
    %v5859 = vld [vmem:[#allocation12 + $0x24] sm:$0xf]
    %v5860 = vld [vmem:[#allocation12 + $0x28] sm:$0xff]
    %v5861 = vld [vmem:[#allocation12 + $0x30] sm:$0xff]
    %v5862 = vld [vmem:[#allocation12 + $0x38] sm:$0xf]
    %v5863 = vld [vmem:[#allocation12 + $0x3c] sm:$0xff]
    %v5864 = vld [vmem:[#allocation12 + $0x44] sm:$0xff]
    %v5865 = vld [vmem:[#allocation12 + $0x4c] sm:$0xf]
    %v5866 = vld [vmem:[#allocation12 + $0x50] sm:$0xff]
    %v5867 = vld [vmem:[#allocation12 + $0x58] sm:$0xff]
    %v5868 = vld [vmem:[#allocation12 + $0x60] sm:$0xf]
    %v5869 = vld [vmem:[#allocation12 + $0x64] sm:$0xff]
    %v5870 = vld [vmem:[#allocation12 + $0x6c] sm:$0xff]
    %v5871 = vld [vmem:[#allocation12 + $0x74] sm:$0xf]
    %v5872 = vld [vmem:[#allocation12 + $0x78] sm:$0xff]
    %v5873 = vld [vmem:[#allocation12 + $0x80] sm:$0xff]
    %v5874 = vld [vmem:[#allocation12 + $0x88] sm:$0xf]
    %v5875 = vld [vmem:[#allocation12 + $0x8c] sm:$0xff]
    %v5876 = vld [vmem:[#allocation12 + $0x94] sm:$0xff]
    %v5877 = vld [vmem:[#allocation12 + $0x9c] sm:$0xf]
    %v5878 = vld [vmem:[#allocation12 + $0xa0] sm:$0xff]
    %v5879 = vld [vmem:[#allocation12 + $0xa8] sm:$0xff]
    %v5880 = vld [vmem:[#allocation12 + $0xb0] sm:$0xf]
    %v5881 = vld [vmem:[#allocation12 + $0xb4] sm:$0xff]
    %v5882 = vld [vmem:[#allocation12 + $0xbc] sm:$0xff]
    %v5883 = vld [vmem:[#allocation12 + $0xc4] sm:$0xf]
    %v5884 = vld [vmem:[#allocation12 + $0xc8] sm:$0xff]
    %v5885 = vld [vmem:[#allocation12 + $0xd0] sm:$0xff]
    %v5886 = vld [vmem:[#allocation12 + $0xd8] sm:$0xf]
    %v5887 = vld [vmem:[#allocation12 + $0xdc] sm:$0xff]
    %v5888 = vld [vmem:[#allocation12 + $0xe4] sm:$0xff]
    %v5889 = vld [vmem:[#allocation12 + $0xec] sm:$0xf]
    %v5890 = vld [vmem:[#allocation12 + $0xf0] sm:$0xff]
    %v5891 = vld [vmem:[#allocation12 + $0xf8] sm:$0xff]
    %v5892 = vld [vmem:[#allocation12 + $0x100] sm:$0xf]
    %v5893 = vld [vmem:[#allocation12 + $0x104] sm:$0xff]
    %v5894 = vld [vmem:[#allocation12 + $0x10c] sm:$0xff]
    %v5895 = vld [vmem:[#allocation12 + $0x114] sm:$0xf]
    %v5896 = vld [vmem:[#allocation12 + $0x118] sm:$0xff]
    %v5897 = vld [vmem:[#allocation12 + $0x120] sm:$0xff]
    %v5898 = vld [vmem:[#allocation12 + $0x128] sm:$0xf]
    %v5899 = vld [vmem:[#allocation12 + $0x12c] sm:$0xff]
    %v5900 = vld [vmem:[#allocation12 + $0x134] sm:$0xff]
    %v5901 = vld [vmem:[#allocation12 + $0x13c] sm:$0xf]
    %v5902 = vld [vmem:[#allocation12 + $0x140] sm:$0xff]
    %v5903 = vld [vmem:[#allocation12 + $0x148] sm:$0xff]
    %v5904 = vld [vmem:[#allocation12 + $0x150] sm:$0xf]
    %v5905 = vld [vmem:[#allocation12 + $0x154] sm:$0xff]
    %v5906 = vld [vmem:[#allocation12 + $0x15c] sm:$0xff]
    %v5907 = vld [vmem:[#allocation12 + $0x164] sm:$0xf]
    %v5908 = vld [vmem:[#allocation12 + $0x168] sm:$0xff]
    %v5909 = vld [vmem:[#allocation12 + $0x170] sm:$0xff]
    %v5910 = vld [vmem:[#allocation12 + $0x178] sm:$0xf]
    %v5911 = vld [vmem:[#allocation12 + $0x17c] sm:$0xff]
    %v5912 = vld [vmem:[#allocation12 + $0x184] sm:$0xff]
    %v5913 = vld [vmem:[#allocation12 + $0x18c] sm:$0xf]
    %v5914 = vld [vmem:[#allocation12 + $0x190] sm:$0xff]
    %v5915 = vld [vmem:[#allocation12 + $0x198] sm:$0xff]
    %v5916 = vld [vmem:[#allocation12 + $0x1a0] sm:$0xf]
    %v5917 = vld [vmem:[#allocation12 + $0x1a4] sm:$0xff]
    %v5918 = vld [vmem:[#allocation12 + $0x1ac] sm:$0xff]
    %v5919 = vld [vmem:[#allocation12 + $0x1b4] sm:$0xf]
    %v5920 = vld [vmem:[#allocation12 + $0x1b8] sm:$0xff]
    %v5921 = vld [vmem:[#allocation12 + $0x1c0] sm:$0xff]
    %v5922 = vld [vmem:[#allocation12 + $0x1c8] sm:$0xf]
    %v5923 = vld [vmem:[#allocation12 + $0x1cc] sm:$0xff]
    %v5924 = vld [vmem:[#allocation12 + $0x1d4] sm:$0xff]
    %v5925 = vld [vmem:[#allocation12 + $0x1dc] sm:$0xf]
    %v5926 = vld [vmem:[#allocation12 + $0x1e0] sm:$0xff]
    %v5927 = vld [vmem:[#allocation12 + $0x1e8] sm:$0xff]
    %v5928 = vld [vmem:[#allocation12 + $0x1f0] sm:$0xf]
    %v5929 = vld [vmem:[#allocation12 + $0x1f4] sm:$0xff]
    %v5930 = vld [vmem:[#allocation12 + $0x1fc] sm:$0xff]
    %v5931 = vld [vmem:[#allocation12 + $0x204] sm:$0xf]
    %v5932 = vld [vmem:[#allocation12 + $0x208] sm:$0xff]
    %v5933 = vld [vmem:[#allocation12 + $0x210] sm:$0xff]
    %v5934 = vld [vmem:[#allocation12 + $0x218] sm:$0xf]
    %v5935 = vld [vmem:[#allocation12 + $0x21c] sm:$0xff]
    %v5936 = vld [vmem:[#allocation12 + $0x224] sm:$0xff]
    %v5937 = vld [vmem:[#allocation12 + $0x22c] sm:$0xf]
    %v5938 = vld [vmem:[#allocation12 + $0x230] sm:$0xff]
    %v5939 = vld [vmem:[#allocation12 + $0x238] sm:$0xff]
    %v5940 = vld [vmem:[#allocation12 + $0x240] sm:$0xf]
    %v5941 = vld [vmem:[#allocation12 + $0x244] sm:$0xff]
    %v5942 = vld [vmem:[#allocation12 + $0x24c] sm:$0xff]
    %v5943 = vld [vmem:[#allocation12 + $0x254] sm:$0xf]
    %v5944 = vld [vmem:[#allocation12 + $0x258] sm:$0xff]
    %v5945 = vld [vmem:[#allocation12 + $0x260] sm:$0xff]
    %v5946 = vld [vmem:[#allocation12 + $0x268] sm:$0xf]
    %v5947 = vld [vmem:[#allocation12 + $0x26c] sm:$0xff]
    %v5948 = vld [vmem:[#allocation12 + $0x274] sm:$0xff]
    %v5949 = vld [vmem:[#allocation12 + $0x27c] sm:$0xf]
    %v5950 = vld [vmem:[#allocation12 + $0x280] sm:$0xff]
    %v5951 = vld [vmem:[#allocation12 + $0x288] sm:$0xff]
    %v5952 = vld [vmem:[#allocation12 + $0x290] sm:$0xf]
    %v5953 = vld [vmem:[#allocation12 + $0x294] sm:$0xff]
    %v5954 = vld [vmem:[#allocation12 + $0x29c] sm:$0xff]
    %v5955 = vld [vmem:[#allocation12 + $0x2a4] sm:$0xf]
    %v5956 = vld [vmem:[#allocation12 + $0x2a8] sm:$0xff]
    %v5957 = vld [vmem:[#allocation12 + $0x2b0] sm:$0xff]
    %v5958 = vld [vmem:[#allocation12 + $0x2b8] sm:$0xf]
    %v5959 = vld [vmem:[#allocation12 + $0x2bc] sm:$0xff]
    %v5960 = vld [vmem:[#allocation12 + $0x2c4] sm:$0xff]
    %v5961 = vld [vmem:[#allocation12 + $0x2cc] sm:$0xf]
    %v5962 = vld [vmem:[#allocation12 + $0x2d0] sm:$0xff]
    %v5963 = vld [vmem:[#allocation12 + $0x2d8] sm:$0xff]
    %v5964 = vld [vmem:[#allocation12 + $0x2e0] sm:$0xf]
    %v5965 = vld [vmem:[#allocation12 + $0x2e4] sm:$0xff]
    %v5966 = vld [vmem:[#allocation12 + $0x2ec] sm:$0xff]
    %v5967 = vld [vmem:[#allocation12 + $0x2f4] sm:$0xf]
    %v5968 = vld [vmem:[#allocation12 + $0x2f8] sm:$0xff]
    %v5969 = vld [vmem:[#allocation12 + $0x300] sm:$0xff]
    %v5970 = vld [vmem:[#allocation12 + $0x308] sm:$0xf]
    %v5971 = vld [vmem:[#allocation12 + $0x30c] sm:$0xff]
    %v5972 = vld [vmem:[#allocation12 + $0x314] sm:$0xff]
    %v5973 = vld [vmem:[#allocation12 + $0x31c] sm:$0xf]
    %v5974 = vld [vmem:[#allocation12 + $0x320] sm:$0xff]
    %v5975 = vld [vmem:[#allocation12 + $0x328] sm:$0xff]
    %v5976 = vld [vmem:[#allocation12 + $0x330] sm:$0xf]
    %v5977 = vld [vmem:[#allocation12 + $0x334] sm:$0xff]
    %v5978 = vld [vmem:[#allocation12 + $0x33c] sm:$0xff]
    %v5979 = vld [vmem:[#allocation12 + $0x344] sm:$0xf]
    %v5980 = vld [vmem:[#allocation12 + $0x348] sm:$0xff]
    %v5981 = vld [vmem:[#allocation12 + $0x350] sm:$0xff]
    %v5982 = vld [vmem:[#allocation12 + $0x358] sm:$0xf]
    %v5983 = vld [vmem:[#allocation12 + $0x35c] sm:$0xff]
    %v5984 = vld [vmem:[#allocation12 + $0x364] sm:$0xff]
    %v5985 = vld [vmem:[#allocation12 + $0x36c] sm:$0xf]
    %v5986 = vld [vmem:[#allocation12 + $0x370] sm:$0xff]
    %v5987 = vld [vmem:[#allocation12 + $0x378] sm:$0xff]
    %v5988 = vld [vmem:[#allocation12 + $0x380] sm:$0xf]
    %v5989 = vld [vmem:[#allocation12 + $0x384] sm:$0xff]
    %v5990 = vld [vmem:[#allocation12 + $0x38c] sm:$0xff]
    %v5991 = vld [vmem:[#allocation12 + $0x394] sm:$0xf]
    %v5992 = vld [vmem:[#allocation12 + $0x398] sm:$0xff]
    %v5993 = vld [vmem:[#allocation12 + $0x3a0] sm:$0xff]
    %v5994 = vld [vmem:[#allocation12 + $0x3a8] sm:$0xf]
    %v5995 = vld [vmem:[#allocation12 + $0x3ac] sm:$0xff]
    %v5996 = vld [vmem:[#allocation12 + $0x3b4] sm:$0xff]
    %v5997 = vld [vmem:[#allocation12 + $0x3bc] sm:$0xf]
    %v5998 = vld [vmem:[#allocation12 + $0x3c0] sm:$0xff]
    %v5999 = vld [vmem:[#allocation12 + $0x3c8] sm:$0xff]
    %v6000 = vld [vmem:[#allocation12 + $0x3d0] sm:$0xf]
    %v6001 = vld [vmem:[#allocation12 + $0x3d4] sm:$0xff]
    %v6002 = vld [vmem:[#allocation12 + $0x3dc] sm:$0xff]
    %v6003 = vld [vmem:[#allocation12 + $0x3e4] sm:$0xf]
    %v6004 = vld [vmem:[#allocation12 + $0x3e8] sm:$0xff]
    %v6005 = vld [vmem:[#allocation12 + $0x3f0] sm:$0xff]
    %v6006 = vld [vmem:[#allocation12 + $0x3f8] sm:$0xf]
    %v6007 = vld [vmem:[#allocation12 + $0x3fc] sm:$0xff]
    %v6008 = vld [vmem:[#allocation12 + $0x404] sm:$0xff]
    %v6009 = vld [vmem:[#allocation12 + $0x40c] sm:$0xf]
    %v6010 = vld [vmem:[#allocation12 + $0x410] sm:$0xff]
    %v6011 = vld [vmem:[#allocation12 + $0x418] sm:$0xff]
    %v6012 = vld [vmem:[#allocation12 + $0x420] sm:$0xf]
    %v6013 = vld [vmem:[#allocation12 + $0x424] sm:$0xff]
    %v6014 = vld [vmem:[#allocation12 + $0x42c] sm:$0xff]
    %v6015 = vld [vmem:[#allocation12 + $0x434] sm:$0xf]
    %v6016 = vld [vmem:[#allocation12 + $0x438] sm:$0xff]
    %v6017 = vld [vmem:[#allocation12 + $0x440] sm:$0xff]
    %v6018 = vld [vmem:[#allocation12 + $0x448] sm:$0xf]
    %v6019 = vld [vmem:[#allocation12 + $0x44c] sm:$0xff]
    %v6020 = vld [vmem:[#allocation12 + $0x454] sm:$0xff]
    %v6021 = vld [vmem:[#allocation12 + $0x45c] sm:$0xf]
    %v6022 = vld [vmem:[#allocation12 + $0x460] sm:$0xff]
    %v6023 = vld [vmem:[#allocation12 + $0x468] sm:$0xff]
    %v6024 = vld [vmem:[#allocation12 + $0x470] sm:$0xf]
    %v6025 = vld [vmem:[#allocation12 + $0x474] sm:$0xff]
    %v6026 = vld [vmem:[#allocation12 + $0x47c] sm:$0xff]
    %v6027 = vld [vmem:[#allocation12 + $0x484] sm:$0xf]
    %v6028 = vld [vmem:[#allocation12 + $0x488] sm:$0xff]
    %v6029 = vld [vmem:[#allocation12 + $0x490] sm:$0xff]
    %v6030 = vld [vmem:[#allocation12 + $0x498] sm:$0xf]
    %v6031 = vld [vmem:[#allocation12 + $0x49c] sm:$0xff]
    %v6032 = vld [vmem:[#allocation12 + $0x4a4] sm:$0xff]
    %v6033 = vld [vmem:[#allocation12 + $0x4ac] sm:$0xf]
    %v6034 = vld [vmem:[#allocation12 + $0x4b0] sm:$0xff]
    %v6035 = vld [vmem:[#allocation12 + $0x4b8] sm:$0xff]
    %v6036 = vld [vmem:[#allocation12 + $0x4c0] sm:$0xf]
    %v6037 = vld [vmem:[#allocation12 + $0x4c4] sm:$0xff]
    %v6038 = vld [vmem:[#allocation12 + $0x4cc] sm:$0xff]
    %v6039 = vld [vmem:[#allocation12 + $0x4d4] sm:$0xf]
    %v6040 = vld [vmem:[#allocation12 + $0x4d8] sm:$0xff]
    %v6041 = vld [vmem:[#allocation12 + $0x4e0] sm:$0xff]
    %v6042 = vld [vmem:[#allocation12 + $0x4e8] sm:$0xf]
    %v6043 = vld [vmem:[#allocation12 + $0x4ec] sm:$0xff]
    %v6044 = vld [vmem:[#allocation12 + $0x4f4] sm:$0xff]
    %v6045 = vld [vmem:[#allocation12 + $0x4fc] sm:$0xf]
    %v6238 = vunpack.c.l.b16 %v5854
    %v6239 = vunpack.c.h.b16 %v5854
    %v6240 = vunpack.c.l.b16 %v5855
    %v6241 = vunpack.c.h.b16 %v5855
    %v6242 = vunpack.c.l.b16 %v5856
    %v6243 = vunpack.c.l.b16 %v5857
    %v6244 = vunpack.c.h.b16 %v5857
    %v6245 = vunpack.c.l.b16 %v5858
    %v6246 = vunpack.c.h.b16 %v5858
    %v6247 = vunpack.c.l.b16 %v5859
    %v6248 = vunpack.c.l.b16 %v5860
    %v6249 = vunpack.c.h.b16 %v5860
    %v6250 = vunpack.c.l.b16 %v5861
    %v6251 = vunpack.c.h.b16 %v5861
    %v6252 = vunpack.c.l.b16 %v5862
    %v6253 = vunpack.c.l.b16 %v5863
    %v6254 = vunpack.c.h.b16 %v5863
    %v6255 = vunpack.c.l.b16 %v5864
    %v6256 = vunpack.c.h.b16 %v5864
    %v6257 = vunpack.c.l.b16 %v5865
    %v6258 = vunpack.c.l.b16 %v5866
    %v6259 = vunpack.c.h.b16 %v5866
    %v6260 = vunpack.c.l.b16 %v5867
    %v6261 = vunpack.c.h.b16 %v5867
    %v6262 = vunpack.c.l.b16 %v5868
    %v6263 = vunpack.c.l.b16 %v5869
    %v6264 = vunpack.c.h.b16 %v5869
    %v6265 = vunpack.c.l.b16 %v5870
    %v6266 = vunpack.c.h.b16 %v5870
    %v6267 = vunpack.c.l.b16 %v5871
    %v6268 = vunpack.c.l.b16 %v5872
    %v6269 = vunpack.c.h.b16 %v5872
    %v6270 = vunpack.c.l.b16 %v5873
    %v6271 = vunpack.c.h.b16 %v5873
    %v6272 = vunpack.c.l.b16 %v5874
    %v6273 = vunpack.c.l.b16 %v5875
    %v6274 = vunpack.c.h.b16 %v5875
    %v6275 = vunpack.c.l.b16 %v5876
    %v6276 = vunpack.c.h.b16 %v5876
    %v6277 = vunpack.c.l.b16 %v5877
    %v6278 = vunpack.c.l.b16 %v5878
    %v6279 = vunpack.c.h.b16 %v5878
    %v6280 = vunpack.c.l.b16 %v5879
    %v6281 = vunpack.c.h.b16 %v5879
    %v6282 = vunpack.c.l.b16 %v5880
    %v6283 = vunpack.c.l.b16 %v5881
    %v6284 = vunpack.c.h.b16 %v5881
    %v6285 = vunpack.c.l.b16 %v5882
    %v6286 = vunpack.c.h.b16 %v5882
    %v6287 = vunpack.c.l.b16 %v5883
    %v6288 = vunpack.c.l.b16 %v5884
    %v6289 = vunpack.c.h.b16 %v5884
    %v6290 = vunpack.c.l.b16 %v5885
    %v6291 = vunpack.c.h.b16 %v5885
    %v6292 = vunpack.c.l.b16 %v5886
    %v6293 = vunpack.c.l.b16 %v5887
    %v6294 = vunpack.c.h.b16 %v5887
    %v6295 = vunpack.c.l.b16 %v5888
    %v6296 = vunpack.c.h.b16 %v5888
    %v6297 = vunpack.c.l.b16 %v5889
    %v6298 = vunpack.c.l.b16 %v5890
    %v6299 = vunpack.c.h.b16 %v5890
    %v6300 = vunpack.c.l.b16 %v5891
    %v6301 = vunpack.c.h.b16 %v5891
    %v6302 = vunpack.c.l.b16 %v5892
    %v6303 = vunpack.c.l.b16 %v5893
    %v6304 = vunpack.c.h.b16 %v5893
    %v6305 = vunpack.c.l.b16 %v5894
    %v6306 = vunpack.c.h.b16 %v5894
    %v6307 = vunpack.c.l.b16 %v5895
    %v6308 = vunpack.c.l.b16 %v5896
    %v6309 = vunpack.c.h.b16 %v5896
    %v6310 = vunpack.c.l.b16 %v5897
    %v6311 = vunpack.c.h.b16 %v5897
    %v6312 = vunpack.c.l.b16 %v5898
    %v6313 = vunpack.c.l.b16 %v5899
    %v6314 = vunpack.c.h.b16 %v5899
    %v6315 = vunpack.c.l.b16 %v5900
    %v6316 = vunpack.c.h.b16 %v5900
    %v6317 = vunpack.c.l.b16 %v5901
    %v6318 = vunpack.c.l.b16 %v5902
    %v6319 = vunpack.c.h.b16 %v5902
    %v6320 = vunpack.c.l.b16 %v5903
    %v6321 = vunpack.c.h.b16 %v5903
    %v6322 = vunpack.c.l.b16 %v5904
    %v6323 = vunpack.c.l.b16 %v5905
    %v6324 = vunpack.c.h.b16 %v5905
    %v6325 = vunpack.c.l.b16 %v5906
    %v6326 = vunpack.c.h.b16 %v5906
    %v6327 = vunpack.c.l.b16 %v5907
    %v6328 = vunpack.c.l.b16 %v5908
    %v6329 = vunpack.c.h.b16 %v5908
    %v6330 = vunpack.c.l.b16 %v5909
    %v6331 = vunpack.c.h.b16 %v5909
    %v6332 = vunpack.c.l.b16 %v5910
    %v6333 = vunpack.c.l.b16 %v5911
    %v6334 = vunpack.c.h.b16 %v5911
    %v6335 = vunpack.c.l.b16 %v5912
    %v6336 = vunpack.c.h.b16 %v5912
    %v6337 = vunpack.c.l.b16 %v5913
    %v6338 = vunpack.c.l.b16 %v5914
    %v6339 = vunpack.c.h.b16 %v5914
    %v6340 = vunpack.c.l.b16 %v5915
    %v6341 = vunpack.c.h.b16 %v5915
    %v6342 = vunpack.c.l.b16 %v5916
    %v6343 = vunpack.c.l.b16 %v5917
    %v6344 = vunpack.c.h.b16 %v5917
    %v6345 = vunpack.c.l.b16 %v5918
    %v6346 = vunpack.c.h.b16 %v5918
    %v6347 = vunpack.c.l.b16 %v5919
    %v6348 = vunpack.c.l.b16 %v5920
    %v6349 = vunpack.c.h.b16 %v5920
    %v6350 = vunpack.c.l.b16 %v5921
    %v6351 = vunpack.c.h.b16 %v5921
    %v6352 = vunpack.c.l.b16 %v5922
    %v6353 = vunpack.c.l.b16 %v5923
    %v6354 = vunpack.c.h.b16 %v5923
    %v6355 = vunpack.c.l.b16 %v5924
    %v6356 = vunpack.c.h.b16 %v5924
    %v6357 = vunpack.c.l.b16 %v5925
    %v6358 = vunpack.c.l.b16 %v5926
    %v6359 = vunpack.c.h.b16 %v5926
    %v6360 = vunpack.c.l.b16 %v5927
    %v6361 = vunpack.c.h.b16 %v5927
    %v6362 = vunpack.c.l.b16 %v5928
    %v6363 = vunpack.c.l.b16 %v5929
    %v6364 = vunpack.c.h.b16 %v5929
    %v6365 = vunpack.c.l.b16 %v5930
    %v6366 = vunpack.c.h.b16 %v5930
    %v6367 = vunpack.c.l.b16 %v5931
    %v6368 = vunpack.c.l.b16 %v5932
    %v6369 = vunpack.c.h.b16 %v5932
    %v6370 = vunpack.c.l.b16 %v5933
    %v6371 = vunpack.c.h.b16 %v5933
    %v6372 = vunpack.c.l.b16 %v5934
    %v6373 = vunpack.c.l.b16 %v5935
    %v6374 = vunpack.c.h.b16 %v5935
    %v6375 = vunpack.c.l.b16 %v5936
    %v6376 = vunpack.c.h.b16 %v5936
    %v6377 = vunpack.c.l.b16 %v5937
    %v6378 = vunpack.c.l.b16 %v5938
    %v6379 = vunpack.c.h.b16 %v5938
    %v6380 = vunpack.c.l.b16 %v5939
    %v6381 = vunpack.c.h.b16 %v5939
    %v6382 = vunpack.c.l.b16 %v5940
    %v6383 = vunpack.c.l.b16 %v5941
    %v6384 = vunpack.c.h.b16 %v5941
    %v6385 = vunpack.c.l.b16 %v5942
    %v6386 = vunpack.c.h.b16 %v5942
    %v6387 = vunpack.c.l.b16 %v5943
    %v6388 = vunpack.c.l.b16 %v5944
    %v6389 = vunpack.c.h.b16 %v5944
    %v6390 = vunpack.c.l.b16 %v5945
    %v6391 = vunpack.c.h.b16 %v5945
    %v6392 = vunpack.c.l.b16 %v5946
    %v6393 = vunpack.c.l.b16 %v5947
    %v6394 = vunpack.c.h.b16 %v5947
    %v6395 = vunpack.c.l.b16 %v5948
    %v6396 = vunpack.c.h.b16 %v5948
    %v6397 = vunpack.c.l.b16 %v5949
    %v6398 = vunpack.c.l.b16 %v5950
    %v6399 = vunpack.c.h.b16 %v5950
    %v6400 = vunpack.c.l.b16 %v5951
    %v6401 = vunpack.c.h.b16 %v5951
    %v6402 = vunpack.c.l.b16 %v5952
    %v6403 = vunpack.c.l.b16 %v5953
    %v6404 = vunpack.c.h.b16 %v5953
    %v6405 = vunpack.c.l.b16 %v5954
    %v6406 = vunpack.c.h.b16 %v5954
    %v6407 = vunpack.c.l.b16 %v5955
    %v6408 = vunpack.c.l.b16 %v5956
    %v6409 = vunpack.c.h.b16 %v5956
    %v6410 = vunpack.c.l.b16 %v5957
    %v6411 = vunpack.c.h.b16 %v5957
    %v6412 = vunpack.c.l.b16 %v5958
    %v6413 = vunpack.c.l.b16 %v5959
    %v6414 = vunpack.c.h.b16 %v5959
    %v6415 = vunpack.c.l.b16 %v5960
    %v6416 = vunpack.c.h.b16 %v5960
    %v6417 = vunpack.c.l.b16 %v5961
    %v6418 = vunpack.c.l.b16 %v5962
    %v6419 = vunpack.c.h.b16 %v5962
    %v6420 = vunpack.c.l.b16 %v5963
    %v6421 = vunpack.c.h.b16 %v5963
    %v6422 = vunpack.c.l.b16 %v5964
    %v6423 = vunpack.c.l.b16 %v5965
    %v6424 = vunpack.c.h.b16 %v5965
    %v6425 = vunpack.c.l.b16 %v5966
    %v6426 = vunpack.c.h.b16 %v5966
    %v6427 = vunpack.c.l.b16 %v5967
    %v6428 = vunpack.c.l.b16 %v5968
    %v6429 = vunpack.c.h.b16 %v5968
    %v6430 = vunpack.c.l.b16 %v5969
    %v6431 = vunpack.c.h.b16 %v5969
    %v6432 = vunpack.c.l.b16 %v5970
    %v6433 = vunpack.c.l.b16 %v5971
    %v6434 = vunpack.c.h.b16 %v5971
    %v6435 = vunpack.c.l.b16 %v5972
    %v6436 = vunpack.c.h.b16 %v5972
    %v6437 = vunpack.c.l.b16 %v5973
    %v6438 = vunpack.c.l.b16 %v5974
    %v6439 = vunpack.c.h.b16 %v5974
    %v6440 = vunpack.c.l.b16 %v5975
    %v6441 = vunpack.c.h.b16 %v5975
    %v6442 = vunpack.c.l.b16 %v5976
    %v6443 = vunpack.c.l.b16 %v5977
    %v6444 = vunpack.c.h.b16 %v5977
    %v6445 = vunpack.c.l.b16 %v5978
    %v6446 = vunpack.c.h.b16 %v5978
    %v6447 = vunpack.c.l.b16 %v5979
    %v6448 = vunpack.c.l.b16 %v5980
    %v6449 = vunpack.c.h.b16 %v5980
    %v6450 = vunpack.c.l.b16 %v5981
    %v6451 = vunpack.c.h.b16 %v5981
    %v6452 = vunpack.c.l.b16 %v5982
    %v6453 = vunpack.c.l.b16 %v5983
    %v6454 = vunpack.c.h.b16 %v5983
    %v6455 = vunpack.c.l.b16 %v5984
    %v6456 = vunpack.c.h.b16 %v5984
    %v6457 = vunpack.c.l.b16 %v5985
    %v6458 = vunpack.c.l.b16 %v5986
    %v6459 = vunpack.c.h.b16 %v5986
    %v6460 = vunpack.c.l.b16 %v5987
    %v6461 = vunpack.c.h.b16 %v5987
    %v6462 = vunpack.c.l.b16 %v5988
    %v6463 = vunpack.c.l.b16 %v5989
    %v6464 = vunpack.c.h.b16 %v5989
    %v6465 = vunpack.c.l.b16 %v5990
    %v6466 = vunpack.c.h.b16 %v5990
    %v6467 = vunpack.c.l.b16 %v5991
    %v6468 = vunpack.c.l.b16 %v5992
    %v6469 = vunpack.c.h.b16 %v5992
    %v6470 = vunpack.c.l.b16 %v5993
    %v6471 = vunpack.c.h.b16 %v5993
    %v6472 = vunpack.c.l.b16 %v5994
    %v6473 = vunpack.c.l.b16 %v5995
    %v6474 = vunpack.c.h.b16 %v5995
    %v6475 = vunpack.c.l.b16 %v5996
    %v6476 = vunpack.c.h.b16 %v5996
    %v6477 = vunpack.c.l.b16 %v5997
    %v6478 = vunpack.c.l.b16 %v5998
    %v6479 = vunpack.c.h.b16 %v5998
    %v6480 = vunpack.c.l.b16 %v5999
    %v6481 = vunpack.c.h.b16 %v5999
    %v6482 = vunpack.c.l.b16 %v6000
    %v6483 = vunpack.c.l.b16 %v6001
    %v6484 = vunpack.c.h.b16 %v6001
    %v6485 = vunpack.c.l.b16 %v6002
    %v6486 = vunpack.c.h.b16 %v6002
    %v6487 = vunpack.c.l.b16 %v6003
    %v6488 = vunpack.c.l.b16 %v6004
    %v6489 = vunpack.c.h.b16 %v6004
    %v6490 = vunpack.c.l.b16 %v6005
    %v6491 = vunpack.c.h.b16 %v6005
    %v6492 = vunpack.c.l.b16 %v6006
    %v6493 = vunpack.c.l.b16 %v6007
    %v6494 = vunpack.c.h.b16 %v6007
    %v6495 = vunpack.c.l.b16 %v6008
    %v6496 = vunpack.c.h.b16 %v6008
    %v6497 = vunpack.c.l.b16 %v6009
    %v6498 = vunpack.c.l.b16 %v6010
    %v6499 = vunpack.c.h.b16 %v6010
    %v6500 = vunpack.c.l.b16 %v6011
    %v6501 = vunpack.c.h.b16 %v6011
    %v6502 = vunpack.c.l.b16 %v6012
    %v6503 = vunpack.c.l.b16 %v6013
    %v6504 = vunpack.c.h.b16 %v6013
    %v6505 = vunpack.c.l.b16 %v6014
    %v6506 = vunpack.c.h.b16 %v6014
    %v6507 = vunpack.c.l.b16 %v6015
    %v6508 = vunpack.c.l.b16 %v6016
    %v6509 = vunpack.c.h.b16 %v6016
    %v6510 = vunpack.c.l.b16 %v6017
    %v6511 = vunpack.c.h.b16 %v6017
    %v6512 = vunpack.c.l.b16 %v6018
    %v6513 = vunpack.c.l.b16 %v6019
    %v6514 = vunpack.c.h.b16 %v6019
    %v6515 = vunpack.c.l.b16 %v6020
    %v6516 = vunpack.c.h.b16 %v6020
    %v6517 = vunpack.c.l.b16 %v6021
    %v6518 = vunpack.c.l.b16 %v6022
    %v6519 = vunpack.c.h.b16 %v6022
    %v6520 = vunpack.c.l.b16 %v6023
    %v6521 = vunpack.c.h.b16 %v6023
    %v6522 = vunpack.c.l.b16 %v6024
    %v6523 = vunpack.c.l.b16 %v6025
    %v6524 = vunpack.c.h.b16 %v6025
    %v6525 = vunpack.c.l.b16 %v6026
    %v6526 = vunpack.c.h.b16 %v6026
    %v6527 = vunpack.c.l.b16 %v6027
    %v6528 = vunpack.c.l.b16 %v6028
    %v6529 = vunpack.c.h.b16 %v6028
    %v6530 = vunpack.c.l.b16 %v6029
    %v6531 = vunpack.c.h.b16 %v6029
    %v6532 = vunpack.c.l.b16 %v6030
    %v6533 = vunpack.c.l.b16 %v6031
    %v6534 = vunpack.c.h.b16 %v6031
    %v6535 = vunpack.c.l.b16 %v6032
    %v6536 = vunpack.c.h.b16 %v6032
    %v6537 = vunpack.c.l.b16 %v6033
    %v6538 = vunpack.c.l.b16 %v6034
    %v6539 = vunpack.c.h.b16 %v6034
    %v6540 = vunpack.c.l.b16 %v6035
    %v6541 = vunpack.c.h.b16 %v6035
    %v6542 = vunpack.c.l.b16 %v6036
    %v6543 = vunpack.c.l.b16 %v6037
    %v6544 = vunpack.c.h.b16 %v6037
    %v6545 = vunpack.c.l.b16 %v6038
    %v6546 = vunpack.c.h.b16 %v6038
    %v6547 = vunpack.c.l.b16 %v6039
    %v6548 = vunpack.c.l.b16 %v6040
    %v6549 = vunpack.c.h.b16 %v6040
    %v6550 = vunpack.c.l.b16 %v6041
    %v6551 = vunpack.c.h.b16 %v6041
    %v6552 = vunpack.c.l.b16 %v6042
    %v6553 = vunpack.c.l.b16 %v6043
    %v6554 = vunpack.c.h.b16 %v6043
    %v6555 = vunpack.c.l.b16 %v6044
    %v6556 = vunpack.c.h.b16 %v6044
    %v6557 = vunpack.c.l.b16 %v6045
    %v6558 = vpack.c.b16 %v6243, %v6238
    %v6559 = vpack.c.b16 %v6244, %v6239
    %v6560 = vpack.c.b16 %v6245, %v6240
    %v6561 = vpack.c.b16 %v6246, %v6241
    %v6562 = vpack.c.b16 %v6247, %v6242
    %v6563 = vpack.c.b16 %v6253, %v6248
    %v6564 = vpack.c.b16 %v6254, %v6249
    %v6565 = vpack.c.b16 %v6255, %v6250
    %v6566 = vpack.c.b16 %v6256, %v6251
    %v6567 = vpack.c.b16 %v6257, %v6252
    %v6568 = vpack.c.b16 %v6263, %v6258
    %v6569 = vpack.c.b16 %v6264, %v6259
    %v6570 = vpack.c.b16 %v6265, %v6260
    %v6571 = vpack.c.b16 %v6266, %v6261
    %v6572 = vpack.c.b16 %v6267, %v6262
    %v6573 = vpack.c.b16 %v6273, %v6268
    %v6574 = vpack.c.b16 %v6274, %v6269
    %v6575 = vpack.c.b16 %v6275, %v6270
    %v6576 = vpack.c.b16 %v6276, %v6271
    %v6577 = vpack.c.b16 %v6277, %v6272
    %v6578 = vpack.c.b16 %v6283, %v6278
    %v6579 = vpack.c.b16 %v6284, %v6279
    %v6580 = vpack.c.b16 %v6285, %v6280
    %v6581 = vpack.c.b16 %v6286, %v6281
    %v6582 = vpack.c.b16 %v6287, %v6282
    %v6583 = vpack.c.b16 %v6293, %v6288
    %v6584 = vpack.c.b16 %v6294, %v6289
    %v6585 = vpack.c.b16 %v6295, %v6290
    %v6586 = vpack.c.b16 %v6296, %v6291
    %v6587 = vpack.c.b16 %v6297, %v6292
    %v6588 = vpack.c.b16 %v6303, %v6298
    %v6589 = vpack.c.b16 %v6304, %v6299
    %v6590 = vpack.c.b16 %v6305, %v6300
    %v6591 = vpack.c.b16 %v6306, %v6301
    %v6592 = vpack.c.b16 %v6307, %v6302
    %v6593 = vpack.c.b16 %v6313, %v6308
    %v6594 = vpack.c.b16 %v6314, %v6309
    %v6595 = vpack.c.b16 %v6315, %v6310
    %v6596 = vpack.c.b16 %v6316, %v6311
    %v6597 = vpack.c.b16 %v6317, %v6312
    %v6598 = vpack.c.b16 %v6323, %v6318
    %v6599 = vpack.c.b16 %v6324, %v6319
    %v6600 = vpack.c.b16 %v6325, %v6320
    %v6601 = vpack.c.b16 %v6326, %v6321
    %v6602 = vpack.c.b16 %v6327, %v6322
    %v6603 = vpack.c.b16 %v6333, %v6328
    %v6604 = vpack.c.b16 %v6334, %v6329
    %v6605 = vpack.c.b16 %v6335, %v6330
    %v6606 = vpack.c.b16 %v6336, %v6331
    %v6607 = vpack.c.b16 %v6337, %v6332
    %v6608 = vpack.c.b16 %v6343, %v6338
    %v6609 = vpack.c.b16 %v6344, %v6339
    %v6610 = vpack.c.b16 %v6345, %v6340
    %v6611 = vpack.c.b16 %v6346, %v6341
    %v6612 = vpack.c.b16 %v6347, %v6342
    %v6613 = vpack.c.b16 %v6353, %v6348
    %v6614 = vpack.c.b16 %v6354, %v6349
    %v6615 = vpack.c.b16 %v6355, %v6350
    %v6616 = vpack.c.b16 %v6356, %v6351
    %v6617 = vpack.c.b16 %v6357, %v6352
    %v6618 = vpack.c.b16 %v6363, %v6358
    %v6619 = vpack.c.b16 %v6364, %v6359
    %v6620 = vpack.c.b16 %v6365, %v6360
    %v6621 = vpack.c.b16 %v6366, %v6361
    %v6622 = vpack.c.b16 %v6367, %v6362
    %v6623 = vpack.c.b16 %v6373, %v6368
    %v6624 = vpack.c.b16 %v6374, %v6369
    %v6625 = vpack.c.b16 %v6375, %v6370
    %v6626 = vpack.c.b16 %v6376, %v6371
    %v6627 = vpack.c.b16 %v6377, %v6372
    %v6628 = vpack.c.b16 %v6383, %v6378
    %v6629 = vpack.c.b16 %v6384, %v6379
    %v6630 = vpack.c.b16 %v6385, %v6380
    %v6631 = vpack.c.b16 %v6386, %v6381
    %v6632 = vpack.c.b16 %v6387, %v6382
    %v6633 = vpack.c.b16 %v6393, %v6388
    %v6634 = vpack.c.b16 %v6394, %v6389
    %v6635 = vpack.c.b16 %v6395, %v6390
    %v6636 = vpack.c.b16 %v6396, %v6391
    %v6637 = vpack.c.b16 %v6397, %v6392
    %v6638 = vpack.c.b16 %v6403, %v6398
    %v6639 = vpack.c.b16 %v6404, %v6399
    %v6640 = vpack.c.b16 %v6405, %v6400
    %v6641 = vpack.c.b16 %v6406, %v6401
    %v6642 = vpack.c.b16 %v6407, %v6402
    %v6643 = vpack.c.b16 %v6413, %v6408
    %v6644 = vpack.c.b16 %v6414, %v6409
    %v6645 = vpack.c.b16 %v6415, %v6410
    %v6646 = vpack.c.b16 %v6416, %v6411
    %v6647 = vpack.c.b16 %v6417, %v6412
    %v6648 = vpack.c.b16 %v6423, %v6418
    %v6649 = vpack.c.b16 %v6424, %v6419
    %v6650 = vpack.c.b16 %v6425, %v6420
    %v6651 = vpack.c.b16 %v6426, %v6421
    %v6652 = vpack.c.b16 %v6427, %v6422
    %v6653 = vpack.c.b16 %v6433, %v6428
    %v6654 = vpack.c.b16 %v6434, %v6429
    %v6655 = vpack.c.b16 %v6435, %v6430
    %v6656 = vpack.c.b16 %v6436, %v6431
    %v6657 = vpack.c.b16 %v6437, %v6432
    %v6658 = vpack.c.b16 %v6443, %v6438
    %v6659 = vpack.c.b16 %v6444, %v6439
    %v6660 = vpack.c.b16 %v6445, %v6440
    %v6661 = vpack.c.b16 %v6446, %v6441
    %v6662 = vpack.c.b16 %v6447, %v6442
    %v6663 = vpack.c.b16 %v6453, %v6448
    %v6664 = vpack.c.b16 %v6454, %v6449
    %v6665 = vpack.c.b16 %v6455, %v6450
    %v6666 = vpack.c.b16 %v6456, %v6451
    %v6667 = vpack.c.b16 %v6457, %v6452
    %v6668 = vpack.c.b16 %v6463, %v6458
    %v6669 = vpack.c.b16 %v6464, %v6459
    %v6670 = vpack.c.b16 %v6465, %v6460
    %v6671 = vpack.c.b16 %v6466, %v6461
    %v6672 = vpack.c.b16 %v6467, %v6462
    %v6673 = vpack.c.b16 %v6473, %v6468
    %v6674 = vpack.c.b16 %v6474, %v6469
    %v6675 = vpack.c.b16 %v6475, %v6470
    %v6676 = vpack.c.b16 %v6476, %v6471
    %v6677 = vpack.c.b16 %v6477, %v6472
    %v6678 = vpack.c.b16 %v6483, %v6478
    %v6679 = vpack.c.b16 %v6484, %v6479
    %v6680 = vpack.c.b16 %v6485, %v6480
    %v6681 = vpack.c.b16 %v6486, %v6481
    %v6682 = vpack.c.b16 %v6487, %v6482
    %v6683 = vpack.c.b16 %v6493, %v6488
    %v6684 = vpack.c.b16 %v6494, %v6489
    %v6685 = vpack.c.b16 %v6495, %v6490
    %v6686 = vpack.c.b16 %v6496, %v6491
    %v6687 = vpack.c.b16 %v6497, %v6492
    %v6688 = vpack.c.b16 %v6503, %v6498
    %v6689 = vpack.c.b16 %v6504, %v6499
    %v6690 = vpack.c.b16 %v6505, %v6500
    %v6691 = vpack.c.b16 %v6506, %v6501
    %v6692 = vpack.c.b16 %v6507, %v6502
    %v6693 = vpack.c.b16 %v6513, %v6508
    %v6694 = vpack.c.b16 %v6514, %v6509
    %v6695 = vpack.c.b16 %v6515, %v6510
    %v6696 = vpack.c.b16 %v6516, %v6511
    %v6697 = vpack.c.b16 %v6517, %v6512
    %v6698 = vpack.c.b16 %v6523, %v6518
    %v6699 = vpack.c.b16 %v6524, %v6519
    %v6700 = vpack.c.b16 %v6525, %v6520
    %v6701 = vpack.c.b16 %v6526, %v6521
    %v6702 = vpack.c.b16 %v6527, %v6522
    %v6703 = vpack.c.b16 %v6533, %v6528
    %v6704 = vpack.c.b16 %v6534, %v6529
    %v6705 = vpack.c.b16 %v6535, %v6530
    %v6706 = vpack.c.b16 %v6536, %v6531
    %v6707 = vpack.c.b16 %v6537, %v6532
    %v6708 = vpack.c.b16 %v6543, %v6538
    %v6709 = vpack.c.b16 %v6544, %v6539
    %v6710 = vpack.c.b16 %v6545, %v6540
    %v6711 = vpack.c.b16 %v6546, %v6541
    %v6712 = vpack.c.b16 %v6547, %v6542
    %v6713 = vpack.c.b16 %v6553, %v6548
    %v6714 = vpack.c.b16 %v6554, %v6549
    %v6715 = vpack.c.b16 %v6555, %v6550
    %v6716 = vpack.c.b16 %v6556, %v6551
    %v6717 = vpack.c.b16 %v6557, %v6552
    %6878 = vmatprep.subr.bf16.mxu0 %v6559
    %6879 = vmatpush1.bf16.msra.mxu0 %v6558
    %6880 = vmatprep.subr.bf16.mxu0 %v6564
    %6881 = vmatpush1.bf16.msra.mxu0 %v6563
    %6882 = vmatprep.subr.bf16.mxu0 %v6569
    %6883 = vmatpush1.bf16.msra.mxu0 %v6568
    %6884 = vmatprep.subr.bf16.mxu0 %v6574
    %6885 = vmatpush1.bf16.msra.mxu0 %v6573
    %6886 = vmatprep.subr.bf16.mxu0 %v6579
    %6887 = vmatpush1.bf16.msra.mxu0 %v6578
    %6888 = vmatprep.subr.bf16.mxu0 %v6584
    %6889 = vmatpush1.bf16.msra.mxu0 %v6583
    %6890 = vmatprep.subr.bf16.mxu0 %v6589
    %6891 = vmatpush1.bf16.msra.mxu0 %v6588
    %6892 = vmatprep.subr.bf16.mxu0 %v6594
    %6893 = vmatpush1.bf16.msra.mxu0 %v6593
    %6894 = vmatprep.subr.bf16.mxu0 %v6599
    %6895 = vmatpush1.bf16.msra.mxu0 %v6598
    %6896 = vmatprep.subr.bf16.mxu0 %v6604
    %6897 = vmatpush1.bf16.msra.mxu0 %v6603
    %6898 = vmatprep.subr.bf16.mxu0 %v6609
    %6899 = vmatpush1.bf16.msra.mxu0 %v6608
    %6900 = vmatprep.subr.bf16.mxu0 %v6614
    %6901 = vmatpush1.bf16.msra.mxu0 %v6613
    %6902 = vmatprep.subr.bf16.mxu0 %v6619
    %6903 = vmatpush1.bf16.msra.mxu0 %v6618
    %6904 = vmatprep.subr.bf16.mxu0 %v6624
    %6905 = vmatpush1.bf16.msra.mxu0 %v6623
    %6906 = vmatprep.subr.bf16.mxu0 %v6629
    %6907 = vmatpush1.bf16.msra.mxu0 %v6628
    %6908 = vmatprep.subr.bf16.mxu0 %v6634
    %6909 = vmatpush1.bf16.msra.mxu0 %v6633
    %6910 = vmatprep.mubr.bf16.mxu0 %v5851
    %6911 = vmatmul.mubr.bf16.gmra.mrb[0].mxu0 %v5850
    %v6912 = vpop.f32.mrb[0].mxu0
    %v6913 = vadd.f32 0.0, %v6912
    %v6914 = vpop.f32.mrb[0].mxu0
    %v6915 = vadd.f32 0.0, %v6914
    %v6916 = vpop.f32.mrb[0].mxu0
    %v6917 = vadd.f32 0.0, %v6916
    %v6918 = vpop.f32.mrb[0].mxu0
    %v6919 = vadd.f32 0.0, %v6918
    %6920 = vdwg.mxu0
    %6921 = vmatprep.subr.bf16.mxu0 %v6639
    %6922 = vmatpush1.bf16.msra.mxu0 %v6638
    %6923 = vmatprep.subr.bf16.mxu0 %v6644
    %6924 = vmatpush1.bf16.msra.mxu0 %v6643
    %6925 = vmatprep.subr.bf16.mxu0 %v6649
    %6926 = vmatpush1.bf16.msra.mxu0 %v6648
    %6927 = vmatprep.subr.bf16.mxu0 %v6654
    %6928 = vmatpush1.bf16.msra.mxu0 %v6653
    %6929 = vmatprep.subr.bf16.mxu0 %v6659
    %6930 = vmatpush1.bf16.msra.mxu0 %v6658
    %6931 = vmatprep.subr.bf16.mxu0 %v6664
    %6932 = vmatpush1.bf16.msra.mxu0 %v6663
    %6933 = vmatprep.subr.bf16.mxu0 %v6669
    %6934 = vmatpush1.bf16.msra.mxu0 %v6668
    %6935 = vmatprep.subr.bf16.mxu0 %v6674
    %6936 = vmatpush1.bf16.msra.mxu0 %v6673
    %6937 = vmatprep.subr.bf16.mxu0 %v6679
    %6938 = vmatpush1.bf16.msra.mxu0 %v6678
    %6939 = vmatprep.subr.bf16.mxu0 %v6684
    %6940 = vmatpush1.bf16.msra.mxu0 %v6683
    %6941 = vmatprep.subr.bf16.mxu0 %v6689
    %6942 = vmatpush1.bf16.msra.mxu0 %v6688
    %6943 = vmatprep.subr.bf16.mxu0 %v6694
    %6944 = vmatpush1.bf16.msra.mxu0 %v6693
    %6945 = vmatprep.subr.bf16.mxu0 %v6699
    %6946 = vmatpush1.bf16.msra.mxu0 %v6698
    %6947 = vmatprep.subr.bf16.mxu0 %v6704
    %6948 = vmatpush1.bf16.msra.mxu0 %v6703
    %6949 = vmatprep.subr.bf16.mxu0 %v6709
    %6950 = vmatpush1.bf16.msra.mxu0 %v6708
    %6951 = vmatprep.subr.bf16.mxu0 %v6714
    %6952 = vmatpush1.bf16.msra.mxu0 %v6713
    %6953 = vmatprep.mubr.bf16.mxu0 %v5853
    %6954 = vmatmul.mubr.bf16.gmra.mrb[0].mxu0 %v5852
    %v6955 = vpop.f32.mrb[0].mxu0
    %v6956 = vadd.f32 %v6913, %v6955
    %v6957 = vpop.f32.mrb[0].mxu0
    %v6958 = vadd.f32 %v6915, %v6957
    %v6959 = vpop.f32.mrb[0].mxu0
    %v6960 = vadd.f32 %v6917, %v6959
    %v6961 = vpop.f32.mrb[0].mxu0
    %v6962 = vadd.f32 %v6919, %v6961
    %6963 = vdwg.mxu0
    %6964 = vmatprep.subr.bf16.mxu0 %v6561
    %6965 = vmatpush1.bf16.msra.mxu0 %v6560
    %6966 = vmatprep.subr.bf16.mxu0 %v6566
    %6967 = vmatpush1.bf16.msra.mxu0 %v6565
    %6968 = vmatprep.subr.bf16.mxu0 %v6571
    %6969 = vmatpush1.bf16.msra.mxu0 %v6570
    %6970 = vmatprep.subr.bf16.mxu0 %v6576
    %6971 = vmatpush1.bf16.msra.mxu0 %v6575
    %6972 = vmatprep.subr.bf16.mxu0 %v6581
    %6973 = vmatpush1.bf16.msra.mxu0 %v6580
    %6974 = vmatprep.subr.bf16.mxu0 %v6586
    %6975 = vmatpush1.bf16.msra.mxu0 %v6585
    %6976 = vmatprep.subr.bf16.mxu0 %v6591
    %6977 = vmatpush1.bf16.msra.mxu0 %v6590
    %6978 = vmatprep.subr.bf16.mxu0 %v6596
    %6979 = vmatpush1.bf16.msra.mxu0 %v6595
    %6980 = vmatprep.subr.bf16.mxu0 %v6601
    %6981 = vmatpush1.bf16.msra.mxu0 %v6600
    %6982 = vmatprep.subr.bf16.mxu0 %v6606
    %6983 = vmatpush1.bf16.msra.mxu0 %v6605
    %6984 = vmatprep.subr.bf16.mxu0 %v6611
    %6985 = vmatpush1.bf16.msra.mxu0 %v6610
    %6986 = vmatprep.subr.bf16.mxu0 %v6616
    %6987 = vmatpush1.bf16.msra.mxu0 %v6615
    %6988 = vmatprep.subr.bf16.mxu0 %v6621
    %6989 = vmatpush1.bf16.msra.mxu0 %v6620
    %6990 = vmatprep.subr.bf16.mxu0 %v6626
    %6991 = vmatpush1.bf16.msra.mxu0 %v6625
    %6992 = vmatprep.subr.bf16.mxu0 %v6631
    %6993 = vmatpush1.bf16.msra.mxu0 %v6630
    %6994 = vmatprep.subr.bf16.mxu0 %v6636
    %6995 = vmatpush1.bf16.msra.mxu0 %v6635
    %6996 = vmatprep.mubr.bf16.mxu0 %v5851
    %6997 = vmatmul.mubr.bf16.gmra.mrb[0].mxu0 %v5850
    %v6998 = vpop.f32.mrb[0].mxu0
    %v6999 = vadd.f32 0.0, %v6998
    %v7000 = vpop.f32.mrb[0].mxu0
    %v7001 = vadd.f32 0.0, %v7000
    %v7002 = vpop.f32.mrb[0].mxu0
    %v7003 = vadd.f32 0.0, %v7002
    %v7004 = vpop.f32.mrb[0].mxu0
    %v7005 = vadd.f32 0.0, %v7004
    %7006 = vdwg.mxu0
    %7007 = vmatprep.subr.bf16.mxu0 %v6641
    %7008 = vmatpush1.bf16.msra.mxu0 %v6640
    %7009 = vmatprep.subr.bf16.mxu0 %v6646
    %7010 = vmatpush1.bf16.msra.mxu0 %v6645
    %7011 = vmatprep.subr.bf16.mxu0 %v6651
    %7012 = vmatpush1.bf16.msra.mxu0 %v6650
    %7013 = vmatprep.subr.bf16.mxu0 %v6656
    %7014 = vmatpush1.bf16.msra.mxu0 %v6655
    %7015 = vmatprep.subr.bf16.mxu0 %v6661
    %7016 = vmatpush1.bf16.msra.mxu0 %v6660
    %7017 = vmatprep.subr.bf16.mxu0 %v6666
    %7018 = vmatpush1.bf16.msra.mxu0 %v6665
    %7019 = vmatprep.subr.bf16.mxu0 %v6671
    %7020 = vmatpush1.bf16.msra.mxu0 %v6670
    %7021 = vmatprep.subr.bf16.mxu0 %v6676
    %7022 = vmatpush1.bf16.msra.mxu0 %v6675
    %7023 = vmatprep.subr.bf16.mxu0 %v6681
    %7024 = vmatpush1.bf16.msra.mxu0 %v6680
    %7025 = vmatprep.subr.bf16.mxu0 %v6686
    %7026 = vmatpush1.bf16.msra.mxu0 %v6685
    %7027 = vmatprep.subr.bf16.mxu0 %v6691
    %7028 = vmatpush1.bf16.msra.mxu0 %v6690
    %7029 = vmatprep.subr.bf16.mxu0 %v6696
    %7030 = vmatpush1.bf16.msra.mxu0 %v6695
    %7031 = vmatprep.subr.bf16.mxu0 %v6701
    %7032 = vmatpush1.bf16.msra.mxu0 %v6700
    %7033 = vmatprep.subr.bf16.mxu0 %v6706
    %7034 = vmatpush1.bf16.msra.mxu0 %v6705
    %7035 = vmatprep.subr.bf16.mxu0 %v6711
    %7036 = vmatpush1.bf16.msra.mxu0 %v6710
    %7037 = vmatprep.subr.bf16.mxu0 %v6716
    %7038 = vmatpush1.bf16.msra.mxu0 %v6715
    %7039 = vmatprep.mubr.bf16.mxu0 %v5853
    %7040 = vmatmul.mubr.bf16.gmra.mrb[0].mxu0 %v5852
    %v7041 = vpop.f32.mrb[0].mxu0
    %v7042 = vadd.f32 %v6999, %v7041
    %v7043 = vpop.f32.mrb[0].mxu0
    %v7044 = vadd.f32 %v7001, %v7043
    %v7045 = vpop.f32.mrb[0].mxu0
    %v7046 = vadd.f32 %v7003, %v7045
    %v7047 = vpop.f32.mrb[0].mxu0
    %v7048 = vadd.f32 %v7005, %v7047
    %7049 = vdwg.mxu0
    %7050 = vmatprep.subr.bf16.mxu0 0
    %7051 = vmatpush1.bf16.msra.mxu0 %v6562
    %7052 = vmatprep.subr.bf16.mxu0 0
    %7053 = vmatpush1.bf16.msra.mxu0 %v6567
    %7054 = vmatprep.subr.bf16.mxu0 0
    %7055 = vmatpush1.bf16.msra.mxu0 %v6572
    %7056 = vmatprep.subr.bf16.mxu0 0
    %7057 = vmatpush1.bf16.msra.mxu0 %v6577
    %7058 = vmatprep.subr.bf16.mxu0 0
    %7059 = vmatpush1.bf16.msra.mxu0 %v6582
    %7060 = vmatprep.subr.bf16.mxu0 0
    %7061 = vmatpush1.bf16.msra.mxu0 %v6587
    %7062 = vmatprep.subr.bf16.mxu0 0
    %7063 = vmatpush1.bf16.msra.mxu0 %v6592
    %7064 = vmatprep.subr.bf16.mxu0 0
    %7065 = vmatpush1.bf16.msra.mxu0 %v6597
    %7066 = vmatprep.subr.bf16.mxu0 0
    %7067 = vmatpush1.bf16.msra.mxu0 %v6602
    %7068 = vmatprep.subr.bf16.mxu0 0
    %7069 = vmatpush1.bf16.msra.mxu0 %v6607
    %7070 = vmatprep.subr.bf16.mxu0 0
    %7071 = vmatpush1.bf16.msra.mxu0 %v6612
    %7072 = vmatprep.subr.bf16.mxu0 0
    %7073 = vmatpush1.bf16.msra.mxu0 %v6617
    %7074 = vmatprep.subr.bf16.mxu0 0
    %7075 = vmatpush1.bf16.msra.mxu0 %v6622
    %7076 = vmatprep.subr.bf16.mxu0 0
    %7077 = vmatpush1.bf16.msra.mxu0 %v6627
    %7078 = vmatprep.subr.bf16.mxu0 0
    %7079 = vmatpush1.bf16.msra.mxu0 %v6632
    %7080 = vmatprep.subr.bf16.mxu0 0
    %7081 = vmatpush1.bf16.msra.mxu0 %v6637
    %7082 = vmatprep.mubr.bf16.mxu0 %v5851
    %7083 = vmatmul.mubr.bf16.gmra.mrb[0].mxu0 %v5850
    %v7084 = vpop.f32.mrb[0].mxu0
    %v7085 = vadd.f32 0.0, %v7084
    %v7086 = vpop.f32.mrb[0].mxu0
    %v7087 = vpop.f32.mrb[0].mxu0
    %v7088 = vadd.f32 0.0, %v7087
    %v7089 = vpop.f32.mrb[0].mxu0
    %7090 = vdwg.mxu0
    %7091 = vmatprep.subr.bf16.mxu0 0
    %7092 = vmatpush1.bf16.msra.mxu0 %v6642
    %7093 = vmatprep.subr.bf16.mxu0 0
    %7094 = vmatpush1.bf16.msra.mxu0 %v6647
    %7095 = vmatprep.subr.bf16.mxu0 0
    %7096 = vmatpush1.bf16.msra.mxu0 %v6652
    %7097 = vmatprep.subr.bf16.mxu0 0
    %7098 = vmatpush1.bf16.msra.mxu0 %v6657
    %7099 = vmatprep.subr.bf16.mxu0 0
    %7100 = vmatpush1.bf16.msra.mxu0 %v6662
    %7101 = vmatprep.subr.bf16.mxu0 0
    %7102 = vmatpush1.bf16.msra.mxu0 %v6667
    %7103 = vmatprep.subr.bf16.mxu0 0
    %7104 = vmatpush1.bf16.msra.mxu0 %v6672
    %7105 = vmatprep.subr.bf16.mxu0 0
    %7106 = vmatpush1.bf16.msra.mxu0 %v6677
    %7107 = vmatprep.subr.bf16.mxu0 0
    %7108 = vmatpush1.bf16.msra.mxu0 %v6682
    %7109 = vmatprep.subr.bf16.mxu0 0
    %7110 = vmatpush1.bf16.msra.mxu0 %v6687
    %7111 = vmatprep.subr.bf16.mxu0 0
    %7112 = vmatpush1.bf16.msra.mxu0 %v6692
    %7113 = vmatprep.subr.bf16.mxu0 0
    %7114 = vmatpush1.bf16.msra.mxu0 %v6697
    %7115 = vmatprep.subr.bf16.mxu0 0
    %7116 = vmatpush1.bf16.msra.mxu0 %v6702
    %7117 = vmatprep.subr.bf16.mxu0 0
    %7118 = vmatpush1.bf16.msra.mxu0 %v6707
    %7119 = vmatprep.subr.bf16.mxu0 0
    %7120 = vmatpush1.bf16.msra.mxu0 %v6712
    %7121 = vmatprep.subr.bf16.mxu0 0
    %7122 = vmatpush1.bf16.msra.mxu0 %v6717
    %7123 = vmatprep.mubr.bf16.mxu0 %v5853
    %7124 = vmatmul.mubr.bf16.gmra.mrb[0].mxu0 %v5852
    %v7125 = vpop.f32.mrb[0].mxu0
    %v7126 = vadd.f32 %v7085, %v7125
    %v7127 = vpop.f32.mrb[0].mxu0
    %v7128 = vpop.f32.mrb[0].mxu0
    %v7129 = vadd.f32 %v7088, %v7128
    %v7130 = vpop.f32.mrb[0].mxu0
    %7131 = vdwg.mxu0
    %v7132 = vadd.f32 %v6956, %v6960
    %v7133 = vrot.slane %v7132, 4
    %v7134 = vadd.f32 %v7132, %v7133
    %v7135 = vrot.slane %v7134, 2
    %v7136 = vadd.f32 %v7134, %v7135
    %v7137 = vrot.slane %v7136, 1
    %v7138 = vadd.f32 %v7136, %v7137
    %v7139 = vadd.f32 %v6958, %v6962
    %v7140 = vrot.slane %v7139, 4
    %v7141 = vadd.f32 %v7139, %v7140
    %v7142 = vrot.slane %v7141, 2
    %v7143 = vadd.f32 %v7141, %v7142
    %v7144 = vrot.slane %v7143, 1
    %v7145 = vadd.f32 %v7143, %v7144
    %v7146 = vadd.f32 %v7042, %v7046
    %v7147 = vrot.slane %v7146, 4
    %v7148 = vadd.f32 %v7146, %v7147
    %v7149 = vrot.slane %v7148, 2
    %v7150 = vadd.f32 %v7148, %v7149
    %v7151 = vrot.slane %v7150, 1
    %v7152 = vadd.f32 %v7150, %v7151
    %v7153 = vadd.f32 %v7044, %v7048
    %v7154 = vrot.slane %v7153, 4
    %v7155 = vadd.f32 %v7153, %v7154
    %v7156 = vrot.slane %v7155, 2
    %v7157 = vadd.f32 %v7155, %v7156
    %v7158 = vrot.slane %v7157, 1
    %v7159 = vadd.f32 %v7157, %v7158
    %v7160 = vadd.f32 %v7126, %v7129
    %v7161 = vrot.slane %v7160, 4
    %v7162 = vadd.f32 %v7160, %v7161
    %v7163 = vrot.slane %v7162, 2
    %v7164 = vadd.f32 %v7162, %v7163
    %v7165 = vrot.slane %v7164, 1
    %v7166 = vadd.f32 %v7164, %v7165
    %v7167 = vmul.f32 %v6956, %v6956
    %v7168 = vmul.f32 %v6958, %v6958
    %v7169 = vmul.f32 %v7042, %v7042
    %v7170 = vmul.f32 %v7044, %v7044
    %v7171 = vmul.f32 %v7126, %v7126
    %v7172 = vmul.f32 %v6960, %v6960
    %v7173 = vmul.f32 %v6962, %v6962
    %v7174 = vmul.f32 %v7046, %v7046
    %v7175 = vmul.f32 %v7048, %v7048
    %v7176 = vmul.f32 %v7129, %v7129
    %v7177 = vadd.f32 %v7167, %v7172
    %v7178 = vrot.slane %v7177, 4
    %v7179 = vadd.f32 %v7177, %v7178
    %v7180 = vrot.slane %v7179, 2
    %v7181 = vadd.f32 %v7179, %v7180
    %v7182 = vrot.slane %v7181, 1
    %v7183 = vadd.f32 %v7181, %v7182
    %v7184 = vadd.f32 %v7168, %v7173
    %v7185 = vrot.slane %v7184, 4
    %v7186 = vadd.f32 %v7184, %v7185
    %v7187 = vrot.slane %v7186, 2
    %v7188 = vadd.f32 %v7186, %v7187
    %v7189 = vrot.slane %v7188, 1
    %v7190 = vadd.f32 %v7188, %v7189
    %v7191 = vadd.f32 %v7169, %v7174
    %v7192 = vrot.slane %v7191, 4
    %v7193 = vadd.f32 %v7191, %v7192
    %v7194 = vrot.slane %v7193, 2
    %v7195 = vadd.f32 %v7193, %v7194
    %v7196 = vrot.slane %v7195, 1
    %v7197 = vadd.f32 %v7195, %v7196
    %v7198 = vadd.f32 %v7170, %v7175
    %v7199 = vrot.slane %v7198, 4
    %v7200 = vadd.f32 %v7198, %v7199
    %v7201 = vrot.slane %v7200, 2
    %v7202 = vadd.f32 %v7200, %v7201
    %v7203 = vrot.slane %v7202, 1
    %v7204 = vadd.f32 %v7202, %v7203
    %v7205 = vadd.f32 %v7171, %v7176
    %v7206 = vrot.slane %v7205, 4
    %v7207 = vadd.f32 %v7205, %v7206
    %v7208 = vrot.slane %v7207, 2
    %v7209 = vadd.f32 %v7207, %v7208
    %v7210 = vrot.slane %v7209, 1
    %v7211 = vadd.f32 %v7209, %v7210
    %v7212 = vmul.f32 %v7138, 0.125
    %v7213 = vmul.f32 %v7145, 0.125
    %v7214 = vmul.f32 %v7152, 0.125
    %v7215 = vmul.f32 %v7159, 0.125
    %v7216 = vmul.f32 %v7166, 0.125
    %v7217 = vmul.f32 %v7183, 0.125
    %v7218 = vmul.f32 %v7190, 0.125
    %v7219 = vmul.f32 %v7197, 0.125
    %v7220 = vmul.f32 %v7204, 0.125
    %v7221 = vmul.f32 %v7211, 0.125
    %v7222 = vmul.f32 %v7212, %v7212
    %v7223 = vmul.f32 %v7213, %v7213
    %v7224 = vmul.f32 %v7214, %v7214
    %v7225 = vmul.f32 %v7215, %v7215
    %v7226 = vmul.f32 %v7216, %v7216
    %v7227 = vsub.f32 %v7217, %v7222
    %v7228 = vsub.f32 %v7218, %v7223
    %v7229 = vsub.f32 %v7219, %v7224
    %v7230 = vsub.f32 %v7220, %v7225
    %v7231 = vsub.f32 %v7221, %v7226
    %s7232 = scalar_lea.vmem [#allocation15], 36
    %v7233 = vld [vmem:[%s7232] ss:$2 sm:$0x1f]
    %s7234 = scalar_lea.vmem [#allocation15], 37
    %v7235 = vld [vmem:[%s7234] ss:$2 sm:$0x1f]
    %v7236 = vsub.f32 %v6956, %v7212
    %v7237 = vsub.f32 %v6958, %v7213
    %v7238 = vsub.f32 %v7042, %v7214
    %v7239 = vsub.f32 %v7044, %v7215
    %v7240 = vsub.f32 %v7126, %v7216
    %v7241 = vsub.f32 %v6960, %v7212
    %v7242 = vsub.f32 %v6962, %v7213
    %v7243 = vsub.f32 %v7046, %v7214
    %v7244 = vsub.f32 %v7048, %v7215
    %v7245 = vsub.f32 %v7129, %v7216
    %v7246 = vadd.f32 %v7227, 1e-05
    %v7247 = vadd.f32 %v7228, 1e-05
    %v7248 = vadd.f32 %v7229, 1e-05
    %v7249 = vadd.f32 %v7230, 1e-05
    %v7250 = vadd.f32 %v7231, 1e-05
    %v7251 = vrsqrt.pop %v7246
    %v7252 = vrsqrt.pop %v7247
    %v7253 = vrsqrt.pop %v7248
    %v7254 = vrsqrt.pop %v7249
    %v7255 = vrsqrt.pop %v7250
    %v7256 = vmul.f32 %v7236, %v7251
    %v7257 = vmul.f32 %v7237, %v7252
    %v7258 = vmul.f32 %v7238, %v7253
    %v7259 = vmul.f32 %v7239, %v7254
    %v7260 = vmul.f32 %v7240, %v7255
    %v7261 = vmul.f32 %v7241, %v7251
    %v7262 = vmul.f32 %v7242, %v7252
    %v7263 = vmul.f32 %v7243, %v7253
    %v7264 = vmul.f32 %v7244, %v7254
    %v7265 = vmul.f32 %v7245, %v7255
    %v7267 = vlaneseq
    %v7268 = vshrl.u32 %v7267, 7
    %v7269 = vsub.s32 0, %v7268
    %v7270 = vrot.slane %v7233, %v7269
    %v7271 = vlaneseq
    %v7272 = vshrl.u32 %v7271, 7
    %v7273 = vsub.s32 1, %v7272
    %v7274 = vrot.slane %v7233, %v7273
    %v7275 = vlaneseq
    %v7276 = vshrl.u32 %v7275, 7
    %v7277 = vsub.s32 2, %v7276
    %v7278 = vrot.slane %v7233, %v7277
    %v7279 = vlaneseq
    %v7280 = vshrl.u32 %v7279, 7
    %v7281 = vsub.s32 3, %v7280
    %v7282 = vrot.slane %v7233, %v7281
    %v7283 = vlaneseq
    %v7284 = vshrl.u32 %v7283, 7
    %v7285 = vsub.s32 4, %v7284
    %v7286 = vrot.slane %v7233, %v7285
    %v7292 = vmul.f32 %v7270, %v7256
    %v7293 = vmul.f32 %v7274, %v7257
    %v7294 = vmul.f32 %v7278, %v7258
    %v7295 = vmul.f32 %v7282, %v7259
    %v7296 = vmul.f32 %v7286, %v7260
    %v7297 = vmul.f32 %v7270, %v7261
    %v7298 = vmul.f32 %v7274, %v7262
    %v7299 = vmul.f32 %v7278, %v7263
    %v7300 = vmul.f32 %v7282, %v7264
    %v7301 = vmul.f32 %v7286, %v7265
    %v7303 = vlaneseq
    %v7304 = vshrl.u32 %v7303, 7
    %v7305 = vsub.s32 0, %v7304
    %v7306 = vrot.slane %v7235, %v7305
    %v7307 = vlaneseq
    %v7308 = vshrl.u32 %v7307, 7
    %v7309 = vsub.s32 1, %v7308
    %v7310 = vrot.slane %v7235, %v7309
    %v7311 = vlaneseq
    %v7312 = vshrl.u32 %v7311, 7
    %v7313 = vsub.s32 2, %v7312
    %v7314 = vrot.slane %v7235, %v7313
    %v7315 = vlaneseq
    %v7316 = vshrl.u32 %v7315, 7
    %v7317 = vsub.s32 3, %v7316
    %v7318 = vrot.slane %v7235, %v7317
    %v7319 = vlaneseq
    %v7320 = vshrl.u32 %v7319, 7
    %v7321 = vsub.s32 4, %v7320
    %v7322 = vrot.slane %v7235, %v7321
    %v7328 = vadd.f32 %v7292, %v7306
    %v7329 = vadd.f32 %v7293, %v7310
    %v7330 = vadd.f32 %v7294, %v7314
    %v7331 = vadd.f32 %v7295, %v7318
    %v7332 = vadd.f32 %v7296, %v7322
    %v7333 = vadd.f32 %v7297, %v7306
    %v7334 = vadd.f32 %v7298, %v7310
    %v7335 = vadd.f32 %v7299, %v7314
    %v7336 = vadd.f32 %v7300, %v7318
    %v7337 = vadd.f32 %v7301, %v7322
    %v7338 = vmul.f32 %v7328, 0.01
    %v7339 = vmul.f32 %v7329, 0.01
    %v7340 = vmul.f32 %v7330, 0.01
    %v7341 = vmul.f32 %v7331, 0.01
    %v7342 = vmul.f32 %v7332, 0.01
    %v7343 = vmul.f32 %v7333, 0.01
    %v7344 = vmul.f32 %v7334, 0.01
    %v7345 = vmul.f32 %v7335, 0.01
    %v7346 = vmul.f32 %v7336, 0.01
    %v7347 = vmul.f32 %v7337, 0.01
    %v7348 = vmax.f32 %v7328, %v7338
    %v7349 = vmax.f32 %v7329, %v7339
    %v7350 = vmax.f32 %v7330, %v7340
    %v7351 = vmax.f32 %v7331, %v7341
    %v7352 = vmax.f32 %v7332, %v7342
    %v7353 = vmax.f32 %v7333, %v7343
    %v7354 = vmax.f32 %v7334, %v7344
    %v7355 = vmax.f32 %v7335, %v7345
    %v7356 = vmax.f32 %v7336, %v7346
    %v7357 = vmax.f32 %v7337, %v7347
    %v7358 = vmul.f32 %v7348, %v165
    %v7359 = vmul.f32 %v7349, %v165
    %v7360 = vmul.f32 %v7350, %v165
    %v7361 = vmul.f32 %v7351, %v165
    %v7362 = vmul.f32 %v7352, %v165
    %v7363 = vmul.f32 %v7353, %v166
    %v7364 = vmul.f32 %v7354, %v166
    %v7365 = vmul.f32 %v7355, %v166
    %v7366 = vmul.f32 %v7356, %v166
    %v7367 = vmul.f32 %v7357, %v166
    %v7368 = vpack.c.bf16 %v7363, %v7358
    %v7369 = vpack.c.bf16 %v7364, %v7359
    %v7370 = vpack.c.bf16 %v7365, %v7360
    %v7371 = vpack.c.bf16 %v7366, %v7361
    %v7372 = vpack.c.bf16 %v7367, %v7362
    %v7373 = vld [vmem:[#allocation13] sm:$0xff]
    %v7374 = vld [vmem:[#allocation13 + $0x8] sm:$0xff]
    %v7375 = vld [vmem:[#allocation13 + $0x10] sm:$0xff]
    %v7376 = vld [vmem:[#allocation13 + $0x18] sm:$0xf]
    %v7377 = vld [vmem:[#allocation13 + $0x1c] sm:$0xff]
    %v7378 = vld [vmem:[#allocation13 + $0x24] sm:$0xff]
    %v7379 = vld [vmem:[#allocation13 + $0x2c] sm:$0xff]
    %v7380 = vld [vmem:[#allocation13 + $0x34] sm:$0xf]
    %v7381 = vld [vmem:[#allocation13 + $0x38] sm:$0xff]
    %v7382 = vld [vmem:[#allocation13 + $0x40] sm:$0xff]
    %v7383 = vld [vmem:[#allocation13 + $0x48] sm:$0xff]
    %v7384 = vld [vmem:[#allocation13 + $0x50] sm:$0xf]
    %v7385 = vld [vmem:[#allocation13 + $0x54] sm:$0xff]
    %v7386 = vld [vmem:[#allocation13 + $0x5c] sm:$0xff]
    %v7387 = vld [vmem:[#allocation13 + $0x64] sm:$0xff]
    %v7388 = vld [vmem:[#allocation13 + $0x6c] sm:$0xf]
    %v7389 = vld [vmem:[#allocation13 + $0x70] sm:$0xff]
    %v7390 = vld [vmem:[#allocation13 + $0x78] sm:$0xff]
    %v7391 = vld [vmem:[#allocation13 + $0x80] sm:$0xff]
    %v7392 = vld [vmem:[#allocation13 + $0x88] sm:$0xf]
    %v7393 = vld [vmem:[#allocation13 + $0x8c] sm:$0xff]
    %v7394 = vld [vmem:[#allocation13 + $0x94] sm:$0xff]
    %v7395 = vld [vmem:[#allocation13 + $0x9c] sm:$0xff]
    %v7396 = vld [vmem:[#allocation13 + $0xa4] sm:$0xf]
    %v7397 = vld [vmem:[#allocation13 + $0xa8] sm:$0xff]
    %v7398 = vld [vmem:[#allocation13 + $0xb0] sm:$0xff]
    %v7399 = vld [vmem:[#allocation13 + $0xb8] sm:$0xff]
    %v7400 = vld [vmem:[#allocation13 + $0xc0] sm:$0xf]
    %v7401 = vld [vmem:[#allocation13 + $0xc4] sm:$0xff]
    %v7402 = vld [vmem:[#allocation13 + $0xcc] sm:$0xff]
    %v7403 = vld [vmem:[#allocation13 + $0xd4] sm:$0xff]
    %v7404 = vld [vmem:[#allocation13 + $0xdc] sm:$0xf]
    %v7405 = vld [vmem:[#allocation13 + $0xe0] sm:$0xff]
    %v7406 = vld [vmem:[#allocation13 + $0xe8] sm:$0xff]
    %v7407 = vld [vmem:[#allocation13 + $0xf0] sm:$0xff]
    %v7408 = vld [vmem:[#allocation13 + $0xf8] sm:$0xf]
    %v7409 = vld [vmem:[#allocation13 + $0xfc] sm:$0xff]
    %v7410 = vld [vmem:[#allocation13 + $0x104] sm:$0xff]
    %v7411 = vld [vmem:[#allocation13 + $0x10c] sm:$0xff]
    %v7412 = vld [vmem:[#allocation13 + $0x114] sm:$0xf]
    %v7413 = vld [vmem:[#allocation13 + $0x118] sm:$0xff]
    %v7414 = vld [vmem:[#allocation13 + $0x120] sm:$0xff]
    %v7415 = vld [vmem:[#allocation13 + $0x128] sm:$0xff]
    %v7416 = vld [vmem:[#allocation13 + $0x130] sm:$0xf]
    %v7417 = vld [vmem:[#allocation13 + $0x134] sm:$0xff]
    %v7418 = vld [vmem:[#allocation13 + $0x13c] sm:$0xff]
    %v7419 = vld [vmem:[#allocation13 + $0x144] sm:$0xff]
    %v7420 = vld [vmem:[#allocation13 + $0x14c] sm:$0xf]
    %v7421 = vld [vmem:[#allocation13 + $0x150] sm:$0xff]
    %v7422 = vld [vmem:[#allocation13 + $0x158] sm:$0xff]
    %v7423 = vld [vmem:[#allocation13 + $0x160] sm:$0xff]
    %v7424 = vld [vmem:[#allocation13 + $0x168] sm:$0xf]
    %v7425 = vld [vmem:[#allocation13 + $0x16c] sm:$0xff]
    %v7426 = vld [vmem:[#allocation13 + $0x174] sm:$0xff]
    %v7427 = vld [vmem:[#allocation13 + $0x17c] sm:$0xff]
    %v7428 = vld [vmem:[#allocation13 + $0x184] sm:$0xf]
    %v7429 = vld [vmem:[#allocation13 + $0x188] sm:$0xff]
    %v7430 = vld [vmem:[#allocation13 + $0x190] sm:$0xff]
    %v7431 = vld [vmem:[#allocation13 + $0x198] sm:$0xff]
    %v7432 = vld [vmem:[#allocation13 + $0x1a0] sm:$0xf]
    %v7433 = vld [vmem:[#allocation13 + $0x1a4] sm:$0xff]
    %v7434 = vld [vmem:[#allocation13 + $0x1ac] sm:$0xff]
    %v7435 = vld [vmem:[#allocation13 + $0x1b4] sm:$0xff]
    %v7436 = vld [vmem:[#allocation13 + $0x1bc] sm:$0xf]
    %v7437 = vld [vmem:[#allocation13 + $0x1c0] sm:$0xff]
    %v7438 = vld [vmem:[#allocation13 + $0x1c8] sm:$0xff]
    %v7439 = vld [vmem:[#allocation13 + $0x1d0] sm:$0xff]
    %v7440 = vld [vmem:[#allocation13 + $0x1d8] sm:$0xf]
    %v7441 = vld [vmem:[#allocation13 + $0x1dc] sm:$0xff]
    %v7442 = vld [vmem:[#allocation13 + $0x1e4] sm:$0xff]
    %v7443 = vld [vmem:[#allocation13 + $0x1ec] sm:$0xff]
    %v7444 = vld [vmem:[#allocation13 + $0x1f4] sm:$0xf]
    %v7445 = vld [vmem:[#allocation13 + $0x1f8] sm:$0xff]
    %v7446 = vld [vmem:[#allocation13 + $0x200] sm:$0xff]
    %v7447 = vld [vmem:[#allocation13 + $0x208] sm:$0xff]
    %v7448 = vld [vmem:[#allocation13 + $0x210] sm:$0xf]
    %v7449 = vld [vmem:[#allocation13 + $0x214] sm:$0xff]
    %v7450 = vld [vmem:[#allocation13 + $0x21c] sm:$0xff]
    %v7451 = vld [vmem:[#allocation13 + $0x224] sm:$0xff]
    %v7452 = vld [vmem:[#allocation13 + $0x22c] sm:$0xf]
    %v7453 = vld [vmem:[#allocation13 + $0x230] sm:$0xff]
    %v7454 = vld [vmem:[#allocation13 + $0x238] sm:$0xff]
    %v7455 = vld [vmem:[#allocation13 + $0x240] sm:$0xff]
    %v7456 = vld [vmem:[#allocation13 + $0x248] sm:$0xf]
    %v7457 = vld [vmem:[#allocation13 + $0x24c] sm:$0xff]
    %v7458 = vld [vmem:[#allocation13 + $0x254] sm:$0xff]
    %v7459 = vld [vmem:[#allocation13 + $0x25c] sm:$0xff]
    %v7460 = vld [vmem:[#allocation13 + $0x264] sm:$0xf]
    %v7461 = vld [vmem:[#allocation13 + $0x268] sm:$0xff]
    %v7462 = vld [vmem:[#allocation13 + $0x270] sm:$0xff]
    %v7463 = vld [vmem:[#allocation13 + $0x278] sm:$0xff]
    %v7464 = vld [vmem:[#allocation13 + $0x280] sm:$0xf]
    %v7465 = vld [vmem:[#allocation13 + $0x284] sm:$0xff]
    %v7466 = vld [vmem:[#allocation13 + $0x28c] sm:$0xff]
    %v7467 = vld [vmem:[#allocation13 + $0x294] sm:$0xff]
    %v7468 = vld [vmem:[#allocation13 + $0x29c] sm:$0xf]
    %v7469 = vld [vmem:[#allocation13 + $0x2a0] sm:$0xff]
    %v7470 = vld [vmem:[#allocation13 + $0x2a8] sm:$0xff]
    %v7471 = vld [vmem:[#allocation13 + $0x2b0] sm:$0xff]
    %v7472 = vld [vmem:[#allocation13 + $0x2b8] sm:$0xf]
    %v7473 = vld [vmem:[#allocation13 + $0x2bc] sm:$0xff]
    %v7474 = vld [vmem:[#allocation13 + $0x2c4] sm:$0xff]
    %v7475 = vld [vmem:[#allocation13 + $0x2cc] sm:$0xff]
    %v7476 = vld [vmem:[#allocation13 + $0x2d4] sm:$0xf]
    %v7477 = vld [vmem:[#allocation13 + $0x2d8] sm:$0xff]
    %v7478 = vld [vmem:[#allocation13 + $0x2e0] sm:$0xff]
    %v7479 = vld [vmem:[#allocation13 + $0x2e8] sm:$0xff]
    %v7480 = vld [vmem:[#allocation13 + $0x2f0] sm:$0xf]
    %v7481 = vld [vmem:[#allocation13 + $0x2f4] sm:$0xff]
    %v7482 = vld [vmem:[#allocation13 + $0x2fc] sm:$0xff]
    %v7483 = vld [vmem:[#allocation13 + $0x304] sm:$0xff]
    %v7484 = vld [vmem:[#allocation13 + $0x30c] sm:$0xf]
    %v7485 = vld [vmem:[#allocation13 + $0x310] sm:$0xff]
    %v7486 = vld [vmem:[#allocation13 + $0x318] sm:$0xff]
    %v7487 = vld [vmem:[#allocation13 + $0x320] sm:$0xff]
    %v7488 = vld [vmem:[#allocation13 + $0x328] sm:$0xf]
    %v7489 = vld [vmem:[#allocation13 + $0x32c] sm:$0xff]
    %v7490 = vld [vmem:[#allocation13 + $0x334] sm:$0xff]
    %v7491 = vld [vmem:[#allocation13 + $0x33c] sm:$0xff]
    %v7492 = vld [vmem:[#allocation13 + $0x344] sm:$0xf]
    %v7493 = vld [vmem:[#allocation13 + $0x348] sm:$0xff]
    %v7494 = vld [vmem:[#allocation13 + $0x350] sm:$0xff]
    %v7495 = vld [vmem:[#allocation13 + $0x358] sm:$0xff]
    %v7496 = vld [vmem:[#allocation13 + $0x360] sm:$0xf]
    %v7497 = vld [vmem:[#allocation13 + $0x364] sm:$0xff]
    %v7498 = vld [vmem:[#allocation13 + $0x36c] sm:$0xff]
    %v7499 = vld [vmem:[#allocation13 + $0x374] sm:$0xff]
    %v7500 = vld [vmem:[#allocation13 + $0x37c] sm:$0xf]
    %v7501 = vld [vmem:[#allocation13 + $0x380] sm:$0xff]
    %v7502 = vld [vmem:[#allocation13 + $0x388] sm:$0xff]
    %v7503 = vld [vmem:[#allocation13 + $0x390] sm:$0xff]
    %v7504 = vld [vmem:[#allocation13 + $0x398] sm:$0xf]
    %v7505 = vld [vmem:[#allocation13 + $0x39c] sm:$0xff]
    %v7506 = vld [vmem:[#allocation13 + $0x3a4] sm:$0xff]
    %v7507 = vld [vmem:[#allocation13 + $0x3ac] sm:$0xff]
    %v7508 = vld [vmem:[#allocation13 + $0x3b4] sm:$0xf]
    %v7509 = vld [vmem:[#allocation13 + $0x3b8] sm:$0xff]
    %v7510 = vld [vmem:[#allocation13 + $0x3c0] sm:$0xff]
    %v7511 = vld [vmem:[#allocation13 + $0x3c8] sm:$0xff]
    %v7512 = vld [vmem:[#allocation13 + $0x3d0] sm:$0xf]
    %v7513 = vld [vmem:[#allocation13 + $0x3d4] sm:$0xff]
    %v7514 = vld [vmem:[#allocation13 + $0x3dc] sm:$0xff]
    %v7515 = vld [vmem:[#allocation13 + $0x3e4] sm:$0xff]
    %v7516 = vld [vmem:[#allocation13 + $0x3ec] sm:$0xf]
    %v7517 = vld [vmem:[#allocation13 + $0x3f0] sm:$0xff]
    %v7518 = vld [vmem:[#allocation13 + $0x3f8] sm:$0xff]
    %v7519 = vld [vmem:[#allocation13 + $0x400] sm:$0xff]
    %v7520 = vld [vmem:[#allocation13 + $0x408] sm:$0xf]
    %v7521 = vld [vmem:[#allocation13 + $0x40c] sm:$0xff]
    %v7522 = vld [vmem:[#allocation13 + $0x414] sm:$0xff]
    %v7523 = vld [vmem:[#allocation13 + $0x41c] sm:$0xff]
    %v7524 = vld [vmem:[#allocation13 + $0x424] sm:$0xf]
    %v7525 = vld [vmem:[#allocation13 + $0x428] sm:$0xff]
    %v7526 = vld [vmem:[#allocation13 + $0x430] sm:$0xff]
    %v7527 = vld [vmem:[#allocation13 + $0x438] sm:$0xff]
    %v7528 = vld [vmem:[#allocation13 + $0x440] sm:$0xf]
    %v7529 = vld [vmem:[#allocation13 + $0x444] sm:$0xff]
    %v7530 = vld [vmem:[#allocation13 + $0x44c] sm:$0xff]
    %v7531 = vld [vmem:[#allocation13 + $0x454] sm:$0xff]
    %v7532 = vld [vmem:[#allocation13 + $0x45c] sm:$0xf]
    %v7533 = vld [vmem:[#allocation13 + $0x460] sm:$0xff]
    %v7534 = vld [vmem:[#allocation13 + $0x468] sm:$0xff]
    %v7535 = vld [vmem:[#allocation13 + $0x470] sm:$0xff]
    %v7536 = vld [vmem:[#allocation13 + $0x478] sm:$0xf]
    %v7537 = vld [vmem:[#allocation13 + $0x47c] sm:$0xff]
    %v7538 = vld [vmem:[#allocation13 + $0x484] sm:$0xff]
    %v7539 = vld [vmem:[#allocation13 + $0x48c] sm:$0xff]
    %v7540 = vld [vmem:[#allocation13 + $0x494] sm:$0xf]
    %v7541 = vld [vmem:[#allocation13 + $0x498] sm:$0xff]
    %v7542 = vld [vmem:[#allocation13 + $0x4a0] sm:$0xff]
    %v7543 = vld [vmem:[#allocation13 + $0x4a8] sm:$0xff]
    %v7544 = vld [vmem:[#allocation13 + $0x4b0] sm:$0xf]
    %v7545 = vld [vmem:[#allocation13 + $0x4b4] sm:$0xff]
    %v7546 = vld [vmem:[#allocation13 + $0x4bc] sm:$0xff]
    %v7547 = vld [vmem:[#allocation13 + $0x4c4] sm:$0xff]
    %v7548 = vld [vmem:[#allocation13 + $0x4cc] sm:$0xf]
    %v7549 = vld [vmem:[#allocation13 + $0x4d0] sm:$0xff]
    %v7550 = vld [vmem:[#allocation13 + $0x4d8] sm:$0xff]
    %v7551 = vld [vmem:[#allocation13 + $0x4e0] sm:$0xff]
    %v7552 = vld [vmem:[#allocation13 + $0x4e8] sm:$0xf]
    %v7553 = vld [vmem:[#allocation13 + $0x4ec] sm:$0xff]
    %v7554 = vld [vmem:[#allocation13 + $0x4f4] sm:$0xff]
    %v7555 = vld [vmem:[#allocation13 + $0x4fc] sm:$0xff]
    %v7556 = vld [vmem:[#allocation13 + $0x504] sm:$0xf]
    %v7557 = vld [vmem:[#allocation13 + $0x508] sm:$0xff]
    %v7558 = vld [vmem:[#allocation13 + $0x510] sm:$0xff]
    %v7559 = vld [vmem:[#allocation13 + $0x518] sm:$0xff]
    %v7560 = vld [vmem:[#allocation13 + $0x520] sm:$0xf]
    %v7561 = vld [vmem:[#allocation13 + $0x524] sm:$0xff]
    %v7562 = vld [vmem:[#allocation13 + $0x52c] sm:$0xff]
    %v7563 = vld [vmem:[#allocation13 + $0x534] sm:$0xff]
    %v7564 = vld [vmem:[#allocation13 + $0x53c] sm:$0xf]
    %v7565 = vld [vmem:[#allocation13 + $0x540] sm:$0xff]
    %v7566 = vld [vmem:[#allocation13 + $0x548] sm:$0xff]
    %v7567 = vld [vmem:[#allocation13 + $0x550] sm:$0xff]
    %v7568 = vld [vmem:[#allocation13 + $0x558] sm:$0xf]
    %v7569 = vld [vmem:[#allocation13 + $0x55c] sm:$0xff]
    %v7570 = vld [vmem:[#allocation13 + $0x564] sm:$0xff]
    %v7571 = vld [vmem:[#allocation13 + $0x56c] sm:$0xff]
    %v7572 = vld [vmem:[#allocation13 + $0x574] sm:$0xf]
    %v7573 = vld [vmem:[#allocation13 + $0x578] sm:$0xff]
    %v7574 = vld [vmem:[#allocation13 + $0x580] sm:$0xff]
    %v7575 = vld [vmem:[#allocation13 + $0x588] sm:$0xff]
    %v7576 = vld [vmem:[#allocation13 + $0x590] sm:$0xf]
    %v7577 = vld [vmem:[#allocation13 + $0x594] sm:$0xff]
    %v7578 = vld [vmem:[#allocation13 + $0x59c] sm:$0xff]
    %v7579 = vld [vmem:[#allocation13 + $0x5a4] sm:$0xff]
    %v7580 = vld [vmem:[#allocation13 + $0x5ac] sm:$0xf]
    %v7581 = vld [vmem:[#allocation13 + $0x5b0] sm:$0xff]
    %v7582 = vld [vmem:[#allocation13 + $0x5b8] sm:$0xff]
    %v7583 = vld [vmem:[#allocation13 + $0x5c0] sm:$0xff]
    %v7584 = vld [vmem:[#allocation13 + $0x5c8] sm:$0xf]
    %v7585 = vld [vmem:[#allocation13 + $0x5cc] sm:$0xff]
    %v7586 = vld [vmem:[#allocation13 + $0x5d4] sm:$0xff]
    %v7587 = vld [vmem:[#allocation13 + $0x5dc] sm:$0xff]
    %v7588 = vld [vmem:[#allocation13 + $0x5e4] sm:$0xf]
    %v7589 = vld [vmem:[#allocation13 + $0x5e8] sm:$0xff]
    %v7590 = vld [vmem:[#allocation13 + $0x5f0] sm:$0xff]
    %v7591 = vld [vmem:[#allocation13 + $0x5f8] sm:$0xff]
    %v7592 = vld [vmem:[#allocation13 + $0x600] sm:$0xf]
    %v7593 = vld [vmem:[#allocation13 + $0x604] sm:$0xff]
    %v7594 = vld [vmem:[#allocation13 + $0x60c] sm:$0xff]
    %v7595 = vld [vmem:[#allocation13 + $0x614] sm:$0xff]
    %v7596 = vld [vmem:[#allocation13 + $0x61c] sm:$0xf]
    %v7597 = vld [vmem:[#allocation13 + $0x620] sm:$0xff]
    %v7598 = vld [vmem:[#allocation13 + $0x628] sm:$0xff]
    %v7599 = vld [vmem:[#allocation13 + $0x630] sm:$0xff]
    %v7600 = vld [vmem:[#allocation13 + $0x638] sm:$0xf]
    %v7601 = vld [vmem:[#allocation13 + $0x63c] sm:$0xff]
    %v7602 = vld [vmem:[#allocation13 + $0x644] sm:$0xff]
    %v7603 = vld [vmem:[#allocation13 + $0x64c] sm:$0xff]
    %v7604 = vld [vmem:[#allocation13 + $0x654] sm:$0xf]
    %v7605 = vld [vmem:[#allocation13 + $0x658] sm:$0xff]
    %v7606 = vld [vmem:[#allocation13 + $0x660] sm:$0xff]
    %v7607 = vld [vmem:[#allocation13 + $0x668] sm:$0xff]
    %v7608 = vld [vmem:[#allocation13 + $0x670] sm:$0xf]
    %v7609 = vld [vmem:[#allocation13 + $0x674] sm:$0xff]
    %v7610 = vld [vmem:[#allocation13 + $0x67c] sm:$0xff]
    %v7611 = vld [vmem:[#allocation13 + $0x684] sm:$0xff]
    %v7612 = vld [vmem:[#allocation13 + $0x68c] sm:$0xf]
    %v7613 = vld [vmem:[#allocation13 + $0x690] sm:$0xff]
    %v7614 = vld [vmem:[#allocation13 + $0x698] sm:$0xff]
    %v7615 = vld [vmem:[#allocation13 + $0x6a0] sm:$0xff]
    %v7616 = vld [vmem:[#allocation13 + $0x6a8] sm:$0xf]
    %v7617 = vld [vmem:[#allocation13 + $0x6ac] sm:$0xff]
    %v7618 = vld [vmem:[#allocation13 + $0x6b4] sm:$0xff]
    %v7619 = vld [vmem:[#allocation13 + $0x6bc] sm:$0xff]
    %v7620 = vld [vmem:[#allocation13 + $0x6c4] sm:$0xf]
    %v7621 = vld [vmem:[#allocation13 + $0x6c8] sm:$0xff]
    %v7622 = vld [vmem:[#allocation13 + $0x6d0] sm:$0xff]
    %v7623 = vld [vmem:[#allocation13 + $0x6d8] sm:$0xff]
    %v7624 = vld [vmem:[#allocation13 + $0x6e0] sm:$0xf]
    %v7625 = vld [vmem:[#allocation13 + $0x6e4] sm:$0xff]
    %v7626 = vld [vmem:[#allocation13 + $0x6ec] sm:$0xff]
    %v7627 = vld [vmem:[#allocation13 + $0x6f4] sm:$0xff]
    %v7628 = vld [vmem:[#allocation13 + $0x6fc] sm:$0xf]
    %v7629 = vld [vmem:[#allocation13 + $0x700] sm:$0xff]
    %v7630 = vld [vmem:[#allocation13 + $0x708] sm:$0xff]
    %v7631 = vld [vmem:[#allocation13 + $0x710] sm:$0xff]
    %v7632 = vld [vmem:[#allocation13 + $0x718] sm:$0xf]
    %v7633 = vld [vmem:[#allocation13 + $0x71c] sm:$0xff]
    %v7634 = vld [vmem:[#allocation13 + $0x724] sm:$0xff]
    %v7635 = vld [vmem:[#allocation13 + $0x72c] sm:$0xff]
    %v7636 = vld [vmem:[#allocation13 + $0x734] sm:$0xf]
    %v7637 = vld [vmem:[#allocation13 + $0x738] sm:$0xff]
    %v7638 = vld [vmem:[#allocation13 + $0x740] sm:$0xff]
    %v7639 = vld [vmem:[#allocation13 + $0x748] sm:$0xff]
    %v7640 = vld [vmem:[#allocation13 + $0x750] sm:$0xf]
    %v7641 = vld [vmem:[#allocation13 + $0x754] sm:$0xff]
    %v7642 = vld [vmem:[#allocation13 + $0x75c] sm:$0xff]
    %v7643 = vld [vmem:[#allocation13 + $0x764] sm:$0xff]
    %v7644 = vld [vmem:[#allocation13 + $0x76c] sm:$0xf]
    %v7645 = vld [vmem:[#allocation13 + $0x770] sm:$0xff]
    %v7646 = vld [vmem:[#allocation13 + $0x778] sm:$0xff]
    %v7647 = vld [vmem:[#allocation13 + $0x780] sm:$0xff]
    %v7648 = vld [vmem:[#allocation13 + $0x788] sm:$0xf]
    %v7649 = vld [vmem:[#allocation13 + $0x78c] sm:$0xff]
    %v7650 = vld [vmem:[#allocation13 + $0x794] sm:$0xff]
    %v7651 = vld [vmem:[#allocation13 + $0x79c] sm:$0xff]
    %v7652 = vld [vmem:[#allocation13 + $0x7a4] sm:$0xf]
    %v7653 = vld [vmem:[#allocation13 + $0x7a8] sm:$0xff]
    %v7654 = vld [vmem:[#allocation13 + $0x7b0] sm:$0xff]
    %v7655 = vld [vmem:[#allocation13 + $0x7b8] sm:$0xff]
    %v7656 = vld [vmem:[#allocation13 + $0x7c0] sm:$0xf]
    %v7657 = vld [vmem:[#allocation13 + $0x7c4] sm:$0xff]
    %v7658 = vld [vmem:[#allocation13 + $0x7cc] sm:$0xff]
    %v7659 = vld [vmem:[#allocation13 + $0x7d4] sm:$0xff]
    %v7660 = vld [vmem:[#allocation13 + $0x7dc] sm:$0xf]
    %v7661 = vld [vmem:[#allocation13 + $0x7e0] sm:$0xff]
    %v7662 = vld [vmem:[#allocation13 + $0x7e8] sm:$0xff]
    %v7663 = vld [vmem:[#allocation13 + $0x7f0] sm:$0xff]
    %v7664 = vld [vmem:[#allocation13 + $0x7f8] sm:$0xf]
    %v7665 = vld [vmem:[#allocation13 + $0x7fc] sm:$0xff]
    %v7666 = vld [vmem:[#allocation13 + $0x804] sm:$0xff]
    %v7667 = vld [vmem:[#allocation13 + $0x80c] sm:$0xff]
    %v7668 = vld [vmem:[#allocation13 + $0x814] sm:$0xf]
    %v7669 = vld [vmem:[#allocation13 + $0x818] sm:$0xff]
    %v7670 = vld [vmem:[#allocation13 + $0x820] sm:$0xff]
    %v7671 = vld [vmem:[#allocation13 + $0x828] sm:$0xff]
    %v7672 = vld [vmem:[#allocation13 + $0x830] sm:$0xf]
    %v7673 = vld [vmem:[#allocation13 + $0x834] sm:$0xff]
    %v7674 = vld [vmem:[#allocation13 + $0x83c] sm:$0xff]
    %v7675 = vld [vmem:[#allocation13 + $0x844] sm:$0xff]
    %v7676 = vld [vmem:[#allocation13 + $0x84c] sm:$0xf]
    %v7677 = vld [vmem:[#allocation13 + $0x850] sm:$0xff]
    %v7678 = vld [vmem:[#allocation13 + $0x858] sm:$0xff]
    %v7679 = vld [vmem:[#allocation13 + $0x860] sm:$0xff]
    %v7680 = vld [vmem:[#allocation13 + $0x868] sm:$0xf]
    %v7681 = vld [vmem:[#allocation13 + $0x86c] sm:$0xff]
    %v7682 = vld [vmem:[#allocation13 + $0x874] sm:$0xff]
    %v7683 = vld [vmem:[#allocation13 + $0x87c] sm:$0xff]
    %v7684 = vld [vmem:[#allocation13 + $0x884] sm:$0xf]
    %v7685 = vld [vmem:[#allocation13 + $0x888] sm:$0xff]
    %v7686 = vld [vmem:[#allocation13 + $0x890] sm:$0xff]
    %v7687 = vld [vmem:[#allocation13 + $0x898] sm:$0xff]
    %v7688 = vld [vmem:[#allocation13 + $0x8a0] sm:$0xf]
    %v7689 = vld [vmem:[#allocation13 + $0x8a4] sm:$0xff]
    %v7690 = vld [vmem:[#allocation13 + $0x8ac] sm:$0xff]
    %v7691 = vld [vmem:[#allocation13 + $0x8b4] sm:$0xff]
    %v7692 = vld [vmem:[#allocation13 + $0x8bc] sm:$0xf]
    %v8013 = vunpack.c.l.b16 %v7373
    %v8014 = vunpack.c.h.b16 %v7373
    %v8015 = vunpack.c.l.b16 %v7374
    %v8016 = vunpack.c.h.b16 %v7374
    %v8017 = vunpack.c.l.b16 %v7375
    %v8018 = vunpack.c.h.b16 %v7375
    %v8019 = vunpack.c.l.b16 %v7376
    %v8020 = vunpack.c.l.b16 %v7377
    %v8021 = vunpack.c.h.b16 %v7377
    %v8022 = vunpack.c.l.b16 %v7378
    %v8023 = vunpack.c.h.b16 %v7378
    %v8024 = vunpack.c.l.b16 %v7379
    %v8025 = vunpack.c.h.b16 %v7379
    %v8026 = vunpack.c.l.b16 %v7380
    %v8027 = vunpack.c.l.b16 %v7381
    %v8028 = vunpack.c.h.b16 %v7381
    %v8029 = vunpack.c.l.b16 %v7382
    %v8030 = vunpack.c.h.b16 %v7382
    %v8031 = vunpack.c.l.b16 %v7383
    %v8032 = vunpack.c.h.b16 %v7383
    %v8033 = vunpack.c.l.b16 %v7384
    %v8034 = vunpack.c.l.b16 %v7385
    %v8035 = vunpack.c.h.b16 %v7385
    %v8036 = vunpack.c.l.b16 %v7386
    %v8037 = vunpack.c.h.b16 %v7386
    %v8038 = vunpack.c.l.b16 %v7387
    %v8039 = vunpack.c.h.b16 %v7387
    %v8040 = vunpack.c.l.b16 %v7388
    %v8041 = vunpack.c.l.b16 %v7389
    %v8042 = vunpack.c.h.b16 %v7389
    %v8043 = vunpack.c.l.b16 %v7390
    %v8044 = vunpack.c.h.b16 %v7390
    %v8045 = vunpack.c.l.b16 %v7391
    %v8046 = vunpack.c.h.b16 %v7391
    %v8047 = vunpack.c.l.b16 %v7392
    %v8048 = vunpack.c.l.b16 %v7393
    %v8049 = vunpack.c.h.b16 %v7393
    %v8050 = vunpack.c.l.b16 %v7394
    %v8051 = vunpack.c.h.b16 %v7394
    %v8052 = vunpack.c.l.b16 %v7395
    %v8053 = vunpack.c.h.b16 %v7395
    %v8054 = vunpack.c.l.b16 %v7396
    %v8055 = vunpack.c.l.b16 %v7397
    %v8056 = vunpack.c.h.b16 %v7397
    %v8057 = vunpack.c.l.b16 %v7398
    %v8058 = vunpack.c.h.b16 %v7398
    %v8059 = vunpack.c.l.b16 %v7399
    %v8060 = vunpack.c.h.b16 %v7399
    %v8061 = vunpack.c.l.b16 %v7400
    %v8062 = vunpack.c.l.b16 %v7401
    %v8063 = vunpack.c.h.b16 %v7401
    %v8064 = vunpack.c.l.b16 %v7402
    %v8065 = vunpack.c.h.b16 %v7402
    %v8066 = vunpack.c.l.b16 %v7403
    %v8067 = vunpack.c.h.b16 %v7403
    %v8068 = vunpack.c.l.b16 %v7404
    %v8069 = vunpack.c.l.b16 %v7405
    %v8070 = vunpack.c.h.b16 %v7405
    %v8071 = vunpack.c.l.b16 %v7406
    %v8072 = vunpack.c.h.b16 %v7406
    %v8073 = vunpack.c.l.b16 %v7407
    %v8074 = vunpack.c.h.b16 %v7407
    %v8075 = vunpack.c.l.b16 %v7408
    %v8076 = vunpack.c.l.b16 %v7409
    %v8077 = vunpack.c.h.b16 %v7409
    %v8078 = vunpack.c.l.b16 %v7410
    %v8079 = vunpack.c.h.b16 %v7410
    %v8080 = vunpack.c.l.b16 %v7411
    %v8081 = vunpack.c.h.b16 %v7411
    %v8082 = vunpack.c.l.b16 %v7412
    %v8083 = vunpack.c.l.b16 %v7413
    %v8084 = vunpack.c.h.b16 %v7413
    %v8085 = vunpack.c.l.b16 %v7414
    %v8086 = vunpack.c.h.b16 %v7414
    %v8087 = vunpack.c.l.b16 %v7415
    %v8088 = vunpack.c.h.b16 %v7415
    %v8089 = vunpack.c.l.b16 %v7416
    %v8090 = vunpack.c.l.b16 %v7417
    %v8091 = vunpack.c.h.b16 %v7417
    %v8092 = vunpack.c.l.b16 %v7418
    %v8093 = vunpack.c.h.b16 %v7418
    %v8094 = vunpack.c.l.b16 %v7419
    %v8095 = vunpack.c.h.b16 %v7419
    %v8096 = vunpack.c.l.b16 %v7420
    %v8097 = vunpack.c.l.b16 %v7421
    %v8098 = vunpack.c.h.b16 %v7421
    %v8099 = vunpack.c.l.b16 %v7422
    %v8100 = vunpack.c.h.b16 %v7422
    %v8101 = vunpack.c.l.b16 %v7423
    %v8102 = vunpack.c.h.b16 %v7423
    %v8103 = vunpack.c.l.b16 %v7424
    %v8104 = vunpack.c.l.b16 %v7425
    %v8105 = vunpack.c.h.b16 %v7425
    %v8106 = vunpack.c.l.b16 %v7426
    %v8107 = vunpack.c.h.b16 %v7426
    %v8108 = vunpack.c.l.b16 %v7427
    %v8109 = vunpack.c.h.b16 %v7427
    %v8110 = vunpack.c.l.b16 %v7428
    %v8111 = vunpack.c.l.b16 %v7429
    %v8112 = vunpack.c.h.b16 %v7429
    %v8113 = vunpack.c.l.b16 %v7430
    %v8114 = vunpack.c.h.b16 %v7430
    %v8115 = vunpack.c.l.b16 %v7431
    %v8116 = vunpack.c.h.b16 %v7431
    %v8117 = vunpack.c.l.b16 %v7432
    %v8118 = vunpack.c.l.b16 %v7433
    %v8119 = vunpack.c.h.b16 %v7433
    %v8120 = vunpack.c.l.b16 %v7434
    %v8121 = vunpack.c.h.b16 %v7434
    %v8122 = vunpack.c.l.b16 %v7435
    %v8123 = vunpack.c.h.b16 %v7435
    %v8124 = vunpack.c.l.b16 %v7436
    %v8125 = vunpack.c.l.b16 %v7437
    %v8126 = vunpack.c.h.b16 %v7437
    %v8127 = vunpack.c.l.b16 %v7438
    %v8128 = vunpack.c.h.b16 %v7438
    %v8129 = vunpack.c.l.b16 %v7439
    %v8130 = vunpack.c.h.b16 %v7439
    %v8131 = vunpack.c.l.b16 %v7440
    %v8132 = vunpack.c.l.b16 %v7441
    %v8133 = vunpack.c.h.b16 %v7441
    %v8134 = vunpack.c.l.b16 %v7442
    %v8135 = vunpack.c.h.b16 %v7442
    %v8136 = vunpack.c.l.b16 %v7443
    %v8137 = vunpack.c.h.b16 %v7443
    %v8138 = vunpack.c.l.b16 %v7444
    %v8139 = vunpack.c.l.b16 %v7445
    %v8140 = vunpack.c.h.b16 %v7445
    %v8141 = vunpack.c.l.b16 %v7446
    %v8142 = vunpack.c.h.b16 %v7446
    %v8143 = vunpack.c.l.b16 %v7447
    %v8144 = vunpack.c.h.b16 %v7447
    %v8145 = vunpack.c.l.b16 %v7448
    %v8146 = vunpack.c.l.b16 %v7449
    %v8147 = vunpack.c.h.b16 %v7449
    %v8148 = vunpack.c.l.b16 %v7450
    %v8149 = vunpack.c.h.b16 %v7450
    %v8150 = vunpack.c.l.b16 %v7451
    %v8151 = vunpack.c.h.b16 %v7451
    %v8152 = vunpack.c.l.b16 %v7452
    %v8153 = vunpack.c.l.b16 %v7453
    %v8154 = vunpack.c.h.b16 %v7453
    %v8155 = vunpack.c.l.b16 %v7454
    %v8156 = vunpack.c.h.b16 %v7454
    %v8157 = vunpack.c.l.b16 %v7455
    %v8158 = vunpack.c.h.b16 %v7455
    %v8159 = vunpack.c.l.b16 %v7456
    %v8160 = vunpack.c.l.b16 %v7457
    %v8161 = vunpack.c.h.b16 %v7457
    %v8162 = vunpack.c.l.b16 %v7458
    %v8163 = vunpack.c.h.b16 %v7458
    %v8164 = vunpack.c.l.b16 %v7459
    %v8165 = vunpack.c.h.b16 %v7459
    %v8166 = vunpack.c.l.b16 %v7460
    %v8167 = vunpack.c.l.b16 %v7461
    %v8168 = vunpack.c.h.b16 %v7461
    %v8169 = vunpack.c.l.b16 %v7462
    %v8170 = vunpack.c.h.b16 %v7462
    %v8171 = vunpack.c.l.b16 %v7463
    %v8172 = vunpack.c.h.b16 %v7463
    %v8173 = vunpack.c.l.b16 %v7464
    %v8174 = vunpack.c.l.b16 %v7465
    %v8175 = vunpack.c.h.b16 %v7465
    %v8176 = vunpack.c.l.b16 %v7466
    %v8177 = vunpack.c.h.b16 %v7466
    %v8178 = vunpack.c.l.b16 %v7467
    %v8179 = vunpack.c.h.b16 %v7467
    %v8180 = vunpack.c.l.b16 %v7468
    %v8181 = vunpack.c.l.b16 %v7469
    %v8182 = vunpack.c.h.b16 %v7469
    %v8183 = vunpack.c.l.b16 %v7470
    %v8184 = vunpack.c.h.b16 %v7470
    %v8185 = vunpack.c.l.b16 %v7471
    %v8186 = vunpack.c.h.b16 %v7471
    %v8187 = vunpack.c.l.b16 %v7472
    %v8188 = vunpack.c.l.b16 %v7473
    %v8189 = vunpack.c.h.b16 %v7473
    %v8190 = vunpack.c.l.b16 %v7474
    %v8191 = vunpack.c.h.b16 %v7474
    %v8192 = vunpack.c.l.b16 %v7475
    %v8193 = vunpack.c.h.b16 %v7475
    %v8194 = vunpack.c.l.b16 %v7476
    %v8195 = vunpack.c.l.b16 %v7477
    %v8196 = vunpack.c.h.b16 %v7477
    %v8197 = vunpack.c.l.b16 %v7478
    %v8198 = vunpack.c.h.b16 %v7478
    %v8199 = vunpack.c.l.b16 %v7479
    %v8200 = vunpack.c.h.b16 %v7479
    %v8201 = vunpack.c.l.b16 %v7480
    %v8202 = vunpack.c.l.b16 %v7481
    %v8203 = vunpack.c.h.b16 %v7481
    %v8204 = vunpack.c.l.b16 %v7482
    %v8205 = vunpack.c.h.b16 %v7482
    %v8206 = vunpack.c.l.b16 %v7483
    %v8207 = vunpack.c.h.b16 %v7483
    %v8208 = vunpack.c.l.b16 %v7484
    %v8209 = vunpack.c.l.b16 %v7485
    %v8210 = vunpack.c.h.b16 %v7485
    %v8211 = vunpack.c.l.b16 %v7486
    %v8212 = vunpack.c.h.b16 %v7486
    %v8213 = vunpack.c.l.b16 %v7487
    %v8214 = vunpack.c.h.b16 %v7487
    %v8215 = vunpack.c.l.b16 %v7488
    %v8216 = vunpack.c.l.b16 %v7489
    %v8217 = vunpack.c.h.b16 %v7489
    %v8218 = vunpack.c.l.b16 %v7490
    %v8219 = vunpack.c.h.b16 %v7490
    %v8220 = vunpack.c.l.b16 %v7491
    %v8221 = vunpack.c.h.b16 %v7491
    %v8222 = vunpack.c.l.b16 %v7492
    %v8223 = vunpack.c.l.b16 %v7493
    %v8224 = vunpack.c.h.b16 %v7493
    %v8225 = vunpack.c.l.b16 %v7494
    %v8226 = vunpack.c.h.b16 %v7494
    %v8227 = vunpack.c.l.b16 %v7495
    %v8228 = vunpack.c.h.b16 %v7495
    %v8229 = vunpack.c.l.b16 %v7496
    %v8230 = vunpack.c.l.b16 %v7497
    %v8231 = vunpack.c.h.b16 %v7497
    %v8232 = vunpack.c.l.b16 %v7498
    %v8233 = vunpack.c.h.b16 %v7498
    %v8234 = vunpack.c.l.b16 %v7499
    %v8235 = vunpack.c.h.b16 %v7499
    %v8236 = vunpack.c.l.b16 %v7500
    %v8237 = vunpack.c.l.b16 %v7501
    %v8238 = vunpack.c.h.b16 %v7501
    %v8239 = vunpack.c.l.b16 %v7502
    %v8240 = vunpack.c.h.b16 %v7502
    %v8241 = vunpack.c.l.b16 %v7503
    %v8242 = vunpack.c.h.b16 %v7503
    %v8243 = vunpack.c.l.b16 %v7504
    %v8244 = vunpack.c.l.b16 %v7505
    %v8245 = vunpack.c.h.b16 %v7505
    %v8246 = vunpack.c.l.b16 %v7506
    %v8247 = vunpack.c.h.b16 %v7506
    %v8248 = vunpack.c.l.b16 %v7507
    %v8249 = vunpack.c.h.b16 %v7507
    %v8250 = vunpack.c.l.b16 %v7508
    %v8251 = vunpack.c.l.b16 %v7509
    %v8252 = vunpack.c.h.b16 %v7509
    %v8253 = vunpack.c.l.b16 %v7510
    %v8254 = vunpack.c.h.b16 %v7510
    %v8255 = vunpack.c.l.b16 %v7511
    %v8256 = vunpack.c.h.b16 %v7511
    %v8257 = vunpack.c.l.b16 %v7512
    %v8258 = vunpack.c.l.b16 %v7513
    %v8259 = vunpack.c.h.b16 %v7513
    %v8260 = vunpack.c.l.b16 %v7514
    %v8261 = vunpack.c.h.b16 %v7514
    %v8262 = vunpack.c.l.b16 %v7515
    %v8263 = vunpack.c.h.b16 %v7515
    %v8264 = vunpack.c.l.b16 %v7516
    %v8265 = vunpack.c.l.b16 %v7517
    %v8266 = vunpack.c.h.b16 %v7517
    %v8267 = vunpack.c.l.b16 %v7518
    %v8268 = vunpack.c.h.b16 %v7518
    %v8269 = vunpack.c.l.b16 %v7519
    %v8270 = vunpack.c.h.b16 %v7519
    %v8271 = vunpack.c.l.b16 %v7520
    %v8272 = vunpack.c.l.b16 %v7521
    %v8273 = vunpack.c.h.b16 %v7521
    %v8274 = vunpack.c.l.b16 %v7522
    %v8275 = vunpack.c.h.b16 %v7522
    %v8276 = vunpack.c.l.b16 %v7523
    %v8277 = vunpack.c.h.b16 %v7523
    %v8278 = vunpack.c.l.b16 %v7524
    %v8279 = vunpack.c.l.b16 %v7525
    %v8280 = vunpack.c.h.b16 %v7525
    %v8281 = vunpack.c.l.b16 %v7526
    %v8282 = vunpack.c.h.b16 %v7526
    %v8283 = vunpack.c.l.b16 %v7527
    %v8284 = vunpack.c.h.b16 %v7527
    %v8285 = vunpack.c.l.b16 %v7528
    %v8286 = vunpack.c.l.b16 %v7529
    %v8287 = vunpack.c.h.b16 %v7529
    %v8288 = vunpack.c.l.b16 %v7530
    %v8289 = vunpack.c.h.b16 %v7530
    %v8290 = vunpack.c.l.b16 %v7531
    %v8291 = vunpack.c.h.b16 %v7531
    %v8292 = vunpack.c.l.b16 %v7532
    %v8293 = vunpack.c.l.b16 %v7533
    %v8294 = vunpack.c.h.b16 %v7533
    %v8295 = vunpack.c.l.b16 %v7534
    %v8296 = vunpack.c.h.b16 %v7534
    %v8297 = vunpack.c.l.b16 %v7535
    %v8298 = vunpack.c.h.b16 %v7535
    %v8299 = vunpack.c.l.b16 %v7536
    %v8300 = vunpack.c.l.b16 %v7537
    %v8301 = vunpack.c.h.b16 %v7537
    %v8302 = vunpack.c.l.b16 %v7538
    %v8303 = vunpack.c.h.b16 %v7538
    %v8304 = vunpack.c.l.b16 %v7539
    %v8305 = vunpack.c.h.b16 %v7539
    %v8306 = vunpack.c.l.b16 %v7540
    %v8307 = vunpack.c.l.b16 %v7541
    %v8308 = vunpack.c.h.b16 %v7541
    %v8309 = vunpack.c.l.b16 %v7542
    %v8310 = vunpack.c.h.b16 %v7542
    %v8311 = vunpack.c.l.b16 %v7543
    %v8312 = vunpack.c.h.b16 %v7543
    %v8313 = vunpack.c.l.b16 %v7544
    %v8314 = vunpack.c.l.b16 %v7545
    %v8315 = vunpack.c.h.b16 %v7545
    %v8316 = vunpack.c.l.b16 %v7546
    %v8317 = vunpack.c.h.b16 %v7546
    %v8318 = vunpack.c.l.b16 %v7547
    %v8319 = vunpack.c.h.b16 %v7547
    %v8320 = vunpack.c.l.b16 %v7548
    %v8321 = vunpack.c.l.b16 %v7549
    %v8322 = vunpack.c.h.b16 %v7549
    %v8323 = vunpack.c.l.b16 %v7550
    %v8324 = vunpack.c.h.b16 %v7550
    %v8325 = vunpack.c.l.b16 %v7551
    %v8326 = vunpack.c.h.b16 %v7551
    %v8327 = vunpack.c.l.b16 %v7552
    %v8328 = vunpack.c.l.b16 %v7553
    %v8329 = vunpack.c.h.b16 %v7553
    %v8330 = vunpack.c.l.b16 %v7554
    %v8331 = vunpack.c.h.b16 %v7554
    %v8332 = vunpack.c.l.b16 %v7555
    %v8333 = vunpack.c.h.b16 %v7555
    %v8334 = vunpack.c.l.b16 %v7556
    %v8335 = vunpack.c.l.b16 %v7557
    %v8336 = vunpack.c.h.b16 %v7557
    %v8337 = vunpack.c.l.b16 %v7558
    %v8338 = vunpack.c.h.b16 %v7558
    %v8339 = vunpack.c.l.b16 %v7559
    %v8340 = vunpack.c.h.b16 %v7559
    %v8341 = vunpack.c.l.b16 %v7560
    %v8342 = vunpack.c.l.b16 %v7561
    %v8343 = vunpack.c.h.b16 %v7561
    %v8344 = vunpack.c.l.b16 %v7562
    %v8345 = vunpack.c.h.b16 %v7562
    %v8346 = vunpack.c.l.b16 %v7563
    %v8347 = vunpack.c.h.b16 %v7563
    %v8348 = vunpack.c.l.b16 %v7564
    %v8349 = vunpack.c.l.b16 %v7565
    %v8350 = vunpack.c.h.b16 %v7565
    %v8351 = vunpack.c.l.b16 %v7566
    %v8352 = vunpack.c.h.b16 %v7566
    %v8353 = vunpack.c.l.b16 %v7567
    %v8354 = vunpack.c.h.b16 %v7567
    %v8355 = vunpack.c.l.b16 %v7568
    %v8356 = vunpack.c.l.b16 %v7569
    %v8357 = vunpack.c.h.b16 %v7569
    %v8358 = vunpack.c.l.b16 %v7570
    %v8359 = vunpack.c.h.b16 %v7570
    %v8360 = vunpack.c.l.b16 %v7571
    %v8361 = vunpack.c.h.b16 %v7571
    %v8362 = vunpack.c.l.b16 %v7572
    %v8363 = vunpack.c.l.b16 %v7573
    %v8364 = vunpack.c.h.b16 %v7573
    %v8365 = vunpack.c.l.b16 %v7574
    %v8366 = vunpack.c.h.b16 %v7574
    %v8367 = vunpack.c.l.b16 %v7575
    %v8368 = vunpack.c.h.b16 %v7575
    %v8369 = vunpack.c.l.b16 %v7576
    %v8370 = vunpack.c.l.b16 %v7577
    %v8371 = vunpack.c.h.b16 %v7577
    %v8372 = vunpack.c.l.b16 %v7578
    %v8373 = vunpack.c.h.b16 %v7578
    %v8374 = vunpack.c.l.b16 %v7579
    %v8375 = vunpack.c.h.b16 %v7579
    %v8376 = vunpack.c.l.b16 %v7580
    %v8377 = vunpack.c.l.b16 %v7581
    %v8378 = vunpack.c.h.b16 %v7581
    %v8379 = vunpack.c.l.b16 %v7582
    %v8380 = vunpack.c.h.b16 %v7582
    %v8381 = vunpack.c.l.b16 %v7583
    %v8382 = vunpack.c.h.b16 %v7583
    %v8383 = vunpack.c.l.b16 %v7584
    %v8384 = vunpack.c.l.b16 %v7585
    %v8385 = vunpack.c.h.b16 %v7585
    %v8386 = vunpack.c.l.b16 %v7586
    %v8387 = vunpack.c.h.b16 %v7586
    %v8388 = vunpack.c.l.b16 %v7587
    %v8389 = vunpack.c.h.b16 %v7587
    %v8390 = vunpack.c.l.b16 %v7588
    %v8391 = vunpack.c.l.b16 %v7589
    %v8392 = vunpack.c.h.b16 %v7589
    %v8393 = vunpack.c.l.b16 %v7590
    %v8394 = vunpack.c.h.b16 %v7590
    %v8395 = vunpack.c.l.b16 %v7591
    %v8396 = vunpack.c.h.b16 %v7591
    %v8397 = vunpack.c.l.b16 %v7592
    %v8398 = vunpack.c.l.b16 %v7593
    %v8399 = vunpack.c.h.b16 %v7593
    %v8400 = vunpack.c.l.b16 %v7594
    %v8401 = vunpack.c.h.b16 %v7594
    %v8402 = vunpack.c.l.b16 %v7595
    %v8403 = vunpack.c.h.b16 %v7595
    %v8404 = vunpack.c.l.b16 %v7596
    %v8405 = vunpack.c.l.b16 %v7597
    %v8406 = vunpack.c.h.b16 %v7597
    %v8407 = vunpack.c.l.b16 %v7598
    %v8408 = vunpack.c.h.b16 %v7598
    %v8409 = vunpack.c.l.b16 %v7599
    %v8410 = vunpack.c.h.b16 %v7599
    %v8411 = vunpack.c.l.b16 %v7600
    %v8412 = vunpack.c.l.b16 %v7601
    %v8413 = vunpack.c.h.b16 %v7601
    %v8414 = vunpack.c.l.b16 %v7602
    %v8415 = vunpack.c.h.b16 %v7602
    %v8416 = vunpack.c.l.b16 %v7603
    %v8417 = vunpack.c.h.b16 %v7603
    %v8418 = vunpack.c.l.b16 %v7604
    %v8419 = vunpack.c.l.b16 %v7605
    %v8420 = vunpack.c.h.b16 %v7605
    %v8421 = vunpack.c.l.b16 %v7606
    %v8422 = vunpack.c.h.b16 %v7606
    %v8423 = vunpack.c.l.b16 %v7607
    %v8424 = vunpack.c.h.b16 %v7607
    %v8425 = vunpack.c.l.b16 %v7608
    %v8426 = vunpack.c.l.b16 %v7609
    %v8427 = vunpack.c.h.b16 %v7609
    %v8428 = vunpack.c.l.b16 %v7610
    %v8429 = vunpack.c.h.b16 %v7610
    %v8430 = vunpack.c.l.b16 %v7611
    %v8431 = vunpack.c.h.b16 %v7611
    %v8432 = vunpack.c.l.b16 %v7612
    %v8433 = vunpack.c.l.b16 %v7613
    %v8434 = vunpack.c.h.b16 %v7613
    %v8435 = vunpack.c.l.b16 %v7614
    %v8436 = vunpack.c.h.b16 %v7614
    %v8437 = vunpack.c.l.b16 %v7615
    %v8438 = vunpack.c.h.b16 %v7615
    %v8439 = vunpack.c.l.b16 %v7616
    %v8440 = vunpack.c.l.b16 %v7617
    %v8441 = vunpack.c.h.b16 %v7617
    %v8442 = vunpack.c.l.b16 %v7618
    %v8443 = vunpack.c.h.b16 %v7618
    %v8444 = vunpack.c.l.b16 %v7619
    %v8445 = vunpack.c.h.b16 %v7619
    %v8446 = vunpack.c.l.b16 %v7620
    %v8447 = vunpack.c.l.b16 %v7621
    %v8448 = vunpack.c.h.b16 %v7621
    %v8449 = vunpack.c.l.b16 %v7622
    %v8450 = vunpack.c.h.b16 %v7622
    %v8451 = vunpack.c.l.b16 %v7623
    %v8452 = vunpack.c.h.b16 %v7623
    %v8453 = vunpack.c.l.b16 %v7624
    %v8454 = vunpack.c.l.b16 %v7625
    %v8455 = vunpack.c.h.b16 %v7625
    %v8456 = vunpack.c.l.b16 %v7626
    %v8457 = vunpack.c.h.b16 %v7626
    %v8458 = vunpack.c.l.b16 %v7627
    %v8459 = vunpack.c.h.b16 %v7627
    %v8460 = vunpack.c.l.b16 %v7628
    %v8461 = vunpack.c.l.b16 %v7629
    %v8462 = vunpack.c.h.b16 %v7629
    %v8463 = vunpack.c.l.b16 %v7630
    %v8464 = vunpack.c.h.b16 %v7630
    %v8465 = vunpack.c.l.b16 %v7631
    %v8466 = vunpack.c.h.b16 %v7631
    %v8467 = vunpack.c.l.b16 %v7632
    %v8468 = vunpack.c.l.b16 %v7633
    %v8469 = vunpack.c.h.b16 %v7633
    %v8470 = vunpack.c.l.b16 %v7634
    %v8471 = vunpack.c.h.b16 %v7634
    %v8472 = vunpack.c.l.b16 %v7635
    %v8473 = vunpack.c.h.b16 %v7635
    %v8474 = vunpack.c.l.b16 %v7636
    %v8475 = vunpack.c.l.b16 %v7637
    %v8476 = vunpack.c.h.b16 %v7637
    %v8477 = vunpack.c.l.b16 %v7638
    %v8478 = vunpack.c.h.b16 %v7638
    %v8479 = vunpack.c.l.b16 %v7639
    %v8480 = vunpack.c.h.b16 %v7639
    %v8481 = vunpack.c.l.b16 %v7640
    %v8482 = vunpack.c.l.b16 %v7641
    %v8483 = vunpack.c.h.b16 %v7641
    %v8484 = vunpack.c.l.b16 %v7642
    %v8485 = vunpack.c.h.b16 %v7642
    %v8486 = vunpack.c.l.b16 %v7643
    %v8487 = vunpack.c.h.b16 %v7643
    %v8488 = vunpack.c.l.b16 %v7644
    %v8489 = vunpack.c.l.b16 %v7645
    %v8490 = vunpack.c.h.b16 %v7645
    %v8491 = vunpack.c.l.b16 %v7646
    %v8492 = vunpack.c.h.b16 %v7646
    %v8493 = vunpack.c.l.b16 %v7647
    %v8494 = vunpack.c.h.b16 %v7647
    %v8495 = vunpack.c.l.b16 %v7648
    %v8496 = vunpack.c.l.b16 %v7649
    %v8497 = vunpack.c.h.b16 %v7649
    %v8498 = vunpack.c.l.b16 %v7650
    %v8499 = vunpack.c.h.b16 %v7650
    %v8500 = vunpack.c.l.b16 %v7651
    %v8501 = vunpack.c.h.b16 %v7651
    %v8502 = vunpack.c.l.b16 %v7652
    %v8503 = vunpack.c.l.b16 %v7653
    %v8504 = vunpack.c.h.b16 %v7653
    %v8505 = vunpack.c.l.b16 %v7654
    %v8506 = vunpack.c.h.b16 %v7654
    %v8507 = vunpack.c.l.b16 %v7655
    %v8508 = vunpack.c.h.b16 %v7655
    %v8509 = vunpack.c.l.b16 %v7656
    %v8510 = vunpack.c.l.b16 %v7657
    %v8511 = vunpack.c.h.b16 %v7657
    %v8512 = vunpack.c.l.b16 %v7658
    %v8513 = vunpack.c.h.b16 %v7658
    %v8514 = vunpack.c.l.b16 %v7659
    %v8515 = vunpack.c.h.b16 %v7659
    %v8516 = vunpack.c.l.b16 %v7660
    %v8517 = vunpack.c.l.b16 %v7661
    %v8518 = vunpack.c.h.b16 %v7661
    %v8519 = vunpack.c.l.b16 %v7662
    %v8520 = vunpack.c.h.b16 %v7662
    %v8521 = vunpack.c.l.b16 %v7663
    %v8522 = vunpack.c.h.b16 %v7663
    %v8523 = vunpack.c.l.b16 %v7664
    %v8524 = vunpack.c.l.b16 %v7665
    %v8525 = vunpack.c.h.b16 %v7665
    %v8526 = vunpack.c.l.b16 %v7666
    %v8527 = vunpack.c.h.b16 %v7666
    %v8528 = vunpack.c.l.b16 %v7667
    %v8529 = vunpack.c.h.b16 %v7667
    %v8530 = vunpack.c.l.b16 %v7668
    %v8531 = vunpack.c.l.b16 %v7669
    %v8532 = vunpack.c.h.b16 %v7669
    %v8533 = vunpack.c.l.b16 %v7670
    %v8534 = vunpack.c.h.b16 %v7670
    %v8535 = vunpack.c.l.b16 %v7671
    %v8536 = vunpack.c.h.b16 %v7671
    %v8537 = vunpack.c.l.b16 %v7672
    %v8538 = vunpack.c.l.b16 %v7673
    %v8539 = vunpack.c.h.b16 %v7673
    %v8540 = vunpack.c.l.b16 %v7674
    %v8541 = vunpack.c.h.b16 %v7674
    %v8542 = vunpack.c.l.b16 %v7675
    %v8543 = vunpack.c.h.b16 %v7675
    %v8544 = vunpack.c.l.b16 %v7676
    %v8545 = vunpack.c.l.b16 %v7677
    %v8546 = vunpack.c.h.b16 %v7677
    %v8547 = vunpack.c.l.b16 %v7678
    %v8548 = vunpack.c.h.b16 %v7678
    %v8549 = vunpack.c.l.b16 %v7679
    %v8550 = vunpack.c.h.b16 %v7679
    %v8551 = vunpack.c.l.b16 %v7680
    %v8552 = vunpack.c.l.b16 %v7681
    %v8553 = vunpack.c.h.b16 %v7681
    %v8554 = vunpack.c.l.b16 %v7682
    %v8555 = vunpack.c.h.b16 %v7682
    %v8556 = vunpack.c.l.b16 %v7683
    %v8557 = vunpack.c.h.b16 %v7683
    %v8558 = vunpack.c.l.b16 %v7684
    %v8559 = vunpack.c.l.b16 %v7685
    %v8560 = vunpack.c.h.b16 %v7685
    %v8561 = vunpack.c.l.b16 %v7686
    %v8562 = vunpack.c.h.b16 %v7686
    %v8563 = vunpack.c.l.b16 %v7687
    %v8564 = vunpack.c.h.b16 %v7687
    %v8565 = vunpack.c.l.b16 %v7688
    %v8566 = vunpack.c.l.b16 %v7689
    %v8567 = vunpack.c.h.b16 %v7689
    %v8568 = vunpack.c.l.b16 %v7690
    %v8569 = vunpack.c.h.b16 %v7690
    %v8570 = vunpack.c.l.b16 %v7691
    %v8571 = vunpack.c.h.b16 %v7691
    %v8572 = vunpack.c.l.b16 %v7692
    %v8573 = vpack.c.b16 %v8020, %v8013
    %v8574 = vpack.c.b16 %v8021, %v8014
    %v8575 = vpack.c.b16 %v8022, %v8015
    %v8576 = vpack.c.b16 %v8023, %v8016
    %v8577 = vpack.c.b16 %v8024, %v8017
    %v8578 = vpack.c.b16 %v8025, %v8018
    %v8579 = vpack.c.b16 %v8026, %v8019
    %v8580 = vpack.c.b16 %v8034, %v8027
    %v8581 = vpack.c.b16 %v8035, %v8028
    %v8582 = vpack.c.b16 %v8036, %v8029
    %v8583 = vpack.c.b16 %v8037, %v8030
    %v8584 = vpack.c.b16 %v8038, %v8031
    %v8585 = vpack.c.b16 %v8039, %v8032
    %v8586 = vpack.c.b16 %v8040, %v8033
    %v8587 = vpack.c.b16 %v8048, %v8041
    %v8588 = vpack.c.b16 %v8049, %v8042
    %v8589 = vpack.c.b16 %v8050, %v8043
    %v8590 = vpack.c.b16 %v8051, %v8044
    %v8591 = vpack.c.b16 %v8052, %v8045
    %v8592 = vpack.c.b16 %v8053, %v8046
    %v8593 = vpack.c.b16 %v8054, %v8047
    %v8594 = vpack.c.b16 %v8062, %v8055
    %v8595 = vpack.c.b16 %v8063, %v8056
    %v8596 = vpack.c.b16 %v8064, %v8057
    %v8597 = vpack.c.b16 %v8065, %v8058
    %v8598 = vpack.c.b16 %v8066, %v8059
    %v8599 = vpack.c.b16 %v8067, %v8060
    %v8600 = vpack.c.b16 %v8068, %v8061
    %v8601 = vpack.c.b16 %v8076, %v8069
    %v8602 = vpack.c.b16 %v8077, %v8070
    %v8603 = vpack.c.b16 %v8078, %v8071
    %v8604 = vpack.c.b16 %v8079, %v8072
    %v8605 = vpack.c.b16 %v8080, %v8073
    %v8606 = vpack.c.b16 %v8081, %v8074
    %v8607 = vpack.c.b16 %v8082, %v8075
    %v8608 = vpack.c.b16 %v8090, %v8083
    %v8609 = vpack.c.b16 %v8091, %v8084
    %v8610 = vpack.c.b16 %v8092, %v8085
    %v8611 = vpack.c.b16 %v8093, %v8086
    %v8612 = vpack.c.b16 %v8094, %v8087
    %v8613 = vpack.c.b16 %v8095, %v8088
    %v8614 = vpack.c.b16 %v8096, %v8089
    %v8615 = vpack.c.b16 %v8104, %v8097
    %v8616 = vpack.c.b16 %v8105, %v8098
    %v8617 = vpack.c.b16 %v8106, %v8099
    %v8618 = vpack.c.b16 %v8107, %v8100
    %v8619 = vpack.c.b16 %v8108, %v8101
    %v8620 = vpack.c.b16 %v8109, %v8102
    %v8621 = vpack.c.b16 %v8110, %v8103
    %v8622 = vpack.c.b16 %v8118, %v8111
    %v8623 = vpack.c.b16 %v8119, %v8112
    %v8624 = vpack.c.b16 %v8120, %v8113
    %v8625 = vpack.c.b16 %v8121, %v8114
    %v8626 = vpack.c.b16 %v8122, %v8115
    %v8627 = vpack.c.b16 %v8123, %v8116
    %v8628 = vpack.c.b16 %v8124, %v8117
    %v8629 = vpack.c.b16 %v8132, %v8125
    %v8630 = vpack.c.b16 %v8133, %v8126
    %v8631 = vpack.c.b16 %v8134, %v8127
    %v8632 = vpack.c.b16 %v8135, %v8128
    %v8633 = vpack.c.b16 %v8136, %v8129
    %v8634 = vpack.c.b16 %v8137, %v8130
    %v8635 = vpack.c.b16 %v8138, %v8131
    %v8636 = vpack.c.b16 %v8146, %v8139
    %v8637 = vpack.c.b16 %v8147, %v8140
    %v8638 = vpack.c.b16 %v8148, %v8141
    %v8639 = vpack.c.b16 %v8149, %v8142
    %v8640 = vpack.c.b16 %v8150, %v8143
    %v8641 = vpack.c.b16 %v8151, %v8144
    %v8642 = vpack.c.b16 %v8152, %v8145
    %v8643 = vpack.c.b16 %v8160, %v8153
    %v8644 = vpack.c.b16 %v8161, %v8154
    %v8645 = vpack.c.b16 %v8162, %v8155
    %v8646 = vpack.c.b16 %v8163, %v8156
    %v8647 = vpack.c.b16 %v8164, %v8157
    %v8648 = vpack.c.b16 %v8165, %v8158
    %v8649 = vpack.c.b16 %v8166, %v8159
    %v8650 = vpack.c.b16 %v8174, %v8167
    %v8651 = vpack.c.b16 %v8175, %v8168
    %v8652 = vpack.c.b16 %v8176, %v8169
    %v8653 = vpack.c.b16 %v8177, %v8170
    %v8654 = vpack.c.b16 %v8178, %v8171
    %v8655 = vpack.c.b16 %v8179, %v8172
    %v8656 = vpack.c.b16 %v8180, %v8173
    %v8657 = vpack.c.b16 %v8188, %v8181
    %v8658 = vpack.c.b16 %v8189, %v8182
    %v8659 = vpack.c.b16 %v8190, %v8183
    %v8660 = vpack.c.b16 %v8191, %v8184
    %v8661 = vpack.c.b16 %v8192, %v8185
    %v8662 = vpack.c.b16 %v8193, %v8186
    %v8663 = vpack.c.b16 %v8194, %v8187
    %v8664 = vpack.c.b16 %v8202, %v8195
    %v8665 = vpack.c.b16 %v8203, %v8196
    %v8666 = vpack.c.b16 %v8204, %v8197
    %v8667 = vpack.c.b16 %v8205, %v8198
    %v8668 = vpack.c.b16 %v8206, %v8199
    %v8669 = vpack.c.b16 %v8207, %v8200
    %v8670 = vpack.c.b16 %v8208, %v8201
    %v8671 = vpack.c.b16 %v8216, %v8209
    %v8672 = vpack.c.b16 %v8217, %v8210
    %v8673 = vpack.c.b16 %v8218, %v8211
    %v8674 = vpack.c.b16 %v8219, %v8212
    %v8675 = vpack.c.b16 %v8220, %v8213
    %v8676 = vpack.c.b16 %v8221, %v8214
    %v8677 = vpack.c.b16 %v8222, %v8215
    %v8678 = vpack.c.b16 %v8230, %v8223
    %v8679 = vpack.c.b16 %v8231, %v8224
    %v8680 = vpack.c.b16 %v8232, %v8225
    %v8681 = vpack.c.b16 %v8233, %v8226
    %v8682 = vpack.c.b16 %v8234, %v8227
    %v8683 = vpack.c.b16 %v8235, %v8228
    %v8684 = vpack.c.b16 %v8236, %v8229
    %v8685 = vpack.c.b16 %v8244, %v8237
    %v8686 = vpack.c.b16 %v8245, %v8238
    %v8687 = vpack.c.b16 %v8246, %v8239
    %v8688 = vpack.c.b16 %v8247, %v8240
    %v8689 = vpack.c.b16 %v8248, %v8241
    %v8690 = vpack.c.b16 %v8249, %v8242
    %v8691 = vpack.c.b16 %v8250, %v8243
    %v8692 = vpack.c.b16 %v8258, %v8251
    %v8693 = vpack.c.b16 %v8259, %v8252
    %v8694 = vpack.c.b16 %v8260, %v8253
    %v8695 = vpack.c.b16 %v8261, %v8254
    %v8696 = vpack.c.b16 %v8262, %v8255
    %v8697 = vpack.c.b16 %v8263, %v8256
    %v8698 = vpack.c.b16 %v8264, %v8257
    %v8699 = vpack.c.b16 %v8272, %v8265
    %v8700 = vpack.c.b16 %v8273, %v8266
    %v8701 = vpack.c.b16 %v8274, %v8267
    %v8702 = vpack.c.b16 %v8275, %v8268
    %v8703 = vpack.c.b16 %v8276, %v8269
    %v8704 = vpack.c.b16 %v8277, %v8270
    %v8705 = vpack.c.b16 %v8278, %v8271
    %v8706 = vpack.c.b16 %v8286, %v8279
    %v8707 = vpack.c.b16 %v8287, %v8280
    %v8708 = vpack.c.b16 %v8288, %v8281
    %v8709 = vpack.c.b16 %v8289, %v8282
    %v8710 = vpack.c.b16 %v8290, %v8283
    %v8711 = vpack.c.b16 %v8291, %v8284
    %v8712 = vpack.c.b16 %v8292, %v8285
    %v8713 = vpack.c.b16 %v8300, %v8293
    %v8714 = vpack.c.b16 %v8301, %v8294
    %v8715 = vpack.c.b16 %v8302, %v8295
    %v8716 = vpack.c.b16 %v8303, %v8296
    %v8717 = vpack.c.b16 %v8304, %v8297
    %v8718 = vpack.c.b16 %v8305, %v8298
    %v8719 = vpack.c.b16 %v8306, %v8299
    %v8720 = vpack.c.b16 %v8314, %v8307
    %v8721 = vpack.c.b16 %v8315, %v8308
    %v8722 = vpack.c.b16 %v8316, %v8309
    %v8723 = vpack.c.b16 %v8317, %v8310
    %v8724 = vpack.c.b16 %v8318, %v8311
    %v8725 = vpack.c.b16 %v8319, %v8312
    %v8726 = vpack.c.b16 %v8320, %v8313
    %v8727 = vpack.c.b16 %v8328, %v8321
    %v8728 = vpack.c.b16 %v8329, %v8322
    %v8729 = vpack.c.b16 %v8330, %v8323
    %v8730 = vpack.c.b16 %v8331, %v8324
    %v8731 = vpack.c.b16 %v8332, %v8325
    %v8732 = vpack.c.b16 %v8333, %v8326
    %v8733 = vpack.c.b16 %v8334, %v8327
    %v8734 = vpack.c.b16 %v8342, %v8335
    %v8735 = vpack.c.b16 %v8343, %v8336
    %v8736 = vpack.c.b16 %v8344, %v8337
    %v8737 = vpack.c.b16 %v8345, %v8338
    %v8738 = vpack.c.b16 %v8346, %v8339
    %v8739 = vpack.c.b16 %v8347, %v8340
    %v8740 = vpack.c.b16 %v8348, %v8341
    %v8741 = vpack.c.b16 %v8356, %v8349
    %v8742 = vpack.c.b16 %v8357, %v8350
    %v8743 = vpack.c.b16 %v8358, %v8351
    %v8744 = vpack.c.b16 %v8359, %v8352
    %v8745 = vpack.c.b16 %v8360, %v8353
    %v8746 = vpack.c.b16 %v8361, %v8354
    %v8747 = vpack.c.b16 %v8362, %v8355
    %v8748 = vpack.c.b16 %v8370, %v8363
    %v8749 = vpack.c.b16 %v8371, %v8364
    %v8750 = vpack.c.b16 %v8372, %v8365
    %v8751 = vpack.c.b16 %v8373, %v8366
    %v8752 = vpack.c.b16 %v8374, %v8367
    %v8753 = vpack.c.b16 %v8375, %v8368
    %v8754 = vpack.c.b16 %v8376, %v8369
    %v8755 = vpack.c.b16 %v8384, %v8377
    %v8756 = vpack.c.b16 %v8385, %v8378
    %v8757 = vpack.c.b16 %v8386, %v8379
    %v8758 = vpack.c.b16 %v8387, %v8380
    %v8759 = vpack.c.b16 %v8388, %v8381
    %v8760 = vpack.c.b16 %v8389, %v8382
    %v8761 = vpack.c.b16 %v8390, %v8383
    %v8762 = vpack.c.b16 %v8398, %v8391
    %v8763 = vpack.c.b16 %v8399, %v8392
    %v8764 = vpack.c.b16 %v8400, %v8393
    %v8765 = vpack.c.b16 %v8401, %v8394
    %v8766 = vpack.c.b16 %v8402, %v8395
    %v8767 = vpack.c.b16 %v8403, %v8396
    %v8768 = vpack.c.b16 %v8404, %v8397
    %v8769 = vpack.c.b16 %v8412, %v8405
    %v8770 = vpack.c.b16 %v8413, %v8406
    %v8771 = vpack.c.b16 %v8414, %v8407
    %v8772 = vpack.c.b16 %v8415, %v8408
    %v8773 = vpack.c.b16 %v8416, %v8409
    %v8774 = vpack.c.b16 %v8417, %v8410
    %v8775 = vpack.c.b16 %v8418, %v8411
    %v8776 = vpack.c.b16 %v8426, %v8419
    %v8777 = vpack.c.b16 %v8427, %v8420
    %v8778 = vpack.c.b16 %v8428, %v8421
    %v8779 = vpack.c.b16 %v8429, %v8422
    %v8780 = vpack.c.b16 %v8430, %v8423
    %v8781 = vpack.c.b16 %v8431, %v8424
    %v8782 = vpack.c.b16 %v8432, %v8425
    %v8783 = vpack.c.b16 %v8440, %v8433
    %v8784 = vpack.c.b16 %v8441, %v8434
    %v8785 = vpack.c.b16 %v8442, %v8435
    %v8786 = vpack.c.b16 %v8443, %v8436
    %v8787 = vpack.c.b16 %v8444, %v8437
    %v8788 = vpack.c.b16 %v8445, %v8438
    %v8789 = vpack.c.b16 %v8446, %v8439
    %v8790 = vpack.c.b16 %v8454, %v8447
    %v8791 = vpack.c.b16 %v8455, %v8448
    %v8792 = vpack.c.b16 %v8456, %v8449
    %v8793 = vpack.c.b16 %v8457, %v8450
    %v8794 = vpack.c.b16 %v8458, %v8451
    %v8795 = vpack.c.b16 %v8459, %v8452
    %v8796 = vpack.c.b16 %v8460, %v8453
    %v8797 = vpack.c.b16 %v8468, %v8461
    %v8798 = vpack.c.b16 %v8469, %v8462
    %v8799 = vpack.c.b16 %v8470, %v8463
    %v8800 = vpack.c.b16 %v8471, %v8464
    %v8801 = vpack.c.b16 %v8472, %v8465
    %v8802 = vpack.c.b16 %v8473, %v8466
    %v8803 = vpack.c.b16 %v8474, %v8467
    %v8804 = vpack.c.b16 %v8482, %v8475
    %v8805 = vpack.c.b16 %v8483, %v8476
    %v8806 = vpack.c.b16 %v8484, %v8477
    %v8807 = vpack.c.b16 %v8485, %v8478
    %v8808 = vpack.c.b16 %v8486, %v8479
    %v8809 = vpack.c.b16 %v8487, %v8480
    %v8810 = vpack.c.b16 %v8488, %v8481
    %v8811 = vpack.c.b16 %v8496, %v8489
    %v8812 = vpack.c.b16 %v8497, %v8490
    %v8813 = vpack.c.b16 %v8498, %v8491
    %v8814 = vpack.c.b16 %v8499, %v8492
    %v8815 = vpack.c.b16 %v8500, %v8493
    %v8816 = vpack.c.b16 %v8501, %v8494
    %v8817 = vpack.c.b16 %v8502, %v8495
    %v8818 = vpack.c.b16 %v8510, %v8503
    %v8819 = vpack.c.b16 %v8511, %v8504
    %v8820 = vpack.c.b16 %v8512, %v8505
    %v8821 = vpack.c.b16 %v8513, %v8506
    %v8822 = vpack.c.b16 %v8514, %v8507
    %v8823 = vpack.c.b16 %v8515, %v8508
    %v8824 = vpack.c.b16 %v8516, %v8509
    %v8825 = vpack.c.b16 %v8524, %v8517
    %v8826 = vpack.c.b16 %v8525, %v8518
    %v8827 = vpack.c.b16 %v8526, %v8519
    %v8828 = vpack.c.b16 %v8527, %v8520
    %v8829 = vpack.c.b16 %v8528, %v8521
    %v8830 = vpack.c.b16 %v8529, %v8522
    %v8831 = vpack.c.b16 %v8530, %v8523
    %v8832 = vpack.c.b16 %v8538, %v8531
    %v8833 = vpack.c.b16 %v8539, %v8532
    %v8834 = vpack.c.b16 %v8540, %v8533
    %v8835 = vpack.c.b16 %v8541, %v8534
    %v8836 = vpack.c.b16 %v8542, %v8535
    %v8837 = vpack.c.b16 %v8543, %v8536
    %v8838 = vpack.c.b16 %v8544, %v8537
    %v8839 = vpack.c.b16 %v8552, %v8545
    %v8840 = vpack.c.b16 %v8553, %v8546
    %v8841 = vpack.c.b16 %v8554, %v8547
    %v8842 = vpack.c.b16 %v8555, %v8548
    %v8843 = vpack.c.b16 %v8556, %v8549
    %v8844 = vpack.c.b16 %v8557, %v8550
    %v8845 = vpack.c.b16 %v8558, %v8551
    %v8846 = vpack.c.b16 %v8566, %v8559
    %v8847 = vpack.c.b16 %v8567, %v8560
    %v8848 = vpack.c.b16 %v8568, %v8561
    %v8849 = vpack.c.b16 %v8569, %v8562
    %v8850 = vpack.c.b16 %v8570, %v8563
    %v8851 = vpack.c.b16 %v8571, %v8564
    %v8852 = vpack.c.b16 %v8572, %v8565
    %9133 = vmatprep.subr.bf16.mxu0 %v8574
    %9134 = vmatpush1.bf16.msra.mxu0 %v8573
    %9135 = vmatprep.subr.bf16.mxu0 %v8581
    %9136 = vmatpush1.bf16.msra.mxu0 %v8580
    %9137 = vmatprep.subr.bf16.mxu0 %v8588
    %9138 = vmatpush1.bf16.msra.mxu0 %v8587
    %9139 = vmatprep.subr.bf16.mxu0 %v8595
    %9140 = vmatpush1.bf16.msra.mxu0 %v8594
    %9141 = vmatprep.subr.bf16.mxu0 %v8602
    %9142 = vmatpush1.bf16.msra.mxu0 %v8601
    %9143 = vmatprep.subr.bf16.mxu0 %v8609
    %9144 = vmatpush1.bf16.msra.mxu0 %v8608
    %9145 = vmatprep.subr.bf16.mxu0 %v8616
    %9146 = vmatpush1.bf16.msra.mxu0 %v8615
    %9147 = vmatprep.subr.bf16.mxu0 %v8623
    %9148 = vmatpush1.bf16.msra.mxu0 %v8622
    %9149 = vmatprep.subr.bf16.mxu0 %v8630
    %9150 = vmatpush1.bf16.msra.mxu0 %v8629
    %9151 = vmatprep.subr.bf16.mxu0 %v8637
    %9152 = vmatpush1.bf16.msra.mxu0 %v8636
    %9153 = vmatprep.subr.bf16.mxu0 %v8644
    %9154 = vmatpush1.bf16.msra.mxu0 %v8643
    %9155 = vmatprep.subr.bf16.mxu0 %v8651
    %9156 = vmatpush1.bf16.msra.mxu0 %v8650
    %9157 = vmatprep.subr.bf16.mxu0 %v8658
    %9158 = vmatpush1.bf16.msra.mxu0 %v8657
    %9159 = vmatprep.subr.bf16.mxu0 %v8665
    %9160 = vmatpush1.bf16.msra.mxu0 %v8664
    %9161 = vmatprep.subr.bf16.mxu0 %v8672
    %9162 = vmatpush1.bf16.msra.mxu0 %v8671
    %9163 = vmatprep.subr.bf16.mxu0 %v8679
    %9164 = vmatpush1.bf16.msra.mxu0 %v8678
    %9165 = vmatprep.mubr.bf16.mxu0 %v7369
    %9166 = vmatmul.mubr.bf16.gmra.mrb[0].mxu0 %v7368
    %v9167 = vpop.f32.mrb[0].mxu0
    %v9168 = vadd.f32 0.0, %v9167
    %v9169 = vpop.f32.mrb[0].mxu0
    %v9170 = vadd.f32 0.0, %v9169
    %v9171 = vpop.f32.mrb[0].mxu0
    %v9172 = vadd.f32 0.0, %v9171
    %v9173 = vpop.f32.mrb[0].mxu0
    %v9174 = vadd.f32 0.0, %v9173
    %9175 = vdwg.mxu0
    %9176 = vmatprep.subr.bf16.mxu0 %v8686
    %9177 = vmatpush1.bf16.msra.mxu0 %v8685
    %9178 = vmatprep.subr.bf16.mxu0 %v8693
    %9179 = vmatpush1.bf16.msra.mxu0 %v8692
    %9180 = vmatprep.subr.bf16.mxu0 %v8700
    %9181 = vmatpush1.bf16.msra.mxu0 %v8699
    %9182 = vmatprep.subr.bf16.mxu0 %v8707
    %9183 = vmatpush1.bf16.msra.mxu0 %v8706
    %9184 = vmatprep.subr.bf16.mxu0 %v8714
    %9185 = vmatpush1.bf16.msra.mxu0 %v8713
    %9186 = vmatprep.subr.bf16.mxu0 %v8721
    %9187 = vmatpush1.bf16.msra.mxu0 %v8720
    %9188 = vmatprep.subr.bf16.mxu0 %v8728
    %9189 = vmatpush1.bf16.msra.mxu0 %v8727
    %9190 = vmatprep.subr.bf16.mxu0 %v8735
    %9191 = vmatpush1.bf16.msra.mxu0 %v8734
    %9192 = vmatprep.subr.bf16.mxu0 %v8742
    %9193 = vmatpush1.bf16.msra.mxu0 %v8741
    %9194 = vmatprep.subr.bf16.mxu0 %v8749
    %9195 = vmatpush1.bf16.msra.mxu0 %v8748
    %9196 = vmatprep.subr.bf16.mxu0 %v8756
    %9197 = vmatpush1.bf16.msra.mxu0 %v8755
    %9198 = vmatprep.subr.bf16.mxu0 %v8763
    %9199 = vmatpush1.bf16.msra.mxu0 %v8762
    %9200 = vmatprep.subr.bf16.mxu0 %v8770
    %9201 = vmatpush1.bf16.msra.mxu0 %v8769
    %9202 = vmatprep.subr.bf16.mxu0 %v8777
    %9203 = vmatpush1.bf16.msra.mxu0 %v8776
    %9204 = vmatprep.subr.bf16.mxu0 %v8784
    %9205 = vmatpush1.bf16.msra.mxu0 %v8783
    %9206 = vmatprep.subr.bf16.mxu0 %v8791
    %9207 = vmatpush1.bf16.msra.mxu0 %v8790
    %9208 = vmatprep.mubr.bf16.mxu0 %v7371
    %9209 = vmatmul.mubr.bf16.gmra.mrb[0].mxu0 %v7370
    %v9210 = vpop.f32.mrb[0].mxu0
    %v9211 = vadd.f32 %v9168, %v9210
    %v9212 = vpop.f32.mrb[0].mxu0
    %v9213 = vadd.f32 %v9170, %v9212
    %v9214 = vpop.f32.mrb[0].mxu0
    %v9215 = vadd.f32 %v9172, %v9214
    %v9216 = vpop.f32.mrb[0].mxu0
    %v9217 = vadd.f32 %v9174, %v9216
    %9218 = vdwg.mxu0
    %9219 = vmatprep.subr.bf16.mxu0 %v8798
    %9220 = vmatpush1.bf16.msra.mxu0 %v8797
    %9221 = vmatprep.subr.bf16.mxu0 %v8805
    %9222 = vmatpush1.bf16.msra.mxu0 %v8804
    %9223 = vmatprep.subr.bf16.mxu0 %v8812
    %9224 = vmatpush1.bf16.msra.mxu0 %v8811
    %9225 = vmatprep.subr.bf16.mxu0 %v8819
    %9226 = vmatpush1.bf16.msra.mxu0 %v8818
    %9227 = vmatprep.subr.bf16.mxu0 %v8826
    %9228 = vmatpush1.bf16.msra.mxu0 %v8825
    %9229 = vmatprep.subr.bf16.mxu0 %v8833
    %9230 = vmatpush1.bf16.msra.mxu0 %v8832
    %9231 = vmatprep.subr.bf16.mxu0 %v8840
    %9232 = vmatpush1.bf16.msra.mxu0 %v8839
    %9233 = vmatprep.subr.bf16.mxu0 %v8847
    %9234 = vmatpush1.bf16.msra.mxu0 %v8846
    %9235 = vmatprep.subr.bf16.mxu0 0
    %9236 = vmatpush1.bf16.msra.mxu0 0
    %9237 = vmatprep.subr.bf16.mxu0 0
    %9238 = vmatpush1.bf16.msra.mxu0 0
    %9239 = vmatprep.subr.bf16.mxu0 0
    %9240 = vmatpush1.bf16.msra.mxu0 0
    %9241 = vmatprep.subr.bf16.mxu0 0
    %9242 = vmatpush1.bf16.msra.mxu0 0
    %9243 = vmatprep.subr.bf16.mxu0 0
    %9244 = vmatpush1.bf16.msra.mxu0 0
    %9245 = vmatprep.subr.bf16.mxu0 0
    %9246 = vmatpush1.bf16.msra.mxu0 0
    %9247 = vmatprep.subr.bf16.mxu0 0
    %9248 = vmatpush1.bf16.msra.mxu0 0
    %9249 = vmatprep.subr.bf16.mxu0 0
    %9250 = vmatpush1.bf16.msra.mxu0 0
    %9251 = vmatprep.mubr.bf16.mxu0 0
    %9252 = vmatmul.mubr.bf16.gmra.mrb[0].mxu0 %v7372
    %v9253 = vpop.f32.mrb[0].mxu0
    %v9254 = vadd.f32 %v9211, %v9253
    %v9255 = vpop.f32.mrb[0].mxu0
    %v9256 = vadd.f32 %v9213, %v9255
    %v9257 = vpop.f32.mrb[0].mxu0
    %v9258 = vadd.f32 %v9215, %v9257
    %v9259 = vpop.f32.mrb[0].mxu0
    %v9260 = vadd.f32 %v9217, %v9259
    %9261 = vdwg.mxu0
    %9262 = vmatprep.subr.bf16.mxu0 %v8576
    %9263 = vmatpush1.bf16.msra.mxu0 %v8575
    %9264 = vmatprep.subr.bf16.mxu0 %v8583
    %9265 = vmatpush1.bf16.msra.mxu0 %v8582
    %9266 = vmatprep.subr.bf16.mxu0 %v8590
    %9267 = vmatpush1.bf16.msra.mxu0 %v8589
    %9268 = vmatprep.subr.bf16.mxu0 %v8597
    %9269 = vmatpush1.bf16.msra.mxu0 %v8596
    %9270 = vmatprep.subr.bf16.mxu0 %v8604
    %9271 = vmatpush1.bf16.msra.mxu0 %v8603
    %9272 = vmatprep.subr.bf16.mxu0 %v8611
    %9273 = vmatpush1.bf16.msra.mxu0 %v8610
    %9274 = vmatprep.subr.bf16.mxu0 %v8618
    %9275 = vmatpush1.bf16.msra.mxu0 %v8617
    %9276 = vmatprep.subr.bf16.mxu0 %v8625
    %9277 = vmatpush1.bf16.msra.mxu0 %v8624
    %9278 = vmatprep.subr.bf16.mxu0 %v8632
    %9279 = vmatpush1.bf16.msra.mxu0 %v8631
    %9280 = vmatprep.subr.bf16.mxu0 %v8639
    %9281 = vmatpush1.bf16.msra.mxu0 %v8638
    %9282 = vmatprep.subr.bf16.mxu0 %v8646
    %9283 = vmatpush1.bf16.msra.mxu0 %v8645
    %9284 = vmatprep.subr.bf16.mxu0 %v8653
    %9285 = vmatpush1.bf16.msra.mxu0 %v8652
    %9286 = vmatprep.subr.bf16.mxu0 %v8660
    %9287 = vmatpush1.bf16.msra.mxu0 %v8659
    %9288 = vmatprep.subr.bf16.mxu0 %v8667
    %9289 = vmatpush1.bf16.msra.mxu0 %v8666
    %9290 = vmatprep.subr.bf16.mxu0 %v8674
    %9291 = vmatpush1.bf16.msra.mxu0 %v8673
    %9292 = vmatprep.subr.bf16.mxu0 %v8681
    %9293 = vmatpush1.bf16.msra.mxu0 %v8680
    %9294 = vmatprep.mubr.bf16.mxu0 %v7369
    %9295 = vmatmul.mubr.bf16.gmra.mrb[0].mxu0 %v7368
    %v9296 = vpop.f32.mrb[0].mxu0
    %v9297 = vadd.f32 0.0, %v9296
    %v9298 = vpop.f32.mrb[0].mxu0
    %v9299 = vadd.f32 0.0, %v9298
    %v9300 = vpop.f32.mrb[0].mxu0
    %v9301 = vadd.f32 0.0, %v9300
    %v9302 = vpop.f32.mrb[0].mxu0
    %v9303 = vadd.f32 0.0, %v9302
    %9304 = vdwg.mxu0
    %9305 = vmatprep.subr.bf16.mxu0 %v8688
    %9306 = vmatpush1.bf16.msra.mxu0 %v8687
    %9307 = vmatprep.subr.bf16.mxu0 %v8695
    %9308 = vmatpush1.bf16.msra.mxu0 %v8694
    %9309 = vmatprep.subr.bf16.mxu0 %v8702
    %9310 = vmatpush1.bf16.msra.mxu0 %v8701
    %9311 = vmatprep.subr.bf16.mxu0 %v8709
    %9312 = vmatpush1.bf16.msra.mxu0 %v8708
    %9313 = vmatprep.subr.bf16.mxu0 %v8716
    %9314 = vmatpush1.bf16.msra.mxu0 %v8715
    %9315 = vmatprep.subr.bf16.mxu0 %v8723
    %9316 = vmatpush1.bf16.msra.mxu0 %v8722
    %9317 = vmatprep.subr.bf16.mxu0 %v8730
    %9318 = vmatpush1.bf16.msra.mxu0 %v8729
    %9319 = vmatprep.subr.bf16.mxu0 %v8737
    %9320 = vmatpush1.bf16.msra.mxu0 %v8736
    %9321 = vmatprep.subr.bf16.mxu0 %v8744
    %9322 = vmatpush1.bf16.msra.mxu0 %v8743
    %9323 = vmatprep.subr.bf16.mxu0 %v8751
    %9324 = vmatpush1.bf16.msra.mxu0 %v8750
    %9325 = vmatprep.subr.bf16.mxu0 %v8758
    %9326 = vmatpush1.bf16.msra.mxu0 %v8757
    %9327 = vmatprep.subr.bf16.mxu0 %v8765
    %9328 = vmatpush1.bf16.msra.mxu0 %v8764
    %9329 = vmatprep.subr.bf16.mxu0 %v8772
    %9330 = vmatpush1.bf16.msra.mxu0 %v8771
    %9331 = vmatprep.subr.bf16.mxu0 %v8779
    %9332 = vmatpush1.bf16.msra.mxu0 %v8778
    %9333 = vmatprep.subr.bf16.mxu0 %v8786
    %9334 = vmatpush1.bf16.msra.mxu0 %v8785
    %9335 = vmatprep.subr.bf16.mxu0 %v8793
    %9336 = vmatpush1.bf16.msra.mxu0 %v8792
    %9337 = vmatprep.mubr.bf16.mxu0 %v7371
    %9338 = vmatmul.mubr.bf16.gmra.mrb[0].mxu0 %v7370
    %v9339 = vpop.f32.mrb[0].mxu0
    %v9340 = vadd.f32 %v9297, %v9339
    %v9341 = vpop.f32.mrb[0].mxu0
    %v9342 = vadd.f32 %v9299, %v9341
    %v9343 = vpop.f32.mrb[0].mxu0
    %v9344 = vadd.f32 %v9301, %v9343
    %v9345 = vpop.f32.mrb[0].mxu0
    %v9346 = vadd.f32 %v9303, %v9345
    %9347 = vdwg.mxu0
    %9348 = vmatprep.subr.bf16.mxu0 %v8800
    %9349 = vmatpush1.bf16.msra.mxu0 %v8799
    %9350 = vmatprep.subr.bf16.mxu0 %v8807
    %9351 = vmatpush1.bf16.msra.mxu0 %v8806
    %9352 = vmatprep.subr.bf16.mxu0 %v8814
    %9353 = vmatpush1.bf16.msra.mxu0 %v8813
    %9354 = vmatprep.subr.bf16.mxu0 %v8821
    %9355 = vmatpush1.bf16.msra.mxu0 %v8820
    %9356 = vmatprep.subr.bf16.mxu0 %v8828
    %9357 = vmatpush1.bf16.msra.mxu0 %v8827
    %9358 = vmatprep.subr.bf16.mxu0 %v8835
    %9359 = vmatpush1.bf16.msra.mxu0 %v8834
    %9360 = vmatprep.subr.bf16.mxu0 %v8842
    %9361 = vmatpush1.bf16.msra.mxu0 %v8841
    %9362 = vmatprep.subr.bf16.mxu0 %v8849
    %9363 = vmatpush1.bf16.msra.mxu0 %v8848
    %9364 = vmatprep.subr.bf16.mxu0 0
    %9365 = vmatpush1.bf16.msra.mxu0 0
    %9366 = vmatprep.subr.bf16.mxu0 0
    %9367 = vmatpush1.bf16.msra.mxu0 0
    %9368 = vmatprep.subr.bf16.mxu0 0
    %9369 = vmatpush1.bf16.msra.mxu0 0
    %9370 = vmatprep.subr.bf16.mxu0 0
    %9371 = vmatpush1.bf16.msra.mxu0 0
    %9372 = vmatprep.subr.bf16.mxu0 0
    %9373 = vmatpush1.bf16.msra.mxu0 0
    %9374 = vmatprep.subr.bf16.mxu0 0
    %9375 = vmatpush1.bf16.msra.mxu0 0
    %9376 = vmatprep.subr.bf16.mxu0 0
    %9377 = vmatpush1.bf16.msra.mxu0 0
    %9378 = vmatprep.subr.bf16.mxu0 0
    %9379 = vmatpush1.bf16.msra.mxu0 0
    %9380 = vmatprep.mubr.bf16.mxu0 0
    %9381 = vmatmul.mubr.bf16.gmra.mrb[0].mxu0 %v7372
    %v9382 = vpop.f32.mrb[0].mxu0
    %v9383 = vadd.f32 %v9340, %v9382
    %v9384 = vpop.f32.mrb[0].mxu0
    %v9385 = vadd.f32 %v9342, %v9384
    %v9386 = vpop.f32.mrb[0].mxu0
    %v9387 = vadd.f32 %v9344, %v9386
    %v9388 = vpop.f32.mrb[0].mxu0
    %v9389 = vadd.f32 %v9346, %v9388
    %9390 = vdwg.mxu0
    %9391 = vmatprep.subr.bf16.mxu0 %v8578
    %9392 = vmatpush1.bf16.msra.mxu0 %v8577
    %9393 = vmatprep.subr.bf16.mxu0 %v8585
    %9394 = vmatpush1.bf16.msra.mxu0 %v8584
    %9395 = vmatprep.subr.bf16.mxu0 %v8592
    %9396 = vmatpush1.bf16.msra.mxu0 %v8591
    %9397 = vmatprep.subr.bf16.mxu0 %v8599
    %9398 = vmatpush1.bf16.msra.mxu0 %v8598
    %9399 = vmatprep.subr.bf16.mxu0 %v8606
    %9400 = vmatpush1.bf16.msra.mxu0 %v8605
    %9401 = vmatprep.subr.bf16.mxu0 %v8613
    %9402 = vmatpush1.bf16.msra.mxu0 %v8612
    %9403 = vmatprep.subr.bf16.mxu0 %v8620
    %9404 = vmatpush1.bf16.msra.mxu0 %v8619
    %9405 = vmatprep.subr.bf16.mxu0 %v8627
    %9406 = vmatpush1.bf16.msra.mxu0 %v8626
    %9407 = vmatprep.subr.bf16.mxu0 %v8634
    %9408 = vmatpush1.bf16.msra.mxu0 %v8633
    %9409 = vmatprep.subr.bf16.mxu0 %v8641
    %9410 = vmatpush1.bf16.msra.mxu0 %v8640
    %9411 = vmatprep.subr.bf16.mxu0 %v8648
    %9412 = vmatpush1.bf16.msra.mxu0 %v8647
    %9413 = vmatprep.subr.bf16.mxu0 %v8655
    %9414 = vmatpush1.bf16.msra.mxu0 %v8654
    %9415 = vmatprep.subr.bf16.mxu0 %v8662
    %9416 = vmatpush1.bf16.msra.mxu0 %v8661
    %9417 = vmatprep.subr.bf16.mxu0 %v8669
    %9418 = vmatpush1.bf16.msra.mxu0 %v8668
    %9419 = vmatprep.subr.bf16.mxu0 %v8676
    %9420 = vmatpush1.bf16.msra.mxu0 %v8675
    %9421 = vmatprep.subr.bf16.mxu0 %v8683
    %9422 = vmatpush1.bf16.msra.mxu0 %v8682
    %9423 = vmatprep.mubr.bf16.mxu0 %v7369
    %9424 = vmatmul.mubr.bf16.gmra.mrb[0].mxu0 %v7368
    %v9425 = vpop.f32.mrb[0].mxu0
    %v9426 = vadd.f32 0.0, %v9425
    %v9427 = vpop.f32.mrb[0].mxu0
    %v9428 = vadd.f32 0.0, %v9427
    %v9429 = vpop.f32.mrb[0].mxu0
    %v9430 = vadd.f32 0.0, %v9429
    %v9431 = vpop.f32.mrb[0].mxu0
    %v9432 = vadd.f32 0.0, %v9431
    %9433 = vdwg.mxu0
    %9434 = vmatprep.subr.bf16.mxu0 %v8690
    %9435 = vmatpush1.bf16.msra.mxu0 %v8689
    %9436 = vmatprep.subr.bf16.mxu0 %v8697
    %9437 = vmatpush1.bf16.msra.mxu0 %v8696
    %9438 = vmatprep.subr.bf16.mxu0 %v8704
    %9439 = vmatpush1.bf16.msra.mxu0 %v8703
    %9440 = vmatprep.subr.bf16.mxu0 %v8711
    %9441 = vmatpush1.bf16.msra.mxu0 %v8710
    %9442 = vmatprep.subr.bf16.mxu0 %v8718
    %9443 = vmatpush1.bf16.msra.mxu0 %v8717
    %9444 = vmatprep.subr.bf16.mxu0 %v8725
    %9445 = vmatpush1.bf16.msra.mxu0 %v8724
    %9446 = vmatprep.subr.bf16.mxu0 %v8732
    %9447 = vmatpush1.bf16.msra.mxu0 %v8731
    %9448 = vmatprep.subr.bf16.mxu0 %v8739
    %9449 = vmatpush1.bf16.msra.mxu0 %v8738
    %9450 = vmatprep.subr.bf16.mxu0 %v8746
    %9451 = vmatpush1.bf16.msra.mxu0 %v8745
    %9452 = vmatprep.subr.bf16.mxu0 %v8753
    %9453 = vmatpush1.bf16.msra.mxu0 %v8752
    %9454 = vmatprep.subr.bf16.mxu0 %v8760
    %9455 = vmatpush1.bf16.msra.mxu0 %v8759
    %9456 = vmatprep.subr.bf16.mxu0 %v8767
    %9457 = vmatpush1.bf16.msra.mxu0 %v8766
    %9458 = vmatprep.subr.bf16.mxu0 %v8774
    %9459 = vmatpush1.bf16.msra.mxu0 %v8773
    %9460 = vmatprep.subr.bf16.mxu0 %v8781
    %9461 = vmatpush1.bf16.msra.mxu0 %v8780
    %9462 = vmatprep.subr.bf16.mxu0 %v8788
    %9463 = vmatpush1.bf16.msra.mxu0 %v8787
    %9464 = vmatprep.subr.bf16.mxu0 %v8795
    %9465 = vmatpush1.bf16.msra.mxu0 %v8794
    %9466 = vmatprep.mubr.bf16.mxu0 %v7371
    %9467 = vmatmul.mubr.bf16.gmra.mrb[0].mxu0 %v7370
    %v9468 = vpop.f32.mrb[0].mxu0
    %v9469 = vadd.f32 %v9426, %v9468
    %v9470 = vpop.f32.mrb[0].mxu0
    %v9471 = vadd.f32 %v9428, %v9470
    %v9472 = vpop.f32.mrb[0].mxu0
    %v9473 = vadd.f32 %v9430, %v9472
    %v9474 = vpop.f32.mrb[0].mxu0
    %v9475 = vadd.f32 %v9432, %v9474
    %9476 = vdwg.mxu0
    %9477 = vmatprep.subr.bf16.mxu0 %v8802
    %9478 = vmatpush1.bf16.msra.mxu0 %v8801
    %9479 = vmatprep.subr.bf16.mxu0 %v8809
    %9480 = vmatpush1.bf16.msra.mxu0 %v8808
    %9481 = vmatprep.subr.bf16.mxu0 %v8816
    %9482 = vmatpush1.bf16.msra.mxu0 %v8815
    %9483 = vmatprep.subr.bf16.mxu0 %v8823
    %9484 = vmatpush1.bf16.msra.mxu0 %v8822
    %9485 = vmatprep.subr.bf16.mxu0 %v8830
    %9486 = vmatpush1.bf16.msra.mxu0 %v8829
    %9487 = vmatprep.subr.bf16.mxu0 %v8837
    %9488 = vmatpush1.bf16.msra.mxu0 %v8836
    %9489 = vmatprep.subr.bf16.mxu0 %v8844
    %9490 = vmatpush1.bf16.msra.mxu0 %v8843
    %9491 = vmatprep.subr.bf16.mxu0 %v8851
    %9492 = vmatpush1.bf16.msra.mxu0 %v8850
    %9493 = vmatprep.subr.bf16.mxu0 0
    %9494 = vmatpush1.bf16.msra.mxu0 0
    %9495 = vmatprep.subr.bf16.mxu0 0
    %9496 = vmatpush1.bf16.msra.mxu0 0
    %9497 = vmatprep.subr.bf16.mxu0 0
    %9498 = vmatpush1.bf16.msra.mxu0 0
    %9499 = vmatprep.subr.bf16.mxu0 0
    %9500 = vmatpush1.bf16.msra.mxu0 0
    %9501 = vmatprep.subr.bf16.mxu0 0
    %9502 = vmatpush1.bf16.msra.mxu0 0
    %9503 = vmatprep.subr.bf16.mxu0 0
    %9504 = vmatpush1.bf16.msra.mxu0 0
    %9505 = vmatprep.subr.bf16.mxu0 0
    %9506 = vmatpush1.bf16.msra.mxu0 0
    %9507 = vmatprep.subr.bf16.mxu0 0
    %9508 = vmatpush1.bf16.msra.mxu0 0
    %9509 = vmatprep.mubr.bf16.mxu0 0
    %9510 = vmatmul.mubr.bf16.gmra.mrb[0].mxu0 %v7372
    %v9511 = vpop.f32.mrb[0].mxu0
    %v9512 = vadd.f32 %v9469, %v9511
    %v9513 = vpop.f32.mrb[0].mxu0
    %v9514 = vadd.f32 %v9471, %v9513
    %v9515 = vpop.f32.mrb[0].mxu0
    %v9516 = vadd.f32 %v9473, %v9515
    %v9517 = vpop.f32.mrb[0].mxu0
    %v9518 = vadd.f32 %v9475, %v9517
    %9519 = vdwg.mxu0
    %9520 = vmatprep.subr.bf16.mxu0 0
    %9521 = vmatpush1.bf16.msra.mxu0 %v8579
    %9522 = vmatprep.subr.bf16.mxu0 0
    %9523 = vmatpush1.bf16.msra.mxu0 %v8586
    %9524 = vmatprep.subr.bf16.mxu0 0
    %9525 = vmatpush1.bf16.msra.mxu0 %v8593
    %9526 = vmatprep.subr.bf16.mxu0 0
    %9527 = vmatpush1.bf16.msra.mxu0 %v8600
    %9528 = vmatprep.subr.bf16.mxu0 0
    %9529 = vmatpush1.bf16.msra.mxu0 %v8607
    %9530 = vmatprep.subr.bf16.mxu0 0
    %9531 = vmatpush1.bf16.msra.mxu0 %v8614
    %9532 = vmatprep.subr.bf16.mxu0 0
    %9533 = vmatpush1.bf16.msra.mxu0 %v8621
    %9534 = vmatprep.subr.bf16.mxu0 0
    %9535 = vmatpush1.bf16.msra.mxu0 %v8628
    %9536 = vmatprep.subr.bf16.mxu0 0
    %9537 = vmatpush1.bf16.msra.mxu0 %v8635
    %9538 = vmatprep.subr.bf16.mxu0 0
    %9539 = vmatpush1.bf16.msra.mxu0 %v8642
    %9540 = vmatprep.subr.bf16.mxu0 0
    %9541 = vmatpush1.bf16.msra.mxu0 %v8649
    %9542 = vmatprep.subr.bf16.mxu0 0
    %9543 = vmatpush1.bf16.msra.mxu0 %v8656
    %9544 = vmatprep.subr.bf16.mxu0 0
    %9545 = vmatpush1.bf16.msra.mxu0 %v8663
    %9546 = vmatprep.subr.bf16.mxu0 0
    %9547 = vmatpush1.bf16.msra.mxu0 %v8670
    %9548 = vmatprep.subr.bf16.mxu0 0
    %9549 = vmatpush1.bf16.msra.mxu0 %v8677
    %9550 = vmatprep.subr.bf16.mxu0 0
    %9551 = vmatpush1.bf16.msra.mxu0 %v8684
    %9552 = vmatprep.mubr.bf16.mxu0 %v7369
    %9553 = vmatmul.mubr.bf16.gmra.mrb[0].mxu0 %v7368
    %v9554 = vpop.f32.mrb[0].mxu0
    %v9555 = vadd.f32 0.0, %v9554
    %v9556 = vpop.f32.mrb[0].mxu0
    %v9557 = vpop.f32.mrb[0].mxu0
    %v9558 = vadd.f32 0.0, %v9557
    %v9559 = vpop.f32.mrb[0].mxu0
    %9560 = vdwg.mxu0
    %9561 = vmatprep.subr.bf16.mxu0 0
    %9562 = vmatpush1.bf16.msra.mxu0 %v8691
    %9563 = vmatprep.subr.bf16.mxu0 0
    %9564 = vmatpush1.bf16.msra.mxu0 %v8698
    %9565 = vmatprep.subr.bf16.mxu0 0
    %9566 = vmatpush1.bf16.msra.mxu0 %v8705
    %9567 = vmatprep.subr.bf16.mxu0 0
    %9568 = vmatpush1.bf16.msra.mxu0 %v8712
    %9569 = vmatprep.subr.bf16.mxu0 0
    %9570 = vmatpush1.bf16.msra.mxu0 %v8719
    %9571 = vmatprep.subr.bf16.mxu0 0
    %9572 = vmatpush1.bf16.msra.mxu0 %v8726
    %9573 = vmatprep.subr.bf16.mxu0 0
    %9574 = vmatpush1.bf16.msra.mxu0 %v8733
    %9575 = vmatprep.subr.bf16.mxu0 0
    %9576 = vmatpush1.bf16.msra.mxu0 %v8740
    %9577 = vmatprep.subr.bf16.mxu0 0
    %9578 = vmatpush1.bf16.msra.mxu0 %v8747
    %9579 = vmatprep.subr.bf16.mxu0 0
    %9580 = vmatpush1.bf16.msra.mxu0 %v8754
    %9581 = vmatprep.subr.bf16.mxu0 0
    %9582 = vmatpush1.bf16.msra.mxu0 %v8761
    %9583 = vmatprep.subr.bf16.mxu0 0
    %9584 = vmatpush1.bf16.msra.mxu0 %v8768
    %9585 = vmatprep.subr.bf16.mxu0 0
    %9586 = vmatpush1.bf16.msra.mxu0 %v8775
    %9587 = vmatprep.subr.bf16.mxu0 0
    %9588 = vmatpush1.bf16.msra.mxu0 %v8782
    %9589 = vmatprep.subr.bf16.mxu0 0
    %9590 = vmatpush1.bf16.msra.mxu0 %v8789
    %9591 = vmatprep.subr.bf16.mxu0 0
    %9592 = vmatpush1.bf16.msra.mxu0 %v8796
    %9593 = vmatprep.mubr.bf16.mxu0 %v7371
    %9594 = vmatmul.mubr.bf16.gmra.mrb[0].mxu0 %v7370
    %v9595 = vpop.f32.mrb[0].mxu0
    %v9596 = vadd.f32 %v9555, %v9595
    %v9597 = vpop.f32.mrb[0].mxu0
    %v9598 = vpop.f32.mrb[0].mxu0
    %v9599 = vadd.f32 %v9558, %v9598
    %v9600 = vpop.f32.mrb[0].mxu0
    %9601 = vdwg.mxu0
    %9602 = vmatprep.subr.bf16.mxu0 0
    %9603 = vmatpush1.bf16.msra.mxu0 %v8803
    %9604 = vmatprep.subr.bf16.mxu0 0
    %9605 = vmatpush1.bf16.msra.mxu0 %v8810
    %9606 = vmatprep.subr.bf16.mxu0 0
    %9607 = vmatpush1.bf16.msra.mxu0 %v8817
    %9608 = vmatprep.subr.bf16.mxu0 0
    %9609 = vmatpush1.bf16.msra.mxu0 %v8824
    %9610 = vmatprep.subr.bf16.mxu0 0
    %9611 = vmatpush1.bf16.msra.mxu0 %v8831
    %9612 = vmatprep.subr.bf16.mxu0 0
    %9613 = vmatpush1.bf16.msra.mxu0 %v8838
    %9614 = vmatprep.subr.bf16.mxu0 0
    %9615 = vmatpush1.bf16.msra.mxu0 %v8845
    %9616 = vmatprep.subr.bf16.mxu0 0
    %9617 = vmatpush1.bf16.msra.mxu0 %v8852
    %9618 = vmatprep.subr.bf16.mxu0 0
    %9619 = vmatpush1.bf16.msra.mxu0 0
    %9620 = vmatprep.subr.bf16.mxu0 0
    %9621 = vmatpush1.bf16.msra.mxu0 0
    %9622 = vmatprep.subr.bf16.mxu0 0
    %9623 = vmatpush1.bf16.msra.mxu0 0
    %9624 = vmatprep.subr.bf16.mxu0 0
    %9625 = vmatpush1.bf16.msra.mxu0 0
    %9626 = vmatprep.subr.bf16.mxu0 0
    %9627 = vmatpush1.bf16.msra.mxu0 0
    %9628 = vmatprep.subr.bf16.mxu0 0
    %9629 = vmatpush1.bf16.msra.mxu0 0
    %9630 = vmatprep.subr.bf16.mxu0 0
    %9631 = vmatpush1.bf16.msra.mxu0 0
    %9632 = vmatprep.subr.bf16.mxu0 0
    %9633 = vmatpush1.bf16.msra.mxu0 0
    %9634 = vmatprep.mubr.bf16.mxu0 0
    %9635 = vmatmul.mubr.bf16.gmra.mrb[0].mxu0 %v7372
    %v9636 = vpop.f32.mrb[0].mxu0
    %v9637 = vadd.f32 %v9596, %v9636
    %v9638 = vpop.f32.mrb[0].mxu0
    %v9639 = vpop.f32.mrb[0].mxu0
    %v9640 = vadd.f32 %v9599, %v9639
    %v9641 = vpop.f32.mrb[0].mxu0
    %9642 = vdwg.mxu0
    %v9643 = vadd.f32 %v9254, %v9258
    %v9644 = vrot.slane %v9643, 4
    %v9645 = vadd.f32 %v9643, %v9644
    %v9646 = vrot.slane %v9645, 2
    %v9647 = vadd.f32 %v9645, %v9646
    %v9648 = vrot.slane %v9647, 1
    %v9649 = vadd.f32 %v9647, %v9648
    %v9650 = vadd.f32 %v9256, %v9260
    %v9651 = vrot.slane %v9650, 4
    %v9652 = vadd.f32 %v9650, %v9651
    %v9653 = vrot.slane %v9652, 2
    %v9654 = vadd.f32 %v9652, %v9653
    %v9655 = vrot.slane %v9654, 1
    %v9656 = vadd.f32 %v9654, %v9655
    %v9657 = vadd.f32 %v9383, %v9387
    %v9658 = vrot.slane %v9657, 4
    %v9659 = vadd.f32 %v9657, %v9658
    %v9660 = vrot.slane %v9659, 2
    %v9661 = vadd.f32 %v9659, %v9660
    %v9662 = vrot.slane %v9661, 1
    %v9663 = vadd.f32 %v9661, %v9662
    %v9664 = vadd.f32 %v9385, %v9389
    %v9665 = vrot.slane %v9664, 4
    %v9666 = vadd.f32 %v9664, %v9665
    %v9667 = vrot.slane %v9666, 2
    %v9668 = vadd.f32 %v9666, %v9667
    %v9669 = vrot.slane %v9668, 1
    %v9670 = vadd.f32 %v9668, %v9669
    %v9671 = vadd.f32 %v9512, %v9516
    %v9672 = vrot.slane %v9671, 4
    %v9673 = vadd.f32 %v9671, %v9672
    %v9674 = vrot.slane %v9673, 2
    %v9675 = vadd.f32 %v9673, %v9674
    %v9676 = vrot.slane %v9675, 1
    %v9677 = vadd.f32 %v9675, %v9676
    %v9678 = vadd.f32 %v9514, %v9518
    %v9679 = vrot.slane %v9678, 4
    %v9680 = vadd.f32 %v9678, %v9679
    %v9681 = vrot.slane %v9680, 2
    %v9682 = vadd.f32 %v9680, %v9681
    %v9683 = vrot.slane %v9682, 1
    %v9684 = vadd.f32 %v9682, %v9683
    %v9685 = vadd.f32 %v9637, %v9640
    %v9686 = vrot.slane %v9685, 4
    %v9687 = vadd.f32 %v9685, %v9686
    %v9688 = vrot.slane %v9687, 2
    %v9689 = vadd.f32 %v9687, %v9688
    %v9690 = vrot.slane %v9689, 1
    %v9691 = vadd.f32 %v9689, %v9690
    %v9692 = vmul.f32 %v9254, %v9254
    %v9693 = vmul.f32 %v9256, %v9256
    %v9694 = vmul.f32 %v9383, %v9383
    %v9695 = vmul.f32 %v9385, %v9385
    %v9696 = vmul.f32 %v9512, %v9512
    %v9697 = vmul.f32 %v9514, %v9514
    %v9698 = vmul.f32 %v9637, %v9637
    %v9699 = vmul.f32 %v9258, %v9258
    %v9700 = vmul.f32 %v9260, %v9260
    %v9701 = vmul.f32 %v9387, %v9387
    %v9702 = vmul.f32 %v9389, %v9389
    %v9703 = vmul.f32 %v9516, %v9516
    %v9704 = vmul.f32 %v9518, %v9518
    %v9705 = vmul.f32 %v9640, %v9640
    %v9706 = vadd.f32 %v9692, %v9699
    %v9707 = vrot.slane %v9706, 4
    %v9708 = vadd.f32 %v9706, %v9707
    %v9709 = vrot.slane %v9708, 2
    %v9710 = vadd.f32 %v9708, %v9709
    %v9711 = vrot.slane %v9710, 1
    %v9712 = vadd.f32 %v9710, %v9711
    %v9713 = vadd.f32 %v9693, %v9700
    %v9714 = vrot.slane %v9713, 4
    %v9715 = vadd.f32 %v9713, %v9714
    %v9716 = vrot.slane %v9715, 2
    %v9717 = vadd.f32 %v9715, %v9716
    %v9718 = vrot.slane %v9717, 1
    %v9719 = vadd.f32 %v9717, %v9718
    %v9720 = vadd.f32 %v9694, %v9701
    %v9721 = vrot.slane %v9720, 4
    %v9722 = vadd.f32 %v9720, %v9721
    %v9723 = vrot.slane %v9722, 2
    %v9724 = vadd.f32 %v9722, %v9723
    %v9725 = vrot.slane %v9724, 1
    %v9726 = vadd.f32 %v9724, %v9725
    %v9727 = vadd.f32 %v9695, %v9702
    %v9728 = vrot.slane %v9727, 4
    %v9729 = vadd.f32 %v9727, %v9728
    %v9730 = vrot.slane %v9729, 2
    %v9731 = vadd.f32 %v9729, %v9730
    %v9732 = vrot.slane %v9731, 1
    %v9733 = vadd.f32 %v9731, %v9732
    %v9734 = vadd.f32 %v9696, %v9703
    %v9735 = vrot.slane %v9734, 4
    %v9736 = vadd.f32 %v9734, %v9735
    %v9737 = vrot.slane %v9736, 2
    %v9738 = vadd.f32 %v9736, %v9737
    %v9739 = vrot.slane %v9738, 1
    %v9740 = vadd.f32 %v9738, %v9739
    %v9741 = vadd.f32 %v9697, %v9704
    %v9742 = vrot.slane %v9741, 4
    %v9743 = vadd.f32 %v9741, %v9742
    %v9744 = vrot.slane %v9743, 2
    %v9745 = vadd.f32 %v9743, %v9744
    %v9746 = vrot.slane %v9745, 1
    %v9747 = vadd.f32 %v9745, %v9746
    %v9748 = vadd.f32 %v9698, %v9705
    %v9749 = vrot.slane %v9748, 4
    %v9750 = vadd.f32 %v9748, %v9749
    %v9751 = vrot.slane %v9750, 2
    %v9752 = vadd.f32 %v9750, %v9751
    %v9753 = vrot.slane %v9752, 1
    %v9754 = vadd.f32 %v9752, %v9753
    %v9755 = vmul.f32 %v9649, 0.125
    %v9756 = vmul.f32 %v9656, 0.125
    %v9757 = vmul.f32 %v9663, 0.125
    %v9758 = vmul.f32 %v9670, 0.125
    %v9759 = vmul.f32 %v9677, 0.125
    %v9760 = vmul.f32 %v9684, 0.125
    %v9761 = vmul.f32 %v9691, 0.125
    %v9762 = vmul.f32 %v9712, 0.125
    %v9763 = vmul.f32 %v9719, 0.125
    %v9764 = vmul.f32 %v9726, 0.125
    %v9765 = vmul.f32 %v9733, 0.125
    %v9766 = vmul.f32 %v9740, 0.125
    %v9767 = vmul.f32 %v9747, 0.125
    %v9768 = vmul.f32 %v9754, 0.125
    %v9769 = vmul.f32 %v9755, %v9755
    %v9770 = vmul.f32 %v9756, %v9756
    %v9771 = vmul.f32 %v9757, %v9757
    %v9772 = vmul.f32 %v9758, %v9758
    %v9773 = vmul.f32 %v9759, %v9759
    %v9774 = vmul.f32 %v9760, %v9760
    %v9775 = vmul.f32 %v9761, %v9761
    %v9776 = vsub.f32 %v9762, %v9769
    %v9777 = vsub.f32 %v9763, %v9770
    %v9778 = vsub.f32 %v9764, %v9771
    %v9779 = vsub.f32 %v9765, %v9772
    %v9780 = vsub.f32 %v9766, %v9773
    %v9781 = vsub.f32 %v9767, %v9774
    %v9782 = vsub.f32 %v9768, %v9775
    %s9783 = scalar_lea.vmem [#allocation15], 46
    %v9784 = vld [vmem:[%s9783] ss:$2 sm:$0xff]
    %s9785 = scalar_lea.vmem [#allocation15], 47
    %v9786 = vld [vmem:[%s9785] ss:$2 sm:$0xff]
    %v9787 = vsub.f32 %v9254, %v9755
    %v9788 = vsub.f32 %v9256, %v9756
    %v9789 = vsub.f32 %v9383, %v9757
    %v9790 = vsub.f32 %v9385, %v9758
    %v9791 = vsub.f32 %v9512, %v9759
    %v9792 = vsub.f32 %v9514, %v9760
    %v9793 = vsub.f32 %v9637, %v9761
    %v9794 = vsub.f32 %v9258, %v9755
    %v9795 = vsub.f32 %v9260, %v9756
    %v9796 = vsub.f32 %v9387, %v9757
    %v9797 = vsub.f32 %v9389, %v9758
    %v9798 = vsub.f32 %v9516, %v9759
    %v9799 = vsub.f32 %v9518, %v9760
    %v9800 = vsub.f32 %v9640, %v9761
    %v9801 = vadd.f32 %v9776, 1e-05
    %v9802 = vadd.f32 %v9777, 1e-05
    %v9803 = vadd.f32 %v9778, 1e-05
    %v9804 = vadd.f32 %v9779, 1e-05
    %v9805 = vadd.f32 %v9780, 1e-05
    %v9806 = vadd.f32 %v9781, 1e-05
    %v9807 = vadd.f32 %v9782, 1e-05
    %v9808 = vrsqrt.pop %v9801
    %v9809 = vrsqrt.pop %v9802
    %v9810 = vrsqrt.pop %v9803
    %v9811 = vrsqrt.pop %v9804
    %v9812 = vrsqrt.pop %v9805
    %v9813 = vrsqrt.pop %v9806
    %v9814 = vrsqrt.pop %v9807
    %v9815 = vmul.f32 %v9787, %v9808
    %v9816 = vmul.f32 %v9788, %v9809
    %v9817 = vmul.f32 %v9789, %v9810
    %v9818 = vmul.f32 %v9790, %v9811
    %v9819 = vmul.f32 %v9791, %v9812
    %v9820 = vmul.f32 %v9792, %v9813
    %v9821 = vmul.f32 %v9793, %v9814
    %v9822 = vmul.f32 %v9794, %v9808
    %v9823 = vmul.f32 %v9795, %v9809
    %v9824 = vmul.f32 %v9796, %v9810
    %v9825 = vmul.f32 %v9797, %v9811
    %v9826 = vmul.f32 %v9798, %v9812
    %v9827 = vmul.f32 %v9799, %v9813
    %v9828 = vmul.f32 %v9800, %v9814
    %v9830 = vlaneseq
    %v9831 = vshrl.u32 %v9830, 7
    %v9832 = vsub.s32 0, %v9831
    %v9833 = vrot.slane %v9784, %v9832
    %v9834 = vlaneseq
    %v9835 = vshrl.u32 %v9834, 7
    %v9836 = vsub.s32 1, %v9835
    %v9837 = vrot.slane %v9784, %v9836
    %v9838 = vlaneseq
    %v9839 = vshrl.u32 %v9838, 7
    %v9840 = vsub.s32 2, %v9839
    %v9841 = vrot.slane %v9784, %v9840
    %v9842 = vlaneseq
    %v9843 = vshrl.u32 %v9842, 7
    %v9844 = vsub.s32 3, %v9843
    %v9845 = vrot.slane %v9784, %v9844
    %v9846 = vlaneseq
    %v9847 = vshrl.u32 %v9846, 7
    %v9848 = vsub.s32 4, %v9847
    %v9849 = vrot.slane %v9784, %v9848
    %v9850 = vlaneseq
    %v9851 = vshrl.u32 %v9850, 7
    %v9852 = vsub.s32 5, %v9851
    %v9853 = vrot.slane %v9784, %v9852
    %v9854 = vlaneseq
    %v9855 = vshrl.u32 %v9854, 7
    %v9856 = vsub.s32 6, %v9855
    %v9857 = vrot.slane %v9784, %v9856
    %v9865 = vmul.f32 %v9833, %v9815
    %v9866 = vmul.f32 %v9837, %v9816
    %v9867 = vmul.f32 %v9841, %v9817
    %v9868 = vmul.f32 %v9845, %v9818
    %v9869 = vmul.f32 %v9849, %v9819
    %v9870 = vmul.f32 %v9853, %v9820
    %v9871 = vmul.f32 %v9857, %v9821
    %v9872 = vmul.f32 %v9833, %v9822
    %v9873 = vmul.f32 %v9837, %v9823
    %v9874 = vmul.f32 %v9841, %v9824
    %v9875 = vmul.f32 %v9845, %v9825
    %v9876 = vmul.f32 %v9849, %v9826
    %v9877 = vmul.f32 %v9853, %v9827
    %v9878 = vmul.f32 %v9857, %v9828
    %v9880 = vlaneseq
    %v9881 = vshrl.u32 %v9880, 7
    %v9882 = vsub.s32 0, %v9881
    %v9883 = vrot.slane %v9786, %v9882
    %v9884 = vlaneseq
    %v9885 = vshrl.u32 %v9884, 7
    %v9886 = vsub.s32 1, %v9885
    %v9887 = vrot.slane %v9786, %v9886
    %v9888 = vlaneseq
    %v9889 = vshrl.u32 %v9888, 7
    %v9890 = vsub.s32 2, %v9889
    %v9891 = vrot.slane %v9786, %v9890
    %v9892 = vlaneseq
    %v9893 = vshrl.u32 %v9892, 7
    %v9894 = vsub.s32 3, %v9893
    %v9895 = vrot.slane %v9786, %v9894
    %v9896 = vlaneseq
    %v9897 = vshrl.u32 %v9896, 7
    %v9898 = vsub.s32 4, %v9897
    %v9899 = vrot.slane %v9786, %v9898
    %v9900 = vlaneseq
    %v9901 = vshrl.u32 %v9900, 7
    %v9902 = vsub.s32 5, %v9901
    %v9903 = vrot.slane %v9786, %v9902
    %v9904 = vlaneseq
    %v9905 = vshrl.u32 %v9904, 7
    %v9906 = vsub.s32 6, %v9905
    %v9907 = vrot.slane %v9786, %v9906
    %v9915 = vadd.f32 %v9865, %v9883
    %v9916 = vadd.f32 %v9866, %v9887
    %v9917 = vadd.f32 %v9867, %v9891
    %v9918 = vadd.f32 %v9868, %v9895
    %v9919 = vadd.f32 %v9869, %v9899
    %v9920 = vadd.f32 %v9870, %v9903
    %v9921 = vadd.f32 %v9871, %v9907
    %v9922 = vadd.f32 %v9872, %v9883
    %v9923 = vadd.f32 %v9873, %v9887
    %v9924 = vadd.f32 %v9874, %v9891
    %v9925 = vadd.f32 %v9875, %v9895
    %v9926 = vadd.f32 %v9876, %v9899
    %v9927 = vadd.f32 %v9877, %v9903
    %v9928 = vadd.f32 %v9878, %v9907
    %v9929 = vxor.u32 %v9915, 2147483648
    %v9930 = vxor.u32 %v9916, 2147483648
    %v9931 = vxor.u32 %v9917, 2147483648
    %v9932 = vxor.u32 %v9918, 2147483648
    %v9933 = vxor.u32 %v9919, 2147483648
    %v9934 = vxor.u32 %v9920, 2147483648
    %v9935 = vxor.u32 %v9921, 2147483648
    %v9936 = vxor.u32 %v9922, 2147483648
    %v9937 = vxor.u32 %v9923, 2147483648
    %v9938 = vxor.u32 %v9924, 2147483648
    %v9939 = vxor.u32 %v9925, 2147483648
    %v9940 = vxor.u32 %v9926, 2147483648
    %v9941 = vxor.u32 %v9927, 2147483648
    %v9942 = vxor.u32 %v9928, 2147483648
    %v9943 = vmul.f32 %v9929, 1.442695
    %v9944 = vpow.pop %v9943
    %v9945 = vmul.f32 %v9930, 1.442695
    %v9946 = vpow.pop %v9945
    %v9947 = vmul.f32 %v9931, 1.442695
    %v9948 = vpow.pop %v9947
    %v9949 = vmul.f32 %v9932, 1.442695
    %v9950 = vpow.pop %v9949
    %v9951 = vmul.f32 %v9933, 1.442695
    %v9952 = vpow.pop %v9951
    %v9953 = vmul.f32 %v9934, 1.442695
    %v9954 = vpow.pop %v9953
    %v9955 = vmul.f32 %v9935, 1.442695
    %v9956 = vpow.pop %v9955
    %v9957 = vmul.f32 %v9936, 1.442695
    %v9958 = vpow.pop %v9957
    %v9959 = vmul.f32 %v9937, 1.442695
    %v9960 = vpow.pop %v9959
    %v9961 = vmul.f32 %v9938, 1.442695
    %v9962 = vpow.pop %v9961
    %v9963 = vmul.f32 %v9939, 1.442695
    %v9964 = vpow.pop %v9963
    %v9965 = vmul.f32 %v9940, 1.442695
    %v9966 = vpow.pop %v9965
    %v9967 = vmul.f32 %v9941, 1.442695
    %v9968 = vpow.pop %v9967
    %v9969 = vmul.f32 %v9942, 1.442695
    %v9970 = vpow.pop %v9969
    %v9971 = vadd.f32 %v9944, 1.0
    %v9972 = vadd.f32 %v9946, 1.0
    %v9973 = vadd.f32 %v9948, 1.0
    %v9974 = vadd.f32 %v9950, 1.0
    %v9975 = vadd.f32 %v9952, 1.0
    %v9976 = vadd.f32 %v9954, 1.0
    %v9977 = vadd.f32 %v9956, 1.0
    %v9978 = vadd.f32 %v9958, 1.0
    %v9979 = vadd.f32 %v9960, 1.0
    %v9980 = vadd.f32 %v9962, 1.0
    %v9981 = vadd.f32 %v9964, 1.0
    %v9982 = vadd.f32 %v9966, 1.0
    %v9983 = vadd.f32 %v9968, 1.0
    %v9984 = vadd.f32 %v9970, 1.0
    %v9985 = vrcp.pop %v9971
    %v9986 = vmul.f32 1.0, %v9985
    %v9987 = vrcp.pop %v9972
    %v9988 = vmul.f32 1.0, %v9987
    %v9989 = vrcp.pop %v9973
    %v9990 = vmul.f32 1.0, %v9989
    %v9991 = vrcp.pop %v9974
    %v9992 = vmul.f32 1.0, %v9991
    %v9993 = vrcp.pop %v9975
    %v9994 = vmul.f32 1.0, %v9993
    %v9995 = vrcp.pop %v9976
    %v9996 = vmul.f32 1.0, %v9995
    %v9997 = vrcp.pop %v9977
    %v9998 = vmul.f32 1.0, %v9997
    %v9999 = vrcp.pop %v9978
    %v10000 = vmul.f32 1.0, %v9999
    %v10001 = vrcp.pop %v9979
    %v10002 = vmul.f32 1.0, %v10001
    %v10003 = vrcp.pop %v9980
    %v10004 = vmul.f32 1.0, %v10003
    %v10005 = vrcp.pop %v9981
    %v10006 = vmul.f32 1.0, %v10005
    %v10007 = vrcp.pop %v9982
    %v10008 = vmul.f32 1.0, %v10007
    %v10009 = vrcp.pop %v9983
    %v10010 = vmul.f32 1.0, %v10009
    %v10011 = vrcp.pop %v9984
    %v10012 = vmul.f32 1.0, %v10011
    %v10013 = vmul.f32 %v9986, %v165
    %v10014 = vmul.f32 %v9988, %v165
    %v10015 = vmul.f32 %v9990, %v165
    %v10016 = vmul.f32 %v9992, %v165
    %v10017 = vmul.f32 %v9994, %v165
    %v10018 = vmul.f32 %v9996, %v165
    %v10019 = vmul.f32 %v9998, %v165
    %v10020 = vmul.f32 %v10000, %v166
    %v10021 = vmul.f32 %v10002, %v166
    %v10022 = vmul.f32 %v10004, %v166
    %v10023 = vmul.f32 %v10006, %v166
    %v10024 = vmul.f32 %v10008, %v166
    %v10025 = vmul.f32 %v10010, %v166
    %v10026 = vmul.f32 %v10012, %v166
    %10027 = vst [vmem:[%s10] sm:$0xff] %v10013
    %10028 = vst [vmem:[%s10 + $0x8] sm:$0xff] %v10014
    %10029 = vst [vmem:[%s10 + $0x10] sm:$0xff] %v10015
    %10030 = vst [vmem:[%s10 + $0x18] sm:$0xff] %v10016
    %10031 = vst [vmem:[%s10 + $0x20] sm:$0xff] %v10017
    %10032 = vst [vmem:[%s10 + $0x28] sm:$0xff] %v10018
    %10033 = vst [vmem:[%s10 + $0x30] sm:$0xff] %v10019
    %10034 = vst [vmem:[%s10 + $0x38] sm:$0xff] %v10020
    %10035 = vst [vmem:[%s10 + $0x40] sm:$0xff] %v10021
    %10036 = vst [vmem:[%s10 + $0x48] sm:$0xff] %v10022
    %10037 = vst [vmem:[%s10 + $0x50] sm:$0xff] %v10023
    %10038 = vst [vmem:[%s10 + $0x58] sm:$0xff] %v10024
    %10039 = vst [vmem:[%s10 + $0x60] sm:$0xff] %v10025
    %10040 = vst [vmem:[%s10 + $0x68] sm:$0xff] %v10026
    // Predicated region
    $region78: #{autoencoder_forward.1} parent=1 // pred_check
      _
    $region79: #{autoencoder_forward.1} parent=1 // pred_check_branch
      %10042 = sbr.rel (0) target = $region81
    $region80: #{autoencoder_forward.1} parent=1 // pred_region
      _
    $region81: #{autoencoder_forward.1} parent=1 // pred_fallthru
      _
    // Predicated region
    $region82: #{autoencoder_forward.1} parent=1 // pred_check
      _
    $region83: #{autoencoder_forward.1} parent=1 // pred_check_branch
      %10044 = sbr.rel (0) target = $region85
    $region84: #{autoencoder_forward.1} parent=1 // pred_region
      _
    $region85: #{autoencoder_forward.1} parent=1 // pred_fallthru
      _
    // Predicated region
    $region86: #{autoencoder_forward.1} parent=1 // pred_check
      _
    $region87: #{autoencoder_forward.1} parent=1 // pred_check_branch
      %10046 = sbr.rel (0) target = $region89
    $region88: #{autoencoder_forward.1} parent=1 // pred_region
      _
    $region89: #{autoencoder_forward.1} parent=1 // pred_fallthru
      _
    // Predicated region
    $region90: #{autoencoder_forward.1} parent=1 // pred_check
      _
    $region91: #{autoencoder_forward.1} parent=1 // pred_check_branch
      %10048 = sbr.rel (0) target = $region93
    $region92: #{autoencoder_forward.1} parent=1 // pred_region
      _
    $region93: #{autoencoder_forward.1} parent=1 // pred_fallthru
      _
    %10049 = vsyncpa [#allocation3], 1
    %10050 = vsyncpa [#allocation5], 1
    %10051 = vsyncpa [#allocation8], 1
    %10052 = vsyncpa [#allocation11], 1
    %10053 = vsyncpa [#allocation14], 1

</llo_original>
